<compile_context>
chip_gen: v7x
topology: tpu7x:2x2x1
jax: 0.10.0
libtpu: 0.0.40
codegen_flags: <defaults>
</compile_context>

<pallas_src>
import jax
import jax.numpy as jnp
from jax.experimental import pallas as pl
from jax.experimental.pallas import tpu as pltpu

C_PAD = 128  # persistent padded channel width (lane-dense layout)


# --------------------------------------------------------------------------- #
# Fused conv matmul kernel (single K step):
#   out = relu( (A @ B) * scale + bias (+ residual) )
# --------------------------------------------------------------------------- #
def _make_conv_kernel(relu: bool, has_res: bool):
    def kernel(a_ref, b_ref, s_ref, bb_ref, *rest):
        if has_res:
            r_ref, o_ref = rest
        else:
            (o_ref,) = rest
        acc = jnp.dot(a_ref[...], b_ref[...],
                      preferred_element_type=jnp.float32)
        out = acc * s_ref[...] + bb_ref[...]
        if has_res:
            out = out + r_ref[...]
        if relu:
            out = jnp.maximum(out, 0.0)
        o_ref[...] = out.astype(o_ref.dtype)

    return kernel


def _m_tiling(M):
    """Small M -> one full-M block (no pad/crop).  Big M -> two 16-aligned
    blocks on a parallel grid axis so a v7x megacore can use both cores."""
    if M >= 256:
        Mp = ((M + 31) // 32) * 32
        return Mp, Mp // 2, 2
    return M, M, 1


def conv_matmul(a, w, scale, bias, residual=None, relu=True, tm=None, m_tiles=1):
    Mp, K = a.shape
    Np = w.shape[1]
    has_res = residual is not None
    inputs = [a, w, scale, bias]
    in_specs = [
        pl.BlockSpec((tm, K), lambda i: (i, 0)),
        pl.BlockSpec((K, Np), lambda i: (0, 0)),
        pl.BlockSpec((1, Np), lambda i: (0, 0)),
        pl.BlockSpec((1, Np), lambda i: (0, 0)),
    ]
    if has_res:
        inputs.append(residual)
        in_specs.append(pl.BlockSpec((tm, Np), lambda i: (i, 0)))
    return pl.pallas_call(
        _make_conv_kernel(relu, has_res),
        out_shape=jax.ShapeDtypeStruct((Mp, Np), jnp.float32),
        grid_spec=pltpu.PrefetchScalarGridSpec(
            num_scalar_prefetch=0,
            grid=(m_tiles,),
            in_specs=in_specs,
            out_specs=pl.BlockSpec((tm, Np), lambda i: (i, 0)),
        ),
        compiler_params=pltpu.CompilerParams(
            dimension_semantics=("parallel",)),
    )(*inputs)


# --------------------------------------------------------------------------- #
# Conv (im2col in wrapper) + folded BN (+ residual, ReLU) fused in the kernel
# --------------------------------------------------------------------------- #
def _im2col(x, kh, kw, stride, pad):
    n, h, w, c = x.shape
    if pad > 0:
        x = jnp.pad(x, ((0, 0), (pad, pad), (pad, pad), (0, 0)))
    hp, wp = h + 2 * pad, w + 2 * pad
    oh = (hp - kh) // stride + 1
    ow = (wp - kw) // stride + 1
    if kh == 1 and kw == 1:
        patches = x[:, ::stride, ::stride, :][:, :oh, :ow, :]
    else:
        cols = [x[:, i:i + stride * (oh - 1) + 1:stride,
                  j:j + stride * (ow - 1) + 1:stride, :]
                for i in range(kh) for j in range(kw)]
        patches = jnp.concatenate(cols, axis=-1)      # [n, oh, ow, kh*kw*c]
    return patches.reshape(n * oh * ow, kh * kw * c), oh, ow


def conv_bn(x, cp, kh, kw, stride, pad, relu=True, residual=None):
    """x: NHWC (channels already lane-padded), cp: dict(w[K,128] bf16, scale, bias)."""
    n = x.shape[0]
    patches, oh, ow = _im2col(x, kh, kw, stride, pad)
    M = patches.shape[0]
    Mp, tm, m_tiles = _m_tiling(M)
    if Mp != M:
        patches = jnp.pad(patches, ((0, Mp - M), (0, 0)))
    a = patches.astype(jnp.bfloat16)
    res2d = None
    if residual is not None:
        res2d = residual.reshape(M, -1)
        if Mp != M:
            res2d = jnp.pad(res2d, ((0, Mp - M), (0, 0)))
    out = conv_matmul(a, cp["w"], cp["scale"], cp["bias"],
                      residual=res2d, relu=relu, tm=tm, m_tiles=m_tiles)
    if Mp != M:
        out = out[:M]
    return out.reshape(n, oh, ow, -1)


# --------------------------------------------------------------------------- #
# MaxPool2d(kernel=2, stride=2, padding=1)  (lane-dense 128-channel tensors)
# --------------------------------------------------------------------------- #
def _max4_kernel(a_ref, b_ref, c_ref, d_ref, o_ref):
    o_ref[...] = jnp.maximum(jnp.maximum(a_ref[...], b_ref[...]),
                             jnp.maximum(c_ref[...], d_ref[...]))


def maxpool_2x2_s2_p1(x):
    n, h, w, c = x.shape
    oh = (h + 2 - 2) // 2 + 1
    ow = (w + 2 - 2) // 2 + 1
    xp = jnp.pad(x, ((0, 0), (1, 1), (1, 1), (0, 0)),
                 constant_values=-jnp.inf)
    views = [xp[:, r::2, cc::2, :][:, :oh, :ow, :].reshape(n * oh * ow, c)
             for r in (0, 1) for cc in (0, 1)]
    out = pl.pallas_call(
        _max4_kernel,
        out_shape=jax.ShapeDtypeStruct((n * oh * ow, c), x.dtype),
    )(*views)
    return out.reshape(n, oh, ow, c)


# --------------------------------------------------------------------------- #
# Fused AdaptiveAvgPool2d((1,1)) + flatten + Linear
# --------------------------------------------------------------------------- #
def _gap_fc_kernel(x_ref, w_ref, b_ref, o_ref):
    xm = jnp.mean(x_ref[...], axis=1)                       # [Np, C]
    o_ref[...] = jnp.dot(xm.astype(jnp.bfloat16), w_ref[...],
                         preferred_element_type=jnp.float32) + b_ref[...]


def gap_fc(x, w, b):
    n, h, wd, c = x.shape
    x3 = x.reshape(n, h * wd, c)
    np_ = ((n + 7) // 8) * 8                                # sublane minimum, not 128
    if np_ != n:
        x3 = jnp.pad(x3, ((0, np_ - n), (0, 0), (0, 0)))
    out = pl.pallas_call(
        _gap_fc_kernel,
        out_shape=jax.ShapeDtypeStruct((np_, w.shape[1]), jnp.float32),
    )(x3, w, b)
    return out[:n]


# --------------------------------------------------------------------------- #
# Parameter init (deterministic, synthetic): BN folded, channels padded to 128,
# weights pre-reshaped to [K, 128] bf16 so the forward pass has zero weight glue.
# --------------------------------------------------------------------------- #
def _bn_fold(key, c, eps=1e-5):
    k1, k2, k3, k4 = jax.random.split(key, 4)
    gamma = 1.0 + 0.1 * jax.random.normal(k1, (c,), jnp.float32)
    beta = 0.1 * jax.random.normal(k2, (c,), jnp.float32)
    mean = 0.1 * jax.random.normal(k3, (c,), jnp.float32)
    var = jnp.abs(1.0 + 0.1 * jax.random.normal(k4, (c,), jnp.float32))
    scale = gamma / jnp.sqrt(var + eps)
    bias = beta - mean * scale
    return scale, bias


def make_conv(key, kh, kw, cin, cout, cin_pad, cout_pad=C_PAD, std=0.05):
    wkey, bnkey = jax.random.split(key)
    w = jax.random.normal(wkey, (kh, kw, cin, cout), jnp.float32) * std
    scale, bias = _bn_fold(bnkey, cout)
    wp = jnp.zeros((kh, kw, cin_pad, cout_pad), jnp.float32)
    wp = wp.at[:, :, :cin, :cout].set(w)
    sp = jnp.zeros((1, cout_pad), jnp.float32).at[0, :cout].set(scale)
    bp = jnp.zeros((1, cout_pad), jnp.float32).at[0, :cout].set(bias)  # pad bias = 0
    return dict(w=wp.reshape(kh * kw * cin_pad, cout_pad).astype(jnp.bfloat16),
                scale=sp, bias=bp)


def init_params(key, num_classes=4, num_outputs=9):
    keys = iter(jax.random.split(key, 16))
    nk = lambda: next(keys)
    p = {}
    # layer0: Conv2d(3,64,k=3,s=2,p=3,bias=False) + BN + ReLU (+ MaxPool in forward)
    p["l0"] = make_conv(nk(), 3, 3, 3, 64, cin_pad=3)
    # layer1: 2 x BasicBlock(64 -> 64)
    p["layer1"] = [dict(c1=make_conv(nk(), 3, 3, 64, 64, C_PAD),
                        c2=make_conv(nk(), 3, 3, 64, 64, C_PAD))
                   for _ in range(2)]
    # layer2: BasicBlock(64->128, stride 2, 1x1 downsample) + BasicBlock(128->128)
    p["layer2"] = [dict(c1=make_conv(nk(), 3, 3, 64, 128, C_PAD),
                        c2=make_conv(nk(), 3, 3, 128, 128, C_PAD)),
                   dict(c1=make_conv(nk(), 3, 3, 128, 128, C_PAD),
                        c2=make_conv(nk(), 3, 3, 128, 128, C_PAD))]
    p["l2_down"] = make_conv(nk(), 1, 1, 64, 128, C_PAD)
    # fc: Linear(128 -> num_classes*num_outputs), out padded to 128 lanes
    nfc = num_classes * num_outputs
    wfc = jax.random.normal(nk(), (128, nfc), jnp.float32) * 0.05
    bfc = jax.random.normal(nk(), (nfc,), jnp.float32) * 0.05
    wfc_p = jnp.zeros((C_PAD, C_PAD), jnp.float32).at[:128, :nfc].set(wfc)
    bfc_p = jnp.zeros((1, C_PAD), jnp.float32).at[0, :nfc].set(bfc)
    p["fc"] = (wfc_p.astype(jnp.bfloat16), bfc_p)
    return p


# --------------------------------------------------------------------------- #
# Forward
# --------------------------------------------------------------------------- #
def basic_block(x, blk, stride, downsample=None):
    identity = x
    out = conv_bn(x, blk["c1"], 3, 3, stride, 1, relu=True)
    if downsample is not None:
        identity = conv_bn(x, downsample, 1, 1, stride, 0, relu=False)
    # conv2 + bn2 + residual add + ReLU fused in the matmul epilogue
    out = conv_bn(out, blk["c2"], 3, 3, 1, 1, relu=True, residual=identity)
    return out


def forward(params, x_nchw, num_out=36):
    x = jnp.transpose(x_nchw, (0, 2, 3, 1))                 # NCHW -> NHWC
    # layer0
    x = conv_bn(x, params["l0"], 3, 3, stride=2, pad=3, relu=True)
    x = maxpool_2x2_s2_p1(x)
    # layer1
    for blk in params["layer1"]:
        x = basic_block(x, blk, stride=1)
    # layer2
    x = basic_block(x, params["layer2"][0], stride=2, downsample=params["l2_down"])
    x = basic_block(x, params["layer2"][1], stride=1)
    # avgpool + flatten + fc (one fused kernel), crop padded output lanes once
    wfc, bfc = params["fc"]
    y = gap_fc(x, wfc, bfc)                                 # [N, 128]
    return y[:, :num_out]


# --------------------------------------------------------------------------- #
if __name__ == "__main__":
    key = jax.random.PRNGKey(0)
    pkey, xkey = jax.random.split(key)
    params = init_params(pkey, num_classes=4, num_outputs=9)
    x = jax.random.normal(xkey, (2, 3, 32, 32), jnp.float32)   # NCHW, like PyTorch

    y = jax.jit(forward)(params, x)
    jax.block_until_ready(y)
    assert y.shape == (2, 36) and y.dtype == jnp.float32
    print("KERNEL_OK")
</pallas_src>

<mosaic_0001>
module attributes {stable_mosaic.version = 11 : i64} {
  func.func @kernel(%arg0: i32, %arg1: memref<336x27xbf16, #tpu.memory_space<vmem>>, %arg2: memref<27x128xbf16, #tpu.memory_space<vmem>>, %arg3: memref<1x128xf32, #tpu.memory_space<vmem>>, %arg4: memref<1x128xf32, #tpu.memory_space<vmem>>, %arg5: memref<336x128xf32, #tpu.memory_space<vmem>>) attributes {dimension_semantics = [#tpu.dimension_semantics<parallel>], iteration_bounds = array<i64: 2>, scalar_prefetch = 0 : i64, scratch_operands = 0 : i64, tpu.core_type = #tpu.core_type<tc>, window_params = [{transform_indices = @transform_0, window_bounds = array<i64: 336, 27>}, {pipeline_mode = #tpu.pipeline_mode<synchronous>, transform_indices = @transform_1, window_bounds = array<i64: 27, 128>}, {pipeline_mode = #tpu.pipeline_mode<synchronous>, transform_indices = @transform_2, window_bounds = array<i64: 1, 128>}, {pipeline_mode = #tpu.pipeline_mode<synchronous>, transform_indices = @transform_3, window_bounds = array<i64: 1, 128>}, {transform_indices = @transform_4, window_bounds = array<i64: 336, 128>}]} {
    %c0 = arith.constant 0 : index
    %c0_0 = arith.constant 0 : index
    %0 = vector.load %arg1[%c0, %c0_0] : memref<336x27xbf16, #tpu.memory_space<vmem>>, vector<336x27xbf16>
    %c0_1 = arith.constant 0 : index
    %c0_2 = arith.constant 0 : index
    %1 = vector.load %arg2[%c0_1, %c0_2] : memref<27x128xbf16, #tpu.memory_space<vmem>>, vector<27x128xbf16>
    %cst = arith.constant dense<0.000000e+00> : vector<336x128xf32>
    %2 = tpu.matmul %0, %1, %cst {dimension_numbers = #tpu.dot_dimension_numbers<[1], [0], [0], [1], [0, 0, 1, 1], [], []>} : vector<336x27xbf16>, vector<27x128xbf16>, vector<336x128xf32> -> vector<336x128xf32>
    %c0_3 = arith.constant 0 : index
    %c0_4 = arith.constant 0 : index
    %3 = vector.load %arg3[%c0_3, %c0_4] : memref<1x128xf32, #tpu.memory_space<vmem>>, vector<1x128xf32>
    %4 = vector.broadcast %3 : vector<1x128xf32> to vector<336x128xf32>
    %5 = arith.mulf %2, %4 : vector<336x128xf32>
    %c0_5 = arith.constant 0 : index
    %c0_6 = arith.constant 0 : index
    %6 = vector.load %arg4[%c0_5, %c0_6] : memref<1x128xf32, #tpu.memory_space<vmem>>, vector<1x128xf32>
    %7 = vector.broadcast %6 : vector<1x128xf32> to vector<336x128xf32>
    %8 = arith.addf %5, %7 : vector<336x128xf32>
    %cst_7 = arith.constant 0.000000e+00 : f32
    %9 = vector.broadcast %cst_7 : f32 to vector<336x128xf32>
    %10 = arith.maximumf %8, %9 : vector<336x128xf32>
    %c0_8 = arith.constant 0 : index
    %c0_9 = arith.constant 0 : index
    %11 = vector.load %arg5[%c0_8, %c0_9] : memref<336x128xf32, #tpu.memory_space<vmem>>, vector<336x128xf32>
    tpu.vector_store %arg5[%c0_8, %c0_9], %10 {strides = array<i32>} : memref<336x128xf32, #tpu.memory_space<vmem>>, vector<336x128xf32>,
    return
  }
  func.func @transform_0(%arg0: i32) -> (i32, i32) {
    %c0_i32 = arith.constant 0 : i32
    %c0_i32_0 = arith.constant 0 : i32
    return %arg0, %c0_i32 : i32, i32
  }
  func.func @transform_1(%arg0: i32) -> (i32, i32) {
    %c0_i32 = arith.constant 0 : i32
    %c0_i32_0 = arith.constant 0 : i32
    %c0_i32_1 = arith.constant 0 : i32
    return %c0_i32, %c0_i32_0 : i32, i32
  }
  func.func @transform_2(%arg0: i32) -> (i32, i32) {
    %c0_i32 = arith.constant 0 : i32
    %c0_i32_0 = arith.constant 0 : i32
    %c0_i32_1 = arith.constant 0 : i32
    return %c0_i32, %c0_i32_0 : i32, i32
  }
  func.func @transform_3(%arg0: i32) -> (i32, i32) {
    %c0_i32 = arith.constant 0 : i32
    %c0_i32_0 = arith.constant 0 : i32
    %c0_i32_1 = arith.constant 0 : i32
    return %c0_i32, %c0_i32_0 : i32, i32
  }
  func.func @transform_4(%arg0: i32) -> (i32, i32) {
    %c0_i32 = arith.constant 0 : i32
    %c0_i32_0 = arith.constant 0 : i32
    return %arg0, %c0_i32 : i32, i32
  }
}

module attributes {stable_mosaic.version = 11 : i64} {
  func.func @_max4_kernel(%arg0: memref<200x128xf32, #tpu.memory_space<vmem>>, %arg1: memref<200x128xf32, #tpu.memory_space<vmem>>, %arg2: memref<200x128xf32, #tpu.memory_space<vmem>>, %arg3: memref<200x128xf32, #tpu.memory_space<vmem>>, %arg4: memref<200x128xf32, #tpu.memory_space<vmem>>) attributes {dimension_semantics = [], scalar_prefetch = 0 : i64, scratch_operands = 0 : i64, tpu.core_type = #tpu.core_type<tc>} {
    %c0 = arith.constant 0 : index
    %c0_0 = arith.constant 0 : index
    %0 = vector.load %arg0[%c0, %c0_0] : memref<200x128xf32, #tpu.memory_space<vmem>>, vector<200x128xf32>
    %c0_1 = arith.constant 0 : index
    %c0_2 = arith.constant 0 : index
    %1 = vector.load %arg1[%c0_1, %c0_2] : memref<200x128xf32, #tpu.memory_space<vmem>>, vector<200x128xf32>
    %2 = arith.maximumf %0, %1 : vector<200x128xf32>
    %c0_3 = arith.constant 0 : index
    %c0_4 = arith.constant 0 : index
    %3 = vector.load %arg2[%c0_3, %c0_4] : memref<200x128xf32, #tpu.memory_space<vmem>>, vector<200x128xf32>
    %c0_5 = arith.constant 0 : index
    %c0_6 = arith.constant 0 : index
    %4 = vector.load %arg3[%c0_5, %c0_6] : memref<200x128xf32, #tpu.memory_space<vmem>>, vector<200x128xf32>
    %5 = arith.maximumf %3, %4 : vector<200x128xf32>
    %6 = arith.maximumf %2, %5 : vector<200x128xf32>
    %c0_7 = arith.constant 0 : index
    %c0_8 = arith.constant 0 : index
    %7 = vector.load %arg4[%c0_7, %c0_8] : memref<200x128xf32, #tpu.memory_space<vmem>>, vector<200x128xf32>
    tpu.vector_store %arg4[%c0_7, %c0_8], %6 {strides = array<i32>} : memref<200x128xf32, #tpu.memory_space<vmem>>, vector<200x128xf32>,
    return
  }
}

module attributes {stable_mosaic.version = 11 : i64} {
  func.func @kernel(%arg0: i32, %arg1: memref<200x1152xbf16, #tpu.memory_space<vmem>>, %arg2: memref<1152x128xbf16, #tpu.memory_space<vmem>>, %arg3: memref<1x128xf32, #tpu.memory_space<vmem>>, %arg4: memref<1x128xf32, #tpu.memory_space<vmem>>, %arg5: memref<200x128xf32, #tpu.memory_space<vmem>>) attributes {dimension_semantics = [#tpu.dimension_semantics<parallel>], iteration_bounds = array<i64: 1>, scalar_prefetch = 0 : i64, scratch_operands = 0 : i64, tpu.core_type = #tpu.core_type<tc>, window_params = [{transform_indices = @transform_0, window_bounds = array<i64: 200, 1152>}, {pipeline_mode = #tpu.pipeline_mode<synchronous>, transform_indices = @transform_1, window_bounds = array<i64: 1152, 128>}, {pipeline_mode = #tpu.pipeline_mode<synchronous>, transform_indices = @transform_2, window_bounds = array<i64: 1, 128>}, {pipeline_mode = #tpu.pipeline_mode<synchronous>, transform_indices = @transform_3, window_bounds = array<i64: 1, 128>}, {transform_indices = @transform_4, window_bounds = array<i64: 200, 128>}]} {
    %c0 = arith.constant 0 : index
    %c0_0 = arith.constant 0 : index
    %0 = vector.load %arg1[%c0, %c0_0] : memref<200x1152xbf16, #tpu.memory_space<vmem>>, vector<200x1152xbf16>
    %c0_1 = arith.constant 0 : index
    %c0_2 = arith.constant 0 : index
    %1 = vector.load %arg2[%c0_1, %c0_2] : memref<1152x128xbf16, #tpu.memory_space<vmem>>, vector<1152x128xbf16>
    %cst = arith.constant dense<0.000000e+00> : vector<200x128xf32>
    %2 = tpu.matmul %0, %1, %cst {dimension_numbers = #tpu.dot_dimension_numbers<[1], [0], [0], [1], [0, 0, 1, 1], [], []>} : vector<200x1152xbf16>, vector<1152x128xbf16>, vector<200x128xf32> -> vector<200x128xf32>
    %c0_3 = arith.constant 0 : index
    %c0_4 = arith.constant 0 : index
    %3 = vector.load %arg3[%c0_3, %c0_4] : memref<1x128xf32, #tpu.memory_space<vmem>>, vector<1x128xf32>
    %4 = vector.broadcast %3 : vector<1x128xf32> to vector<200x128xf32>
    %5 = arith.mulf %2, %4 : vector<200x128xf32>
    %c0_5 = arith.constant 0 : index
    %c0_6 = arith.constant 0 : index
    %6 = vector.load %arg4[%c0_5, %c0_6] : memref<1x128xf32, #tpu.memory_space<vmem>>, vector<1x128xf32>
    %7 = vector.broadcast %6 : vector<1x128xf32> to vector<200x128xf32>
    %8 = arith.addf %5, %7 : vector<200x128xf32>
    %cst_7 = arith.constant 0.000000e+00 : f32
    %9 = vector.broadcast %cst_7 : f32 to vector<200x128xf32>
    %10 = arith.maximumf %8, %9 : vector<200x128xf32>
    %c0_8 = arith.constant 0 : index
    %c0_9 = arith.constant 0 : index
    %11 = vector.load %arg5[%c0_8, %c0_9] : memref<200x128xf32, #tpu.memory_space<vmem>>, vector<200x128xf32>
    tpu.vector_store %arg5[%c0_8, %c0_9], %10 {strides = array<i32>} : memref<200x128xf32, #tpu.memory_space<vmem>>, vector<200x128xf32>,
    return
  }
  func.func @transform_0(%arg0: i32) -> (i32, i32) {
    %c0_i32 = arith.constant 0 : i32
    %c0_i32_0 = arith.constant 0 : i32
    return %arg0, %c0_i32 : i32, i32
  }
  func.func @transform_1(%arg0: i32) -> (i32, i32) {
    %c0_i32 = arith.constant 0 : i32
    %c0_i32_0 = arith.constant 0 : i32
    %c0_i32_1 = arith.constant 0 : i32
    return %c0_i32, %c0_i32_0 : i32, i32
  }
  func.func @transform_2(%arg0: i32) -> (i32, i32) {
    %c0_i32 = arith.constant 0 : i32
    %c0_i32_0 = arith.constant 0 : i32
    %c0_i32_1 = arith.constant 0 : i32
    return %c0_i32, %c0_i32_0 : i32, i32
  }
  func.func @transform_3(%arg0: i32) -> (i32, i32) {
    %c0_i32 = arith.constant 0 : i32
    %c0_i32_0 = arith.constant 0 : i32
    %c0_i32_1 = arith.constant 0 : i32
    return %c0_i32, %c0_i32_0 : i32, i32
  }
  func.func @transform_4(%arg0: i32) -> (i32, i32) {
    %c0_i32 = arith.constant 0 : i32
    %c0_i32_0 = arith.constant 0 : i32
    return %arg0, %c0_i32 : i32, i32
  }
}

module attributes {stable_mosaic.version = 11 : i64} {
  func.func @kernel(%arg0: i32, %arg1: memref<200x1152xbf16, #tpu.memory_space<vmem>>, %arg2: memref<1152x128xbf16, #tpu.memory_space<vmem>>, %arg3: memref<1x128xf32, #tpu.memory_space<vmem>>, %arg4: memref<1x128xf32, #tpu.memory_space<vmem>>, %arg5: memref<200x128xf32, #tpu.memory_space<vmem>>, %arg6: memref<200x128xf32, #tpu.memory_space<vmem>>) attributes {dimension_semantics = [#tpu.dimension_semantics<parallel>], iteration_bounds = array<i64: 1>, scalar_prefetch = 0 : i64, scratch_operands = 0 : i64, tpu.core_type = #tpu.core_type<tc>, window_params = [{transform_indices = @transform_0, window_bounds = array<i64: 200, 1152>}, {pipeline_mode = #tpu.pipeline_mode<synchronous>, transform_indices = @transform_1, window_bounds = array<i64: 1152, 128>}, {pipeline_mode = #tpu.pipeline_mode<synchronous>, transform_indices = @transform_2, window_bounds = array<i64: 1, 128>}, {pipeline_mode = #tpu.pipeline_mode<synchronous>, transform_indices = @transform_3, window_bounds = array<i64: 1, 128>}, {transform_indices = @transform_4, window_bounds = array<i64: 200, 128>}, {transform_indices = @transform_5, window_bounds = array<i64: 200, 128>}]} {
    %c0 = arith.constant 0 : index
    %c0_0 = arith.constant 0 : index
    %0 = vector.load %arg1[%c0, %c0_0] : memref<200x1152xbf16, #tpu.memory_space<vmem>>, vector<200x1152xbf16>
    %c0_1 = arith.constant 0 : index
    %c0_2 = arith.constant 0 : index
    %1 = vector.load %arg2[%c0_1, %c0_2] : memref<1152x128xbf16, #tpu.memory_space<vmem>>, vector<1152x128xbf16>
    %cst = arith.constant dense<0.000000e+00> : vector<200x128xf32>
    %2 = tpu.matmul %0, %1, %cst {dimension_numbers = #tpu.dot_dimension_numbers<[1], [0], [0], [1], [0, 0, 1, 1], [], []>} : vector<200x1152xbf16>, vector<1152x128xbf16>, vector<200x128xf32> -> vector<200x128xf32>
    %c0_3 = arith.constant 0 : index
    %c0_4 = arith.constant 0 : index
    %3 = vector.load %arg3[%c0_3, %c0_4] : memref<1x128xf32, #tpu.memory_space<vmem>>, vector<1x128xf32>
    %4 = vector.broadcast %3 : vector<1x128xf32> to vector<200x128xf32>
    %5 = arith.mulf %2, %4 : vector<200x128xf32>
    %c0_5 = arith.constant 0 : index
    %c0_6 = arith.constant 0 : index
    %6 = vector.load %arg4[%c0_5, %c0_6] : memref<1x128xf32, #tpu.memory_space<vmem>>, vector<1x128xf32>
    %7 = vector.broadcast %6 : vector<1x128xf32> to vector<200x128xf32>
    %8 = arith.addf %5, %7 : vector<200x128xf32>
    %c0_7 = arith.constant 0 : index
    %c0_8 = arith.constant 0 : index
    %9 = vector.load %arg5[%c0_7, %c0_8] : memref<200x128xf32, #tpu.memory_space<vmem>>, vector<200x128xf32>
    %10 = arith.addf %8, %9 : vector<200x128xf32>
    %cst_9 = arith.constant 0.000000e+00 : f32
    %11 = vector.broadcast %cst_9 : f32 to vector<200x128xf32>
    %12 = arith.maximumf %10, %11 : vector<200x128xf32>
    %c0_10 = arith.constant 0 : index
    %c0_11 = arith.constant 0 : index
    %13 = vector.load %arg6[%c0_10, %c0_11] : memref<200x128xf32, #tpu.memory_space<vmem>>, vector<200x128xf32>
    tpu.vector_store %arg6[%c0_10, %c0_11], %12 {strides = array<i32>} : memref<200x128xf32, #tpu.memory_space<vmem>>, vector<200x128xf32>,
    return
  }
  func.func @transform_0(%arg0: i32) -> (i32, i32) {
    %c0_i32 = arith.constant 0 : i32
    %c0_i32_0 = arith.constant 0 : i32
    return %arg0, %c0_i32 : i32, i32
  }
  func.func @transform_1(%arg0: i32) -> (i32, i32) {
    %c0_i32 = arith.constant 0 : i32
    %c0_i32_0 = arith.constant 0 : i32
    %c0_i32_1 = arith.constant 0 : i32
    return %c0_i32, %c0_i32_0 : i32, i32
  }
  func.func @transform_2(%arg0: i32) -> (i32, i32) {
    %c0_i32 = arith.constant 0 : i32
    %c0_i32_0 = arith.constant 0 : i32
    %c0_i32_1 = arith.constant 0 : i32
    return %c0_i32, %c0_i32_0 : i32, i32
  }
  func.func @transform_3(%arg0: i32) -> (i32, i32) {
    %c0_i32 = arith.constant 0 : i32
    %c0_i32_0 = arith.constant 0 : i32
    %c0_i32_1 = arith.constant 0 : i32
    return %c0_i32, %c0_i32_0 : i32, i32
  }
  func.func @transform_4(%arg0: i32) -> (i32, i32) {
    %c0_i32 = arith.constant 0 : i32
    %c0_i32_0 = arith.constant 0 : i32
    return %arg0, %c0_i32 : i32, i32
  }
  func.func @transform_5(%arg0: i32) -> (i32, i32) {
    %c0_i32 = arith.constant 0 : i32
    %c0_i32_0 = arith.constant 0 : i32
    return %arg0, %c0_i32 : i32, i32
  }
}

module attributes {stable_mosaic.version = 11 : i64} {
  func.func @kernel(%arg0: i32, %arg1: memref<50x128xbf16, #tpu.memory_space<vmem>>, %arg2: memref<128x128xbf16, #tpu.memory_space<vmem>>, %arg3: memref<1x128xf32, #tpu.memory_space<vmem>>, %arg4: memref<1x128xf32, #tpu.memory_space<vmem>>, %arg5: memref<50x128xf32, #tpu.memory_space<vmem>>) attributes {dimension_semantics = [#tpu.dimension_semantics<parallel>], iteration_bounds = array<i64: 1>, scalar_prefetch = 0 : i64, scratch_operands = 0 : i64, tpu.core_type = #tpu.core_type<tc>, window_params = [{transform_indices = @transform_0, window_bounds = array<i64: 50, 128>}, {pipeline_mode = #tpu.pipeline_mode<synchronous>, transform_indices = @transform_1, window_bounds = array<i64: 128, 128>}, {pipeline_mode = #tpu.pipeline_mode<synchronous>, transform_indices = @transform_2, window_bounds = array<i64: 1, 128>}, {pipeline_mode = #tpu.pipeline_mode<synchronous>, transform_indices = @transform_3, window_bounds = array<i64: 1, 128>}, {transform_indices = @transform_4, window_bounds = array<i64: 50, 128>}]} {
    %c0 = arith.constant 0 : index
    %c0_0 = arith.constant 0 : index
    %0 = vector.load %arg1[%c0, %c0_0] : memref<50x128xbf16, #tpu.memory_space<vmem>>, vector<50x128xbf16>
    %c0_1 = arith.constant 0 : index
    %c0_2 = arith.constant 0 : index
    %1 = vector.load %arg2[%c0_1, %c0_2] : memref<128x128xbf16, #tpu.memory_space<vmem>>, vector<128x128xbf16>
    %cst = arith.constant dense<0.000000e+00> : vector<50x128xf32>
    %2 = tpu.matmul %0, %1, %cst {dimension_numbers = #tpu.dot_dimension_numbers<[1], [0], [0], [1], [0, 0, 1, 1], [], []>} : vector<50x128xbf16>, vector<128x128xbf16>, vector<50x128xf32> -> vector<50x128xf32>
    %c0_3 = arith.constant 0 : index
    %c0_4 = arith.constant 0 : index
    %3 = vector.load %arg3[%c0_3, %c0_4] : memref<1x128xf32, #tpu.memory_space<vmem>>, vector<1x128xf32>
    %4 = vector.broadcast %3 : vector<1x128xf32> to vector<50x128xf32>
    %5 = arith.mulf %2, %4 : vector<50x128xf32>
    %c0_5 = arith.constant 0 : index
    %c0_6 = arith.constant 0 : index
    %6 = vector.load %arg4[%c0_5, %c0_6] : memref<1x128xf32, #tpu.memory_space<vmem>>, vector<1x128xf32>
    %7 = vector.broadcast %6 : vector<1x128xf32> to vector<50x128xf32>
    %8 = arith.addf %5, %7 : vector<50x128xf32>
    %c0_7 = arith.constant 0 : index
    %c0_8 = arith.constant 0 : index
    %9 = vector.load %arg5[%c0_7, %c0_8] : memref<50x128xf32, #tpu.memory_space<vmem>>, vector<50x128xf32>
    tpu.vector_store %arg5[%c0_7, %c0_8], %8 {strides = array<i32>} : memref<50x128xf32, #tpu.memory_space<vmem>>, vector<50x128xf32>,
    return
  }
  func.func @transform_0(%arg0: i32) -> (i32, i32) {
    %c0_i32 = arith.constant 0 : i32
    %c0_i32_0 = arith.constant 0 : i32
    return %arg0, %c0_i32 : i32, i32
  }
  func.func @transform_1(%arg0: i32) -> (i32, i32) {
    %c0_i32 = arith.constant 0 : i32
    %c0_i32_0 = arith.constant 0 : i32
    %c0_i32_1 = arith.constant 0 : i32
    return %c0_i32, %c0_i32_0 : i32, i32
  }
  func.func @transform_2(%arg0: i32) -> (i32, i32) {
    %c0_i32 = arith.constant 0 : i32
    %c0_i32_0 = arith.constant 0 : i32
    %c0_i32_1 = arith.constant 0 : i32
    return %c0_i32, %c0_i32_0 : i32, i32
  }
  func.func @transform_3(%arg0: i32) -> (i32, i32) {
    %c0_i32 = arith.constant 0 : i32
    %c0_i32_0 = arith.constant 0 : i32
    %c0_i32_1 = arith.constant 0 : i32
    return %c0_i32, %c0_i32_0 : i32, i32
  }
  func.func @transform_4(%arg0: i32) -> (i32, i32) {
    %c0_i32 = arith.constant 0 : i32
    %c0_i32_0 = arith.constant 0 : i32
    return %arg0, %c0_i32 : i32, i32
  }
}

module attributes {stable_mosaic.version = 11 : i64} {
  func.func @kernel(%arg0: i32, %arg1: memref<50x1152xbf16, #tpu.memory_space<vmem>>, %arg2: memref<1152x128xbf16, #tpu.memory_space<vmem>>, %arg3: memref<1x128xf32, #tpu.memory_space<vmem>>, %arg4: memref<1x128xf32, #tpu.memory_space<vmem>>, %arg5: memref<50x128xf32, #tpu.memory_space<vmem>>) attributes {dimension_semantics = [#tpu.dimension_semantics<parallel>], iteration_bounds = array<i64: 1>, scalar_prefetch = 0 : i64, scratch_operands = 0 : i64, tpu.core_type = #tpu.core_type<tc>, window_params = [{transform_indices = @transform_0, window_bounds = array<i64: 50, 1152>}, {pipeline_mode = #tpu.pipeline_mode<synchronous>, transform_indices = @transform_1, window_bounds = array<i64: 1152, 128>}, {pipeline_mode = #tpu.pipeline_mode<synchronous>, transform_indices = @transform_2, window_bounds = array<i64: 1, 128>}, {pipeline_mode = #tpu.pipeline_mode<synchronous>, transform_indices = @transform_3, window_bounds = array<i64: 1, 128>}, {transform_indices = @transform_4, window_bounds = array<i64: 50, 128>}]} {
    %c0 = arith.constant 0 : index
    %c0_0 = arith.constant 0 : index
    %0 = vector.load %arg1[%c0, %c0_0] : memref<50x1152xbf16, #tpu.memory_space<vmem>>, vector<50x1152xbf16>
    %c0_1 = arith.constant 0 : index
    %c0_2 = arith.constant 0 : index
    %1 = vector.load %arg2[%c0_1, %c0_2] : memref<1152x128xbf16, #tpu.memory_space<vmem>>, vector<1152x128xbf16>
    %cst = arith.constant dense<0.000000e+00> : vector<50x128xf32>
    %2 = tpu.matmul %0, %1, %cst {dimension_numbers = #tpu.dot_dimension_numbers<[1], [0], [0], [1], [0, 0, 1, 1], [], []>} : vector<50x1152xbf16>, vector<1152x128xbf16>, vector<50x128xf32> -> vector<50x128xf32>
    %c0_3 = arith.constant 0 : index
    %c0_4 = arith.constant 0 : index
    %3 = vector.load %arg3[%c0_3, %c0_4] : memref<1x128xf32, #tpu.memory_space<vmem>>, vector<1x128xf32>
    %4 = vector.broadcast %3 : vector<1x128xf32> to vector<50x128xf32>
    %5 = arith.mulf %2, %4 : vector<50x128xf32>
    %c0_5 = arith.constant 0 : index
    %c0_6 = arith.constant 0 : index
    %6 = vector.load %arg4[%c0_5, %c0_6] : memref<1x128xf32, #tpu.memory_space<vmem>>, vector<1x128xf32>
    %7 = vector.broadcast %6 : vector<1x128xf32> to vector<50x128xf32>
    %8 = arith.addf %5, %7 : vector<50x128xf32>
    %cst_7 = arith.constant 0.000000e+00 : f32
    %9 = vector.broadcast %cst_7 : f32 to vector<50x128xf32>
    %10 = arith.maximumf %8, %9 : vector<50x128xf32>
    %c0_8 = arith.constant 0 : index
    %c0_9 = arith.constant 0 : index
    %11 = vector.load %arg5[%c0_8, %c0_9] : memref<50x128xf32, #tpu.memory_space<vmem>>, vector<50x128xf32>
    tpu.vector_store %arg5[%c0_8, %c0_9], %10 {strides = array<i32>} : memref<50x128xf32, #tpu.memory_space<vmem>>, vector<50x128xf32>,
    return
  }
  func.func @transform_0(%arg0: i32) -> (i32, i32) {
    %c0_i32 = arith.constant 0 : i32
    %c0_i32_0 = arith.constant 0 : i32
    return %arg0, %c0_i32 : i32, i32
  }
  func.func @transform_1(%arg0: i32) -> (i32, i32) {
    %c0_i32 = arith.constant 0 : i32
    %c0_i32_0 = arith.constant 0 : i32
    %c0_i32_1 = arith.constant 0 : i32
    return %c0_i32, %c0_i32_0 : i32, i32
  }
  func.func @transform_2(%arg0: i32) -> (i32, i32) {
    %c0_i32 = arith.constant 0 : i32
    %c0_i32_0 = arith.constant 0 : i32
    %c0_i32_1 = arith.constant 0 : i32
    return %c0_i32, %c0_i32_0 : i32, i32
  }
  func.func @transform_3(%arg0: i32) -> (i32, i32) {
    %c0_i32 = arith.constant 0 : i32
    %c0_i32_0 = arith.constant 0 : i32
    %c0_i32_1 = arith.constant 0 : i32
    return %c0_i32, %c0_i32_0 : i32, i32
  }
  func.func @transform_4(%arg0: i32) -> (i32, i32) {
    %c0_i32 = arith.constant 0 : i32
    %c0_i32_0 = arith.constant 0 : i32
    return %arg0, %c0_i32 : i32, i32
  }
}

module attributes {stable_mosaic.version = 11 : i64} {
  func.func @kernel(%arg0: i32, %arg1: memref<50x1152xbf16, #tpu.memory_space<vmem>>, %arg2: memref<1152x128xbf16, #tpu.memory_space<vmem>>, %arg3: memref<1x128xf32, #tpu.memory_space<vmem>>, %arg4: memref<1x128xf32, #tpu.memory_space<vmem>>, %arg5: memref<50x128xf32, #tpu.memory_space<vmem>>, %arg6: memref<50x128xf32, #tpu.memory_space<vmem>>) attributes {dimension_semantics = [#tpu.dimension_semantics<parallel>], iteration_bounds = array<i64: 1>, scalar_prefetch = 0 : i64, scratch_operands = 0 : i64, tpu.core_type = #tpu.core_type<tc>, window_params = [{transform_indices = @transform_0, window_bounds = array<i64: 50, 1152>}, {pipeline_mode = #tpu.pipeline_mode<synchronous>, transform_indices = @transform_1, window_bounds = array<i64: 1152, 128>}, {pipeline_mode = #tpu.pipeline_mode<synchronous>, transform_indices = @transform_2, window_bounds = array<i64: 1, 128>}, {pipeline_mode = #tpu.pipeline_mode<synchronous>, transform_indices = @transform_3, window_bounds = array<i64: 1, 128>}, {transform_indices = @transform_4, window_bounds = array<i64: 50, 128>}, {transform_indices = @transform_5, window_bounds = array<i64: 50, 128>}]} {
    %c0 = arith.constant 0 : index
    %c0_0 = arith.constant 0 : index
    %0 = vector.load %arg1[%c0, %c0_0] : memref<50x1152xbf16, #tpu.memory_space<vmem>>, vector<50x1152xbf16>
    %c0_1 = arith.constant 0 : index
    %c0_2 = arith.constant 0 : index
    %1 = vector.load %arg2[%c0_1, %c0_2] : memref<1152x128xbf16, #tpu.memory_space<vmem>>, vector<1152x128xbf16>
    %cst = arith.constant dense<0.000000e+00> : vector<50x128xf32>
    %2 = tpu.matmul %0, %1, %cst {dimension_numbers = #tpu.dot_dimension_numbers<[1], [0], [0], [1], [0, 0, 1, 1], [], []>} : vector<50x1152xbf16>, vector<1152x128xbf16>, vector<50x128xf32> -> vector<50x128xf32>
    %c0_3 = arith.constant 0 : index
    %c0_4 = arith.constant 0 : index
    %3 = vector.load %arg3[%c0_3, %c0_4] : memref<1x128xf32, #tpu.memory_space<vmem>>, vector<1x128xf32>
    %4 = vector.broadcast %3 : vector<1x128xf32> to vector<50x128xf32>
    %5 = arith.mulf %2, %4 : vector<50x128xf32>
    %c0_5 = arith.constant 0 : index
    %c0_6 = arith.constant 0 : index
    %6 = vector.load %arg4[%c0_5, %c0_6] : memref<1x128xf32, #tpu.memory_space<vmem>>, vector<1x128xf32>
    %7 = vector.broadcast %6 : vector<1x128xf32> to vector<50x128xf32>
    %8 = arith.addf %5, %7 : vector<50x128xf32>
    %c0_7 = arith.constant 0 : index
    %c0_8 = arith.constant 0 : index
    %9 = vector.load %arg5[%c0_7, %c0_8] : memref<50x128xf32, #tpu.memory_space<vmem>>, vector<50x128xf32>
    %10 = arith.addf %8, %9 : vector<50x128xf32>
    %cst_9 = arith.constant 0.000000e+00 : f32
    %11 = vector.broadcast %cst_9 : f32 to vector<50x128xf32>
    %12 = arith.maximumf %10, %11 : vector<50x128xf32>
    %c0_10 = arith.constant 0 : index
    %c0_11 = arith.constant 0 : index
    %13 = vector.load %arg6[%c0_10, %c0_11] : memref<50x128xf32, #tpu.memory_space<vmem>>, vector<50x128xf32>
    tpu.vector_store %arg6[%c0_10, %c0_11], %12 {strides = array<i32>} : memref<50x128xf32, #tpu.memory_space<vmem>>, vector<50x128xf32>,
    return
  }
  func.func @transform_0(%arg0: i32) -> (i32, i32) {
    %c0_i32 = arith.constant 0 : i32
    %c0_i32_0 = arith.constant 0 : i32
    return %arg0, %c0_i32 : i32, i32
  }
  func.func @transform_1(%arg0: i32) -> (i32, i32) {
    %c0_i32 = arith.constant 0 : i32
    %c0_i32_0 = arith.constant 0 : i32
    %c0_i32_1 = arith.constant 0 : i32
    return %c0_i32, %c0_i32_0 : i32, i32
  }
  func.func @transform_2(%arg0: i32) -> (i32, i32) {
    %c0_i32 = arith.constant 0 : i32
    %c0_i32_0 = arith.constant 0 : i32
    %c0_i32_1 = arith.constant 0 : i32
    return %c0_i32, %c0_i32_0 : i32, i32
  }
  func.func @transform_3(%arg0: i32) -> (i32, i32) {
    %c0_i32 = arith.constant 0 : i32
    %c0_i32_0 = arith.constant 0 : i32
    %c0_i32_1 = arith.constant 0 : i32
    return %c0_i32, %c0_i32_0 : i32, i32
  }
  func.func @transform_4(%arg0: i32) -> (i32, i32) {
    %c0_i32 = arith.constant 0 : i32
    %c0_i32_0 = arith.constant 0 : i32
    return %arg0, %c0_i32 : i32, i32
  }
  func.func @transform_5(%arg0: i32) -> (i32, i32) {
    %c0_i32 = arith.constant 0 : i32
    %c0_i32_0 = arith.constant 0 : i32
    return %arg0, %c0_i32 : i32, i32
  }
}

module attributes {stable_mosaic.version = 11 : i64} {
  func.func @_gap_fc_kernel(%arg0: memref<8x25x128xf32, #tpu.memory_space<vmem>>, %arg1: memref<128x128xbf16, #tpu.memory_space<vmem>>, %arg2: memref<1x128xf32, #tpu.memory_space<vmem>>, %arg3: memref<8x128xf32, #tpu.memory_space<vmem>>) attributes {dimension_semantics = [], scalar_prefetch = 0 : i64, scratch_operands = 0 : i64, tpu.core_type = #tpu.core_type<tc>} {
    %c0 = arith.constant 0 : index
    %c0_0 = arith.constant 0 : index
    %c0_1 = arith.constant 0 : index
    %0 = vector.load %arg0[%c0, %c0_0, %c0_1] : memref<8x25x128xf32, #tpu.memory_space<vmem>>, vector<8x25x128xf32>
    %cst = arith.constant dense<0.000000e+00> : vector<8x128xf32>
    %1 = vector.multi_reduction <add>, %0, %cst [1] : vector<8x25x128xf32> to vector<8x128xf32>
    %cst_2 = arith.constant 2.500000e+01 : f32
    %2 = vector.broadcast %cst_2 : f32 to vector<8x128xf32>
    %3 = arith.divf %1, %2 : vector<8x128xf32>
    %4 = arith.truncf %3 : vector<8x128xf32> to vector<8x128xbf16>
    %c0_3 = arith.constant 0 : index
    %c0_4 = arith.constant 0 : index
    %5 = vector.load %arg1[%c0_3, %c0_4] : memref<128x128xbf16, #tpu.memory_space<vmem>>, vector<128x128xbf16>
    %cst_5 = arith.constant dense<0.000000e+00> : vector<8x128xf32>
    %6 = tpu.matmul %4, %5, %cst_5 {dimension_numbers = #tpu.dot_dimension_numbers<[1], [0], [0], [1], [0, 0, 1, 1], [], []>} : vector<8x128xbf16>, vector<128x128xbf16>, vector<8x128xf32> -> vector<8x128xf32>
    %c0_6 = arith.constant 0 : index
    %c0_7 = arith.constant 0 : index
    %7 = vector.load %arg2[%c0_6, %c0_7] : memref<1x128xf32, #tpu.memory_space<vmem>>, vector<1x128xf32>
    %8 = vector.broadcast %7 : vector<1x128xf32> to vector<8x128xf32>
    %9 = arith.addf %6, %8 : vector<8x128xf32>
    %c0_8 = arith.constant 0 : index
    %c0_9 = arith.constant 0 : index
    %10 = vector.load %arg3[%c0_8, %c0_9] : memref<8x128xf32, #tpu.memory_space<vmem>>, vector<8x128xf32>
    tpu.vector_store %arg3[%c0_8, %c0_9], %9 {strides = array<i32>} : memref<8x128xf32, #tpu.memory_space<vmem>>, vector<8x128xf32>,
    return
  }
}

</mosaic_0001>

<llo_original>
// kernel: forward.12
$region0: #{forward.12}
  #allocation0 [shape = 'u32[]', space=smem, size = 0x4, offset = 0x4, fixed_abs, tag = 'smem constant byte address 0x4 - core index']
  #allocation1 [shape = 'u32[144,128]{1,0:T(1,128)}', space=vmem, size = 0x12000, scoped, tag = 'internal scratch']
  %s0 = inlined_call_operand.vmem [shape: bf16[672,27], index: 0, kind: input, shape index: {}]
  %s1 = inlined_call_operand.vmem [shape: bf16[27,128], index: 1, kind: input, shape index: {}]
  %s2 = inlined_call_operand.vmem [shape: f32[1,128], index: 2, kind: input, shape index: {}]
  %s3 = inlined_call_operand.vmem [shape: f32[1,128], index: 3, kind: input, shape index: {}]
  %s4 = inlined_call_operand.vmem [shape: f32[672,128], index: 4, kind: output, shape index: {}]
  %s5 = sld [smem:[#allocation0]]
  $region49: #{forward.12} parent=0
    _
  %s7 = ssub.s32 1, %s5
  %s8 = scalar_select 0, %s7, %s5
  loop: start=0, step=1, limit=4
  $region2: #{forward.12} parent=0 // loop_pre_header
    _
  $region3: #{forward.12} parent=0 // loop_header
    %s10 = sphi 0, %s14
    %p11 = scmp.ge.s32.totalorder %s10, 4
    %s20 = sphi 0, %s22
    %s23 = sphi 0, %s20
    %s24 = sphi 0, %s23
    %s40 = sphi 0, %s24
    %s44 = sphi 0, %s44
    %s46 = sphi 0, %s44
    %s47 = sphi 0, %s46
    %s61 = sphi 0, %s47
    %s65 = sphi 0, %s65
    %s67 = sphi 0, %s65
    %s68 = sphi 0, %s67
    %s82 = sphi 0, %s68
    %s86 = sphi 0, %s86
    %s88 = sphi 0, %s86
    %s89 = sphi 0, %s88
    %s103 = sphi 0, %s89
    %s109 = sphi 0, %s111
    %s112 = sphi 0, %s109
    %s113 = sphi 0, %s112
    %s129 = sphi 0, %s113
  $region4: #{forward.12} parent=0 // loop_header_branch
    %13 = sbr.rel (%p11) target = $region8
  $region5: #{forward.12} parent=0 // loop_body
    %s15 = ssub.s32 %s10, 1
    %s16 = ssub.s32 %s10, 2
    %s17 = sadd.s32 %s10, 1
    %s18 = ssub.s32 %s10, %s17
    %p19 = scmp.eq.s32.totalorder %s18, 0
    %s21 = sadd.s32 %s20, 1
    %s22 = scalar_select %p19, %s20, %s21
    %p25 = pneg %p19
    %p26 = scmp.eq.s32.totalorder %s10, 1
    %p27 = por %p25, %p26
    %p28 = scmp.ne.s32.totalorder %s20, %s23
    %p29 = scmp.eq.s32.totalorder %s10, 0
    %p30 = por %p28, %p29
    %p31 = scmp.ne.s32.totalorder %s20, %s23
    %p32 = scmp.eq.s32.totalorder %s15, 1
    %p33 = por %p31, %p32
    %p34 = scmp.ne.s32.totalorder %s23, %s24
    %p35 = scmp.eq.s32.totalorder %s15, 0
    %p36 = por %p34, %p35
    %p37 = scmp.ne.s32.totalorder %s23, %s24
    %p38 = scmp.eq.s32.totalorder %s16, 1
    %p39 = por %p37, %p38
    %p41 = scmp.ne.s32.totalorder %s24, %s40
    %p42 = scmp.eq.s32.totalorder %s16, 0
    %p43 = por %p41, %p42
    %s45 = sadd.s32 %s44, 1
    %p48 = scmp.eq.s32.totalorder %s10, 1
    %p49 = scmp.ne.s32.totalorder %s44, %s46
    %p50 = scmp.eq.s32.totalorder %s10, 0
    %p51 = por %p49, %p50
    %p52 = scmp.ne.s32.totalorder %s44, %s46
    %p53 = scmp.eq.s32.totalorder %s15, 1
    %p54 = por %p52, %p53
    %p55 = scmp.ne.s32.totalorder %s46, %s47
    %p56 = scmp.eq.s32.totalorder %s15, 0
    %p57 = por %p55, %p56
    %p58 = scmp.ne.s32.totalorder %s46, %s47
    %p59 = scmp.eq.s32.totalorder %s16, 1
    %p60 = por %p58, %p59
    %p62 = scmp.ne.s32.totalorder %s47, %s61
    %p63 = scmp.eq.s32.totalorder %s16, 0
    %p64 = por %p62, %p63
    %s66 = sadd.s32 %s65, 1
    %p69 = scmp.eq.s32.totalorder %s10, 1
    %p70 = scmp.ne.s32.totalorder %s65, %s67
    %p71 = scmp.eq.s32.totalorder %s10, 0
    %p72 = por %p70, %p71
    %p73 = scmp.ne.s32.totalorder %s65, %s67
    %p74 = scmp.eq.s32.totalorder %s15, 1
    %p75 = por %p73, %p74
    %p76 = scmp.ne.s32.totalorder %s67, %s68
    %p77 = scmp.eq.s32.totalorder %s15, 0
    %p78 = por %p76, %p77
    %p79 = scmp.ne.s32.totalorder %s67, %s68
    %p80 = scmp.eq.s32.totalorder %s16, 1
    %p81 = por %p79, %p80
    %p83 = scmp.ne.s32.totalorder %s68, %s82
    %p84 = scmp.eq.s32.totalorder %s16, 0
    %p85 = por %p83, %p84
    %s87 = sadd.s32 %s86, 1
    %p90 = scmp.eq.s32.totalorder %s10, 1
    %p91 = scmp.ne.s32.totalorder %s86, %s88
    %p92 = scmp.eq.s32.totalorder %s10, 0
    %p93 = por %p91, %p92
    %p94 = scmp.ne.s32.totalorder %s86, %s88
    %p95 = scmp.eq.s32.totalorder %s15, 1
    %p96 = por %p94, %p95
    %p97 = scmp.ne.s32.totalorder %s88, %s89
    %p98 = scmp.eq.s32.totalorder %s15, 0
    %p99 = por %p97, %p98
    %p100 = scmp.ne.s32.totalorder %s88, %s89
    %p101 = scmp.eq.s32.totalorder %s16, 1
    %p102 = por %p100, %p101
    %p104 = scmp.ne.s32.totalorder %s89, %s103
    %p105 = scmp.eq.s32.totalorder %s16, 0
    %p106 = por %p104, %p105
    %s107 = ssub.s32 %s10, %s17
    %p108 = scmp.eq.s32.totalorder %s107, 0
    %s110 = sadd.s32 %s109, 1
    %s111 = scalar_select %p108, %s109, %s110
    %p114 = pneg %p108
    %p115 = scmp.eq.s32.totalorder %s10, 1
    %p116 = por %p114, %p115
    %p117 = scmp.ne.s32.totalorder %s109, %s112
    %p118 = scmp.eq.s32.totalorder %s10, 0
    %p119 = por %p117, %p118
    %p120 = scmp.ne.s32.totalorder %s109, %s112
    %p121 = scmp.eq.s32.totalorder %s15, 1
    %p122 = por %p120, %p121
    %p123 = scmp.ne.s32.totalorder %s112, %s113
    %p124 = scmp.eq.s32.totalorder %s15, 0
    %p125 = por %p123, %p124
    %p126 = scmp.ne.s32.totalorder %s112, %s113
    %p127 = scmp.eq.s32.totalorder %s16, 1
    %p128 = por %p126, %p127
    %p130 = scmp.ne.s32.totalorder %s113, %s129
    %p131 = scmp.eq.s32.totalorder %s16, 0
    %p132 = por %p130, %p131
    %p133 = scmp.le.s32.totalorder 1, %s10
    %p134 = scmp.lt.s32.totalorder %s10, 3
    %p135 = pnand %p133, %p134
    %p136 = pneg %p135
    // Predicated region
    $region9: #{forward.12} parent=5 // pred_check
      _
    $region10: #{forward.12} parent=5 // pred_check_branch
      %138 = sbr.rel (%p135) target = $region12
    $region11: #{forward.12} parent=5 // pred_region
      %s139 = ssub.s32 %s10, 1
      // Predicated region
      $region13: #{forward.12} parent=11 // pred_check
        %p140 = pneg %p57
      $region14: #{forward.12} parent=11 // pred_check_branch
        %142 = sbr.rel (%p140) target = $region16
      $region15: #{forward.12} parent=11 // pred_region
        _
      $region16: #{forward.12} parent=11 // pred_fallthru
        _
      // Predicated region
      $region17: #{forward.12} parent=11 // pred_check
        %p143 = pneg %p78
      $region18: #{forward.12} parent=11 // pred_check_branch
        %145 = sbr.rel (%p143) target = $region20
      $region19: #{forward.12} parent=11 // pred_region
        _
      $region20: #{forward.12} parent=11 // pred_fallthru
        _
      // Predicated region
      $region21: #{forward.12} parent=11 // pred_check
        %p146 = pneg %p99
      $region22: #{forward.12} parent=11 // pred_check_branch
        %148 = sbr.rel (%p146) target = $region24
      $region23: #{forward.12} parent=11 // pred_region
        _
      $region24: #{forward.12} parent=11 // pred_fallthru
        _
    $region12: #{forward.12} parent=5 // pred_fallthru
      _
    %p149 = scmp.lt.s32.totalorder %s10, 2
    // Predicated region
    $region25: #{forward.12} parent=5 // pred_check
      %p150 = pneg %p149
    $region26: #{forward.12} parent=5 // pred_check_branch
      %152 = sbr.rel (%p150) target = $region28
    $region27: #{forward.12} parent=5 // pred_region
      // Predicated region
      $region29: #{forward.12} parent=27 // pred_check
        %p153 = pneg %p30
      $region30: #{forward.12} parent=27 // pred_check_branch
        %155 = sbr.rel (%p153) target = $region32
      $region31: #{forward.12} parent=27 // pred_region
        %s156 = smul.u32 42, %s10
        %p157 = scmp.lt.s32.totalorder %s156, 83
        %s158 = scalar_select %p157, %s156, 83
        %s159 = smul.addr %s158, 4
        %s160 = scalar_lea.vmem %s0, %s159
        %s161 = smul.u32 42, %s10
      $region32: #{forward.12} parent=27 // pred_fallthru
        _
    $region28: #{forward.12} parent=5 // pred_fallthru
      _
    %p162 = scmp.le.s32.totalorder 1, %s10
    %p163 = scmp.lt.s32.totalorder %s10, 3
    %p164 = pnand %p162, %p163
    %p165 = pneg %p164
    // Predicated region
    $region33: #{forward.12} parent=5 // pred_check
      _
    $region34: #{forward.12} parent=5 // pred_check_branch
      %167 = sbr.rel (%p164) target = $region36
    $region35: #{forward.12} parent=5 // pred_region
      %s168 = ssub.s32 %s10, 1
      %s169 = smul.u32 42, %s15
      %p170 = scmp.lt.s32.totalorder %s169, 83
      %s171 = scalar_select %p170, %s169, 83
      %s172 = smul.addr %s171, 4
      %s173 = scalar_lea.vmem %s0, %s172
      %p174 = pneg %p36
      %p175 = pneg %p33
      %p176 = pneg %p57
      %p177 = pneg %p54
      %p178 = pneg %p78
      %p179 = pneg %p75
      %p180 = pneg %p99
      %p181 = pneg %p96
      %p182 = pneg %p125
      %p183 = pneg %p122
      %s184 = smul.u32 42, %s15
      %p185 = scmp.lt.s32.totalorder %s184, 83
      %s186 = scalar_select %p185, %s184, 83
      %s187 = smul.addr %s186, 8
      %s188 = scalar_lea.vmem %s4, %s187
      %s189 = smul.u32 42, %s15
      %p190 = scmp.lt.s32.totalorder %s189, 83
      %s191 = scalar_select %p190, %s189, 83
      %s192 = smul.addr %s191, 4
      %s193 = scalar_lea.vmem %s0, %s192
      %s194 = smul.u32 42, %s15
      %s195 = smul.u32 42, %s15
      %p196 = scmp.lt.s32.totalorder %s195, 83
      %s197 = scalar_select %p196, %s195, 83
      %s198 = smul.addr %s197, 8
      %s199 = scalar_lea.vmem %s4, %s198
      %s200 = smul.u32 42, %s15
      %v202 = vld [vmem:[%s193] sm:$0xf]
      %v203 = vld [vmem:[%s193 + $0x4] sm:$0xf]
      %v204 = vld [vmem:[%s193 + $0x8] sm:$0xf]
      %v205 = vld [vmem:[%s193 + $0xc] sm:$0xf]
      %v206 = vld [vmem:[%s193 + $0x10] sm:$0xf]
      %v207 = vld [vmem:[%s193 + $0x14] sm:$0xf]
      %v208 = vld [vmem:[%s193 + $0x18] sm:$0xf]
      %v209 = vld [vmem:[%s193 + $0x1c] sm:$0xf]
      %v210 = vld [vmem:[%s193 + $0x20] sm:$0xf]
      %v211 = vld [vmem:[%s193 + $0x24] sm:$0xf]
      %v212 = vld [vmem:[%s193 + $0x28] sm:$0xf]
      %v213 = vld [vmem:[%s193 + $0x2c] sm:$0xf]
      %v214 = vld [vmem:[%s193 + $0x30] sm:$0xf]
      %v215 = vld [vmem:[%s193 + $0x34] sm:$0xf]
      %v216 = vld [vmem:[%s193 + $0x38] sm:$0xf]
      %v217 = vld [vmem:[%s193 + $0x3c] sm:$0xf]
      %v218 = vld [vmem:[%s193 + $0x40] sm:$0xf]
      %v219 = vld [vmem:[%s193 + $0x44] sm:$0xf]
      %v220 = vld [vmem:[%s193 + $0x48] sm:$0xf]
      %v221 = vld [vmem:[%s193 + $0x4c] sm:$0xf]
      %v222 = vld [vmem:[%s193 + $0x50] sm:$0xf]
      %v223 = vld [vmem:[%s193 + $0x54] sm:$0xf]
      %v224 = vld [vmem:[%s193 + $0x58] sm:$0xf]
      %v225 = vld [vmem:[%s193 + $0x5c] sm:$0xf]
      %v226 = vld [vmem:[%s193 + $0x60] sm:$0xf]
      %v227 = vld [vmem:[%s193 + $0x64] sm:$0xf]
      %v228 = vld [vmem:[%s193 + $0x68] sm:$0xf]
      %v229 = vld [vmem:[%s193 + $0x6c] sm:$0xf]
      %v230 = vld [vmem:[%s193 + $0x70] sm:$0xf]
      %v231 = vld [vmem:[%s193 + $0x74] sm:$0xf]
      %v232 = vld [vmem:[%s193 + $0x78] sm:$0xf]
      %v233 = vld [vmem:[%s193 + $0x7c] sm:$0xf]
      %v234 = vld [vmem:[%s193 + $0x80] sm:$0xf]
      %v235 = vld [vmem:[%s193 + $0x84] sm:$0xf]
      %v236 = vld [vmem:[%s193 + $0x88] sm:$0xf]
      %v237 = vld [vmem:[%s193 + $0x8c] sm:$0xf]
      %v238 = vld [vmem:[%s193 + $0x90] sm:$0xf]
      %v239 = vld [vmem:[%s193 + $0x94] sm:$0xf]
      %v240 = vld [vmem:[%s193 + $0x98] sm:$0xf]
      %v241 = vld [vmem:[%s193 + $0x9c] sm:$0xf]
      %v242 = vld [vmem:[%s193 + $0xa0] sm:$0xf]
      %v243 = vld [vmem:[%s193 + $0xa4] sm:$0xf]
      %v244 = vld [vmem:[%s1] sm:$0xf]
      %v245 = vld [vmem:[%s1 + $0x4] sm:$0xf]
      %v246 = vld [vmem:[%s1 + $0x8] sm:$0xf]
      %v247 = vld [vmem:[%s1 + $0xc] sm:$0x3]
      %v290 = vunpack.c.l.b16 %v202
      %v291 = vunpack.c.l.b16 %v203
      %v292 = vunpack.c.l.b16 %v204
      %v293 = vunpack.c.l.b16 %v205
      %v294 = vunpack.c.l.b16 %v206
      %v295 = vunpack.c.l.b16 %v207
      %v296 = vunpack.c.l.b16 %v208
      %v297 = vunpack.c.l.b16 %v209
      %v298 = vunpack.c.l.b16 %v210
      %v299 = vunpack.c.l.b16 %v211
      %v300 = vunpack.c.l.b16 %v212
      %v301 = vunpack.c.l.b16 %v213
      %v302 = vunpack.c.l.b16 %v214
      %v303 = vunpack.c.l.b16 %v215
      %v304 = vunpack.c.l.b16 %v216
      %v305 = vunpack.c.l.b16 %v217
      %v306 = vunpack.c.l.b16 %v218
      %v307 = vunpack.c.l.b16 %v219
      %v308 = vunpack.c.l.b16 %v220
      %v309 = vunpack.c.l.b16 %v221
      %v310 = vunpack.c.l.b16 %v222
      %v311 = vunpack.c.l.b16 %v223
      %v312 = vunpack.c.l.b16 %v224
      %v313 = vunpack.c.l.b16 %v225
      %v314 = vunpack.c.l.b16 %v226
      %v315 = vunpack.c.l.b16 %v227
      %v316 = vunpack.c.l.b16 %v228
      %v317 = vunpack.c.l.b16 %v229
      %v318 = vunpack.c.l.b16 %v230
      %v319 = vunpack.c.l.b16 %v231
      %v320 = vunpack.c.l.b16 %v232
      %v321 = vunpack.c.l.b16 %v233
      %v322 = vunpack.c.l.b16 %v234
      %v323 = vunpack.c.l.b16 %v235
      %v324 = vunpack.c.l.b16 %v236
      %v325 = vunpack.c.l.b16 %v237
      %v326 = vunpack.c.l.b16 %v238
      %v327 = vunpack.c.l.b16 %v239
      %v328 = vunpack.c.l.b16 %v240
      %v329 = vunpack.c.l.b16 %v241
      %v330 = vunpack.c.l.b16 %v242
      %v331 = vunpack.c.l.b16 %v243
      %v332 = vpack.c.b16 %v291, %v290
      %v333 = vpack.c.b16 %v293, %v292
      %v334 = vpack.c.b16 %v295, %v294
      %v335 = vpack.c.b16 %v297, %v296
      %v336 = vpack.c.b16 %v299, %v298
      %v337 = vpack.c.b16 %v301, %v300
      %v338 = vpack.c.b16 %v303, %v302
      %v339 = vpack.c.b16 %v305, %v304
      %v340 = vpack.c.b16 %v307, %v306
      %v341 = vpack.c.b16 %v309, %v308
      %v342 = vpack.c.b16 %v311, %v310
      %v343 = vpack.c.b16 %v313, %v312
      %v344 = vpack.c.b16 %v315, %v314
      %v345 = vpack.c.b16 %v317, %v316
      %v346 = vpack.c.b16 %v319, %v318
      %v347 = vpack.c.b16 %v321, %v320
      %v348 = vpack.c.b16 %v323, %v322
      %v349 = vpack.c.b16 %v325, %v324
      %v350 = vpack.c.b16 %v327, %v326
      %v351 = vpack.c.b16 %v329, %v328
      %v352 = vpack.c.b16 %v331, %v330
      %v357 = vunpack.c.l.b16 %v244
      %v358 = vunpack.c.l.b16 %v245
      %v359 = vunpack.c.l.b16 %v246
      %v360 = vunpack.c.l.b16 %v247
      %v361 = vpack.c.b16 %v358, %v357
      %v362 = vpack.c.b16 %v360, %v359
      %vm364 = vcmask 220160
      %v366 = vsel %vm364, %v332, 0
      %v369 = vsel %vm364, %v333, 0
      %v372 = vsel %vm364, %v334, 0
      %v375 = vsel %vm364, %v335, 0
      %v378 = vsel %vm364, %v336, 0
      %v381 = vsel %vm364, %v337, 0
      %v384 = vsel %vm364, %v338, 0
      %v387 = vsel %vm364, %v339, 0
      %v390 = vsel %vm364, %v340, 0
      %v393 = vsel %vm364, %v341, 0
      %v396 = vsel %vm364, %v342, 0
      %v399 = vsel %vm364, %v343, 0
      %v402 = vsel %vm364, %v344, 0
      %v405 = vsel %vm364, %v345, 0
      %v408 = vsel %vm364, %v346, 0
      %v411 = vsel %vm364, %v347, 0
      %v414 = vsel %vm364, %v348, 0
      %v417 = vsel %vm364, %v349, 0
      %v420 = vsel %vm364, %v350, 0
      %v423 = vsel %vm364, %v351, 0
      %v426 = vsel %vm364, %v352, 0
      %vm428 = vcmask 1044480
      %vm429 = vcmask 1045504
      %v430 = vsel %vm428, 4294967295, 65535
      %v431 = vsel %vm429, %v430, 0
      %v433 = vand.u32 %v362, %v431
      %435 = vmatprep.subr.bf16.mxu0 0
      %436 = vmatpush1.bf16.msra.mxu0 %v361
      %437 = vmatprep.subr.bf16.mxu0 0
      %438 = vmatpush1.bf16.msra.mxu0 %v433
      %439 = vmatprep.subr.bf16.mxu0 0
      %440 = vmatpush1.bf16.msra.mxu0 0
      %441 = vmatprep.subr.bf16.mxu0 0
      %442 = vmatpush1.bf16.msra.mxu0 0
      %443 = vmatprep.subr.bf16.mxu0 0
      %444 = vmatpush1.bf16.msra.mxu0 0
      %445 = vmatprep.subr.bf16.mxu0 0
      %446 = vmatpush1.bf16.msra.mxu0 0
      %447 = vmatprep.subr.bf16.mxu0 0
      %448 = vmatpush1.bf16.msra.mxu0 0
      %449 = vmatprep.subr.bf16.mxu0 0
      %450 = vmatpush1.bf16.msra.mxu0 0
      %451 = vmatprep.subr.bf16.mxu0 0
      %452 = vmatpush1.bf16.msra.mxu0 0
      %453 = vmatprep.subr.bf16.mxu0 0
      %454 = vmatpush1.bf16.msra.mxu0 0
      %455 = vmatprep.subr.bf16.mxu0 0
      %456 = vmatpush1.bf16.msra.mxu0 0
      %457 = vmatprep.subr.bf16.mxu0 0
      %458 = vmatpush1.bf16.msra.mxu0 0
      %459 = vmatprep.subr.bf16.mxu0 0
      %460 = vmatpush1.bf16.msra.mxu0 0
      %461 = vmatprep.subr.bf16.mxu0 0
      %462 = vmatpush1.bf16.msra.mxu0 0
      %463 = vmatprep.subr.bf16.mxu0 0
      %464 = vmatpush1.bf16.msra.mxu0 0
      %465 = vmatprep.subr.bf16.mxu0 0
      %466 = vmatpush1.bf16.msra.mxu0 0
      %467 = vmatprep.mubr.bf16.mxu0 0
      %468 = vmatmul.mubr.bf16.gmra.mrb[0].mxu0 %v366
      %v469 = vpop.f32.mrb[0].mxu0
      %v470 = vadd.f32 0.0, %v469
      %v471 = vpop.f32.mrb[0].mxu0
      %v472 = vpop.f32.mrb[0].mxu0
      %v473 = vadd.f32 0.0, %v472
      %v474 = vpop.f32.mrb[0].mxu0
      %475 = vmatprep.mubr.bf16.mxu0 0
      %476 = vmatmul.mubr.bf16.gmra.mrb[0].mxu0 %v369
      %v477 = vpop.f32.mrb[0].mxu0
      %v478 = vadd.f32 0.0, %v477
      %v479 = vpop.f32.mrb[0].mxu0
      %v480 = vpop.f32.mrb[0].mxu0
      %v481 = vadd.f32 0.0, %v480
      %v482 = vpop.f32.mrb[0].mxu0
      %483 = vmatprep.mubr.bf16.mxu0 0
      %484 = vmatmul.mubr.bf16.gmra.mrb[0].mxu0 %v372
      %v485 = vpop.f32.mrb[0].mxu0
      %v486 = vadd.f32 0.0, %v485
      %v487 = vpop.f32.mrb[0].mxu0
      %v488 = vpop.f32.mrb[0].mxu0
      %v489 = vadd.f32 0.0, %v488
      %v490 = vpop.f32.mrb[0].mxu0
      %491 = vmatprep.mubr.bf16.mxu0 0
      %492 = vmatmul.mubr.bf16.gmra.mrb[0].mxu0 %v375
      %v493 = vpop.f32.mrb[0].mxu0
      %v494 = vadd.f32 0.0, %v493
      %v495 = vpop.f32.mrb[0].mxu0
      %v496 = vpop.f32.mrb[0].mxu0
      %v497 = vadd.f32 0.0, %v496
      %v498 = vpop.f32.mrb[0].mxu0
      %499 = vmatprep.mubr.bf16.mxu0 0
      %500 = vmatmul.mubr.bf16.gmra.mrb[0].mxu0 %v378
      %v501 = vpop.f32.mrb[0].mxu0
      %v502 = vadd.f32 0.0, %v501
      %v503 = vpop.f32.mrb[0].mxu0
      %v504 = vpop.f32.mrb[0].mxu0
      %v505 = vadd.f32 0.0, %v504
      %v506 = vpop.f32.mrb[0].mxu0
      %507 = vmatprep.mubr.bf16.mxu0 0
      %508 = vmatmul.mubr.bf16.gmra.mrb[0].mxu0 %v381
      %v509 = vpop.f32.mrb[0].mxu0
      %v510 = vadd.f32 0.0, %v509
      %v511 = vpop.f32.mrb[0].mxu0
      %v512 = vpop.f32.mrb[0].mxu0
      %v513 = vadd.f32 0.0, %v512
      %v514 = vpop.f32.mrb[0].mxu0
      %515 = vmatprep.mubr.bf16.mxu0 0
      %516 = vmatmul.mubr.bf16.gmra.mrb[0].mxu0 %v384
      %v517 = vpop.f32.mrb[0].mxu0
      %v518 = vadd.f32 0.0, %v517
      %v519 = vpop.f32.mrb[0].mxu0
      %v520 = vpop.f32.mrb[0].mxu0
      %v521 = vadd.f32 0.0, %v520
      %v522 = vpop.f32.mrb[0].mxu0
      %523 = vmatprep.mubr.bf16.mxu0 0
      %524 = vmatmul.mubr.bf16.gmra.mrb[0].mxu0 %v387
      %v525 = vpop.f32.mrb[0].mxu0
      %v526 = vadd.f32 0.0, %v525
      %v527 = vpop.f32.mrb[0].mxu0
      %v528 = vpop.f32.mrb[0].mxu0
      %v529 = vadd.f32 0.0, %v528
      %v530 = vpop.f32.mrb[0].mxu0
      %531 = vmatprep.mubr.bf16.mxu0 0
      %532 = vmatmul.mubr.bf16.gmra.mrb[0].mxu0 %v390
      %v533 = vpop.f32.mrb[0].mxu0
      %v534 = vadd.f32 0.0, %v533
      %v535 = vpop.f32.mrb[0].mxu0
      %v536 = vpop.f32.mrb[0].mxu0
      %v537 = vadd.f32 0.0, %v536
      %v538 = vpop.f32.mrb[0].mxu0
      %539 = vmatprep.mubr.bf16.mxu0 0
      %540 = vmatmul.mubr.bf16.gmra.mrb[0].mxu0 %v393
      %v541 = vpop.f32.mrb[0].mxu0
      %v542 = vadd.f32 0.0, %v541
      %v543 = vpop.f32.mrb[0].mxu0
      %v544 = vpop.f32.mrb[0].mxu0
      %v545 = vadd.f32 0.0, %v544
      %v546 = vpop.f32.mrb[0].mxu0
      %547 = vmatprep.mubr.bf16.mxu0 0
      %548 = vmatmul.mubr.bf16.gmra.mrb[0].mxu0 %v396
      %v549 = vpop.f32.mrb[0].mxu0
      %v550 = vadd.f32 0.0, %v549
      %v551 = vpop.f32.mrb[0].mxu0
      %v552 = vpop.f32.mrb[0].mxu0
      %v553 = vadd.f32 0.0, %v552
      %v554 = vpop.f32.mrb[0].mxu0
      %555 = vmatprep.mubr.bf16.mxu0 0
      %556 = vmatmul.mubr.bf16.gmra.mrb[0].mxu0 %v399
      %v557 = vpop.f32.mrb[0].mxu0
      %v558 = vadd.f32 0.0, %v557
      %v559 = vpop.f32.mrb[0].mxu0
      %v560 = vpop.f32.mrb[0].mxu0
      %v561 = vadd.f32 0.0, %v560
      %v562 = vpop.f32.mrb[0].mxu0
      %563 = vmatprep.mubr.bf16.mxu0 0
      %564 = vmatmul.mubr.bf16.gmra.mrb[0].mxu0 %v402
      %v565 = vpop.f32.mrb[0].mxu0
      %v566 = vadd.f32 0.0, %v565
      %v567 = vpop.f32.mrb[0].mxu0
      %v568 = vpop.f32.mrb[0].mxu0
      %v569 = vadd.f32 0.0, %v568
      %v570 = vpop.f32.mrb[0].mxu0
      %571 = vmatprep.mubr.bf16.mxu0 0
      %572 = vmatmul.mubr.bf16.gmra.mrb[0].mxu0 %v405
      %v573 = vpop.f32.mrb[0].mxu0
      %v574 = vadd.f32 0.0, %v573
      %v575 = vpop.f32.mrb[0].mxu0
      %v576 = vpop.f32.mrb[0].mxu0
      %v577 = vadd.f32 0.0, %v576
      %v578 = vpop.f32.mrb[0].mxu0
      %579 = vmatprep.mubr.bf16.mxu0 0
      %580 = vmatmul.mubr.bf16.gmra.mrb[0].mxu0 %v408
      %v581 = vpop.f32.mrb[0].mxu0
      %v582 = vadd.f32 0.0, %v581
      %v583 = vpop.f32.mrb[0].mxu0
      %v584 = vpop.f32.mrb[0].mxu0
      %v585 = vadd.f32 0.0, %v584
      %v586 = vpop.f32.mrb[0].mxu0
      %587 = vmatprep.mubr.bf16.mxu0 0
      %588 = vmatmul.mubr.bf16.gmra.mrb[0].mxu0 %v411
      %v589 = vpop.f32.mrb[0].mxu0
      %v590 = vadd.f32 0.0, %v589
      %v591 = vpop.f32.mrb[0].mxu0
      %v592 = vpop.f32.mrb[0].mxu0
      %v593 = vadd.f32 0.0, %v592
      %v594 = vpop.f32.mrb[0].mxu0
      %595 = vmatprep.mubr.bf16.mxu0 0
      %596 = vmatmul.mubr.bf16.gmra.mrb[0].mxu0 %v414
      %v597 = vpop.f32.mrb[0].mxu0
      %v598 = vadd.f32 0.0, %v597
      %v599 = vpop.f32.mrb[0].mxu0
      %v600 = vpop.f32.mrb[0].mxu0
      %v601 = vadd.f32 0.0, %v600
      %v602 = vpop.f32.mrb[0].mxu0
      %603 = vmatprep.mubr.bf16.mxu0 0
      %604 = vmatmul.mubr.bf16.gmra.mrb[0].mxu0 %v417
      %v605 = vpop.f32.mrb[0].mxu0
      %v606 = vadd.f32 0.0, %v605
      %v607 = vpop.f32.mrb[0].mxu0
      %v608 = vpop.f32.mrb[0].mxu0
      %v609 = vadd.f32 0.0, %v608
      %v610 = vpop.f32.mrb[0].mxu0
      %611 = vmatprep.mubr.bf16.mxu0 0
      %612 = vmatmul.mubr.bf16.gmra.mrb[0].mxu0 %v420
      %v613 = vpop.f32.mrb[0].mxu0
      %v614 = vadd.f32 0.0, %v613
      %v615 = vpop.f32.mrb[0].mxu0
      %v616 = vpop.f32.mrb[0].mxu0
      %v617 = vadd.f32 0.0, %v616
      %v618 = vpop.f32.mrb[0].mxu0
      %619 = vmatprep.mubr.bf16.mxu0 0
      %620 = vmatmul.mubr.bf16.gmra.mrb[0].mxu0 %v423
      %v621 = vpop.f32.mrb[0].mxu0
      %v622 = vadd.f32 0.0, %v621
      %v623 = vpop.f32.mrb[0].mxu0
      %v624 = vpop.f32.mrb[0].mxu0
      %v625 = vadd.f32 0.0, %v624
      %v626 = vpop.f32.mrb[0].mxu0
      %627 = vmatprep.mubr.bf16.mxu0 0
      %628 = vmatmul.mubr.bf16.gmra.mrb[0].mxu0 %v426
      %v629 = vpop.f32.mrb[0].mxu0
      %v630 = vadd.f32 0.0, %v629
      %v631 = vpop.f32.mrb[0].mxu0
      %v632 = vpop.f32.mrb[0].mxu0
      %v633 = vadd.f32 0.0, %v632
      %v634 = vpop.f32.mrb[0].mxu0
      %635 = vdwg.mxu0
      %v636 = vld [vmem:[%s2] sm:$0x1]
      %v638 = vlaneseq
      %v639 = vshrl.u32 %v638, 7
      %v640 = vsub.s32 0, %v639
      %v641 = vrot.slane %v636, %v640
      %v643 = vmul.f32 %v470, %v641
      %v644 = vmul.f32 %v473, %v641
      %v645 = vmul.f32 %v478, %v641
      %v646 = vmul.f32 %v481, %v641
      %v647 = vmul.f32 %v486, %v641
      %v648 = vmul.f32 %v489, %v641
      %v649 = vmul.f32 %v494, %v641
      %v650 = vmul.f32 %v497, %v641
      %v651 = vmul.f32 %v502, %v641
      %v652 = vmul.f32 %v505, %v641
      %v653 = vmul.f32 %v510, %v641
      %v654 = vmul.f32 %v513, %v641
      %v655 = vmul.f32 %v518, %v641
      %v656 = vmul.f32 %v521, %v641
      %v657 = vmul.f32 %v526, %v641
      %v658 = vmul.f32 %v529, %v641
      %v659 = vmul.f32 %v534, %v641
      %v660 = vmul.f32 %v537, %v641
      %v661 = vmul.f32 %v542, %v641
      %v662 = vmul.f32 %v545, %v641
      %v663 = vmul.f32 %v550, %v641
      %v664 = vmul.f32 %v553, %v641
      %v665 = vmul.f32 %v558, %v641
      %v666 = vmul.f32 %v561, %v641
      %v667 = vmul.f32 %v566, %v641
      %v668 = vmul.f32 %v569, %v641
      %v669 = vmul.f32 %v574, %v641
      %v670 = vmul.f32 %v577, %v641
      %v671 = vmul.f32 %v582, %v641
      %v672 = vmul.f32 %v585, %v641
      %v673 = vmul.f32 %v590, %v641
      %v674 = vmul.f32 %v593, %v641
      %v675 = vmul.f32 %v598, %v641
      %v676 = vmul.f32 %v601, %v641
      %v677 = vmul.f32 %v606, %v641
      %v678 = vmul.f32 %v609, %v641
      %v679 = vmul.f32 %v614, %v641
      %v680 = vmul.f32 %v617, %v641
      %v681 = vmul.f32 %v622, %v641
      %v682 = vmul.f32 %v625, %v641
      %v683 = vmul.f32 %v630, %v641
      %v684 = vmul.f32 %v633, %v641
      %v685 = vld [vmem:[%s3] sm:$0x1]
      %v687 = vlaneseq
      %v688 = vshrl.u32 %v687, 7
      %v689 = vsub.s32 0, %v688
      %v690 = vrot.slane %v685, %v689
      %v692 = vadd.f32 %v643, %v690
      %v693 = vadd.f32 %v644, %v690
      %v694 = vadd.f32 %v645, %v690
      %v695 = vadd.f32 %v646, %v690
      %v696 = vadd.f32 %v647, %v690
      %v697 = vadd.f32 %v648, %v690
      %v698 = vadd.f32 %v649, %v690
      %v699 = vadd.f32 %v650, %v690
      %v700 = vadd.f32 %v651, %v690
      %v701 = vadd.f32 %v652, %v690
      %v702 = vadd.f32 %v653, %v690
      %v703 = vadd.f32 %v654, %v690
      %v704 = vadd.f32 %v655, %v690
      %v705 = vadd.f32 %v656, %v690
      %v706 = vadd.f32 %v657, %v690
      %v707 = vadd.f32 %v658, %v690
      %v708 = vadd.f32 %v659, %v690
      %v709 = vadd.f32 %v660, %v690
      %v710 = vadd.f32 %v661, %v690
      %v711 = vadd.f32 %v662, %v690
      %v712 = vadd.f32 %v663, %v690
      %v713 = vadd.f32 %v664, %v690
      %v714 = vadd.f32 %v665, %v690
      %v715 = vadd.f32 %v666, %v690
      %v716 = vadd.f32 %v667, %v690
      %v717 = vadd.f32 %v668, %v690
      %v718 = vadd.f32 %v669, %v690
      %v719 = vadd.f32 %v670, %v690
      %v720 = vadd.f32 %v671, %v690
      %v721 = vadd.f32 %v672, %v690
      %v722 = vadd.f32 %v673, %v690
      %v723 = vadd.f32 %v674, %v690
      %v724 = vadd.f32 %v675, %v690
      %v725 = vadd.f32 %v676, %v690
      %v726 = vadd.f32 %v677, %v690
      %v727 = vadd.f32 %v678, %v690
      %v728 = vadd.f32 %v679, %v690
      %v729 = vadd.f32 %v680, %v690
      %v730 = vadd.f32 %v681, %v690
      %v731 = vadd.f32 %v682, %v690
      %v732 = vadd.f32 %v683, %v690
      %v733 = vadd.f32 %v684, %v690
      %v734 = vmax.f32 %v692, 0.0
      %v735 = vmax.f32 %v693, 0.0
      %v736 = vmax.f32 %v694, 0.0
      %v737 = vmax.f32 %v695, 0.0
      %v738 = vmax.f32 %v696, 0.0
      %v739 = vmax.f32 %v697, 0.0
      %v740 = vmax.f32 %v698, 0.0
      %v741 = vmax.f32 %v699, 0.0
      %v742 = vmax.f32 %v700, 0.0
      %v743 = vmax.f32 %v701, 0.0
      %v744 = vmax.f32 %v702, 0.0
      %v745 = vmax.f32 %v703, 0.0
      %v746 = vmax.f32 %v704, 0.0
      %v747 = vmax.f32 %v705, 0.0
      %v748 = vmax.f32 %v706, 0.0
      %v749 = vmax.f32 %v707, 0.0
      %v750 = vmax.f32 %v708, 0.0
      %v751 = vmax.f32 %v709, 0.0
      %v752 = vmax.f32 %v710, 0.0
      %v753 = vmax.f32 %v711, 0.0
      %v754 = vmax.f32 %v712, 0.0
      %v755 = vmax.f32 %v713, 0.0
      %v756 = vmax.f32 %v714, 0.0
      %v757 = vmax.f32 %v715, 0.0
      %v758 = vmax.f32 %v716, 0.0
      %v759 = vmax.f32 %v717, 0.0
      %v760 = vmax.f32 %v718, 0.0
      %v761 = vmax.f32 %v719, 0.0
      %v762 = vmax.f32 %v720, 0.0
      %v763 = vmax.f32 %v721, 0.0
      %v764 = vmax.f32 %v722, 0.0
      %v765 = vmax.f32 %v723, 0.0
      %v766 = vmax.f32 %v724, 0.0
      %v767 = vmax.f32 %v725, 0.0
      %v768 = vmax.f32 %v726, 0.0
      %v769 = vmax.f32 %v727, 0.0
      %v770 = vmax.f32 %v728, 0.0
      %v771 = vmax.f32 %v729, 0.0
      %v772 = vmax.f32 %v730, 0.0
      %v773 = vmax.f32 %v731, 0.0
      %v774 = vmax.f32 %v732, 0.0
      %v775 = vmax.f32 %v733, 0.0
      %776 = vst [vmem:[%s199] sm:$0xff] %v734
      %777 = vst [vmem:[%s199 + $0x8] sm:$0xff] %v735
      %778 = vst [vmem:[%s199 + $0x10] sm:$0xff] %v736
      %779 = vst [vmem:[%s199 + $0x18] sm:$0xff] %v737
      %780 = vst [vmem:[%s199 + $0x20] sm:$0xff] %v738
      %781 = vst [vmem:[%s199 + $0x28] sm:$0xff] %v739
      %782 = vst [vmem:[%s199 + $0x30] sm:$0xff] %v740
      %783 = vst [vmem:[%s199 + $0x38] sm:$0xff] %v741
      %784 = vst [vmem:[%s199 + $0x40] sm:$0xff] %v742
      %785 = vst [vmem:[%s199 + $0x48] sm:$0xff] %v743
      %786 = vst [vmem:[%s199 + $0x50] sm:$0xff] %v744
      %787 = vst [vmem:[%s199 + $0x58] sm:$0xff] %v745
      %788 = vst [vmem:[%s199 + $0x60] sm:$0xff] %v746
      %789 = vst [vmem:[%s199 + $0x68] sm:$0xff] %v747
      %790 = vst [vmem:[%s199 + $0x70] sm:$0xff] %v748
      %791 = vst [vmem:[%s199 + $0x78] sm:$0xff] %v749
      %792 = vst [vmem:[%s199 + $0x80] sm:$0xff] %v750
      %793 = vst [vmem:[%s199 + $0x88] sm:$0xff] %v751
      %794 = vst [vmem:[%s199 + $0x90] sm:$0xff] %v752
      %795 = vst [vmem:[%s199 + $0x98] sm:$0xff] %v753
      %796 = vst [vmem:[%s199 + $0xa0] sm:$0xff] %v754
      %797 = vst [vmem:[%s199 + $0xa8] sm:$0xff] %v755
      %798 = vst [vmem:[%s199 + $0xb0] sm:$0xff] %v756
      %799 = vst [vmem:[%s199 + $0xb8] sm:$0xff] %v757
      %800 = vst [vmem:[%s199 + $0xc0] sm:$0xff] %v758
      %801 = vst [vmem:[%s199 + $0xc8] sm:$0xff] %v759
      %802 = vst [vmem:[%s199 + $0xd0] sm:$0xff] %v760
      %803 = vst [vmem:[%s199 + $0xd8] sm:$0xff] %v761
      %804 = vst [vmem:[%s199 + $0xe0] sm:$0xff] %v762
      %805 = vst [vmem:[%s199 + $0xe8] sm:$0xff] %v763
      %806 = vst [vmem:[%s199 + $0xf0] sm:$0xff] %v764
      %807 = vst [vmem:[%s199 + $0xf8] sm:$0xff] %v765
      %808 = vst [vmem:[%s199 + $0x100] sm:$0xff] %v766
      %809 = vst [vmem:[%s199 + $0x108] sm:$0xff] %v767
      %810 = vst [vmem:[%s199 + $0x110] sm:$0xff] %v768
      %811 = vst [vmem:[%s199 + $0x118] sm:$0xff] %v769
      %812 = vst [vmem:[%s199 + $0x120] sm:$0xff] %v770
      %813 = vst [vmem:[%s199 + $0x128] sm:$0xff] %v771
      %814 = vst [vmem:[%s199 + $0x130] sm:$0xff] %v772
      %815 = vst [vmem:[%s199 + $0x138] sm:$0xff] %v773
      %816 = vst [vmem:[%s199 + $0x140] sm:$0xff] %v774
      %817 = vst [vmem:[%s199 + $0x148] sm:$0xff] %v775
      %s818 = smul.u32 42, %s15
      %p819 = scmp.lt.s32.totalorder %s818, 83
      %s820 = scalar_select %p819, %s818, 83
      %s821 = smul.addr %s820, 8
      %s822 = scalar_lea.vmem %s4, %s821
      // Predicated region
      $region37: #{forward.12} parent=35 // pred_check
        %p823 = pneg %p122
      $region38: #{forward.12} parent=35 // pred_check_branch
        %825 = sbr.rel (%p823) target = $region40
      $region39: #{forward.12} parent=35 // pred_region
        %s826 = smul.u32 42, %s15
      $region40: #{forward.12} parent=35 // pred_fallthru
        _
    $region36: #{forward.12} parent=5 // pred_fallthru
      _
    %p827 = scmp.le.s32.totalorder 2, %s10
    // Predicated region
    $region41: #{forward.12} parent=5 // pred_check
      %p828 = pneg %p827
    $region42: #{forward.12} parent=5 // pred_check_branch
      %830 = sbr.rel (%p828) target = $region44
    $region43: #{forward.12} parent=5 // pred_region
      %s831 = ssub.s32 %s10, 2
      // Predicated region
      $region45: #{forward.12} parent=43 // pred_check
        %p832 = pneg %p128
      $region46: #{forward.12} parent=43 // pred_check_branch
        %834 = sbr.rel (%p832) target = $region48
      $region47: #{forward.12} parent=43 // pred_region
        %s835 = smul.u32 42, %s16
        %p836 = scmp.lt.s32.totalorder %s835, 83
        %s837 = scalar_select %p836, %s835, 83
        %s838 = smul.addr %s837, 8
        %s839 = scalar_lea.vmem %s4, %s838
      $region48: #{forward.12} parent=43 // pred_fallthru
        _
    $region44: #{forward.12} parent=5 // pred_fallthru
      _
  $region6: #{forward.12} parent=0 // loop_footer
    %s14 = sadd.s32 1, %s10
  $region7: #{forward.12} parent=0 // loop_footer_branch
    %9 = sbr.rel target = $region3
  $region8: #{forward.12} parent=0 // loop_exit
    _

// kernel: forward.13
$region0: #{forward.13}
  #allocation0 [shape = 'u32[]', space=smem, size = 0x4, offset = 0x4, fixed_abs, tag = 'smem constant byte address 0x4 - core index']
  #allocation1 [shape = 'u32[144,128]{1,0:T(1,128)}', space=vmem, size = 0x12000, scoped, tag = 'internal scratch']
  %s0 = inlined_call_operand.vmem [shape: f32[200,128], index: 0, kind: input, shape index: {}]
  %s1 = inlined_call_operand.vmem [shape: f32[200,128], index: 1, kind: input, shape index: {}]
  %s2 = inlined_call_operand.vmem [shape: f32[200,128], index: 2, kind: input, shape index: {}]
  %s3 = inlined_call_operand.vmem [shape: f32[200,128], index: 3, kind: input, shape index: {}]
  %s4 = inlined_call_operand.vmem [shape: f32[200,128], index: 4, kind: output, shape index: {}]
  %s5 = sld [smem:[#allocation0]]
  $region26: #{forward.13} parent=0
    _
  %s7 = ssub.s32 1, %s5
  %s8 = scalar_select 0, %s7, %s5
  // Predicated region
  $region2: #{forward.13} parent=0 // pred_check
    _
  $region3: #{forward.13} parent=0 // pred_check_branch
    %10 = sbr.rel (0) target = $region5
  $region4: #{forward.13} parent=0 // pred_region
    _
  $region5: #{forward.13} parent=0 // pred_fallthru
    _
  // Predicated region
  $region6: #{forward.13} parent=0 // pred_check
    _
  $region7: #{forward.13} parent=0 // pred_check_branch
    %12 = sbr.rel (0) target = $region9
  $region8: #{forward.13} parent=0 // pred_region
    _
  $region9: #{forward.13} parent=0 // pred_fallthru
    _
  // Predicated region
  $region10: #{forward.13} parent=0 // pred_check
    _
  $region11: #{forward.13} parent=0 // pred_check_branch
    %14 = sbr.rel (0) target = $region13
  $region12: #{forward.13} parent=0 // pred_region
    _
  $region13: #{forward.13} parent=0 // pred_fallthru
    _
  // Predicated region
  $region14: #{forward.13} parent=0 // pred_check
    _
  $region15: #{forward.13} parent=0 // pred_check_branch
    %16 = sbr.rel (0) target = $region17
  $region16: #{forward.13} parent=0 // pred_region
    _
  $region17: #{forward.13} parent=0 // pred_fallthru
    _
  %v17 = vld [vmem:[%s0] sm:$0xff]
  %v18 = vld [vmem:[%s0 + $0x8] sm:$0xff]
  %v19 = vld [vmem:[%s0 + $0x10] sm:$0xff]
  %v20 = vld [vmem:[%s0 + $0x18] sm:$0xff]
  %v21 = vld [vmem:[%s0 + $0x20] sm:$0xff]
  %v22 = vld [vmem:[%s0 + $0x28] sm:$0xff]
  %v23 = vld [vmem:[%s0 + $0x30] sm:$0xff]
  %v24 = vld [vmem:[%s0 + $0x38] sm:$0xff]
  %v25 = vld [vmem:[%s0 + $0x40] sm:$0xff]
  %v26 = vld [vmem:[%s0 + $0x48] sm:$0xff]
  %v27 = vld [vmem:[%s0 + $0x50] sm:$0xff]
  %v28 = vld [vmem:[%s0 + $0x58] sm:$0xff]
  %v29 = vld [vmem:[%s0 + $0x60] sm:$0xff]
  %v30 = vld [vmem:[%s0 + $0x68] sm:$0xff]
  %v31 = vld [vmem:[%s0 + $0x70] sm:$0xff]
  %v32 = vld [vmem:[%s0 + $0x78] sm:$0xff]
  %v33 = vld [vmem:[%s0 + $0x80] sm:$0xff]
  %v34 = vld [vmem:[%s0 + $0x88] sm:$0xff]
  %v35 = vld [vmem:[%s0 + $0x90] sm:$0xff]
  %v36 = vld [vmem:[%s0 + $0x98] sm:$0xff]
  %v37 = vld [vmem:[%s0 + $0xa0] sm:$0xff]
  %v38 = vld [vmem:[%s0 + $0xa8] sm:$0xff]
  %v39 = vld [vmem:[%s0 + $0xb0] sm:$0xff]
  %v40 = vld [vmem:[%s0 + $0xb8] sm:$0xff]
  %v41 = vld [vmem:[%s0 + $0xc0] sm:$0xff]
  %v42 = vld [vmem:[%s1] sm:$0xff]
  %v43 = vld [vmem:[%s1 + $0x8] sm:$0xff]
  %v44 = vld [vmem:[%s1 + $0x10] sm:$0xff]
  %v45 = vld [vmem:[%s1 + $0x18] sm:$0xff]
  %v46 = vld [vmem:[%s1 + $0x20] sm:$0xff]
  %v47 = vld [vmem:[%s1 + $0x28] sm:$0xff]
  %v48 = vld [vmem:[%s1 + $0x30] sm:$0xff]
  %v49 = vld [vmem:[%s1 + $0x38] sm:$0xff]
  %v50 = vld [vmem:[%s1 + $0x40] sm:$0xff]
  %v51 = vld [vmem:[%s1 + $0x48] sm:$0xff]
  %v52 = vld [vmem:[%s1 + $0x50] sm:$0xff]
  %v53 = vld [vmem:[%s1 + $0x58] sm:$0xff]
  %v54 = vld [vmem:[%s1 + $0x60] sm:$0xff]
  %v55 = vld [vmem:[%s1 + $0x68] sm:$0xff]
  %v56 = vld [vmem:[%s1 + $0x70] sm:$0xff]
  %v57 = vld [vmem:[%s1 + $0x78] sm:$0xff]
  %v58 = vld [vmem:[%s1 + $0x80] sm:$0xff]
  %v59 = vld [vmem:[%s1 + $0x88] sm:$0xff]
  %v60 = vld [vmem:[%s1 + $0x90] sm:$0xff]
  %v61 = vld [vmem:[%s1 + $0x98] sm:$0xff]
  %v62 = vld [vmem:[%s1 + $0xa0] sm:$0xff]
  %v63 = vld [vmem:[%s1 + $0xa8] sm:$0xff]
  %v64 = vld [vmem:[%s1 + $0xb0] sm:$0xff]
  %v65 = vld [vmem:[%s1 + $0xb8] sm:$0xff]
  %v66 = vld [vmem:[%s1 + $0xc0] sm:$0xff]
  %v67 = vmax.f32 %v17, %v42
  %v68 = vmax.f32 %v18, %v43
  %v69 = vmax.f32 %v19, %v44
  %v70 = vmax.f32 %v20, %v45
  %v71 = vmax.f32 %v21, %v46
  %v72 = vmax.f32 %v22, %v47
  %v73 = vmax.f32 %v23, %v48
  %v74 = vmax.f32 %v24, %v49
  %v75 = vmax.f32 %v25, %v50
  %v76 = vmax.f32 %v26, %v51
  %v77 = vmax.f32 %v27, %v52
  %v78 = vmax.f32 %v28, %v53
  %v79 = vmax.f32 %v29, %v54
  %v80 = vmax.f32 %v30, %v55
  %v81 = vmax.f32 %v31, %v56
  %v82 = vmax.f32 %v32, %v57
  %v83 = vmax.f32 %v33, %v58
  %v84 = vmax.f32 %v34, %v59
  %v85 = vmax.f32 %v35, %v60
  %v86 = vmax.f32 %v36, %v61
  %v87 = vmax.f32 %v37, %v62
  %v88 = vmax.f32 %v38, %v63
  %v89 = vmax.f32 %v39, %v64
  %v90 = vmax.f32 %v40, %v65
  %v91 = vmax.f32 %v41, %v66
  %v92 = vld [vmem:[%s2] sm:$0xff]
  %v93 = vld [vmem:[%s2 + $0x8] sm:$0xff]
  %v94 = vld [vmem:[%s2 + $0x10] sm:$0xff]
  %v95 = vld [vmem:[%s2 + $0x18] sm:$0xff]
  %v96 = vld [vmem:[%s2 + $0x20] sm:$0xff]
  %v97 = vld [vmem:[%s2 + $0x28] sm:$0xff]
  %v98 = vld [vmem:[%s2 + $0x30] sm:$0xff]
  %v99 = vld [vmem:[%s2 + $0x38] sm:$0xff]
  %v100 = vld [vmem:[%s2 + $0x40] sm:$0xff]
  %v101 = vld [vmem:[%s2 + $0x48] sm:$0xff]
  %v102 = vld [vmem:[%s2 + $0x50] sm:$0xff]
  %v103 = vld [vmem:[%s2 + $0x58] sm:$0xff]
  %v104 = vld [vmem:[%s2 + $0x60] sm:$0xff]
  %v105 = vld [vmem:[%s2 + $0x68] sm:$0xff]
  %v106 = vld [vmem:[%s2 + $0x70] sm:$0xff]
  %v107 = vld [vmem:[%s2 + $0x78] sm:$0xff]
  %v108 = vld [vmem:[%s2 + $0x80] sm:$0xff]
  %v109 = vld [vmem:[%s2 + $0x88] sm:$0xff]
  %v110 = vld [vmem:[%s2 + $0x90] sm:$0xff]
  %v111 = vld [vmem:[%s2 + $0x98] sm:$0xff]
  %v112 = vld [vmem:[%s2 + $0xa0] sm:$0xff]
  %v113 = vld [vmem:[%s2 + $0xa8] sm:$0xff]
  %v114 = vld [vmem:[%s2 + $0xb0] sm:$0xff]
  %v115 = vld [vmem:[%s2 + $0xb8] sm:$0xff]
  %v116 = vld [vmem:[%s2 + $0xc0] sm:$0xff]
  %v117 = vld [vmem:[%s3] sm:$0xff]
  %v118 = vld [vmem:[%s3 + $0x8] sm:$0xff]
  %v119 = vld [vmem:[%s3 + $0x10] sm:$0xff]
  %v120 = vld [vmem:[%s3 + $0x18] sm:$0xff]
  %v121 = vld [vmem:[%s3 + $0x20] sm:$0xff]
  %v122 = vld [vmem:[%s3 + $0x28] sm:$0xff]
  %v123 = vld [vmem:[%s3 + $0x30] sm:$0xff]
  %v124 = vld [vmem:[%s3 + $0x38] sm:$0xff]
  %v125 = vld [vmem:[%s3 + $0x40] sm:$0xff]
  %v126 = vld [vmem:[%s3 + $0x48] sm:$0xff]
  %v127 = vld [vmem:[%s3 + $0x50] sm:$0xff]
  %v128 = vld [vmem:[%s3 + $0x58] sm:$0xff]
  %v129 = vld [vmem:[%s3 + $0x60] sm:$0xff]
  %v130 = vld [vmem:[%s3 + $0x68] sm:$0xff]
  %v131 = vld [vmem:[%s3 + $0x70] sm:$0xff]
  %v132 = vld [vmem:[%s3 + $0x78] sm:$0xff]
  %v133 = vld [vmem:[%s3 + $0x80] sm:$0xff]
  %v134 = vld [vmem:[%s3 + $0x88] sm:$0xff]
  %v135 = vld [vmem:[%s3 + $0x90] sm:$0xff]
  %v136 = vld [vmem:[%s3 + $0x98] sm:$0xff]
  %v137 = vld [vmem:[%s3 + $0xa0] sm:$0xff]
  %v138 = vld [vmem:[%s3 + $0xa8] sm:$0xff]
  %v139 = vld [vmem:[%s3 + $0xb0] sm:$0xff]
  %v140 = vld [vmem:[%s3 + $0xb8] sm:$0xff]
  %v141 = vld [vmem:[%s3 + $0xc0] sm:$0xff]
  %v142 = vmax.f32 %v92, %v117
  %v143 = vmax.f32 %v93, %v118
  %v144 = vmax.f32 %v94, %v119
  %v145 = vmax.f32 %v95, %v120
  %v146 = vmax.f32 %v96, %v121
  %v147 = vmax.f32 %v97, %v122
  %v148 = vmax.f32 %v98, %v123
  %v149 = vmax.f32 %v99, %v124
  %v150 = vmax.f32 %v100, %v125
  %v151 = vmax.f32 %v101, %v126
  %v152 = vmax.f32 %v102, %v127
  %v153 = vmax.f32 %v103, %v128
  %v154 = vmax.f32 %v104, %v129
  %v155 = vmax.f32 %v105, %v130
  %v156 = vmax.f32 %v106, %v131
  %v157 = vmax.f32 %v107, %v132
  %v158 = vmax.f32 %v108, %v133
  %v159 = vmax.f32 %v109, %v134
  %v160 = vmax.f32 %v110, %v135
  %v161 = vmax.f32 %v111, %v136
  %v162 = vmax.f32 %v112, %v137
  %v163 = vmax.f32 %v113, %v138
  %v164 = vmax.f32 %v114, %v139
  %v165 = vmax.f32 %v115, %v140
  %v166 = vmax.f32 %v116, %v141
  %v167 = vmax.f32 %v67, %v142
  %v168 = vmax.f32 %v68, %v143
  %v169 = vmax.f32 %v69, %v144
  %v170 = vmax.f32 %v70, %v145
  %v171 = vmax.f32 %v71, %v146
  %v172 = vmax.f32 %v72, %v147
  %v173 = vmax.f32 %v73, %v148
  %v174 = vmax.f32 %v74, %v149
  %v175 = vmax.f32 %v75, %v150
  %v176 = vmax.f32 %v76, %v151
  %v177 = vmax.f32 %v77, %v152
  %v178 = vmax.f32 %v78, %v153
  %v179 = vmax.f32 %v79, %v154
  %v180 = vmax.f32 %v80, %v155
  %v181 = vmax.f32 %v81, %v156
  %v182 = vmax.f32 %v82, %v157
  %v183 = vmax.f32 %v83, %v158
  %v184 = vmax.f32 %v84, %v159
  %v185 = vmax.f32 %v85, %v160
  %v186 = vmax.f32 %v86, %v161
  %v187 = vmax.f32 %v87, %v162
  %v188 = vmax.f32 %v88, %v163
  %v189 = vmax.f32 %v89, %v164
  %v190 = vmax.f32 %v90, %v165
  %v191 = vmax.f32 %v91, %v166
  %192 = vst [vmem:[%s4] sm:$0xff] %v167
  %193 = vst [vmem:[%s4 + $0x8] sm:$0xff] %v168
  %194 = vst [vmem:[%s4 + $0x10] sm:$0xff] %v169
  %195 = vst [vmem:[%s4 + $0x18] sm:$0xff] %v170
  %196 = vst [vmem:[%s4 + $0x20] sm:$0xff] %v171
  %197 = vst [vmem:[%s4 + $0x28] sm:$0xff] %v172
  %198 = vst [vmem:[%s4 + $0x30] sm:$0xff] %v173
  %199 = vst [vmem:[%s4 + $0x38] sm:$0xff] %v174
  %200 = vst [vmem:[%s4 + $0x40] sm:$0xff] %v175
  %201 = vst [vmem:[%s4 + $0x48] sm:$0xff] %v176
  %202 = vst [vmem:[%s4 + $0x50] sm:$0xff] %v177
  %203 = vst [vmem:[%s4 + $0x58] sm:$0xff] %v178
  %204 = vst [vmem:[%s4 + $0x60] sm:$0xff] %v179
  %205 = vst [vmem:[%s4 + $0x68] sm:$0xff] %v180
  %206 = vst [vmem:[%s4 + $0x70] sm:$0xff] %v181
  %207 = vst [vmem:[%s4 + $0x78] sm:$0xff] %v182
  %208 = vst [vmem:[%s4 + $0x80] sm:$0xff] %v183
  %209 = vst [vmem:[%s4 + $0x88] sm:$0xff] %v184
  %210 = vst [vmem:[%s4 + $0x90] sm:$0xff] %v185
  %211 = vst [vmem:[%s4 + $0x98] sm:$0xff] %v186
  %212 = vst [vmem:[%s4 + $0xa0] sm:$0xff] %v187
  %213 = vst [vmem:[%s4 + $0xa8] sm:$0xff] %v188
  %214 = vst [vmem:[%s4 + $0xb0] sm:$0xff] %v189
  %215 = vst [vmem:[%s4 + $0xb8] sm:$0xff] %v190
  %216 = vst [vmem:[%s4 + $0xc0] sm:$0xff] %v191
  // Predicated region
  $region18: #{forward.13} parent=0 // pred_check
    _
  $region19: #{forward.13} parent=0 // pred_check_branch
    %218 = sbr.rel (0) target = $region21
  $region20: #{forward.13} parent=0 // pred_region
    _
  $region21: #{forward.13} parent=0 // pred_fallthru
    _
  // Predicated region
  $region22: #{forward.13} parent=0 // pred_check
    _
  $region23: #{forward.13} parent=0 // pred_check_branch
    %220 = sbr.rel (0) target = $region25
  $region24: #{forward.13} parent=0 // pred_region
    _
  $region25: #{forward.13} parent=0 // pred_fallthru
    _

// kernel: forward.19
$region0: #{forward.19}
  #allocation0 [shape = 'u32[]', space=smem, size = 0x4, offset = 0x4, fixed_abs, tag = 'smem constant byte address 0x4 - core index']
  #allocation1 [shape = 'u32[144,128]{1,0:T(1,128)}', space=vmem, size = 0x12000, scoped, tag = 'internal scratch']
  %s0 = inlined_call_operand.vmem [shape: bf16[50,128], index: 0, kind: input, shape index: {}]
  %s1 = inlined_call_operand.vmem [shape: bf16[128,128], index: 1, kind: input, shape index: {}]
  %s2 = inlined_call_operand.vmem [shape: f32[1,128], index: 2, kind: input, shape index: {}]
  %s3 = inlined_call_operand.vmem [shape: f32[1,128], index: 3, kind: input, shape index: {}]
  %s4 = inlined_call_operand.vmem [shape: f32[50,128], index: 4, kind: output, shape index: {}]
  %s5 = sld [smem:[#allocation0]]
  $region26: #{forward.19} parent=0
    _
  %s7 = ssub.s32 1, %s5
  %s8 = scalar_select 0, %s7, %s5
  // Predicated region
  $region2: #{forward.19} parent=0 // pred_check
    _
  $region3: #{forward.19} parent=0 // pred_check_branch
    %10 = sbr.rel (0) target = $region5
  $region4: #{forward.19} parent=0 // pred_region
    _
  $region5: #{forward.19} parent=0 // pred_fallthru
    _
  // Predicated region
  $region6: #{forward.19} parent=0 // pred_check
    _
  $region7: #{forward.19} parent=0 // pred_check_branch
    %12 = sbr.rel (0) target = $region9
  $region8: #{forward.19} parent=0 // pred_region
    _
  $region9: #{forward.19} parent=0 // pred_fallthru
    _
  // Predicated region
  $region10: #{forward.19} parent=0 // pred_check
    _
  $region11: #{forward.19} parent=0 // pred_check_branch
    %14 = sbr.rel (0) target = $region13
  $region12: #{forward.19} parent=0 // pred_region
    _
  $region13: #{forward.19} parent=0 // pred_fallthru
    _
  // Predicated region
  $region14: #{forward.19} parent=0 // pred_check
    _
  $region15: #{forward.19} parent=0 // pred_check_branch
    %16 = sbr.rel (0) target = $region17
  $region16: #{forward.19} parent=0 // pred_region
    _
  $region17: #{forward.19} parent=0 // pred_fallthru
    _
  %v18 = vld [vmem:[%s0] sm:$0xf]
  %v19 = vld [vmem:[%s0 + $0x4] sm:$0xf]
  %v20 = vld [vmem:[%s0 + $0x8] sm:$0xf]
  %v21 = vld [vmem:[%s0 + $0xc] sm:$0xf]
  %v22 = vld [vmem:[%s0 + $0x10] sm:$0xf]
  %v23 = vld [vmem:[%s0 + $0x14] sm:$0xf]
  %v24 = vld [vmem:[%s0 + $0x18] sm:$0x1]
  %v25 = vld [vmem:[%s1] sm:$0xf]
  %v26 = vld [vmem:[%s1 + $0x4] sm:$0xf]
  %v27 = vld [vmem:[%s1 + $0x8] sm:$0xf]
  %v28 = vld [vmem:[%s1 + $0xc] sm:$0xf]
  %v29 = vld [vmem:[%s1 + $0x10] sm:$0xf]
  %v30 = vld [vmem:[%s1 + $0x14] sm:$0xf]
  %v31 = vld [vmem:[%s1 + $0x18] sm:$0xf]
  %v32 = vld [vmem:[%s1 + $0x1c] sm:$0xf]
  %v33 = vld [vmem:[%s1 + $0x20] sm:$0xf]
  %v34 = vld [vmem:[%s1 + $0x24] sm:$0xf]
  %v35 = vld [vmem:[%s1 + $0x28] sm:$0xf]
  %v36 = vld [vmem:[%s1 + $0x2c] sm:$0xf]
  %v37 = vld [vmem:[%s1 + $0x30] sm:$0xf]
  %v38 = vld [vmem:[%s1 + $0x34] sm:$0xf]
  %v39 = vld [vmem:[%s1 + $0x38] sm:$0xf]
  %v40 = vld [vmem:[%s1 + $0x3c] sm:$0xf]
  %v48 = vunpack.c.l.b16 %v18
  %v49 = vunpack.c.l.b16 %v19
  %v50 = vunpack.c.l.b16 %v20
  %v51 = vunpack.c.l.b16 %v21
  %v52 = vunpack.c.l.b16 %v22
  %v53 = vunpack.c.l.b16 %v23
  %v54 = vunpack.c.l.b16 %v24
  %v55 = vpack.c.b16 %v49, %v48
  %v56 = vpack.c.b16 %v51, %v50
  %v57 = vpack.c.b16 %v53, %v52
  %v58 = vpack.c.b16 %v54, %v54
  %v79 = vunpack.c.l.b16 %v25
  %v80 = vunpack.c.l.b16 %v26
  %v81 = vunpack.c.l.b16 %v27
  %v82 = vunpack.c.l.b16 %v28
  %v83 = vunpack.c.l.b16 %v29
  %v84 = vunpack.c.l.b16 %v30
  %v85 = vunpack.c.l.b16 %v31
  %v86 = vunpack.c.l.b16 %v32
  %v87 = vunpack.c.l.b16 %v33
  %v88 = vunpack.c.l.b16 %v34
  %v89 = vunpack.c.l.b16 %v35
  %v90 = vunpack.c.l.b16 %v36
  %v91 = vunpack.c.l.b16 %v37
  %v92 = vunpack.c.l.b16 %v38
  %v93 = vunpack.c.l.b16 %v39
  %v94 = vunpack.c.l.b16 %v40
  %v95 = vpack.c.b16 %v80, %v79
  %v96 = vpack.c.b16 %v82, %v81
  %v97 = vpack.c.b16 %v84, %v83
  %v98 = vpack.c.b16 %v86, %v85
  %v99 = vpack.c.b16 %v88, %v87
  %v100 = vpack.c.b16 %v90, %v89
  %v101 = vpack.c.b16 %v92, %v91
  %v102 = vpack.c.b16 %v94, %v93
  %111 = vmatprep.subr.bf16.mxu0 0
  %112 = vmatpush1.bf16.msra.mxu0 %v95
  %113 = vmatprep.subr.bf16.mxu0 0
  %114 = vmatpush1.bf16.msra.mxu0 %v96
  %115 = vmatprep.subr.bf16.mxu0 0
  %116 = vmatpush1.bf16.msra.mxu0 %v97
  %117 = vmatprep.subr.bf16.mxu0 0
  %118 = vmatpush1.bf16.msra.mxu0 %v98
  %119 = vmatprep.subr.bf16.mxu0 0
  %120 = vmatpush1.bf16.msra.mxu0 %v99
  %121 = vmatprep.subr.bf16.mxu0 0
  %122 = vmatpush1.bf16.msra.mxu0 %v100
  %123 = vmatprep.subr.bf16.mxu0 0
  %124 = vmatpush1.bf16.msra.mxu0 %v101
  %125 = vmatprep.subr.bf16.mxu0 0
  %126 = vmatpush1.bf16.msra.mxu0 %v102
  %127 = vmatprep.subr.bf16.mxu0 0
  %128 = vmatpush1.bf16.msra.mxu0 0
  %129 = vmatprep.subr.bf16.mxu0 0
  %130 = vmatpush1.bf16.msra.mxu0 0
  %131 = vmatprep.subr.bf16.mxu0 0
  %132 = vmatpush1.bf16.msra.mxu0 0
  %133 = vmatprep.subr.bf16.mxu0 0
  %134 = vmatpush1.bf16.msra.mxu0 0
  %135 = vmatprep.subr.bf16.mxu0 0
  %136 = vmatpush1.bf16.msra.mxu0 0
  %137 = vmatprep.subr.bf16.mxu0 0
  %138 = vmatpush1.bf16.msra.mxu0 0
  %139 = vmatprep.subr.bf16.mxu0 0
  %140 = vmatpush1.bf16.msra.mxu0 0
  %141 = vmatprep.subr.bf16.mxu0 0
  %142 = vmatpush1.bf16.msra.mxu0 0
  %143 = vmatprep.mubr.bf16.mxu0 0
  %144 = vmatmul.mubr.bf16.gmra.mrb[0].mxu0 %v55
  %v145 = vpop.f32.mrb[0].mxu0
  %v146 = vadd.f32 0.0, %v145
  %v147 = vpop.f32.mrb[0].mxu0
  %v148 = vpop.f32.mrb[0].mxu0
  %v149 = vadd.f32 0.0, %v148
  %v150 = vpop.f32.mrb[0].mxu0
  %151 = vmatprep.mubr.bf16.mxu0 0
  %152 = vmatmul.mubr.bf16.gmra.mrb[0].mxu0 %v56
  %v153 = vpop.f32.mrb[0].mxu0
  %v154 = vadd.f32 0.0, %v153
  %v155 = vpop.f32.mrb[0].mxu0
  %v156 = vpop.f32.mrb[0].mxu0
  %v157 = vadd.f32 0.0, %v156
  %v158 = vpop.f32.mrb[0].mxu0
  %159 = vmatprep.mubr.bf16.mxu0 0
  %160 = vmatmul.mubr.bf16.gmra.mrb[0].mxu0 %v57
  %v161 = vpop.f32.mrb[0].mxu0
  %v162 = vadd.f32 0.0, %v161
  %v163 = vpop.f32.mrb[0].mxu0
  %v164 = vpop.f32.mrb[0].mxu0
  %v165 = vadd.f32 0.0, %v164
  %v166 = vpop.f32.mrb[0].mxu0
  %167 = vmatprep.mubr.bf16.mxu0 0
  %168 = vmatmul.mubr.bf16.gmra.mrb[0].mxu0 %v58
  %v169 = vpop.f32.mrb[0].mxu0
  %v170 = vadd.f32 0.0, %v169
  %v171 = vpop.f32.mrb[0].mxu0
  %v172 = vpop.f32.mrb[0].mxu0
  %v173 = vpop.f32.mrb[0].mxu0
  %174 = vdwg.mxu0
  %v175 = vld [vmem:[%s2] sm:$0x1]
  %v177 = vlaneseq
  %v178 = vshrl.u32 %v177, 7
  %v179 = vsub.s32 0, %v178
  %v180 = vrot.slane %v175, %v179
  %v182 = vmul.f32 %v146, %v180
  %v183 = vmul.f32 %v149, %v180
  %v184 = vmul.f32 %v154, %v180
  %v185 = vmul.f32 %v157, %v180
  %v186 = vmul.f32 %v162, %v180
  %v187 = vmul.f32 %v165, %v180
  %v188 = vmul.f32 %v170, %v180
  %v189 = vld [vmem:[%s3] sm:$0x1]
  %v191 = vlaneseq
  %v192 = vshrl.u32 %v191, 7
  %v193 = vsub.s32 0, %v192
  %v194 = vrot.slane %v189, %v193
  %v196 = vadd.f32 %v182, %v194
  %v197 = vadd.f32 %v183, %v194
  %v198 = vadd.f32 %v184, %v194
  %v199 = vadd.f32 %v185, %v194
  %v200 = vadd.f32 %v186, %v194
  %v201 = vadd.f32 %v187, %v194
  %v202 = vadd.f32 %v188, %v194
  %203 = vst [vmem:[%s4] sm:$0xff] %v196
  %204 = vst [vmem:[%s4 + $0x8] sm:$0xff] %v197
  %205 = vst [vmem:[%s4 + $0x10] sm:$0xff] %v198
  %206 = vst [vmem:[%s4 + $0x18] sm:$0xff] %v199
  %207 = vst [vmem:[%s4 + $0x20] sm:$0xff] %v200
  %208 = vst [vmem:[%s4 + $0x28] sm:$0xff] %v201
  %209 = vst [vmem:[%s4 + $0x30] sm:$0x3] %v202
  // Predicated region
  $region18: #{forward.19} parent=0 // pred_check
    _
  $region19: #{forward.19} parent=0 // pred_check_branch
    %211 = sbr.rel (0) target = $region21
  $region20: #{forward.19} parent=0 // pred_region
    _
  $region21: #{forward.19} parent=0 // pred_fallthru
    _
  // Predicated region
  $region22: #{forward.19} parent=0 // pred_check
    _
  $region23: #{forward.19} parent=0 // pred_check_branch
    %213 = sbr.rel (0) target = $region25
  $region24: #{forward.19} parent=0 // pred_region
    _
  $region25: #{forward.19} parent=0 // pred_fallthru
    _

// kernel: forward.14
$region0: #{forward.14}
  #allocation0 [shape = 'u32[]', space=smem, size = 0x4, offset = 0x4, fixed_abs, tag = 'smem constant byte address 0x4 - core index']
  #allocation1 [shape = 'u32[144,128]{1,0:T(1,128)}', space=vmem, size = 0x12000, scoped, tag = 'internal scratch']
  %s0 = inlined_call_operand.vmem [shape: bf16[200,1152], index: 0, kind: input, shape index: {}]
  %s1 = inlined_call_operand.vmem [shape: bf16[1152,128], index: 1, kind: input, shape index: {}]
  %s2 = inlined_call_operand.vmem [shape: f32[1,128], index: 2, kind: input, shape index: {}]
  %s3 = inlined_call_operand.vmem [shape: f32[1,128], index: 3, kind: input, shape index: {}]
  %s4 = inlined_call_operand.vmem [shape: f32[200,128], index: 4, kind: output, shape index: {}]
  %s5 = sld [smem:[#allocation0]]
  $region26: #{forward.14} parent=0
    _
  %s7 = ssub.s32 1, %s5
  %s8 = scalar_select 0, %s7, %s5
  // Predicated region
  $region2: #{forward.14} parent=0 // pred_check
    _
  $region3: #{forward.14} parent=0 // pred_check_branch
    %10 = sbr.rel (0) target = $region5
  $region4: #{forward.14} parent=0 // pred_region
    _
  $region5: #{forward.14} parent=0 // pred_fallthru
    _
  // Predicated region
  $region6: #{forward.14} parent=0 // pred_check
    _
  $region7: #{forward.14} parent=0 // pred_check_branch
    %12 = sbr.rel (0) target = $region9
  $region8: #{forward.14} parent=0 // pred_region
    _
  $region9: #{forward.14} parent=0 // pred_fallthru
    _
  // Predicated region
  $region10: #{forward.14} parent=0 // pred_check
    _
  $region11: #{forward.14} parent=0 // pred_check_branch
    %14 = sbr.rel (0) target = $region13
  $region12: #{forward.14} parent=0 // pred_region
    _
  $region13: #{forward.14} parent=0 // pred_fallthru
    _
  // Predicated region
  $region14: #{forward.14} parent=0 // pred_check
    _
  $region15: #{forward.14} parent=0 // pred_check_branch
    %16 = sbr.rel (0) target = $region17
  $region16: #{forward.14} parent=0 // pred_region
    _
  $region17: #{forward.14} parent=0 // pred_fallthru
    _
  %v18 = vld [vmem:[%s0] sm:$0xff]
  %v19 = vld [vmem:[%s0 + $0x8] sm:$0xff]
  %v20 = vld [vmem:[%s0 + $0x10] sm:$0xff]
  %v21 = vld [vmem:[%s0 + $0x18] sm:$0xff]
  %v22 = vld [vmem:[%s0 + $0x20] sm:$0xf]
  %v23 = vld [vmem:[%s0 + $0x24] sm:$0xff]
  %v24 = vld [vmem:[%s0 + $0x2c] sm:$0xff]
  %v25 = vld [vmem:[%s0 + $0x34] sm:$0xff]
  %v26 = vld [vmem:[%s0 + $0x3c] sm:$0xff]
  %v27 = vld [vmem:[%s0 + $0x44] sm:$0xf]
  %v28 = vld [vmem:[%s0 + $0x48] sm:$0xff]
  %v29 = vld [vmem:[%s0 + $0x50] sm:$0xff]
  %v30 = vld [vmem:[%s0 + $0x58] sm:$0xff]
  %v31 = vld [vmem:[%s0 + $0x60] sm:$0xff]
  %v32 = vld [vmem:[%s0 + $0x68] sm:$0xf]
  %v33 = vld [vmem:[%s0 + $0x6c] sm:$0xff]
  %v34 = vld [vmem:[%s0 + $0x74] sm:$0xff]
  %v35 = vld [vmem:[%s0 + $0x7c] sm:$0xff]
  %v36 = vld [vmem:[%s0 + $0x84] sm:$0xff]
  %v37 = vld [vmem:[%s0 + $0x8c] sm:$0xf]
  %v38 = vld [vmem:[%s0 + $0x90] sm:$0xff]
  %v39 = vld [vmem:[%s0 + $0x98] sm:$0xff]
  %v40 = vld [vmem:[%s0 + $0xa0] sm:$0xff]
  %v41 = vld [vmem:[%s0 + $0xa8] sm:$0xff]
  %v42 = vld [vmem:[%s0 + $0xb0] sm:$0xf]
  %v43 = vld [vmem:[%s0 + $0xb4] sm:$0xff]
  %v44 = vld [vmem:[%s0 + $0xbc] sm:$0xff]
  %v45 = vld [vmem:[%s0 + $0xc4] sm:$0xff]
  %v46 = vld [vmem:[%s0 + $0xcc] sm:$0xff]
  %v47 = vld [vmem:[%s0 + $0xd4] sm:$0xf]
  %v48 = vld [vmem:[%s0 + $0xd8] sm:$0xff]
  %v49 = vld [vmem:[%s0 + $0xe0] sm:$0xff]
  %v50 = vld [vmem:[%s0 + $0xe8] sm:$0xff]
  %v51 = vld [vmem:[%s0 + $0xf0] sm:$0xff]
  %v52 = vld [vmem:[%s0 + $0xf8] sm:$0xf]
  %v53 = vld [vmem:[%s0 + $0xfc] sm:$0xff]
  %v54 = vld [vmem:[%s0 + $0x104] sm:$0xff]
  %v55 = vld [vmem:[%s0 + $0x10c] sm:$0xff]
  %v56 = vld [vmem:[%s0 + $0x114] sm:$0xff]
  %v57 = vld [vmem:[%s0 + $0x11c] sm:$0xf]
  %v58 = vld [vmem:[%s0 + $0x120] sm:$0xff]
  %v59 = vld [vmem:[%s0 + $0x128] sm:$0xff]
  %v60 = vld [vmem:[%s0 + $0x130] sm:$0xff]
  %v61 = vld [vmem:[%s0 + $0x138] sm:$0xff]
  %v62 = vld [vmem:[%s0 + $0x140] sm:$0xf]
  %v63 = vld [vmem:[%s0 + $0x144] sm:$0xff]
  %v64 = vld [vmem:[%s0 + $0x14c] sm:$0xff]
  %v65 = vld [vmem:[%s0 + $0x154] sm:$0xff]
  %v66 = vld [vmem:[%s0 + $0x15c] sm:$0xff]
  %v67 = vld [vmem:[%s0 + $0x164] sm:$0xf]
  %v68 = vld [vmem:[%s0 + $0x168] sm:$0xff]
  %v69 = vld [vmem:[%s0 + $0x170] sm:$0xff]
  %v70 = vld [vmem:[%s0 + $0x178] sm:$0xff]
  %v71 = vld [vmem:[%s0 + $0x180] sm:$0xff]
  %v72 = vld [vmem:[%s0 + $0x188] sm:$0xf]
  %v73 = vld [vmem:[%s0 + $0x18c] sm:$0xff]
  %v74 = vld [vmem:[%s0 + $0x194] sm:$0xff]
  %v75 = vld [vmem:[%s0 + $0x19c] sm:$0xff]
  %v76 = vld [vmem:[%s0 + $0x1a4] sm:$0xff]
  %v77 = vld [vmem:[%s0 + $0x1ac] sm:$0xf]
  %v78 = vld [vmem:[%s0 + $0x1b0] sm:$0xff]
  %v79 = vld [vmem:[%s0 + $0x1b8] sm:$0xff]
  %v80 = vld [vmem:[%s0 + $0x1c0] sm:$0xff]
  %v81 = vld [vmem:[%s0 + $0x1c8] sm:$0xff]
  %v82 = vld [vmem:[%s0 + $0x1d0] sm:$0xf]
  %v83 = vld [vmem:[%s0 + $0x1d4] sm:$0xff]
  %v84 = vld [vmem:[%s0 + $0x1dc] sm:$0xff]
  %v85 = vld [vmem:[%s0 + $0x1e4] sm:$0xff]
  %v86 = vld [vmem:[%s0 + $0x1ec] sm:$0xff]
  %v87 = vld [vmem:[%s0 + $0x1f4] sm:$0xf]
  %v88 = vld [vmem:[%s0 + $0x1f8] sm:$0xff]
  %v89 = vld [vmem:[%s0 + $0x200] sm:$0xff]
  %v90 = vld [vmem:[%s0 + $0x208] sm:$0xff]
  %v91 = vld [vmem:[%s0 + $0x210] sm:$0xff]
  %v92 = vld [vmem:[%s0 + $0x218] sm:$0xf]
  %v93 = vld [vmem:[%s0 + $0x21c] sm:$0xff]
  %v94 = vld [vmem:[%s0 + $0x224] sm:$0xff]
  %v95 = vld [vmem:[%s0 + $0x22c] sm:$0xff]
  %v96 = vld [vmem:[%s0 + $0x234] sm:$0xff]
  %v97 = vld [vmem:[%s0 + $0x23c] sm:$0xf]
  %v98 = vld [vmem:[%s0 + $0x240] sm:$0xff]
  %v99 = vld [vmem:[%s0 + $0x248] sm:$0xff]
  %v100 = vld [vmem:[%s0 + $0x250] sm:$0xff]
  %v101 = vld [vmem:[%s0 + $0x258] sm:$0xff]
  %v102 = vld [vmem:[%s0 + $0x260] sm:$0xf]
  %v103 = vld [vmem:[%s0 + $0x264] sm:$0xff]
  %v104 = vld [vmem:[%s0 + $0x26c] sm:$0xff]
  %v105 = vld [vmem:[%s0 + $0x274] sm:$0xff]
  %v106 = vld [vmem:[%s0 + $0x27c] sm:$0xff]
  %v107 = vld [vmem:[%s0 + $0x284] sm:$0xf]
  %v108 = vld [vmem:[%s0 + $0x288] sm:$0xff]
  %v109 = vld [vmem:[%s0 + $0x290] sm:$0xff]
  %v110 = vld [vmem:[%s0 + $0x298] sm:$0xff]
  %v111 = vld [vmem:[%s0 + $0x2a0] sm:$0xff]
  %v112 = vld [vmem:[%s0 + $0x2a8] sm:$0xf]
  %v113 = vld [vmem:[%s0 + $0x2ac] sm:$0xff]
  %v114 = vld [vmem:[%s0 + $0x2b4] sm:$0xff]
  %v115 = vld [vmem:[%s0 + $0x2bc] sm:$0xff]
  %v116 = vld [vmem:[%s0 + $0x2c4] sm:$0xff]
  %v117 = vld [vmem:[%s0 + $0x2cc] sm:$0xf]
  %v118 = vld [vmem:[%s0 + $0x2d0] sm:$0xff]
  %v119 = vld [vmem:[%s0 + $0x2d8] sm:$0xff]
  %v120 = vld [vmem:[%s0 + $0x2e0] sm:$0xff]
  %v121 = vld [vmem:[%s0 + $0x2e8] sm:$0xff]
  %v122 = vld [vmem:[%s0 + $0x2f0] sm:$0xf]
  %v123 = vld [vmem:[%s0 + $0x2f4] sm:$0xff]
  %v124 = vld [vmem:[%s0 + $0x2fc] sm:$0xff]
  %v125 = vld [vmem:[%s0 + $0x304] sm:$0xff]
  %v126 = vld [vmem:[%s0 + $0x30c] sm:$0xff]
  %v127 = vld [vmem:[%s0 + $0x314] sm:$0xf]
  %v128 = vld [vmem:[%s0 + $0x318] sm:$0xff]
  %v129 = vld [vmem:[%s0 + $0x320] sm:$0xff]
  %v130 = vld [vmem:[%s0 + $0x328] sm:$0xff]
  %v131 = vld [vmem:[%s0 + $0x330] sm:$0xff]
  %v132 = vld [vmem:[%s0 + $0x338] sm:$0xf]
  %v133 = vld [vmem:[%s0 + $0x33c] sm:$0xff]
  %v134 = vld [vmem:[%s0 + $0x344] sm:$0xff]
  %v135 = vld [vmem:[%s0 + $0x34c] sm:$0xff]
  %v136 = vld [vmem:[%s0 + $0x354] sm:$0xff]
  %v137 = vld [vmem:[%s0 + $0x35c] sm:$0xf]
  %v138 = vld [vmem:[%s0 + $0x360] sm:$0xff]
  %v139 = vld [vmem:[%s0 + $0x368] sm:$0xff]
  %v140 = vld [vmem:[%s0 + $0x370] sm:$0xff]
  %v141 = vld [vmem:[%s0 + $0x378] sm:$0xff]
  %v142 = vld [vmem:[%s0 + $0x380] sm:$0xf]
  %v143 = vld [vmem:[%s1] sm:$0xf]
  %v144 = vld [vmem:[%s1 + $0x4] sm:$0xf]
  %v145 = vld [vmem:[%s1 + $0x8] sm:$0xf]
  %v146 = vld [vmem:[%s1 + $0xc] sm:$0xf]
  %v147 = vld [vmem:[%s1 + $0x10] sm:$0xf]
  %v148 = vld [vmem:[%s1 + $0x14] sm:$0xf]
  %v149 = vld [vmem:[%s1 + $0x18] sm:$0xf]
  %v150 = vld [vmem:[%s1 + $0x1c] sm:$0xf]
  %v151 = vld [vmem:[%s1 + $0x20] sm:$0xf]
  %v152 = vld [vmem:[%s1 + $0x24] sm:$0xf]
  %v153 = vld [vmem:[%s1 + $0x28] sm:$0xf]
  %v154 = vld [vmem:[%s1 + $0x2c] sm:$0xf]
  %v155 = vld [vmem:[%s1 + $0x30] sm:$0xf]
  %v156 = vld [vmem:[%s1 + $0x34] sm:$0xf]
  %v157 = vld [vmem:[%s1 + $0x38] sm:$0xf]
  %v158 = vld [vmem:[%s1 + $0x3c] sm:$0xf]
  %v159 = vld [vmem:[%s1 + $0x40] sm:$0xf]
  %v160 = vld [vmem:[%s1 + $0x44] sm:$0xf]
  %v161 = vld [vmem:[%s1 + $0x48] sm:$0xf]
  %v162 = vld [vmem:[%s1 + $0x4c] sm:$0xf]
  %v163 = vld [vmem:[%s1 + $0x50] sm:$0xf]
  %v164 = vld [vmem:[%s1 + $0x54] sm:$0xf]
  %v165 = vld [vmem:[%s1 + $0x58] sm:$0xf]
  %v166 = vld [vmem:[%s1 + $0x5c] sm:$0xf]
  %v167 = vld [vmem:[%s1 + $0x60] sm:$0xf]
  %v168 = vld [vmem:[%s1 + $0x64] sm:$0xf]
  %v169 = vld [vmem:[%s1 + $0x68] sm:$0xf]
  %v170 = vld [vmem:[%s1 + $0x6c] sm:$0xf]
  %v171 = vld [vmem:[%s1 + $0x70] sm:$0xf]
  %v172 = vld [vmem:[%s1 + $0x74] sm:$0xf]
  %v173 = vld [vmem:[%s1 + $0x78] sm:$0xf]
  %v174 = vld [vmem:[%s1 + $0x7c] sm:$0xf]
  %v175 = vld [vmem:[%s1 + $0x80] sm:$0xf]
  %v176 = vld [vmem:[%s1 + $0x84] sm:$0xf]
  %v177 = vld [vmem:[%s1 + $0x88] sm:$0xf]
  %v178 = vld [vmem:[%s1 + $0x8c] sm:$0xf]
  %v179 = vld [vmem:[%s1 + $0x90] sm:$0xf]
  %v180 = vld [vmem:[%s1 + $0x94] sm:$0xf]
  %v181 = vld [vmem:[%s1 + $0x98] sm:$0xf]
  %v182 = vld [vmem:[%s1 + $0x9c] sm:$0xf]
  %v183 = vld [vmem:[%s1 + $0xa0] sm:$0xf]
  %v184 = vld [vmem:[%s1 + $0xa4] sm:$0xf]
  %v185 = vld [vmem:[%s1 + $0xa8] sm:$0xf]
  %v186 = vld [vmem:[%s1 + $0xac] sm:$0xf]
  %v187 = vld [vmem:[%s1 + $0xb0] sm:$0xf]
  %v188 = vld [vmem:[%s1 + $0xb4] sm:$0xf]
  %v189 = vld [vmem:[%s1 + $0xb8] sm:$0xf]
  %v190 = vld [vmem:[%s1 + $0xbc] sm:$0xf]
  %v191 = vld [vmem:[%s1 + $0xc0] sm:$0xf]
  %v192 = vld [vmem:[%s1 + $0xc4] sm:$0xf]
  %v193 = vld [vmem:[%s1 + $0xc8] sm:$0xf]
  %v194 = vld [vmem:[%s1 + $0xcc] sm:$0xf]
  %v195 = vld [vmem:[%s1 + $0xd0] sm:$0xf]
  %v196 = vld [vmem:[%s1 + $0xd4] sm:$0xf]
  %v197 = vld [vmem:[%s1 + $0xd8] sm:$0xf]
  %v198 = vld [vmem:[%s1 + $0xdc] sm:$0xf]
  %v199 = vld [vmem:[%s1 + $0xe0] sm:$0xf]
  %v200 = vld [vmem:[%s1 + $0xe4] sm:$0xf]
  %v201 = vld [vmem:[%s1 + $0xe8] sm:$0xf]
  %v202 = vld [vmem:[%s1 + $0xec] sm:$0xf]
  %v203 = vld [vmem:[%s1 + $0xf0] sm:$0xf]
  %v204 = vld [vmem:[%s1 + $0xf4] sm:$0xf]
  %v205 = vld [vmem:[%s1 + $0xf8] sm:$0xf]
  %v206 = vld [vmem:[%s1 + $0xfc] sm:$0xf]
  %v207 = vld [vmem:[%s1 + $0x100] sm:$0xf]
  %v208 = vld [vmem:[%s1 + $0x104] sm:$0xf]
  %v209 = vld [vmem:[%s1 + $0x108] sm:$0xf]
  %v210 = vld [vmem:[%s1 + $0x10c] sm:$0xf]
  %v211 = vld [vmem:[%s1 + $0x110] sm:$0xf]
  %v212 = vld [vmem:[%s1 + $0x114] sm:$0xf]
  %v213 = vld [vmem:[%s1 + $0x118] sm:$0xf]
  %v214 = vld [vmem:[%s1 + $0x11c] sm:$0xf]
  %v215 = vld [vmem:[%s1 + $0x120] sm:$0xf]
  %v216 = vld [vmem:[%s1 + $0x124] sm:$0xf]
  %v217 = vld [vmem:[%s1 + $0x128] sm:$0xf]
  %v218 = vld [vmem:[%s1 + $0x12c] sm:$0xf]
  %v219 = vld [vmem:[%s1 + $0x130] sm:$0xf]
  %v220 = vld [vmem:[%s1 + $0x134] sm:$0xf]
  %v221 = vld [vmem:[%s1 + $0x138] sm:$0xf]
  %v222 = vld [vmem:[%s1 + $0x13c] sm:$0xf]
  %v223 = vld [vmem:[%s1 + $0x140] sm:$0xf]
  %v224 = vld [vmem:[%s1 + $0x144] sm:$0xf]
  %v225 = vld [vmem:[%s1 + $0x148] sm:$0xf]
  %v226 = vld [vmem:[%s1 + $0x14c] sm:$0xf]
  %v227 = vld [vmem:[%s1 + $0x150] sm:$0xf]
  %v228 = vld [vmem:[%s1 + $0x154] sm:$0xf]
  %v229 = vld [vmem:[%s1 + $0x158] sm:$0xf]
  %v230 = vld [vmem:[%s1 + $0x15c] sm:$0xf]
  %v231 = vld [vmem:[%s1 + $0x160] sm:$0xf]
  %v232 = vld [vmem:[%s1 + $0x164] sm:$0xf]
  %v233 = vld [vmem:[%s1 + $0x168] sm:$0xf]
  %v234 = vld [vmem:[%s1 + $0x16c] sm:$0xf]
  %v235 = vld [vmem:[%s1 + $0x170] sm:$0xf]
  %v236 = vld [vmem:[%s1 + $0x174] sm:$0xf]
  %v237 = vld [vmem:[%s1 + $0x178] sm:$0xf]
  %v238 = vld [vmem:[%s1 + $0x17c] sm:$0xf]
  %v239 = vld [vmem:[%s1 + $0x180] sm:$0xf]
  %v240 = vld [vmem:[%s1 + $0x184] sm:$0xf]
  %v241 = vld [vmem:[%s1 + $0x188] sm:$0xf]
  %v242 = vld [vmem:[%s1 + $0x18c] sm:$0xf]
  %v243 = vld [vmem:[%s1 + $0x190] sm:$0xf]
  %v244 = vld [vmem:[%s1 + $0x194] sm:$0xf]
  %v245 = vld [vmem:[%s1 + $0x198] sm:$0xf]
  %v246 = vld [vmem:[%s1 + $0x19c] sm:$0xf]
  %v247 = vld [vmem:[%s1 + $0x1a0] sm:$0xf]
  %v248 = vld [vmem:[%s1 + $0x1a4] sm:$0xf]
  %v249 = vld [vmem:[%s1 + $0x1a8] sm:$0xf]
  %v250 = vld [vmem:[%s1 + $0x1ac] sm:$0xf]
  %v251 = vld [vmem:[%s1 + $0x1b0] sm:$0xf]
  %v252 = vld [vmem:[%s1 + $0x1b4] sm:$0xf]
  %v253 = vld [vmem:[%s1 + $0x1b8] sm:$0xf]
  %v254 = vld [vmem:[%s1 + $0x1bc] sm:$0xf]
  %v255 = vld [vmem:[%s1 + $0x1c0] sm:$0xf]
  %v256 = vld [vmem:[%s1 + $0x1c4] sm:$0xf]
  %v257 = vld [vmem:[%s1 + $0x1c8] sm:$0xf]
  %v258 = vld [vmem:[%s1 + $0x1cc] sm:$0xf]
  %v259 = vld [vmem:[%s1 + $0x1d0] sm:$0xf]
  %v260 = vld [vmem:[%s1 + $0x1d4] sm:$0xf]
  %v261 = vld [vmem:[%s1 + $0x1d8] sm:$0xf]
  %v262 = vld [vmem:[%s1 + $0x1dc] sm:$0xf]
  %v263 = vld [vmem:[%s1 + $0x1e0] sm:$0xf]
  %v264 = vld [vmem:[%s1 + $0x1e4] sm:$0xf]
  %v265 = vld [vmem:[%s1 + $0x1e8] sm:$0xf]
  %v266 = vld [vmem:[%s1 + $0x1ec] sm:$0xf]
  %v267 = vld [vmem:[%s1 + $0x1f0] sm:$0xf]
  %v268 = vld [vmem:[%s1 + $0x1f4] sm:$0xf]
  %v269 = vld [vmem:[%s1 + $0x1f8] sm:$0xf]
  %v270 = vld [vmem:[%s1 + $0x1fc] sm:$0xf]
  %v271 = vld [vmem:[%s1 + $0x200] sm:$0xf]
  %v272 = vld [vmem:[%s1 + $0x204] sm:$0xf]
  %v273 = vld [vmem:[%s1 + $0x208] sm:$0xf]
  %v274 = vld [vmem:[%s1 + $0x20c] sm:$0xf]
  %v275 = vld [vmem:[%s1 + $0x210] sm:$0xf]
  %v276 = vld [vmem:[%s1 + $0x214] sm:$0xf]
  %v277 = vld [vmem:[%s1 + $0x218] sm:$0xf]
  %v278 = vld [vmem:[%s1 + $0x21c] sm:$0xf]
  %v279 = vld [vmem:[%s1 + $0x220] sm:$0xf]
  %v280 = vld [vmem:[%s1 + $0x224] sm:$0xf]
  %v281 = vld [vmem:[%s1 + $0x228] sm:$0xf]
  %v282 = vld [vmem:[%s1 + $0x22c] sm:$0xf]
  %v283 = vld [vmem:[%s1 + $0x230] sm:$0xf]
  %v284 = vld [vmem:[%s1 + $0x234] sm:$0xf]
  %v285 = vld [vmem:[%s1 + $0x238] sm:$0xf]
  %v286 = vld [vmem:[%s1 + $0x23c] sm:$0xf]
  %v412 = vunpack.c.l.b16 %v18
  %v413 = vunpack.c.h.b16 %v18
  %v414 = vunpack.c.l.b16 %v19
  %v415 = vunpack.c.h.b16 %v19
  %v416 = vunpack.c.l.b16 %v20
  %v417 = vunpack.c.h.b16 %v20
  %v418 = vunpack.c.l.b16 %v21
  %v419 = vunpack.c.h.b16 %v21
  %v420 = vunpack.c.l.b16 %v22
  %v421 = vunpack.c.l.b16 %v23
  %v422 = vunpack.c.h.b16 %v23
  %v423 = vunpack.c.l.b16 %v24
  %v424 = vunpack.c.h.b16 %v24
  %v425 = vunpack.c.l.b16 %v25
  %v426 = vunpack.c.h.b16 %v25
  %v427 = vunpack.c.l.b16 %v26
  %v428 = vunpack.c.h.b16 %v26
  %v429 = vunpack.c.l.b16 %v27
  %v430 = vunpack.c.l.b16 %v28
  %v431 = vunpack.c.h.b16 %v28
  %v432 = vunpack.c.l.b16 %v29
  %v433 = vunpack.c.h.b16 %v29
  %v434 = vunpack.c.l.b16 %v30
  %v435 = vunpack.c.h.b16 %v30
  %v436 = vunpack.c.l.b16 %v31
  %v437 = vunpack.c.h.b16 %v31
  %v438 = vunpack.c.l.b16 %v32
  %v439 = vunpack.c.l.b16 %v33
  %v440 = vunpack.c.h.b16 %v33
  %v441 = vunpack.c.l.b16 %v34
  %v442 = vunpack.c.h.b16 %v34
  %v443 = vunpack.c.l.b16 %v35
  %v444 = vunpack.c.h.b16 %v35
  %v445 = vunpack.c.l.b16 %v36
  %v446 = vunpack.c.h.b16 %v36
  %v447 = vunpack.c.l.b16 %v37
  %v448 = vunpack.c.l.b16 %v38
  %v449 = vunpack.c.h.b16 %v38
  %v450 = vunpack.c.l.b16 %v39
  %v451 = vunpack.c.h.b16 %v39
  %v452 = vunpack.c.l.b16 %v40
  %v453 = vunpack.c.h.b16 %v40
  %v454 = vunpack.c.l.b16 %v41
  %v455 = vunpack.c.h.b16 %v41
  %v456 = vunpack.c.l.b16 %v42
  %v457 = vunpack.c.l.b16 %v43
  %v458 = vunpack.c.h.b16 %v43
  %v459 = vunpack.c.l.b16 %v44
  %v460 = vunpack.c.h.b16 %v44
  %v461 = vunpack.c.l.b16 %v45
  %v462 = vunpack.c.h.b16 %v45
  %v463 = vunpack.c.l.b16 %v46
  %v464 = vunpack.c.h.b16 %v46
  %v465 = vunpack.c.l.b16 %v47
  %v466 = vunpack.c.l.b16 %v48
  %v467 = vunpack.c.h.b16 %v48
  %v468 = vunpack.c.l.b16 %v49
  %v469 = vunpack.c.h.b16 %v49
  %v470 = vunpack.c.l.b16 %v50
  %v471 = vunpack.c.h.b16 %v50
  %v472 = vunpack.c.l.b16 %v51
  %v473 = vunpack.c.h.b16 %v51
  %v474 = vunpack.c.l.b16 %v52
  %v475 = vunpack.c.l.b16 %v53
  %v476 = vunpack.c.h.b16 %v53
  %v477 = vunpack.c.l.b16 %v54
  %v478 = vunpack.c.h.b16 %v54
  %v479 = vunpack.c.l.b16 %v55
  %v480 = vunpack.c.h.b16 %v55
  %v481 = vunpack.c.l.b16 %v56
  %v482 = vunpack.c.h.b16 %v56
  %v483 = vunpack.c.l.b16 %v57
  %v484 = vunpack.c.l.b16 %v58
  %v485 = vunpack.c.h.b16 %v58
  %v486 = vunpack.c.l.b16 %v59
  %v487 = vunpack.c.h.b16 %v59
  %v488 = vunpack.c.l.b16 %v60
  %v489 = vunpack.c.h.b16 %v60
  %v490 = vunpack.c.l.b16 %v61
  %v491 = vunpack.c.h.b16 %v61
  %v492 = vunpack.c.l.b16 %v62
  %v493 = vunpack.c.l.b16 %v63
  %v494 = vunpack.c.h.b16 %v63
  %v495 = vunpack.c.l.b16 %v64
  %v496 = vunpack.c.h.b16 %v64
  %v497 = vunpack.c.l.b16 %v65
  %v498 = vunpack.c.h.b16 %v65
  %v499 = vunpack.c.l.b16 %v66
  %v500 = vunpack.c.h.b16 %v66
  %v501 = vunpack.c.l.b16 %v67
  %v502 = vunpack.c.l.b16 %v68
  %v503 = vunpack.c.h.b16 %v68
  %v504 = vunpack.c.l.b16 %v69
  %v505 = vunpack.c.h.b16 %v69
  %v506 = vunpack.c.l.b16 %v70
  %v507 = vunpack.c.h.b16 %v70
  %v508 = vunpack.c.l.b16 %v71
  %v509 = vunpack.c.h.b16 %v71
  %v510 = vunpack.c.l.b16 %v72
  %v511 = vunpack.c.l.b16 %v73
  %v512 = vunpack.c.h.b16 %v73
  %v513 = vunpack.c.l.b16 %v74
  %v514 = vunpack.c.h.b16 %v74
  %v515 = vunpack.c.l.b16 %v75
  %v516 = vunpack.c.h.b16 %v75
  %v517 = vunpack.c.l.b16 %v76
  %v518 = vunpack.c.h.b16 %v76
  %v519 = vunpack.c.l.b16 %v77
  %v520 = vunpack.c.l.b16 %v78
  %v521 = vunpack.c.h.b16 %v78
  %v522 = vunpack.c.l.b16 %v79
  %v523 = vunpack.c.h.b16 %v79
  %v524 = vunpack.c.l.b16 %v80
  %v525 = vunpack.c.h.b16 %v80
  %v526 = vunpack.c.l.b16 %v81
  %v527 = vunpack.c.h.b16 %v81
  %v528 = vunpack.c.l.b16 %v82
  %v529 = vunpack.c.l.b16 %v83
  %v530 = vunpack.c.h.b16 %v83
  %v531 = vunpack.c.l.b16 %v84
  %v532 = vunpack.c.h.b16 %v84
  %v533 = vunpack.c.l.b16 %v85
  %v534 = vunpack.c.h.b16 %v85
  %v535 = vunpack.c.l.b16 %v86
  %v536 = vunpack.c.h.b16 %v86
  %v537 = vunpack.c.l.b16 %v87
  %v538 = vunpack.c.l.b16 %v88
  %v539 = vunpack.c.h.b16 %v88
  %v540 = vunpack.c.l.b16 %v89
  %v541 = vunpack.c.h.b16 %v89
  %v542 = vunpack.c.l.b16 %v90
  %v543 = vunpack.c.h.b16 %v90
  %v544 = vunpack.c.l.b16 %v91
  %v545 = vunpack.c.h.b16 %v91
  %v546 = vunpack.c.l.b16 %v92
  %v547 = vunpack.c.l.b16 %v93
  %v548 = vunpack.c.h.b16 %v93
  %v549 = vunpack.c.l.b16 %v94
  %v550 = vunpack.c.h.b16 %v94
  %v551 = vunpack.c.l.b16 %v95
  %v552 = vunpack.c.h.b16 %v95
  %v553 = vunpack.c.l.b16 %v96
  %v554 = vunpack.c.h.b16 %v96
  %v555 = vunpack.c.l.b16 %v97
  %v556 = vunpack.c.l.b16 %v98
  %v557 = vunpack.c.h.b16 %v98
  %v558 = vunpack.c.l.b16 %v99
  %v559 = vunpack.c.h.b16 %v99
  %v560 = vunpack.c.l.b16 %v100
  %v561 = vunpack.c.h.b16 %v100
  %v562 = vunpack.c.l.b16 %v101
  %v563 = vunpack.c.h.b16 %v101
  %v564 = vunpack.c.l.b16 %v102
  %v565 = vunpack.c.l.b16 %v103
  %v566 = vunpack.c.h.b16 %v103
  %v567 = vunpack.c.l.b16 %v104
  %v568 = vunpack.c.h.b16 %v104
  %v569 = vunpack.c.l.b16 %v105
  %v570 = vunpack.c.h.b16 %v105
  %v571 = vunpack.c.l.b16 %v106
  %v572 = vunpack.c.h.b16 %v106
  %v573 = vunpack.c.l.b16 %v107
  %v574 = vunpack.c.l.b16 %v108
  %v575 = vunpack.c.h.b16 %v108
  %v576 = vunpack.c.l.b16 %v109
  %v577 = vunpack.c.h.b16 %v109
  %v578 = vunpack.c.l.b16 %v110
  %v579 = vunpack.c.h.b16 %v110
  %v580 = vunpack.c.l.b16 %v111
  %v581 = vunpack.c.h.b16 %v111
  %v582 = vunpack.c.l.b16 %v112
  %v583 = vunpack.c.l.b16 %v113
  %v584 = vunpack.c.h.b16 %v113
  %v585 = vunpack.c.l.b16 %v114
  %v586 = vunpack.c.h.b16 %v114
  %v587 = vunpack.c.l.b16 %v115
  %v588 = vunpack.c.h.b16 %v115
  %v589 = vunpack.c.l.b16 %v116
  %v590 = vunpack.c.h.b16 %v116
  %v591 = vunpack.c.l.b16 %v117
  %v592 = vunpack.c.l.b16 %v118
  %v593 = vunpack.c.h.b16 %v118
  %v594 = vunpack.c.l.b16 %v119
  %v595 = vunpack.c.h.b16 %v119
  %v596 = vunpack.c.l.b16 %v120
  %v597 = vunpack.c.h.b16 %v120
  %v598 = vunpack.c.l.b16 %v121
  %v599 = vunpack.c.h.b16 %v121
  %v600 = vunpack.c.l.b16 %v122
  %v601 = vunpack.c.l.b16 %v123
  %v602 = vunpack.c.h.b16 %v123
  %v603 = vunpack.c.l.b16 %v124
  %v604 = vunpack.c.h.b16 %v124
  %v605 = vunpack.c.l.b16 %v125
  %v606 = vunpack.c.h.b16 %v125
  %v607 = vunpack.c.l.b16 %v126
  %v608 = vunpack.c.h.b16 %v126
  %v609 = vunpack.c.l.b16 %v127
  %v610 = vunpack.c.l.b16 %v128
  %v611 = vunpack.c.h.b16 %v128
  %v612 = vunpack.c.l.b16 %v129
  %v613 = vunpack.c.h.b16 %v129
  %v614 = vunpack.c.l.b16 %v130
  %v615 = vunpack.c.h.b16 %v130
  %v616 = vunpack.c.l.b16 %v131
  %v617 = vunpack.c.h.b16 %v131
  %v618 = vunpack.c.l.b16 %v132
  %v619 = vunpack.c.l.b16 %v133
  %v620 = vunpack.c.h.b16 %v133
  %v621 = vunpack.c.l.b16 %v134
  %v622 = vunpack.c.h.b16 %v134
  %v623 = vunpack.c.l.b16 %v135
  %v624 = vunpack.c.h.b16 %v135
  %v625 = vunpack.c.l.b16 %v136
  %v626 = vunpack.c.h.b16 %v136
  %v627 = vunpack.c.l.b16 %v137
  %v628 = vunpack.c.l.b16 %v138
  %v629 = vunpack.c.h.b16 %v138
  %v630 = vunpack.c.l.b16 %v139
  %v631 = vunpack.c.h.b16 %v139
  %v632 = vunpack.c.l.b16 %v140
  %v633 = vunpack.c.h.b16 %v140
  %v634 = vunpack.c.l.b16 %v141
  %v635 = vunpack.c.h.b16 %v141
  %v636 = vunpack.c.l.b16 %v142
  %v637 = vpack.c.b16 %v421, %v412
  %v638 = vpack.c.b16 %v422, %v413
  %v639 = vpack.c.b16 %v423, %v414
  %v640 = vpack.c.b16 %v424, %v415
  %v641 = vpack.c.b16 %v425, %v416
  %v642 = vpack.c.b16 %v426, %v417
  %v643 = vpack.c.b16 %v427, %v418
  %v644 = vpack.c.b16 %v428, %v419
  %v645 = vpack.c.b16 %v429, %v420
  %v646 = vpack.c.b16 %v439, %v430
  %v647 = vpack.c.b16 %v440, %v431
  %v648 = vpack.c.b16 %v441, %v432
  %v649 = vpack.c.b16 %v442, %v433
  %v650 = vpack.c.b16 %v443, %v434
  %v651 = vpack.c.b16 %v444, %v435
  %v652 = vpack.c.b16 %v445, %v436
  %v653 = vpack.c.b16 %v446, %v437
  %v654 = vpack.c.b16 %v447, %v438
  %v655 = vpack.c.b16 %v457, %v448
  %v656 = vpack.c.b16 %v458, %v449
  %v657 = vpack.c.b16 %v459, %v450
  %v658 = vpack.c.b16 %v460, %v451
  %v659 = vpack.c.b16 %v461, %v452
  %v660 = vpack.c.b16 %v462, %v453
  %v661 = vpack.c.b16 %v463, %v454
  %v662 = vpack.c.b16 %v464, %v455
  %v663 = vpack.c.b16 %v465, %v456
  %v664 = vpack.c.b16 %v475, %v466
  %v665 = vpack.c.b16 %v476, %v467
  %v666 = vpack.c.b16 %v477, %v468
  %v667 = vpack.c.b16 %v478, %v469
  %v668 = vpack.c.b16 %v479, %v470
  %v669 = vpack.c.b16 %v480, %v471
  %v670 = vpack.c.b16 %v481, %v472
  %v671 = vpack.c.b16 %v482, %v473
  %v672 = vpack.c.b16 %v483, %v474
  %v673 = vpack.c.b16 %v493, %v484
  %v674 = vpack.c.b16 %v494, %v485
  %v675 = vpack.c.b16 %v495, %v486
  %v676 = vpack.c.b16 %v496, %v487
  %v677 = vpack.c.b16 %v497, %v488
  %v678 = vpack.c.b16 %v498, %v489
  %v679 = vpack.c.b16 %v499, %v490
  %v680 = vpack.c.b16 %v500, %v491
  %v681 = vpack.c.b16 %v501, %v492
  %v682 = vpack.c.b16 %v511, %v502
  %v683 = vpack.c.b16 %v512, %v503
  %v684 = vpack.c.b16 %v513, %v504
  %v685 = vpack.c.b16 %v514, %v505
  %v686 = vpack.c.b16 %v515, %v506
  %v687 = vpack.c.b16 %v516, %v507
  %v688 = vpack.c.b16 %v517, %v508
  %v689 = vpack.c.b16 %v518, %v509
  %v690 = vpack.c.b16 %v519, %v510
  %v691 = vpack.c.b16 %v529, %v520
  %v692 = vpack.c.b16 %v530, %v521
  %v693 = vpack.c.b16 %v531, %v522
  %v694 = vpack.c.b16 %v532, %v523
  %v695 = vpack.c.b16 %v533, %v524
  %v696 = vpack.c.b16 %v534, %v525
  %v697 = vpack.c.b16 %v535, %v526
  %v698 = vpack.c.b16 %v536, %v527
  %v699 = vpack.c.b16 %v537, %v528
  %v700 = vpack.c.b16 %v547, %v538
  %v701 = vpack.c.b16 %v548, %v539
  %v702 = vpack.c.b16 %v549, %v540
  %v703 = vpack.c.b16 %v550, %v541
  %v704 = vpack.c.b16 %v551, %v542
  %v705 = vpack.c.b16 %v552, %v543
  %v706 = vpack.c.b16 %v553, %v544
  %v707 = vpack.c.b16 %v554, %v545
  %v708 = vpack.c.b16 %v555, %v546
  %v709 = vpack.c.b16 %v565, %v556
  %v710 = vpack.c.b16 %v566, %v557
  %v711 = vpack.c.b16 %v567, %v558
  %v712 = vpack.c.b16 %v568, %v559
  %v713 = vpack.c.b16 %v569, %v560
  %v714 = vpack.c.b16 %v570, %v561
  %v715 = vpack.c.b16 %v571, %v562
  %v716 = vpack.c.b16 %v572, %v563
  %v717 = vpack.c.b16 %v573, %v564
  %v718 = vpack.c.b16 %v583, %v574
  %v719 = vpack.c.b16 %v584, %v575
  %v720 = vpack.c.b16 %v585, %v576
  %v721 = vpack.c.b16 %v586, %v577
  %v722 = vpack.c.b16 %v587, %v578
  %v723 = vpack.c.b16 %v588, %v579
  %v724 = vpack.c.b16 %v589, %v580
  %v725 = vpack.c.b16 %v590, %v581
  %v726 = vpack.c.b16 %v591, %v582
  %v727 = vpack.c.b16 %v601, %v592
  %v728 = vpack.c.b16 %v602, %v593
  %v729 = vpack.c.b16 %v603, %v594
  %v730 = vpack.c.b16 %v604, %v595
  %v731 = vpack.c.b16 %v605, %v596
  %v732 = vpack.c.b16 %v606, %v597
  %v733 = vpack.c.b16 %v607, %v598
  %v734 = vpack.c.b16 %v608, %v599
  %v735 = vpack.c.b16 %v609, %v600
  %v736 = vpack.c.b16 %v619, %v610
  %v737 = vpack.c.b16 %v620, %v611
  %v738 = vpack.c.b16 %v621, %v612
  %v739 = vpack.c.b16 %v622, %v613
  %v740 = vpack.c.b16 %v623, %v614
  %v741 = vpack.c.b16 %v624, %v615
  %v742 = vpack.c.b16 %v625, %v616
  %v743 = vpack.c.b16 %v626, %v617
  %v744 = vpack.c.b16 %v627, %v618
  %v745 = vpack.c.b16 %v628, %v628
  %v746 = vpack.c.b16 %v629, %v629
  %v747 = vpack.c.b16 %v630, %v630
  %v748 = vpack.c.b16 %v631, %v631
  %v749 = vpack.c.b16 %v632, %v632
  %v750 = vpack.c.b16 %v633, %v633
  %v751 = vpack.c.b16 %v634, %v634
  %v752 = vpack.c.b16 %v635, %v635
  %v753 = vpack.c.b16 %v636, %v636
  %v1015 = vunpack.c.l.b16 %v143
  %v1016 = vunpack.c.l.b16 %v144
  %v1017 = vunpack.c.l.b16 %v145
  %v1018 = vunpack.c.l.b16 %v146
  %v1019 = vunpack.c.l.b16 %v147
  %v1020 = vunpack.c.l.b16 %v148
  %v1021 = vunpack.c.l.b16 %v149
  %v1022 = vunpack.c.l.b16 %v150
  %v1023 = vunpack.c.l.b16 %v151
  %v1024 = vunpack.c.l.b16 %v152
  %v1025 = vunpack.c.l.b16 %v153
  %v1026 = vunpack.c.l.b16 %v154
  %v1027 = vunpack.c.l.b16 %v155
  %v1028 = vunpack.c.l.b16 %v156
  %v1029 = vunpack.c.l.b16 %v157
  %v1030 = vunpack.c.l.b16 %v158
  %v1031 = vunpack.c.l.b16 %v159
  %v1032 = vunpack.c.l.b16 %v160
  %v1033 = vunpack.c.l.b16 %v161
  %v1034 = vunpack.c.l.b16 %v162
  %v1035 = vunpack.c.l.b16 %v163
  %v1036 = vunpack.c.l.b16 %v164
  %v1037 = vunpack.c.l.b16 %v165
  %v1038 = vunpack.c.l.b16 %v166
  %v1039 = vunpack.c.l.b16 %v167
  %v1040 = vunpack.c.l.b16 %v168
  %v1041 = vunpack.c.l.b16 %v169
  %v1042 = vunpack.c.l.b16 %v170
  %v1043 = vunpack.c.l.b16 %v171
  %v1044 = vunpack.c.l.b16 %v172
  %v1045 = vunpack.c.l.b16 %v173
  %v1046 = vunpack.c.l.b16 %v174
  %v1047 = vunpack.c.l.b16 %v175
  %v1048 = vunpack.c.l.b16 %v176
  %v1049 = vunpack.c.l.b16 %v177
  %v1050 = vunpack.c.l.b16 %v178
  %v1051 = vunpack.c.l.b16 %v179
  %v1052 = vunpack.c.l.b16 %v180
  %v1053 = vunpack.c.l.b16 %v181
  %v1054 = vunpack.c.l.b16 %v182
  %v1055 = vunpack.c.l.b16 %v183
  %v1056 = vunpack.c.l.b16 %v184
  %v1057 = vunpack.c.l.b16 %v185
  %v1058 = vunpack.c.l.b16 %v186
  %v1059 = vunpack.c.l.b16 %v187
  %v1060 = vunpack.c.l.b16 %v188
  %v1061 = vunpack.c.l.b16 %v189
  %v1062 = vunpack.c.l.b16 %v190
  %v1063 = vunpack.c.l.b16 %v191
  %v1064 = vunpack.c.l.b16 %v192
  %v1065 = vunpack.c.l.b16 %v193
  %v1066 = vunpack.c.l.b16 %v194
  %v1067 = vunpack.c.l.b16 %v195
  %v1068 = vunpack.c.l.b16 %v196
  %v1069 = vunpack.c.l.b16 %v197
  %v1070 = vunpack.c.l.b16 %v198
  %v1071 = vunpack.c.l.b16 %v199
  %v1072 = vunpack.c.l.b16 %v200
  %v1073 = vunpack.c.l.b16 %v201
  %v1074 = vunpack.c.l.b16 %v202
  %v1075 = vunpack.c.l.b16 %v203
  %v1076 = vunpack.c.l.b16 %v204
  %v1077 = vunpack.c.l.b16 %v205
  %v1078 = vunpack.c.l.b16 %v206
  %v1079 = vunpack.c.l.b16 %v207
  %v1080 = vunpack.c.l.b16 %v208
  %v1081 = vunpack.c.l.b16 %v209
  %v1082 = vunpack.c.l.b16 %v210
  %v1083 = vunpack.c.l.b16 %v211
  %v1084 = vunpack.c.l.b16 %v212
  %v1085 = vunpack.c.l.b16 %v213
  %v1086 = vunpack.c.l.b16 %v214
  %v1087 = vunpack.c.l.b16 %v215
  %v1088 = vunpack.c.l.b16 %v216
  %v1089 = vunpack.c.l.b16 %v217
  %v1090 = vunpack.c.l.b16 %v218
  %v1091 = vunpack.c.l.b16 %v219
  %v1092 = vunpack.c.l.b16 %v220
  %v1093 = vunpack.c.l.b16 %v221
  %v1094 = vunpack.c.l.b16 %v222
  %v1095 = vunpack.c.l.b16 %v223
  %v1096 = vunpack.c.l.b16 %v224
  %v1097 = vunpack.c.l.b16 %v225
  %v1098 = vunpack.c.l.b16 %v226
  %v1099 = vunpack.c.l.b16 %v227
  %v1100 = vunpack.c.l.b16 %v228
  %v1101 = vunpack.c.l.b16 %v229
  %v1102 = vunpack.c.l.b16 %v230
  %v1103 = vunpack.c.l.b16 %v231
  %v1104 = vunpack.c.l.b16 %v232
  %v1105 = vunpack.c.l.b16 %v233
  %v1106 = vunpack.c.l.b16 %v234
  %v1107 = vunpack.c.l.b16 %v235
  %v1108 = vunpack.c.l.b16 %v236
  %v1109 = vunpack.c.l.b16 %v237
  %v1110 = vunpack.c.l.b16 %v238
  %v1111 = vunpack.c.l.b16 %v239
  %v1112 = vunpack.c.l.b16 %v240
  %v1113 = vunpack.c.l.b16 %v241
  %v1114 = vunpack.c.l.b16 %v242
  %v1115 = vunpack.c.l.b16 %v243
  %v1116 = vunpack.c.l.b16 %v244
  %v1117 = vunpack.c.l.b16 %v245
  %v1118 = vunpack.c.l.b16 %v246
  %v1119 = vunpack.c.l.b16 %v247
  %v1120 = vunpack.c.l.b16 %v248
  %v1121 = vunpack.c.l.b16 %v249
  %v1122 = vunpack.c.l.b16 %v250
  %v1123 = vunpack.c.l.b16 %v251
  %v1124 = vunpack.c.l.b16 %v252
  %v1125 = vunpack.c.l.b16 %v253
  %v1126 = vunpack.c.l.b16 %v254
  %v1127 = vunpack.c.l.b16 %v255
  %v1128 = vunpack.c.l.b16 %v256
  %v1129 = vunpack.c.l.b16 %v257
  %v1130 = vunpack.c.l.b16 %v258
  %v1131 = vunpack.c.l.b16 %v259
  %v1132 = vunpack.c.l.b16 %v260
  %v1133 = vunpack.c.l.b16 %v261
  %v1134 = vunpack.c.l.b16 %v262
  %v1135 = vunpack.c.l.b16 %v263
  %v1136 = vunpack.c.l.b16 %v264
  %v1137 = vunpack.c.l.b16 %v265
  %v1138 = vunpack.c.l.b16 %v266
  %v1139 = vunpack.c.l.b16 %v267
  %v1140 = vunpack.c.l.b16 %v268
  %v1141 = vunpack.c.l.b16 %v269
  %v1142 = vunpack.c.l.b16 %v270
  %v1143 = vunpack.c.l.b16 %v271
  %v1144 = vunpack.c.l.b16 %v272
  %v1145 = vunpack.c.l.b16 %v273
  %v1146 = vunpack.c.l.b16 %v274
  %v1147 = vunpack.c.l.b16 %v275
  %v1148 = vunpack.c.l.b16 %v276
  %v1149 = vunpack.c.l.b16 %v277
  %v1150 = vunpack.c.l.b16 %v278
  %v1151 = vunpack.c.l.b16 %v279
  %v1152 = vunpack.c.l.b16 %v280
  %v1153 = vunpack.c.l.b16 %v281
  %v1154 = vunpack.c.l.b16 %v282
  %v1155 = vunpack.c.l.b16 %v283
  %v1156 = vunpack.c.l.b16 %v284
  %v1157 = vunpack.c.l.b16 %v285
  %v1158 = vunpack.c.l.b16 %v286
  %v1159 = vpack.c.b16 %v1016, %v1015
  %v1160 = vpack.c.b16 %v1018, %v1017
  %v1161 = vpack.c.b16 %v1020, %v1019
  %v1162 = vpack.c.b16 %v1022, %v1021
  %v1163 = vpack.c.b16 %v1024, %v1023
  %v1164 = vpack.c.b16 %v1026, %v1025
  %v1165 = vpack.c.b16 %v1028, %v1027
  %v1166 = vpack.c.b16 %v1030, %v1029
  %v1167 = vpack.c.b16 %v1032, %v1031
  %v1168 = vpack.c.b16 %v1034, %v1033
  %v1169 = vpack.c.b16 %v1036, %v1035
  %v1170 = vpack.c.b16 %v1038, %v1037
  %v1171 = vpack.c.b16 %v1040, %v1039
  %v1172 = vpack.c.b16 %v1042, %v1041
  %v1173 = vpack.c.b16 %v1044, %v1043
  %v1174 = vpack.c.b16 %v1046, %v1045
  %v1175 = vpack.c.b16 %v1048, %v1047
  %v1176 = vpack.c.b16 %v1050, %v1049
  %v1177 = vpack.c.b16 %v1052, %v1051
  %v1178 = vpack.c.b16 %v1054, %v1053
  %v1179 = vpack.c.b16 %v1056, %v1055
  %v1180 = vpack.c.b16 %v1058, %v1057
  %v1181 = vpack.c.b16 %v1060, %v1059
  %v1182 = vpack.c.b16 %v1062, %v1061
  %v1183 = vpack.c.b16 %v1064, %v1063
  %v1184 = vpack.c.b16 %v1066, %v1065
  %v1185 = vpack.c.b16 %v1068, %v1067
  %v1186 = vpack.c.b16 %v1070, %v1069
  %v1187 = vpack.c.b16 %v1072, %v1071
  %v1188 = vpack.c.b16 %v1074, %v1073
  %v1189 = vpack.c.b16 %v1076, %v1075
  %v1190 = vpack.c.b16 %v1078, %v1077
  %v1191 = vpack.c.b16 %v1080, %v1079
  %v1192 = vpack.c.b16 %v1082, %v1081
  %v1193 = vpack.c.b16 %v1084, %v1083
  %v1194 = vpack.c.b16 %v1086, %v1085
  %v1195 = vpack.c.b16 %v1088, %v1087
  %v1196 = vpack.c.b16 %v1090, %v1089
  %v1197 = vpack.c.b16 %v1092, %v1091
  %v1198 = vpack.c.b16 %v1094, %v1093
  %v1199 = vpack.c.b16 %v1096, %v1095
  %v1200 = vpack.c.b16 %v1098, %v1097
  %v1201 = vpack.c.b16 %v1100, %v1099
  %v1202 = vpack.c.b16 %v1102, %v1101
  %v1203 = vpack.c.b16 %v1104, %v1103
  %v1204 = vpack.c.b16 %v1106, %v1105
  %v1205 = vpack.c.b16 %v1108, %v1107
  %v1206 = vpack.c.b16 %v1110, %v1109
  %v1207 = vpack.c.b16 %v1112, %v1111
  %v1208 = vpack.c.b16 %v1114, %v1113
  %v1209 = vpack.c.b16 %v1116, %v1115
  %v1210 = vpack.c.b16 %v1118, %v1117
  %v1211 = vpack.c.b16 %v1120, %v1119
  %v1212 = vpack.c.b16 %v1122, %v1121
  %v1213 = vpack.c.b16 %v1124, %v1123
  %v1214 = vpack.c.b16 %v1126, %v1125
  %v1215 = vpack.c.b16 %v1128, %v1127
  %v1216 = vpack.c.b16 %v1130, %v1129
  %v1217 = vpack.c.b16 %v1132, %v1131
  %v1218 = vpack.c.b16 %v1134, %v1133
  %v1219 = vpack.c.b16 %v1136, %v1135
  %v1220 = vpack.c.b16 %v1138, %v1137
  %v1221 = vpack.c.b16 %v1140, %v1139
  %v1222 = vpack.c.b16 %v1142, %v1141
  %v1223 = vpack.c.b16 %v1144, %v1143
  %v1224 = vpack.c.b16 %v1146, %v1145
  %v1225 = vpack.c.b16 %v1148, %v1147
  %v1226 = vpack.c.b16 %v1150, %v1149
  %v1227 = vpack.c.b16 %v1152, %v1151
  %v1228 = vpack.c.b16 %v1154, %v1153
  %v1229 = vpack.c.b16 %v1156, %v1155
  %v1230 = vpack.c.b16 %v1158, %v1157
  %1303 = vmatprep.subr.bf16.mxu0 0
  %1304 = vmatpush1.bf16.msra.mxu0 %v1159
  %1305 = vmatprep.subr.bf16.mxu0 0
  %1306 = vmatpush1.bf16.msra.mxu0 %v1160
  %1307 = vmatprep.subr.bf16.mxu0 0
  %1308 = vmatpush1.bf16.msra.mxu0 %v1161
  %1309 = vmatprep.subr.bf16.mxu0 0
  %1310 = vmatpush1.bf16.msra.mxu0 %v1162
  %1311 = vmatprep.subr.bf16.mxu0 0
  %1312 = vmatpush1.bf16.msra.mxu0 %v1163
  %1313 = vmatprep.subr.bf16.mxu0 0
  %1314 = vmatpush1.bf16.msra.mxu0 %v1164
  %1315 = vmatprep.subr.bf16.mxu0 0
  %1316 = vmatpush1.bf16.msra.mxu0 %v1165
  %1317 = vmatprep.subr.bf16.mxu0 0
  %1318 = vmatpush1.bf16.msra.mxu0 %v1166
  %1319 = vmatprep.subr.bf16.mxu0 0
  %1320 = vmatpush1.bf16.msra.mxu0 %v1167
  %1321 = vmatprep.subr.bf16.mxu0 0
  %1322 = vmatpush1.bf16.msra.mxu0 %v1168
  %1323 = vmatprep.subr.bf16.mxu0 0
  %1324 = vmatpush1.bf16.msra.mxu0 %v1169
  %1325 = vmatprep.subr.bf16.mxu0 0
  %1326 = vmatpush1.bf16.msra.mxu0 %v1170
  %1327 = vmatprep.subr.bf16.mxu0 0
  %1328 = vmatpush1.bf16.msra.mxu0 %v1171
  %1329 = vmatprep.subr.bf16.mxu0 0
  %1330 = vmatpush1.bf16.msra.mxu0 %v1172
  %1331 = vmatprep.subr.bf16.mxu0 0
  %1332 = vmatpush1.bf16.msra.mxu0 %v1173
  %1333 = vmatprep.subr.bf16.mxu0 0
  %1334 = vmatpush1.bf16.msra.mxu0 %v1174
  %1335 = vmatprep.mubr.bf16.mxu0 %v638
  %1336 = vmatmul.mubr.bf16.gmra.mrb[0].mxu0 %v637
  %v1337 = vpop.f32.mrb[0].mxu0
  %v1338 = vadd.f32 0.0, %v1337
  %v1339 = vpop.f32.mrb[0].mxu0
  %v1340 = vpop.f32.mrb[0].mxu0
  %v1341 = vadd.f32 0.0, %v1340
  %v1342 = vpop.f32.mrb[0].mxu0
  %1343 = vmatprep.mubr.bf16.mxu0 %v647
  %1344 = vmatmul.mubr.bf16.gmra.mrb[0].mxu0 %v646
  %v1345 = vpop.f32.mrb[0].mxu0
  %v1346 = vadd.f32 0.0, %v1345
  %v1347 = vpop.f32.mrb[0].mxu0
  %v1348 = vpop.f32.mrb[0].mxu0
  %v1349 = vadd.f32 0.0, %v1348
  %v1350 = vpop.f32.mrb[0].mxu0
  %1351 = vmatprep.mubr.bf16.mxu0 %v656
  %1352 = vmatmul.mubr.bf16.gmra.mrb[0].mxu0 %v655
  %v1353 = vpop.f32.mrb[0].mxu0
  %v1354 = vadd.f32 0.0, %v1353
  %v1355 = vpop.f32.mrb[0].mxu0
  %v1356 = vpop.f32.mrb[0].mxu0
  %v1357 = vadd.f32 0.0, %v1356
  %v1358 = vpop.f32.mrb[0].mxu0
  %1359 = vmatprep.mubr.bf16.mxu0 %v665
  %1360 = vmatmul.mubr.bf16.gmra.mrb[0].mxu0 %v664
  %v1361 = vpop.f32.mrb[0].mxu0
  %v1362 = vadd.f32 0.0, %v1361
  %v1363 = vpop.f32.mrb[0].mxu0
  %v1364 = vpop.f32.mrb[0].mxu0
  %v1365 = vadd.f32 0.0, %v1364
  %v1366 = vpop.f32.mrb[0].mxu0
  %1367 = vmatprep.mubr.bf16.mxu0 %v674
  %1368 = vmatmul.mubr.bf16.gmra.mrb[0].mxu0 %v673
  %v1369 = vpop.f32.mrb[0].mxu0
  %v1370 = vadd.f32 0.0, %v1369
  %v1371 = vpop.f32.mrb[0].mxu0
  %v1372 = vpop.f32.mrb[0].mxu0
  %v1373 = vadd.f32 0.0, %v1372
  %v1374 = vpop.f32.mrb[0].mxu0
  %1375 = vmatprep.mubr.bf16.mxu0 %v683
  %1376 = vmatmul.mubr.bf16.gmra.mrb[0].mxu0 %v682
  %v1377 = vpop.f32.mrb[0].mxu0
  %v1378 = vadd.f32 0.0, %v1377
  %v1379 = vpop.f32.mrb[0].mxu0
  %v1380 = vpop.f32.mrb[0].mxu0
  %v1381 = vadd.f32 0.0, %v1380
  %v1382 = vpop.f32.mrb[0].mxu0
  %1383 = vmatprep.mubr.bf16.mxu0 %v692
  %1384 = vmatmul.mubr.bf16.gmra.mrb[0].mxu0 %v691
  %v1385 = vpop.f32.mrb[0].mxu0
  %v1386 = vadd.f32 0.0, %v1385
  %v1387 = vpop.f32.mrb[0].mxu0
  %v1388 = vpop.f32.mrb[0].mxu0
  %v1389 = vadd.f32 0.0, %v1388
  %v1390 = vpop.f32.mrb[0].mxu0
  %1391 = vmatprep.mubr.bf16.mxu0 %v701
  %1392 = vmatmul.mubr.bf16.gmra.mrb[0].mxu0 %v700
  %v1393 = vpop.f32.mrb[0].mxu0
  %v1394 = vadd.f32 0.0, %v1393
  %v1395 = vpop.f32.mrb[0].mxu0
  %v1396 = vpop.f32.mrb[0].mxu0
  %v1397 = vadd.f32 0.0, %v1396
  %v1398 = vpop.f32.mrb[0].mxu0
  %1399 = vmatprep.mubr.bf16.mxu0 %v710
  %1400 = vmatmul.mubr.bf16.gmra.mrb[0].mxu0 %v709
  %v1401 = vpop.f32.mrb[0].mxu0
  %v1402 = vadd.f32 0.0, %v1401
  %v1403 = vpop.f32.mrb[0].mxu0
  %v1404 = vpop.f32.mrb[0].mxu0
  %v1405 = vadd.f32 0.0, %v1404
  %v1406 = vpop.f32.mrb[0].mxu0
  %1407 = vmatprep.mubr.bf16.mxu0 %v719
  %1408 = vmatmul.mubr.bf16.gmra.mrb[0].mxu0 %v718
  %v1409 = vpop.f32.mrb[0].mxu0
  %v1410 = vadd.f32 0.0, %v1409
  %v1411 = vpop.f32.mrb[0].mxu0
  %v1412 = vpop.f32.mrb[0].mxu0
  %v1413 = vadd.f32 0.0, %v1412
  %v1414 = vpop.f32.mrb[0].mxu0
  %1415 = vmatprep.mubr.bf16.mxu0 %v728
  %1416 = vmatmul.mubr.bf16.gmra.mrb[0].mxu0 %v727
  %v1417 = vpop.f32.mrb[0].mxu0
  %v1418 = vadd.f32 0.0, %v1417
  %v1419 = vpop.f32.mrb[0].mxu0
  %v1420 = vpop.f32.mrb[0].mxu0
  %v1421 = vadd.f32 0.0, %v1420
  %v1422 = vpop.f32.mrb[0].mxu0
  %1423 = vmatprep.mubr.bf16.mxu0 %v737
  %1424 = vmatmul.mubr.bf16.gmra.mrb[0].mxu0 %v736
  %v1425 = vpop.f32.mrb[0].mxu0
  %v1426 = vadd.f32 0.0, %v1425
  %v1427 = vpop.f32.mrb[0].mxu0
  %v1428 = vpop.f32.mrb[0].mxu0
  %v1429 = vadd.f32 0.0, %v1428
  %v1430 = vpop.f32.mrb[0].mxu0
  %1431 = vmatprep.mubr.bf16.mxu0 %v746
  %1432 = vmatmul.mubr.bf16.gmra.mrb[0].mxu0 %v745
  %v1433 = vpop.f32.mrb[0].mxu0
  %v1434 = vadd.f32 0.0, %v1433
  %v1435 = vpop.f32.mrb[0].mxu0
  %v1436 = vpop.f32.mrb[0].mxu0
  %v1437 = vpop.f32.mrb[0].mxu0
  %1438 = vdwg.mxu0
  %1439 = vmatprep.subr.bf16.mxu0 0
  %1440 = vmatpush1.bf16.msra.mxu0 %v1175
  %1441 = vmatprep.subr.bf16.mxu0 0
  %1442 = vmatpush1.bf16.msra.mxu0 %v1176
  %1443 = vmatprep.subr.bf16.mxu0 0
  %1444 = vmatpush1.bf16.msra.mxu0 %v1177
  %1445 = vmatprep.subr.bf16.mxu0 0
  %1446 = vmatpush1.bf16.msra.mxu0 %v1178
  %1447 = vmatprep.subr.bf16.mxu0 0
  %1448 = vmatpush1.bf16.msra.mxu0 %v1179
  %1449 = vmatprep.subr.bf16.mxu0 0
  %1450 = vmatpush1.bf16.msra.mxu0 %v1180
  %1451 = vmatprep.subr.bf16.mxu0 0
  %1452 = vmatpush1.bf16.msra.mxu0 %v1181
  %1453 = vmatprep.subr.bf16.mxu0 0
  %1454 = vmatpush1.bf16.msra.mxu0 %v1182
  %1455 = vmatprep.subr.bf16.mxu0 0
  %1456 = vmatpush1.bf16.msra.mxu0 %v1183
  %1457 = vmatprep.subr.bf16.mxu0 0
  %1458 = vmatpush1.bf16.msra.mxu0 %v1184
  %1459 = vmatprep.subr.bf16.mxu0 0
  %1460 = vmatpush1.bf16.msra.mxu0 %v1185
  %1461 = vmatprep.subr.bf16.mxu0 0
  %1462 = vmatpush1.bf16.msra.mxu0 %v1186
  %1463 = vmatprep.subr.bf16.mxu0 0
  %1464 = vmatpush1.bf16.msra.mxu0 %v1187
  %1465 = vmatprep.subr.bf16.mxu0 0
  %1466 = vmatpush1.bf16.msra.mxu0 %v1188
  %1467 = vmatprep.subr.bf16.mxu0 0
  %1468 = vmatpush1.bf16.msra.mxu0 %v1189
  %1469 = vmatprep.subr.bf16.mxu0 0
  %1470 = vmatpush1.bf16.msra.mxu0 %v1190
  %1471 = vmatprep.mubr.bf16.mxu0 %v640
  %1472 = vmatmul.mubr.bf16.gmra.mrb[0].mxu0 %v639
  %v1473 = vpop.f32.mrb[0].mxu0
  %v1474 = vadd.f32 %v1338, %v1473
  %v1475 = vpop.f32.mrb[0].mxu0
  %v1476 = vpop.f32.mrb[0].mxu0
  %v1477 = vadd.f32 %v1341, %v1476
  %v1478 = vpop.f32.mrb[0].mxu0
  %1479 = vmatprep.mubr.bf16.mxu0 %v649
  %1480 = vmatmul.mubr.bf16.gmra.mrb[0].mxu0 %v648
  %v1481 = vpop.f32.mrb[0].mxu0
  %v1482 = vadd.f32 %v1346, %v1481
  %v1483 = vpop.f32.mrb[0].mxu0
  %v1484 = vpop.f32.mrb[0].mxu0
  %v1485 = vadd.f32 %v1349, %v1484
  %v1486 = vpop.f32.mrb[0].mxu0
  %1487 = vmatprep.mubr.bf16.mxu0 %v658
  %1488 = vmatmul.mubr.bf16.gmra.mrb[0].mxu0 %v657
  %v1489 = vpop.f32.mrb[0].mxu0
  %v1490 = vadd.f32 %v1354, %v1489
  %v1491 = vpop.f32.mrb[0].mxu0
  %v1492 = vpop.f32.mrb[0].mxu0
  %v1493 = vadd.f32 %v1357, %v1492
  %v1494 = vpop.f32.mrb[0].mxu0
  %1495 = vmatprep.mubr.bf16.mxu0 %v667
  %1496 = vmatmul.mubr.bf16.gmra.mrb[0].mxu0 %v666
  %v1497 = vpop.f32.mrb[0].mxu0
  %v1498 = vadd.f32 %v1362, %v1497
  %v1499 = vpop.f32.mrb[0].mxu0
  %v1500 = vpop.f32.mrb[0].mxu0
  %v1501 = vadd.f32 %v1365, %v1500
  %v1502 = vpop.f32.mrb[0].mxu0
  %1503 = vmatprep.mubr.bf16.mxu0 %v676
  %1504 = vmatmul.mubr.bf16.gmra.mrb[0].mxu0 %v675
  %v1505 = vpop.f32.mrb[0].mxu0
  %v1506 = vadd.f32 %v1370, %v1505
  %v1507 = vpop.f32.mrb[0].mxu0
  %v1508 = vpop.f32.mrb[0].mxu0
  %v1509 = vadd.f32 %v1373, %v1508
  %v1510 = vpop.f32.mrb[0].mxu0
  %1511 = vmatprep.mubr.bf16.mxu0 %v685
  %1512 = vmatmul.mubr.bf16.gmra.mrb[0].mxu0 %v684
  %v1513 = vpop.f32.mrb[0].mxu0
  %v1514 = vadd.f32 %v1378, %v1513
  %v1515 = vpop.f32.mrb[0].mxu0
  %v1516 = vpop.f32.mrb[0].mxu0
  %v1517 = vadd.f32 %v1381, %v1516
  %v1518 = vpop.f32.mrb[0].mxu0
  %1519 = vmatprep.mubr.bf16.mxu0 %v694
  %1520 = vmatmul.mubr.bf16.gmra.mrb[0].mxu0 %v693
  %v1521 = vpop.f32.mrb[0].mxu0
  %v1522 = vadd.f32 %v1386, %v1521
  %v1523 = vpop.f32.mrb[0].mxu0
  %v1524 = vpop.f32.mrb[0].mxu0
  %v1525 = vadd.f32 %v1389, %v1524
  %v1526 = vpop.f32.mrb[0].mxu0
  %1527 = vmatprep.mubr.bf16.mxu0 %v703
  %1528 = vmatmul.mubr.bf16.gmra.mrb[0].mxu0 %v702
  %v1529 = vpop.f32.mrb[0].mxu0
  %v1530 = vadd.f32 %v1394, %v1529
  %v1531 = vpop.f32.mrb[0].mxu0
  %v1532 = vpop.f32.mrb[0].mxu0
  %v1533 = vadd.f32 %v1397, %v1532
  %v1534 = vpop.f32.mrb[0].mxu0
  %1535 = vmatprep.mubr.bf16.mxu0 %v712
  %1536 = vmatmul.mubr.bf16.gmra.mrb[0].mxu0 %v711
  %v1537 = vpop.f32.mrb[0].mxu0
  %v1538 = vadd.f32 %v1402, %v1537
  %v1539 = vpop.f32.mrb[0].mxu0
  %v1540 = vpop.f32.mrb[0].mxu0
  %v1541 = vadd.f32 %v1405, %v1540
  %v1542 = vpop.f32.mrb[0].mxu0
  %1543 = vmatprep.mubr.bf16.mxu0 %v721
  %1544 = vmatmul.mubr.bf16.gmra.mrb[0].mxu0 %v720
  %v1545 = vpop.f32.mrb[0].mxu0
  %v1546 = vadd.f32 %v1410, %v1545
  %v1547 = vpop.f32.mrb[0].mxu0
  %v1548 = vpop.f32.mrb[0].mxu0
  %v1549 = vadd.f32 %v1413, %v1548
  %v1550 = vpop.f32.mrb[0].mxu0
  %1551 = vmatprep.mubr.bf16.mxu0 %v730
  %1552 = vmatmul.mubr.bf16.gmra.mrb[0].mxu0 %v729
  %v1553 = vpop.f32.mrb[0].mxu0
  %v1554 = vadd.f32 %v1418, %v1553
  %v1555 = vpop.f32.mrb[0].mxu0
  %v1556 = vpop.f32.mrb[0].mxu0
  %v1557 = vadd.f32 %v1421, %v1556
  %v1558 = vpop.f32.mrb[0].mxu0
  %1559 = vmatprep.mubr.bf16.mxu0 %v739
  %1560 = vmatmul.mubr.bf16.gmra.mrb[0].mxu0 %v738
  %v1561 = vpop.f32.mrb[0].mxu0
  %v1562 = vadd.f32 %v1426, %v1561
  %v1563 = vpop.f32.mrb[0].mxu0
  %v1564 = vpop.f32.mrb[0].mxu0
  %v1565 = vadd.f32 %v1429, %v1564
  %v1566 = vpop.f32.mrb[0].mxu0
  %1567 = vmatprep.mubr.bf16.mxu0 %v748
  %1568 = vmatmul.mubr.bf16.gmra.mrb[0].mxu0 %v747
  %v1569 = vpop.f32.mrb[0].mxu0
  %v1570 = vadd.f32 %v1434, %v1569
  %v1571 = vpop.f32.mrb[0].mxu0
  %v1572 = vpop.f32.mrb[0].mxu0
  %v1573 = vpop.f32.mrb[0].mxu0
  %1574 = vdwg.mxu0
  %1575 = vmatprep.subr.bf16.mxu0 0
  %1576 = vmatpush1.bf16.msra.mxu0 %v1191
  %1577 = vmatprep.subr.bf16.mxu0 0
  %1578 = vmatpush1.bf16.msra.mxu0 %v1192
  %1579 = vmatprep.subr.bf16.mxu0 0
  %1580 = vmatpush1.bf16.msra.mxu0 %v1193
  %1581 = vmatprep.subr.bf16.mxu0 0
  %1582 = vmatpush1.bf16.msra.mxu0 %v1194
  %1583 = vmatprep.subr.bf16.mxu0 0
  %1584 = vmatpush1.bf16.msra.mxu0 %v1195
  %1585 = vmatprep.subr.bf16.mxu0 0
  %1586 = vmatpush1.bf16.msra.mxu0 %v1196
  %1587 = vmatprep.subr.bf16.mxu0 0
  %1588 = vmatpush1.bf16.msra.mxu0 %v1197
  %1589 = vmatprep.subr.bf16.mxu0 0
  %1590 = vmatpush1.bf16.msra.mxu0 %v1198
  %1591 = vmatprep.subr.bf16.mxu0 0
  %1592 = vmatpush1.bf16.msra.mxu0 %v1199
  %1593 = vmatprep.subr.bf16.mxu0 0
  %1594 = vmatpush1.bf16.msra.mxu0 %v1200
  %1595 = vmatprep.subr.bf16.mxu0 0
  %1596 = vmatpush1.bf16.msra.mxu0 %v1201
  %1597 = vmatprep.subr.bf16.mxu0 0
  %1598 = vmatpush1.bf16.msra.mxu0 %v1202
  %1599 = vmatprep.subr.bf16.mxu0 0
  %1600 = vmatpush1.bf16.msra.mxu0 %v1203
  %1601 = vmatprep.subr.bf16.mxu0 0
  %1602 = vmatpush1.bf16.msra.mxu0 %v1204
  %1603 = vmatprep.subr.bf16.mxu0 0
  %1604 = vmatpush1.bf16.msra.mxu0 %v1205
  %1605 = vmatprep.subr.bf16.mxu0 0
  %1606 = vmatpush1.bf16.msra.mxu0 %v1206
  %1607 = vmatprep.mubr.bf16.mxu0 %v642
  %1608 = vmatmul.mubr.bf16.gmra.mrb[0].mxu0 %v641
  %v1609 = vpop.f32.mrb[0].mxu0
  %v1610 = vadd.f32 %v1474, %v1609
  %v1611 = vpop.f32.mrb[0].mxu0
  %v1612 = vpop.f32.mrb[0].mxu0
  %v1613 = vadd.f32 %v1477, %v1612
  %v1614 = vpop.f32.mrb[0].mxu0
  %1615 = vmatprep.mubr.bf16.mxu0 %v651
  %1616 = vmatmul.mubr.bf16.gmra.mrb[0].mxu0 %v650
  %v1617 = vpop.f32.mrb[0].mxu0
  %v1618 = vadd.f32 %v1482, %v1617
  %v1619 = vpop.f32.mrb[0].mxu0
  %v1620 = vpop.f32.mrb[0].mxu0
  %v1621 = vadd.f32 %v1485, %v1620
  %v1622 = vpop.f32.mrb[0].mxu0
  %1623 = vmatprep.mubr.bf16.mxu0 %v660
  %1624 = vmatmul.mubr.bf16.gmra.mrb[0].mxu0 %v659
  %v1625 = vpop.f32.mrb[0].mxu0
  %v1626 = vadd.f32 %v1490, %v1625
  %v1627 = vpop.f32.mrb[0].mxu0
  %v1628 = vpop.f32.mrb[0].mxu0
  %v1629 = vadd.f32 %v1493, %v1628
  %v1630 = vpop.f32.mrb[0].mxu0
  %1631 = vmatprep.mubr.bf16.mxu0 %v669
  %1632 = vmatmul.mubr.bf16.gmra.mrb[0].mxu0 %v668
  %v1633 = vpop.f32.mrb[0].mxu0
  %v1634 = vadd.f32 %v1498, %v1633
  %v1635 = vpop.f32.mrb[0].mxu0
  %v1636 = vpop.f32.mrb[0].mxu0
  %v1637 = vadd.f32 %v1501, %v1636
  %v1638 = vpop.f32.mrb[0].mxu0
  %1639 = vmatprep.mubr.bf16.mxu0 %v678
  %1640 = vmatmul.mubr.bf16.gmra.mrb[0].mxu0 %v677
  %v1641 = vpop.f32.mrb[0].mxu0
  %v1642 = vadd.f32 %v1506, %v1641
  %v1643 = vpop.f32.mrb[0].mxu0
  %v1644 = vpop.f32.mrb[0].mxu0
  %v1645 = vadd.f32 %v1509, %v1644
  %v1646 = vpop.f32.mrb[0].mxu0
  %1647 = vmatprep.mubr.bf16.mxu0 %v687
  %1648 = vmatmul.mubr.bf16.gmra.mrb[0].mxu0 %v686
  %v1649 = vpop.f32.mrb[0].mxu0
  %v1650 = vadd.f32 %v1514, %v1649
  %v1651 = vpop.f32.mrb[0].mxu0
  %v1652 = vpop.f32.mrb[0].mxu0
  %v1653 = vadd.f32 %v1517, %v1652
  %v1654 = vpop.f32.mrb[0].mxu0
  %1655 = vmatprep.mubr.bf16.mxu0 %v696
  %1656 = vmatmul.mubr.bf16.gmra.mrb[0].mxu0 %v695
  %v1657 = vpop.f32.mrb[0].mxu0
  %v1658 = vadd.f32 %v1522, %v1657
  %v1659 = vpop.f32.mrb[0].mxu0
  %v1660 = vpop.f32.mrb[0].mxu0
  %v1661 = vadd.f32 %v1525, %v1660
  %v1662 = vpop.f32.mrb[0].mxu0
  %1663 = vmatprep.mubr.bf16.mxu0 %v705
  %1664 = vmatmul.mubr.bf16.gmra.mrb[0].mxu0 %v704
  %v1665 = vpop.f32.mrb[0].mxu0
  %v1666 = vadd.f32 %v1530, %v1665
  %v1667 = vpop.f32.mrb[0].mxu0
  %v1668 = vpop.f32.mrb[0].mxu0
  %v1669 = vadd.f32 %v1533, %v1668
  %v1670 = vpop.f32.mrb[0].mxu0
  %1671 = vmatprep.mubr.bf16.mxu0 %v714
  %1672 = vmatmul.mubr.bf16.gmra.mrb[0].mxu0 %v713
  %v1673 = vpop.f32.mrb[0].mxu0
  %v1674 = vadd.f32 %v1538, %v1673
  %v1675 = vpop.f32.mrb[0].mxu0
  %v1676 = vpop.f32.mrb[0].mxu0
  %v1677 = vadd.f32 %v1541, %v1676
  %v1678 = vpop.f32.mrb[0].mxu0
  %1679 = vmatprep.mubr.bf16.mxu0 %v723
  %1680 = vmatmul.mubr.bf16.gmra.mrb[0].mxu0 %v722
  %v1681 = vpop.f32.mrb[0].mxu0
  %v1682 = vadd.f32 %v1546, %v1681
  %v1683 = vpop.f32.mrb[0].mxu0
  %v1684 = vpop.f32.mrb[0].mxu0
  %v1685 = vadd.f32 %v1549, %v1684
  %v1686 = vpop.f32.mrb[0].mxu0
  %1687 = vmatprep.mubr.bf16.mxu0 %v732
  %1688 = vmatmul.mubr.bf16.gmra.mrb[0].mxu0 %v731
  %v1689 = vpop.f32.mrb[0].mxu0
  %v1690 = vadd.f32 %v1554, %v1689
  %v1691 = vpop.f32.mrb[0].mxu0
  %v1692 = vpop.f32.mrb[0].mxu0
  %v1693 = vadd.f32 %v1557, %v1692
  %v1694 = vpop.f32.mrb[0].mxu0
  %1695 = vmatprep.mubr.bf16.mxu0 %v741
  %1696 = vmatmul.mubr.bf16.gmra.mrb[0].mxu0 %v740
  %v1697 = vpop.f32.mrb[0].mxu0
  %v1698 = vadd.f32 %v1562, %v1697
  %v1699 = vpop.f32.mrb[0].mxu0
  %v1700 = vpop.f32.mrb[0].mxu0
  %v1701 = vadd.f32 %v1565, %v1700
  %v1702 = vpop.f32.mrb[0].mxu0
  %1703 = vmatprep.mubr.bf16.mxu0 %v750
  %1704 = vmatmul.mubr.bf16.gmra.mrb[0].mxu0 %v749
  %v1705 = vpop.f32.mrb[0].mxu0
  %v1706 = vadd.f32 %v1570, %v1705
  %v1707 = vpop.f32.mrb[0].mxu0
  %v1708 = vpop.f32.mrb[0].mxu0
  %v1709 = vpop.f32.mrb[0].mxu0
  %1710 = vdwg.mxu0
  %1711 = vmatprep.subr.bf16.mxu0 0
  %1712 = vmatpush1.bf16.msra.mxu0 %v1207
  %1713 = vmatprep.subr.bf16.mxu0 0
  %1714 = vmatpush1.bf16.msra.mxu0 %v1208
  %1715 = vmatprep.subr.bf16.mxu0 0
  %1716 = vmatpush1.bf16.msra.mxu0 %v1209
  %1717 = vmatprep.subr.bf16.mxu0 0
  %1718 = vmatpush1.bf16.msra.mxu0 %v1210
  %1719 = vmatprep.subr.bf16.mxu0 0
  %1720 = vmatpush1.bf16.msra.mxu0 %v1211
  %1721 = vmatprep.subr.bf16.mxu0 0
  %1722 = vmatpush1.bf16.msra.mxu0 %v1212
  %1723 = vmatprep.subr.bf16.mxu0 0
  %1724 = vmatpush1.bf16.msra.mxu0 %v1213
  %1725 = vmatprep.subr.bf16.mxu0 0
  %1726 = vmatpush1.bf16.msra.mxu0 %v1214
  %1727 = vmatprep.subr.bf16.mxu0 0
  %1728 = vmatpush1.bf16.msra.mxu0 %v1215
  %1729 = vmatprep.subr.bf16.mxu0 0
  %1730 = vmatpush1.bf16.msra.mxu0 %v1216
  %1731 = vmatprep.subr.bf16.mxu0 0
  %1732 = vmatpush1.bf16.msra.mxu0 %v1217
  %1733 = vmatprep.subr.bf16.mxu0 0
  %1734 = vmatpush1.bf16.msra.mxu0 %v1218
  %1735 = vmatprep.subr.bf16.mxu0 0
  %1736 = vmatpush1.bf16.msra.mxu0 %v1219
  %1737 = vmatprep.subr.bf16.mxu0 0
  %1738 = vmatpush1.bf16.msra.mxu0 %v1220
  %1739 = vmatprep.subr.bf16.mxu0 0
  %1740 = vmatpush1.bf16.msra.mxu0 %v1221
  %1741 = vmatprep.subr.bf16.mxu0 0
  %1742 = vmatpush1.bf16.msra.mxu0 %v1222
  %1743 = vmatprep.mubr.bf16.mxu0 %v644
  %1744 = vmatmul.mubr.bf16.gmra.mrb[0].mxu0 %v643
  %v1745 = vpop.f32.mrb[0].mxu0
  %v1746 = vadd.f32 %v1610, %v1745
  %v1747 = vpop.f32.mrb[0].mxu0
  %v1748 = vpop.f32.mrb[0].mxu0
  %v1749 = vadd.f32 %v1613, %v1748
  %v1750 = vpop.f32.mrb[0].mxu0
  %1751 = vmatprep.mubr.bf16.mxu0 %v653
  %1752 = vmatmul.mubr.bf16.gmra.mrb[0].mxu0 %v652
  %v1753 = vpop.f32.mrb[0].mxu0
  %v1754 = vadd.f32 %v1618, %v1753
  %v1755 = vpop.f32.mrb[0].mxu0
  %v1756 = vpop.f32.mrb[0].mxu0
  %v1757 = vadd.f32 %v1621, %v1756
  %v1758 = vpop.f32.mrb[0].mxu0
  %1759 = vmatprep.mubr.bf16.mxu0 %v662
  %1760 = vmatmul.mubr.bf16.gmra.mrb[0].mxu0 %v661
  %v1761 = vpop.f32.mrb[0].mxu0
  %v1762 = vadd.f32 %v1626, %v1761
  %v1763 = vpop.f32.mrb[0].mxu0
  %v1764 = vpop.f32.mrb[0].mxu0
  %v1765 = vadd.f32 %v1629, %v1764
  %v1766 = vpop.f32.mrb[0].mxu0
  %1767 = vmatprep.mubr.bf16.mxu0 %v671
  %1768 = vmatmul.mubr.bf16.gmra.mrb[0].mxu0 %v670
  %v1769 = vpop.f32.mrb[0].mxu0
  %v1770 = vadd.f32 %v1634, %v1769
  %v1771 = vpop.f32.mrb[0].mxu0
  %v1772 = vpop.f32.mrb[0].mxu0
  %v1773 = vadd.f32 %v1637, %v1772
  %v1774 = vpop.f32.mrb[0].mxu0
  %1775 = vmatprep.mubr.bf16.mxu0 %v680
  %1776 = vmatmul.mubr.bf16.gmra.mrb[0].mxu0 %v679
  %v1777 = vpop.f32.mrb[0].mxu0
  %v1778 = vadd.f32 %v1642, %v1777
  %v1779 = vpop.f32.mrb[0].mxu0
  %v1780 = vpop.f32.mrb[0].mxu0
  %v1781 = vadd.f32 %v1645, %v1780
  %v1782 = vpop.f32.mrb[0].mxu0
  %1783 = vmatprep.mubr.bf16.mxu0 %v689
  %1784 = vmatmul.mubr.bf16.gmra.mrb[0].mxu0 %v688
  %v1785 = vpop.f32.mrb[0].mxu0
  %v1786 = vadd.f32 %v1650, %v1785
  %v1787 = vpop.f32.mrb[0].mxu0
  %v1788 = vpop.f32.mrb[0].mxu0
  %v1789 = vadd.f32 %v1653, %v1788
  %v1790 = vpop.f32.mrb[0].mxu0
  %1791 = vmatprep.mubr.bf16.mxu0 %v698
  %1792 = vmatmul.mubr.bf16.gmra.mrb[0].mxu0 %v697
  %v1793 = vpop.f32.mrb[0].mxu0
  %v1794 = vadd.f32 %v1658, %v1793
  %v1795 = vpop.f32.mrb[0].mxu0
  %v1796 = vpop.f32.mrb[0].mxu0
  %v1797 = vadd.f32 %v1661, %v1796
  %v1798 = vpop.f32.mrb[0].mxu0
  %1799 = vmatprep.mubr.bf16.mxu0 %v707
  %1800 = vmatmul.mubr.bf16.gmra.mrb[0].mxu0 %v706
  %v1801 = vpop.f32.mrb[0].mxu0
  %v1802 = vadd.f32 %v1666, %v1801
  %v1803 = vpop.f32.mrb[0].mxu0
  %v1804 = vpop.f32.mrb[0].mxu0
  %v1805 = vadd.f32 %v1669, %v1804
  %v1806 = vpop.f32.mrb[0].mxu0
  %1807 = vmatprep.mubr.bf16.mxu0 %v716
  %1808 = vmatmul.mubr.bf16.gmra.mrb[0].mxu0 %v715
  %v1809 = vpop.f32.mrb[0].mxu0
  %v1810 = vadd.f32 %v1674, %v1809
  %v1811 = vpop.f32.mrb[0].mxu0
  %v1812 = vpop.f32.mrb[0].mxu0
  %v1813 = vadd.f32 %v1677, %v1812
  %v1814 = vpop.f32.mrb[0].mxu0
  %1815 = vmatprep.mubr.bf16.mxu0 %v725
  %1816 = vmatmul.mubr.bf16.gmra.mrb[0].mxu0 %v724
  %v1817 = vpop.f32.mrb[0].mxu0
  %v1818 = vadd.f32 %v1682, %v1817
  %v1819 = vpop.f32.mrb[0].mxu0
  %v1820 = vpop.f32.mrb[0].mxu0
  %v1821 = vadd.f32 %v1685, %v1820
  %v1822 = vpop.f32.mrb[0].mxu0
  %1823 = vmatprep.mubr.bf16.mxu0 %v734
  %1824 = vmatmul.mubr.bf16.gmra.mrb[0].mxu0 %v733
  %v1825 = vpop.f32.mrb[0].mxu0
  %v1826 = vadd.f32 %v1690, %v1825
  %v1827 = vpop.f32.mrb[0].mxu0
  %v1828 = vpop.f32.mrb[0].mxu0
  %v1829 = vadd.f32 %v1693, %v1828
  %v1830 = vpop.f32.mrb[0].mxu0
  %1831 = vmatprep.mubr.bf16.mxu0 %v743
  %1832 = vmatmul.mubr.bf16.gmra.mrb[0].mxu0 %v742
  %v1833 = vpop.f32.mrb[0].mxu0
  %v1834 = vadd.f32 %v1698, %v1833
  %v1835 = vpop.f32.mrb[0].mxu0
  %v1836 = vpop.f32.mrb[0].mxu0
  %v1837 = vadd.f32 %v1701, %v1836
  %v1838 = vpop.f32.mrb[0].mxu0
  %1839 = vmatprep.mubr.bf16.mxu0 %v752
  %1840 = vmatmul.mubr.bf16.gmra.mrb[0].mxu0 %v751
  %v1841 = vpop.f32.mrb[0].mxu0
  %v1842 = vadd.f32 %v1706, %v1841
  %v1843 = vpop.f32.mrb[0].mxu0
  %v1844 = vpop.f32.mrb[0].mxu0
  %v1845 = vpop.f32.mrb[0].mxu0
  %1846 = vdwg.mxu0
  %1847 = vmatprep.subr.bf16.mxu0 0
  %1848 = vmatpush1.bf16.msra.mxu0 %v1223
  %1849 = vmatprep.subr.bf16.mxu0 0
  %1850 = vmatpush1.bf16.msra.mxu0 %v1224
  %1851 = vmatprep.subr.bf16.mxu0 0
  %1852 = vmatpush1.bf16.msra.mxu0 %v1225
  %1853 = vmatprep.subr.bf16.mxu0 0
  %1854 = vmatpush1.bf16.msra.mxu0 %v1226
  %1855 = vmatprep.subr.bf16.mxu0 0
  %1856 = vmatpush1.bf16.msra.mxu0 %v1227
  %1857 = vmatprep.subr.bf16.mxu0 0
  %1858 = vmatpush1.bf16.msra.mxu0 %v1228
  %1859 = vmatprep.subr.bf16.mxu0 0
  %1860 = vmatpush1.bf16.msra.mxu0 %v1229
  %1861 = vmatprep.subr.bf16.mxu0 0
  %1862 = vmatpush1.bf16.msra.mxu0 %v1230
  %1863 = vmatprep.subr.bf16.mxu0 0
  %1864 = vmatpush1.bf16.msra.mxu0 0
  %1865 = vmatprep.subr.bf16.mxu0 0
  %1866 = vmatpush1.bf16.msra.mxu0 0
  %1867 = vmatprep.subr.bf16.mxu0 0
  %1868 = vmatpush1.bf16.msra.mxu0 0
  %1869 = vmatprep.subr.bf16.mxu0 0
  %1870 = vmatpush1.bf16.msra.mxu0 0
  %1871 = vmatprep.subr.bf16.mxu0 0
  %1872 = vmatpush1.bf16.msra.mxu0 0
  %1873 = vmatprep.subr.bf16.mxu0 0
  %1874 = vmatpush1.bf16.msra.mxu0 0
  %1875 = vmatprep.subr.bf16.mxu0 0
  %1876 = vmatpush1.bf16.msra.mxu0 0
  %1877 = vmatprep.subr.bf16.mxu0 0
  %1878 = vmatpush1.bf16.msra.mxu0 0
  %1879 = vmatprep.mubr.bf16.mxu0 0
  %1880 = vmatmul.mubr.bf16.gmra.mrb[0].mxu0 %v645
  %v1881 = vpop.f32.mrb[0].mxu0
  %v1882 = vadd.f32 %v1746, %v1881
  %v1883 = vpop.f32.mrb[0].mxu0
  %v1884 = vpop.f32.mrb[0].mxu0
  %v1885 = vadd.f32 %v1749, %v1884
  %v1886 = vpop.f32.mrb[0].mxu0
  %1887 = vmatprep.mubr.bf16.mxu0 0
  %1888 = vmatmul.mubr.bf16.gmra.mrb[0].mxu0 %v654
  %v1889 = vpop.f32.mrb[0].mxu0
  %v1890 = vadd.f32 %v1754, %v1889
  %v1891 = vpop.f32.mrb[0].mxu0
  %v1892 = vpop.f32.mrb[0].mxu0
  %v1893 = vadd.f32 %v1757, %v1892
  %v1894 = vpop.f32.mrb[0].mxu0
  %1895 = vmatprep.mubr.bf16.mxu0 0
  %1896 = vmatmul.mubr.bf16.gmra.mrb[0].mxu0 %v663
  %v1897 = vpop.f32.mrb[0].mxu0
  %v1898 = vadd.f32 %v1762, %v1897
  %v1899 = vpop.f32.mrb[0].mxu0
  %v1900 = vpop.f32.mrb[0].mxu0
  %v1901 = vadd.f32 %v1765, %v1900
  %v1902 = vpop.f32.mrb[0].mxu0
  %1903 = vmatprep.mubr.bf16.mxu0 0
  %1904 = vmatmul.mubr.bf16.gmra.mrb[0].mxu0 %v672
  %v1905 = vpop.f32.mrb[0].mxu0
  %v1906 = vadd.f32 %v1770, %v1905
  %v1907 = vpop.f32.mrb[0].mxu0
  %v1908 = vpop.f32.mrb[0].mxu0
  %v1909 = vadd.f32 %v1773, %v1908
  %v1910 = vpop.f32.mrb[0].mxu0
  %1911 = vmatprep.mubr.bf16.mxu0 0
  %1912 = vmatmul.mubr.bf16.gmra.mrb[0].mxu0 %v681
  %v1913 = vpop.f32.mrb[0].mxu0
  %v1914 = vadd.f32 %v1778, %v1913
  %v1915 = vpop.f32.mrb[0].mxu0
  %v1916 = vpop.f32.mrb[0].mxu0
  %v1917 = vadd.f32 %v1781, %v1916
  %v1918 = vpop.f32.mrb[0].mxu0
  %1919 = vmatprep.mubr.bf16.mxu0 0
  %1920 = vmatmul.mubr.bf16.gmra.mrb[0].mxu0 %v690
  %v1921 = vpop.f32.mrb[0].mxu0
  %v1922 = vadd.f32 %v1786, %v1921
  %v1923 = vpop.f32.mrb[0].mxu0
  %v1924 = vpop.f32.mrb[0].mxu0
  %v1925 = vadd.f32 %v1789, %v1924
  %v1926 = vpop.f32.mrb[0].mxu0
  %1927 = vmatprep.mubr.bf16.mxu0 0
  %1928 = vmatmul.mubr.bf16.gmra.mrb[0].mxu0 %v699
  %v1929 = vpop.f32.mrb[0].mxu0
  %v1930 = vadd.f32 %v1794, %v1929
  %v1931 = vpop.f32.mrb[0].mxu0
  %v1932 = vpop.f32.mrb[0].mxu0
  %v1933 = vadd.f32 %v1797, %v1932
  %v1934 = vpop.f32.mrb[0].mxu0
  %1935 = vmatprep.mubr.bf16.mxu0 0
  %1936 = vmatmul.mubr.bf16.gmra.mrb[0].mxu0 %v708
  %v1937 = vpop.f32.mrb[0].mxu0
  %v1938 = vadd.f32 %v1802, %v1937
  %v1939 = vpop.f32.mrb[0].mxu0
  %v1940 = vpop.f32.mrb[0].mxu0
  %v1941 = vadd.f32 %v1805, %v1940
  %v1942 = vpop.f32.mrb[0].mxu0
  %1943 = vmatprep.mubr.bf16.mxu0 0
  %1944 = vmatmul.mubr.bf16.gmra.mrb[0].mxu0 %v717
  %v1945 = vpop.f32.mrb[0].mxu0
  %v1946 = vadd.f32 %v1810, %v1945
  %v1947 = vpop.f32.mrb[0].mxu0
  %v1948 = vpop.f32.mrb[0].mxu0
  %v1949 = vadd.f32 %v1813, %v1948
  %v1950 = vpop.f32.mrb[0].mxu0
  %1951 = vmatprep.mubr.bf16.mxu0 0
  %1952 = vmatmul.mubr.bf16.gmra.mrb[0].mxu0 %v726
  %v1953 = vpop.f32.mrb[0].mxu0
  %v1954 = vadd.f32 %v1818, %v1953
  %v1955 = vpop.f32.mrb[0].mxu0
  %v1956 = vpop.f32.mrb[0].mxu0
  %v1957 = vadd.f32 %v1821, %v1956
  %v1958 = vpop.f32.mrb[0].mxu0
  %1959 = vmatprep.mubr.bf16.mxu0 0
  %1960 = vmatmul.mubr.bf16.gmra.mrb[0].mxu0 %v735
  %v1961 = vpop.f32.mrb[0].mxu0
  %v1962 = vadd.f32 %v1826, %v1961
  %v1963 = vpop.f32.mrb[0].mxu0
  %v1964 = vpop.f32.mrb[0].mxu0
  %v1965 = vadd.f32 %v1829, %v1964
  %v1966 = vpop.f32.mrb[0].mxu0
  %1967 = vmatprep.mubr.bf16.mxu0 0
  %1968 = vmatmul.mubr.bf16.gmra.mrb[0].mxu0 %v744
  %v1969 = vpop.f32.mrb[0].mxu0
  %v1970 = vadd.f32 %v1834, %v1969
  %v1971 = vpop.f32.mrb[0].mxu0
  %v1972 = vpop.f32.mrb[0].mxu0
  %v1973 = vadd.f32 %v1837, %v1972
  %v1974 = vpop.f32.mrb[0].mxu0
  %1975 = vmatprep.mubr.bf16.mxu0 0
  %1976 = vmatmul.mubr.bf16.gmra.mrb[0].mxu0 %v753
  %v1977 = vpop.f32.mrb[0].mxu0
  %v1978 = vadd.f32 %v1842, %v1977
  %v1979 = vpop.f32.mrb[0].mxu0
  %v1980 = vpop.f32.mrb[0].mxu0
  %v1981 = vpop.f32.mrb[0].mxu0
  %1982 = vdwg.mxu0
  %v1983 = vld [vmem:[%s2] sm:$0x1]
  %v1985 = vlaneseq
  %v1986 = vshrl.u32 %v1985, 7
  %v1987 = vsub.s32 0, %v1986
  %v1988 = vrot.slane %v1983, %v1987
  %v1990 = vmul.f32 %v1882, %v1988
  %v1991 = vmul.f32 %v1885, %v1988
  %v1992 = vmul.f32 %v1890, %v1988
  %v1993 = vmul.f32 %v1893, %v1988
  %v1994 = vmul.f32 %v1898, %v1988
  %v1995 = vmul.f32 %v1901, %v1988
  %v1996 = vmul.f32 %v1906, %v1988
  %v1997 = vmul.f32 %v1909, %v1988
  %v1998 = vmul.f32 %v1914, %v1988
  %v1999 = vmul.f32 %v1917, %v1988
  %v2000 = vmul.f32 %v1922, %v1988
  %v2001 = vmul.f32 %v1925, %v1988
  %v2002 = vmul.f32 %v1930, %v1988
  %v2003 = vmul.f32 %v1933, %v1988
  %v2004 = vmul.f32 %v1938, %v1988
  %v2005 = vmul.f32 %v1941, %v1988
  %v2006 = vmul.f32 %v1946, %v1988
  %v2007 = vmul.f32 %v1949, %v1988
  %v2008 = vmul.f32 %v1954, %v1988
  %v2009 = vmul.f32 %v1957, %v1988
  %v2010 = vmul.f32 %v1962, %v1988
  %v2011 = vmul.f32 %v1965, %v1988
  %v2012 = vmul.f32 %v1970, %v1988
  %v2013 = vmul.f32 %v1973, %v1988
  %v2014 = vmul.f32 %v1978, %v1988
  %v2015 = vld [vmem:[%s3] sm:$0x1]
  %v2017 = vlaneseq
  %v2018 = vshrl.u32 %v2017, 7
  %v2019 = vsub.s32 0, %v2018
  %v2020 = vrot.slane %v2015, %v2019
  %v2022 = vadd.f32 %v1990, %v2020
  %v2023 = vadd.f32 %v1991, %v2020
  %v2024 = vadd.f32 %v1992, %v2020
  %v2025 = vadd.f32 %v1993, %v2020
  %v2026 = vadd.f32 %v1994, %v2020
  %v2027 = vadd.f32 %v1995, %v2020
  %v2028 = vadd.f32 %v1996, %v2020
  %v2029 = vadd.f32 %v1997, %v2020
  %v2030 = vadd.f32 %v1998, %v2020
  %v2031 = vadd.f32 %v1999, %v2020
  %v2032 = vadd.f32 %v2000, %v2020
  %v2033 = vadd.f32 %v2001, %v2020
  %v2034 = vadd.f32 %v2002, %v2020
  %v2035 = vadd.f32 %v2003, %v2020
  %v2036 = vadd.f32 %v2004, %v2020
  %v2037 = vadd.f32 %v2005, %v2020
  %v2038 = vadd.f32 %v2006, %v2020
  %v2039 = vadd.f32 %v2007, %v2020
  %v2040 = vadd.f32 %v2008, %v2020
  %v2041 = vadd.f32 %v2009, %v2020
  %v2042 = vadd.f32 %v2010, %v2020
  %v2043 = vadd.f32 %v2011, %v2020
  %v2044 = vadd.f32 %v2012, %v2020
  %v2045 = vadd.f32 %v2013, %v2020
  %v2046 = vadd.f32 %v2014, %v2020
  %v2047 = vmax.f32 %v2022, 0.0
  %v2048 = vmax.f32 %v2023, 0.0
  %v2049 = vmax.f32 %v2024, 0.0
  %v2050 = vmax.f32 %v2025, 0.0
  %v2051 = vmax.f32 %v2026, 0.0
  %v2052 = vmax.f32 %v2027, 0.0
  %v2053 = vmax.f32 %v2028, 0.0
  %v2054 = vmax.f32 %v2029, 0.0
  %v2055 = vmax.f32 %v2030, 0.0
  %v2056 = vmax.f32 %v2031, 0.0
  %v2057 = vmax.f32 %v2032, 0.0
  %v2058 = vmax.f32 %v2033, 0.0
  %v2059 = vmax.f32 %v2034, 0.0
  %v2060 = vmax.f32 %v2035, 0.0
  %v2061 = vmax.f32 %v2036, 0.0
  %v2062 = vmax.f32 %v2037, 0.0
  %v2063 = vmax.f32 %v2038, 0.0
  %v2064 = vmax.f32 %v2039, 0.0
  %v2065 = vmax.f32 %v2040, 0.0
  %v2066 = vmax.f32 %v2041, 0.0
  %v2067 = vmax.f32 %v2042, 0.0
  %v2068 = vmax.f32 %v2043, 0.0
  %v2069 = vmax.f32 %v2044, 0.0
  %v2070 = vmax.f32 %v2045, 0.0
  %v2071 = vmax.f32 %v2046, 0.0
  %2072 = vst [vmem:[%s4] sm:$0xff] %v2047
  %2073 = vst [vmem:[%s4 + $0x8] sm:$0xff] %v2048
  %2074 = vst [vmem:[%s4 + $0x10] sm:$0xff] %v2049
  %2075 = vst [vmem:[%s4 + $0x18] sm:$0xff] %v2050
  %2076 = vst [vmem:[%s4 + $0x20] sm:$0xff] %v2051
  %2077 = vst [vmem:[%s4 + $0x28] sm:$0xff] %v2052
  %2078 = vst [vmem:[%s4 + $0x30] sm:$0xff] %v2053
  %2079 = vst [vmem:[%s4 + $0x38] sm:$0xff] %v2054
  %2080 = vst [vmem:[%s4 + $0x40] sm:$0xff] %v2055
  %2081 = vst [vmem:[%s4 + $0x48] sm:$0xff] %v2056
  %2082 = vst [vmem:[%s4 + $0x50] sm:$0xff] %v2057
  %2083 = vst [vmem:[%s4 + $0x58] sm:$0xff] %v2058
  %2084 = vst [vmem:[%s4 + $0x60] sm:$0xff] %v2059
  %2085 = vst [vmem:[%s4 + $0x68] sm:$0xff] %v2060
  %2086 = vst [vmem:[%s4 + $0x70] sm:$0xff] %v2061
  %2087 = vst [vmem:[%s4 + $0x78] sm:$0xff] %v2062
  %2088 = vst [vmem:[%s4 + $0x80] sm:$0xff] %v2063
  %2089 = vst [vmem:[%s4 + $0x88] sm:$0xff] %v2064
  %2090 = vst [vmem:[%s4 + $0x90] sm:$0xff] %v2065
  %2091 = vst [vmem:[%s4 + $0x98] sm:$0xff] %v2066
  %2092 = vst [vmem:[%s4 + $0xa0] sm:$0xff] %v2067
  %2093 = vst [vmem:[%s4 + $0xa8] sm:$0xff] %v2068
  %2094 = vst [vmem:[%s4 + $0xb0] sm:$0xff] %v2069
  %2095 = vst [vmem:[%s4 + $0xb8] sm:$0xff] %v2070
  %2096 = vst [vmem:[%s4 + $0xc0] sm:$0xff] %v2071
  // Predicated region
  $region18: #{forward.14} parent=0 // pred_check
    _
  $region19: #{forward.14} parent=0 // pred_check_branch
    %2098 = sbr.rel (0) target = $region21
  $region20: #{forward.14} parent=0 // pred_region
    _
  $region21: #{forward.14} parent=0 // pred_fallthru
    _
  // Predicated region
  $region22: #{forward.14} parent=0 // pred_check
    _
  $region23: #{forward.14} parent=0 // pred_check_branch
    %2100 = sbr.rel (0) target = $region25
  $region24: #{forward.14} parent=0 // pred_region
    _
  $region25: #{forward.14} parent=0 // pred_fallthru
    _

// kernel: forward.15
$region0: #{forward.15}
  #allocation0 [shape = 'u32[]', space=smem, size = 0x4, offset = 0x4, fixed_abs, tag = 'smem constant byte address 0x4 - core index']
  #allocation1 [shape = 'u32[144,128]{1,0:T(1,128)}', space=vmem, size = 0x12000, scoped, tag = 'internal scratch']
  %s0 = inlined_call_operand.vmem [shape: bf16[200,1152], index: 0, kind: input, shape index: {}]
  %s1 = inlined_call_operand.vmem [shape: bf16[1152,128], index: 1, kind: input, shape index: {}]
  %s2 = inlined_call_operand.vmem [shape: f32[1,128], index: 2, kind: input, shape index: {}]
  %s3 = inlined_call_operand.vmem [shape: f32[1,128], index: 3, kind: input, shape index: {}]
  %s4 = inlined_call_operand.vmem [shape: f32[200,128], index: 4, kind: input, shape index: {}]
  %s5 = inlined_call_operand.vmem [shape: f32[200,128], index: 5, kind: output, shape index: {}]
  %s6 = sld [smem:[#allocation0]]
  $region30: #{forward.15} parent=0
    _
  %s8 = ssub.s32 1, %s6
  %s9 = scalar_select 0, %s8, %s6
  // Predicated region
  $region2: #{forward.15} parent=0 // pred_check
    _
  $region3: #{forward.15} parent=0 // pred_check_branch
    %11 = sbr.rel (0) target = $region5
  $region4: #{forward.15} parent=0 // pred_region
    _
  $region5: #{forward.15} parent=0 // pred_fallthru
    _
  // Predicated region
  $region6: #{forward.15} parent=0 // pred_check
    _
  $region7: #{forward.15} parent=0 // pred_check_branch
    %13 = sbr.rel (0) target = $region9
  $region8: #{forward.15} parent=0 // pred_region
    _
  $region9: #{forward.15} parent=0 // pred_fallthru
    _
  // Predicated region
  $region10: #{forward.15} parent=0 // pred_check
    _
  $region11: #{forward.15} parent=0 // pred_check_branch
    %15 = sbr.rel (0) target = $region13
  $region12: #{forward.15} parent=0 // pred_region
    _
  $region13: #{forward.15} parent=0 // pred_fallthru
    _
  // Predicated region
  $region14: #{forward.15} parent=0 // pred_check
    _
  $region15: #{forward.15} parent=0 // pred_check_branch
    %17 = sbr.rel (0) target = $region17
  $region16: #{forward.15} parent=0 // pred_region
    _
  $region17: #{forward.15} parent=0 // pred_fallthru
    _
  // Predicated region
  $region18: #{forward.15} parent=0 // pred_check
    _
  $region19: #{forward.15} parent=0 // pred_check_branch
    %19 = sbr.rel (0) target = $region21
  $region20: #{forward.15} parent=0 // pred_region
    _
  $region21: #{forward.15} parent=0 // pred_fallthru
    _
  %v21 = vld [vmem:[%s0] sm:$0xff]
  %v22 = vld [vmem:[%s0 + $0x8] sm:$0xff]
  %v23 = vld [vmem:[%s0 + $0x10] sm:$0xff]
  %v24 = vld [vmem:[%s0 + $0x18] sm:$0xff]
  %v25 = vld [vmem:[%s0 + $0x20] sm:$0xf]
  %v26 = vld [vmem:[%s0 + $0x24] sm:$0xff]
  %v27 = vld [vmem:[%s0 + $0x2c] sm:$0xff]
  %v28 = vld [vmem:[%s0 + $0x34] sm:$0xff]
  %v29 = vld [vmem:[%s0 + $0x3c] sm:$0xff]
  %v30 = vld [vmem:[%s0 + $0x44] sm:$0xf]
  %v31 = vld [vmem:[%s0 + $0x48] sm:$0xff]
  %v32 = vld [vmem:[%s0 + $0x50] sm:$0xff]
  %v33 = vld [vmem:[%s0 + $0x58] sm:$0xff]
  %v34 = vld [vmem:[%s0 + $0x60] sm:$0xff]
  %v35 = vld [vmem:[%s0 + $0x68] sm:$0xf]
  %v36 = vld [vmem:[%s0 + $0x6c] sm:$0xff]
  %v37 = vld [vmem:[%s0 + $0x74] sm:$0xff]
  %v38 = vld [vmem:[%s0 + $0x7c] sm:$0xff]
  %v39 = vld [vmem:[%s0 + $0x84] sm:$0xff]
  %v40 = vld [vmem:[%s0 + $0x8c] sm:$0xf]
  %v41 = vld [vmem:[%s0 + $0x90] sm:$0xff]
  %v42 = vld [vmem:[%s0 + $0x98] sm:$0xff]
  %v43 = vld [vmem:[%s0 + $0xa0] sm:$0xff]
  %v44 = vld [vmem:[%s0 + $0xa8] sm:$0xff]
  %v45 = vld [vmem:[%s0 + $0xb0] sm:$0xf]
  %v46 = vld [vmem:[%s0 + $0xb4] sm:$0xff]
  %v47 = vld [vmem:[%s0 + $0xbc] sm:$0xff]
  %v48 = vld [vmem:[%s0 + $0xc4] sm:$0xff]
  %v49 = vld [vmem:[%s0 + $0xcc] sm:$0xff]
  %v50 = vld [vmem:[%s0 + $0xd4] sm:$0xf]
  %v51 = vld [vmem:[%s0 + $0xd8] sm:$0xff]
  %v52 = vld [vmem:[%s0 + $0xe0] sm:$0xff]
  %v53 = vld [vmem:[%s0 + $0xe8] sm:$0xff]
  %v54 = vld [vmem:[%s0 + $0xf0] sm:$0xff]
  %v55 = vld [vmem:[%s0 + $0xf8] sm:$0xf]
  %v56 = vld [vmem:[%s0 + $0xfc] sm:$0xff]
  %v57 = vld [vmem:[%s0 + $0x104] sm:$0xff]
  %v58 = vld [vmem:[%s0 + $0x10c] sm:$0xff]
  %v59 = vld [vmem:[%s0 + $0x114] sm:$0xff]
  %v60 = vld [vmem:[%s0 + $0x11c] sm:$0xf]
  %v61 = vld [vmem:[%s0 + $0x120] sm:$0xff]
  %v62 = vld [vmem:[%s0 + $0x128] sm:$0xff]
  %v63 = vld [vmem:[%s0 + $0x130] sm:$0xff]
  %v64 = vld [vmem:[%s0 + $0x138] sm:$0xff]
  %v65 = vld [vmem:[%s0 + $0x140] sm:$0xf]
  %v66 = vld [vmem:[%s0 + $0x144] sm:$0xff]
  %v67 = vld [vmem:[%s0 + $0x14c] sm:$0xff]
  %v68 = vld [vmem:[%s0 + $0x154] sm:$0xff]
  %v69 = vld [vmem:[%s0 + $0x15c] sm:$0xff]
  %v70 = vld [vmem:[%s0 + $0x164] sm:$0xf]
  %v71 = vld [vmem:[%s0 + $0x168] sm:$0xff]
  %v72 = vld [vmem:[%s0 + $0x170] sm:$0xff]
  %v73 = vld [vmem:[%s0 + $0x178] sm:$0xff]
  %v74 = vld [vmem:[%s0 + $0x180] sm:$0xff]
  %v75 = vld [vmem:[%s0 + $0x188] sm:$0xf]
  %v76 = vld [vmem:[%s0 + $0x18c] sm:$0xff]
  %v77 = vld [vmem:[%s0 + $0x194] sm:$0xff]
  %v78 = vld [vmem:[%s0 + $0x19c] sm:$0xff]
  %v79 = vld [vmem:[%s0 + $0x1a4] sm:$0xff]
  %v80 = vld [vmem:[%s0 + $0x1ac] sm:$0xf]
  %v81 = vld [vmem:[%s0 + $0x1b0] sm:$0xff]
  %v82 = vld [vmem:[%s0 + $0x1b8] sm:$0xff]
  %v83 = vld [vmem:[%s0 + $0x1c0] sm:$0xff]
  %v84 = vld [vmem:[%s0 + $0x1c8] sm:$0xff]
  %v85 = vld [vmem:[%s0 + $0x1d0] sm:$0xf]
  %v86 = vld [vmem:[%s0 + $0x1d4] sm:$0xff]
  %v87 = vld [vmem:[%s0 + $0x1dc] sm:$0xff]
  %v88 = vld [vmem:[%s0 + $0x1e4] sm:$0xff]
  %v89 = vld [vmem:[%s0 + $0x1ec] sm:$0xff]
  %v90 = vld [vmem:[%s0 + $0x1f4] sm:$0xf]
  %v91 = vld [vmem:[%s0 + $0x1f8] sm:$0xff]
  %v92 = vld [vmem:[%s0 + $0x200] sm:$0xff]
  %v93 = vld [vmem:[%s0 + $0x208] sm:$0xff]
  %v94 = vld [vmem:[%s0 + $0x210] sm:$0xff]
  %v95 = vld [vmem:[%s0 + $0x218] sm:$0xf]
  %v96 = vld [vmem:[%s0 + $0x21c] sm:$0xff]
  %v97 = vld [vmem:[%s0 + $0x224] sm:$0xff]
  %v98 = vld [vmem:[%s0 + $0x22c] sm:$0xff]
  %v99 = vld [vmem:[%s0 + $0x234] sm:$0xff]
  %v100 = vld [vmem:[%s0 + $0x23c] sm:$0xf]
  %v101 = vld [vmem:[%s0 + $0x240] sm:$0xff]
  %v102 = vld [vmem:[%s0 + $0x248] sm:$0xff]
  %v103 = vld [vmem:[%s0 + $0x250] sm:$0xff]
  %v104 = vld [vmem:[%s0 + $0x258] sm:$0xff]
  %v105 = vld [vmem:[%s0 + $0x260] sm:$0xf]
  %v106 = vld [vmem:[%s0 + $0x264] sm:$0xff]
  %v107 = vld [vmem:[%s0 + $0x26c] sm:$0xff]
  %v108 = vld [vmem:[%s0 + $0x274] sm:$0xff]
  %v109 = vld [vmem:[%s0 + $0x27c] sm:$0xff]
  %v110 = vld [vmem:[%s0 + $0x284] sm:$0xf]
  %v111 = vld [vmem:[%s0 + $0x288] sm:$0xff]
  %v112 = vld [vmem:[%s0 + $0x290] sm:$0xff]
  %v113 = vld [vmem:[%s0 + $0x298] sm:$0xff]
  %v114 = vld [vmem:[%s0 + $0x2a0] sm:$0xff]
  %v115 = vld [vmem:[%s0 + $0x2a8] sm:$0xf]
  %v116 = vld [vmem:[%s0 + $0x2ac] sm:$0xff]
  %v117 = vld [vmem:[%s0 + $0x2b4] sm:$0xff]
  %v118 = vld [vmem:[%s0 + $0x2bc] sm:$0xff]
  %v119 = vld [vmem:[%s0 + $0x2c4] sm:$0xff]
  %v120 = vld [vmem:[%s0 + $0x2cc] sm:$0xf]
  %v121 = vld [vmem:[%s0 + $0x2d0] sm:$0xff]
  %v122 = vld [vmem:[%s0 + $0x2d8] sm:$0xff]
  %v123 = vld [vmem:[%s0 + $0x2e0] sm:$0xff]
  %v124 = vld [vmem:[%s0 + $0x2e8] sm:$0xff]
  %v125 = vld [vmem:[%s0 + $0x2f0] sm:$0xf]
  %v126 = vld [vmem:[%s0 + $0x2f4] sm:$0xff]
  %v127 = vld [vmem:[%s0 + $0x2fc] sm:$0xff]
  %v128 = vld [vmem:[%s0 + $0x304] sm:$0xff]
  %v129 = vld [vmem:[%s0 + $0x30c] sm:$0xff]
  %v130 = vld [vmem:[%s0 + $0x314] sm:$0xf]
  %v131 = vld [vmem:[%s0 + $0x318] sm:$0xff]
  %v132 = vld [vmem:[%s0 + $0x320] sm:$0xff]
  %v133 = vld [vmem:[%s0 + $0x328] sm:$0xff]
  %v134 = vld [vmem:[%s0 + $0x330] sm:$0xff]
  %v135 = vld [vmem:[%s0 + $0x338] sm:$0xf]
  %v136 = vld [vmem:[%s0 + $0x33c] sm:$0xff]
  %v137 = vld [vmem:[%s0 + $0x344] sm:$0xff]
  %v138 = vld [vmem:[%s0 + $0x34c] sm:$0xff]
  %v139 = vld [vmem:[%s0 + $0x354] sm:$0xff]
  %v140 = vld [vmem:[%s0 + $0x35c] sm:$0xf]
  %v141 = vld [vmem:[%s0 + $0x360] sm:$0xff]
  %v142 = vld [vmem:[%s0 + $0x368] sm:$0xff]
  %v143 = vld [vmem:[%s0 + $0x370] sm:$0xff]
  %v144 = vld [vmem:[%s0 + $0x378] sm:$0xff]
  %v145 = vld [vmem:[%s0 + $0x380] sm:$0xf]
  %v146 = vld [vmem:[%s1] sm:$0xf]
  %v147 = vld [vmem:[%s1 + $0x4] sm:$0xf]
  %v148 = vld [vmem:[%s1 + $0x8] sm:$0xf]
  %v149 = vld [vmem:[%s1 + $0xc] sm:$0xf]
  %v150 = vld [vmem:[%s1 + $0x10] sm:$0xf]
  %v151 = vld [vmem:[%s1 + $0x14] sm:$0xf]
  %v152 = vld [vmem:[%s1 + $0x18] sm:$0xf]
  %v153 = vld [vmem:[%s1 + $0x1c] sm:$0xf]
  %v154 = vld [vmem:[%s1 + $0x20] sm:$0xf]
  %v155 = vld [vmem:[%s1 + $0x24] sm:$0xf]
  %v156 = vld [vmem:[%s1 + $0x28] sm:$0xf]
  %v157 = vld [vmem:[%s1 + $0x2c] sm:$0xf]
  %v158 = vld [vmem:[%s1 + $0x30] sm:$0xf]
  %v159 = vld [vmem:[%s1 + $0x34] sm:$0xf]
  %v160 = vld [vmem:[%s1 + $0x38] sm:$0xf]
  %v161 = vld [vmem:[%s1 + $0x3c] sm:$0xf]
  %v162 = vld [vmem:[%s1 + $0x40] sm:$0xf]
  %v163 = vld [vmem:[%s1 + $0x44] sm:$0xf]
  %v164 = vld [vmem:[%s1 + $0x48] sm:$0xf]
  %v165 = vld [vmem:[%s1 + $0x4c] sm:$0xf]
  %v166 = vld [vmem:[%s1 + $0x50] sm:$0xf]
  %v167 = vld [vmem:[%s1 + $0x54] sm:$0xf]
  %v168 = vld [vmem:[%s1 + $0x58] sm:$0xf]
  %v169 = vld [vmem:[%s1 + $0x5c] sm:$0xf]
  %v170 = vld [vmem:[%s1 + $0x60] sm:$0xf]
  %v171 = vld [vmem:[%s1 + $0x64] sm:$0xf]
  %v172 = vld [vmem:[%s1 + $0x68] sm:$0xf]
  %v173 = vld [vmem:[%s1 + $0x6c] sm:$0xf]
  %v174 = vld [vmem:[%s1 + $0x70] sm:$0xf]
  %v175 = vld [vmem:[%s1 + $0x74] sm:$0xf]
  %v176 = vld [vmem:[%s1 + $0x78] sm:$0xf]
  %v177 = vld [vmem:[%s1 + $0x7c] sm:$0xf]
  %v178 = vld [vmem:[%s1 + $0x80] sm:$0xf]
  %v179 = vld [vmem:[%s1 + $0x84] sm:$0xf]
  %v180 = vld [vmem:[%s1 + $0x88] sm:$0xf]
  %v181 = vld [vmem:[%s1 + $0x8c] sm:$0xf]
  %v182 = vld [vmem:[%s1 + $0x90] sm:$0xf]
  %v183 = vld [vmem:[%s1 + $0x94] sm:$0xf]
  %v184 = vld [vmem:[%s1 + $0x98] sm:$0xf]
  %v185 = vld [vmem:[%s1 + $0x9c] sm:$0xf]
  %v186 = vld [vmem:[%s1 + $0xa0] sm:$0xf]
  %v187 = vld [vmem:[%s1 + $0xa4] sm:$0xf]
  %v188 = vld [vmem:[%s1 + $0xa8] sm:$0xf]
  %v189 = vld [vmem:[%s1 + $0xac] sm:$0xf]
  %v190 = vld [vmem:[%s1 + $0xb0] sm:$0xf]
  %v191 = vld [vmem:[%s1 + $0xb4] sm:$0xf]
  %v192 = vld [vmem:[%s1 + $0xb8] sm:$0xf]
  %v193 = vld [vmem:[%s1 + $0xbc] sm:$0xf]
  %v194 = vld [vmem:[%s1 + $0xc0] sm:$0xf]
  %v195 = vld [vmem:[%s1 + $0xc4] sm:$0xf]
  %v196 = vld [vmem:[%s1 + $0xc8] sm:$0xf]
  %v197 = vld [vmem:[%s1 + $0xcc] sm:$0xf]
  %v198 = vld [vmem:[%s1 + $0xd0] sm:$0xf]
  %v199 = vld [vmem:[%s1 + $0xd4] sm:$0xf]
  %v200 = vld [vmem:[%s1 + $0xd8] sm:$0xf]
  %v201 = vld [vmem:[%s1 + $0xdc] sm:$0xf]
  %v202 = vld [vmem:[%s1 + $0xe0] sm:$0xf]
  %v203 = vld [vmem:[%s1 + $0xe4] sm:$0xf]
  %v204 = vld [vmem:[%s1 + $0xe8] sm:$0xf]
  %v205 = vld [vmem:[%s1 + $0xec] sm:$0xf]
  %v206 = vld [vmem:[%s1 + $0xf0] sm:$0xf]
  %v207 = vld [vmem:[%s1 + $0xf4] sm:$0xf]
  %v208 = vld [vmem:[%s1 + $0xf8] sm:$0xf]
  %v209 = vld [vmem:[%s1 + $0xfc] sm:$0xf]
  %v210 = vld [vmem:[%s1 + $0x100] sm:$0xf]
  %v211 = vld [vmem:[%s1 + $0x104] sm:$0xf]
  %v212 = vld [vmem:[%s1 + $0x108] sm:$0xf]
  %v213 = vld [vmem:[%s1 + $0x10c] sm:$0xf]
  %v214 = vld [vmem:[%s1 + $0x110] sm:$0xf]
  %v215 = vld [vmem:[%s1 + $0x114] sm:$0xf]
  %v216 = vld [vmem:[%s1 + $0x118] sm:$0xf]
  %v217 = vld [vmem:[%s1 + $0x11c] sm:$0xf]
  %v218 = vld [vmem:[%s1 + $0x120] sm:$0xf]
  %v219 = vld [vmem:[%s1 + $0x124] sm:$0xf]
  %v220 = vld [vmem:[%s1 + $0x128] sm:$0xf]
  %v221 = vld [vmem:[%s1 + $0x12c] sm:$0xf]
  %v222 = vld [vmem:[%s1 + $0x130] sm:$0xf]
  %v223 = vld [vmem:[%s1 + $0x134] sm:$0xf]
  %v224 = vld [vmem:[%s1 + $0x138] sm:$0xf]
  %v225 = vld [vmem:[%s1 + $0x13c] sm:$0xf]
  %v226 = vld [vmem:[%s1 + $0x140] sm:$0xf]
  %v227 = vld [vmem:[%s1 + $0x144] sm:$0xf]
  %v228 = vld [vmem:[%s1 + $0x148] sm:$0xf]
  %v229 = vld [vmem:[%s1 + $0x14c] sm:$0xf]
  %v230 = vld [vmem:[%s1 + $0x150] sm:$0xf]
  %v231 = vld [vmem:[%s1 + $0x154] sm:$0xf]
  %v232 = vld [vmem:[%s1 + $0x158] sm:$0xf]
  %v233 = vld [vmem:[%s1 + $0x15c] sm:$0xf]
  %v234 = vld [vmem:[%s1 + $0x160] sm:$0xf]
  %v235 = vld [vmem:[%s1 + $0x164] sm:$0xf]
  %v236 = vld [vmem:[%s1 + $0x168] sm:$0xf]
  %v237 = vld [vmem:[%s1 + $0x16c] sm:$0xf]
  %v238 = vld [vmem:[%s1 + $0x170] sm:$0xf]
  %v239 = vld [vmem:[%s1 + $0x174] sm:$0xf]
  %v240 = vld [vmem:[%s1 + $0x178] sm:$0xf]
  %v241 = vld [vmem:[%s1 + $0x17c] sm:$0xf]
  %v242 = vld [vmem:[%s1 + $0x180] sm:$0xf]
  %v243 = vld [vmem:[%s1 + $0x184] sm:$0xf]
  %v244 = vld [vmem:[%s1 + $0x188] sm:$0xf]
  %v245 = vld [vmem:[%s1 + $0x18c] sm:$0xf]
  %v246 = vld [vmem:[%s1 + $0x190] sm:$0xf]
  %v247 = vld [vmem:[%s1 + $0x194] sm:$0xf]
  %v248 = vld [vmem:[%s1 + $0x198] sm:$0xf]
  %v249 = vld [vmem:[%s1 + $0x19c] sm:$0xf]
  %v250 = vld [vmem:[%s1 + $0x1a0] sm:$0xf]
  %v251 = vld [vmem:[%s1 + $0x1a4] sm:$0xf]
  %v252 = vld [vmem:[%s1 + $0x1a8] sm:$0xf]
  %v253 = vld [vmem:[%s1 + $0x1ac] sm:$0xf]
  %v254 = vld [vmem:[%s1 + $0x1b0] sm:$0xf]
  %v255 = vld [vmem:[%s1 + $0x1b4] sm:$0xf]
  %v256 = vld [vmem:[%s1 + $0x1b8] sm:$0xf]
  %v257 = vld [vmem:[%s1 + $0x1bc] sm:$0xf]
  %v258 = vld [vmem:[%s1 + $0x1c0] sm:$0xf]
  %v259 = vld [vmem:[%s1 + $0x1c4] sm:$0xf]
  %v260 = vld [vmem:[%s1 + $0x1c8] sm:$0xf]
  %v261 = vld [vmem:[%s1 + $0x1cc] sm:$0xf]
  %v262 = vld [vmem:[%s1 + $0x1d0] sm:$0xf]
  %v263 = vld [vmem:[%s1 + $0x1d4] sm:$0xf]
  %v264 = vld [vmem:[%s1 + $0x1d8] sm:$0xf]
  %v265 = vld [vmem:[%s1 + $0x1dc] sm:$0xf]
  %v266 = vld [vmem:[%s1 + $0x1e0] sm:$0xf]
  %v267 = vld [vmem:[%s1 + $0x1e4] sm:$0xf]
  %v268 = vld [vmem:[%s1 + $0x1e8] sm:$0xf]
  %v269 = vld [vmem:[%s1 + $0x1ec] sm:$0xf]
  %v270 = vld [vmem:[%s1 + $0x1f0] sm:$0xf]
  %v271 = vld [vmem:[%s1 + $0x1f4] sm:$0xf]
  %v272 = vld [vmem:[%s1 + $0x1f8] sm:$0xf]
  %v273 = vld [vmem:[%s1 + $0x1fc] sm:$0xf]
  %v274 = vld [vmem:[%s1 + $0x200] sm:$0xf]
  %v275 = vld [vmem:[%s1 + $0x204] sm:$0xf]
  %v276 = vld [vmem:[%s1 + $0x208] sm:$0xf]
  %v277 = vld [vmem:[%s1 + $0x20c] sm:$0xf]
  %v278 = vld [vmem:[%s1 + $0x210] sm:$0xf]
  %v279 = vld [vmem:[%s1 + $0x214] sm:$0xf]
  %v280 = vld [vmem:[%s1 + $0x218] sm:$0xf]
  %v281 = vld [vmem:[%s1 + $0x21c] sm:$0xf]
  %v282 = vld [vmem:[%s1 + $0x220] sm:$0xf]
  %v283 = vld [vmem:[%s1 + $0x224] sm:$0xf]
  %v284 = vld [vmem:[%s1 + $0x228] sm:$0xf]
  %v285 = vld [vmem:[%s1 + $0x22c] sm:$0xf]
  %v286 = vld [vmem:[%s1 + $0x230] sm:$0xf]
  %v287 = vld [vmem:[%s1 + $0x234] sm:$0xf]
  %v288 = vld [vmem:[%s1 + $0x238] sm:$0xf]
  %v289 = vld [vmem:[%s1 + $0x23c] sm:$0xf]
  %v415 = vunpack.c.l.b16 %v21
  %v416 = vunpack.c.h.b16 %v21
  %v417 = vunpack.c.l.b16 %v22
  %v418 = vunpack.c.h.b16 %v22
  %v419 = vunpack.c.l.b16 %v23
  %v420 = vunpack.c.h.b16 %v23
  %v421 = vunpack.c.l.b16 %v24
  %v422 = vunpack.c.h.b16 %v24
  %v423 = vunpack.c.l.b16 %v25
  %v424 = vunpack.c.l.b16 %v26
  %v425 = vunpack.c.h.b16 %v26
  %v426 = vunpack.c.l.b16 %v27
  %v427 = vunpack.c.h.b16 %v27
  %v428 = vunpack.c.l.b16 %v28
  %v429 = vunpack.c.h.b16 %v28
  %v430 = vunpack.c.l.b16 %v29
  %v431 = vunpack.c.h.b16 %v29
  %v432 = vunpack.c.l.b16 %v30
  %v433 = vunpack.c.l.b16 %v31
  %v434 = vunpack.c.h.b16 %v31
  %v435 = vunpack.c.l.b16 %v32
  %v436 = vunpack.c.h.b16 %v32
  %v437 = vunpack.c.l.b16 %v33
  %v438 = vunpack.c.h.b16 %v33
  %v439 = vunpack.c.l.b16 %v34
  %v440 = vunpack.c.h.b16 %v34
  %v441 = vunpack.c.l.b16 %v35
  %v442 = vunpack.c.l.b16 %v36
  %v443 = vunpack.c.h.b16 %v36
  %v444 = vunpack.c.l.b16 %v37
  %v445 = vunpack.c.h.b16 %v37
  %v446 = vunpack.c.l.b16 %v38
  %v447 = vunpack.c.h.b16 %v38
  %v448 = vunpack.c.l.b16 %v39
  %v449 = vunpack.c.h.b16 %v39
  %v450 = vunpack.c.l.b16 %v40
  %v451 = vunpack.c.l.b16 %v41
  %v452 = vunpack.c.h.b16 %v41
  %v453 = vunpack.c.l.b16 %v42
  %v454 = vunpack.c.h.b16 %v42
  %v455 = vunpack.c.l.b16 %v43
  %v456 = vunpack.c.h.b16 %v43
  %v457 = vunpack.c.l.b16 %v44
  %v458 = vunpack.c.h.b16 %v44
  %v459 = vunpack.c.l.b16 %v45
  %v460 = vunpack.c.l.b16 %v46
  %v461 = vunpack.c.h.b16 %v46
  %v462 = vunpack.c.l.b16 %v47
  %v463 = vunpack.c.h.b16 %v47
  %v464 = vunpack.c.l.b16 %v48
  %v465 = vunpack.c.h.b16 %v48
  %v466 = vunpack.c.l.b16 %v49
  %v467 = vunpack.c.h.b16 %v49
  %v468 = vunpack.c.l.b16 %v50
  %v469 = vunpack.c.l.b16 %v51
  %v470 = vunpack.c.h.b16 %v51
  %v471 = vunpack.c.l.b16 %v52
  %v472 = vunpack.c.h.b16 %v52
  %v473 = vunpack.c.l.b16 %v53
  %v474 = vunpack.c.h.b16 %v53
  %v475 = vunpack.c.l.b16 %v54
  %v476 = vunpack.c.h.b16 %v54
  %v477 = vunpack.c.l.b16 %v55
  %v478 = vunpack.c.l.b16 %v56
  %v479 = vunpack.c.h.b16 %v56
  %v480 = vunpack.c.l.b16 %v57
  %v481 = vunpack.c.h.b16 %v57
  %v482 = vunpack.c.l.b16 %v58
  %v483 = vunpack.c.h.b16 %v58
  %v484 = vunpack.c.l.b16 %v59
  %v485 = vunpack.c.h.b16 %v59
  %v486 = vunpack.c.l.b16 %v60
  %v487 = vunpack.c.l.b16 %v61
  %v488 = vunpack.c.h.b16 %v61
  %v489 = vunpack.c.l.b16 %v62
  %v490 = vunpack.c.h.b16 %v62
  %v491 = vunpack.c.l.b16 %v63
  %v492 = vunpack.c.h.b16 %v63
  %v493 = vunpack.c.l.b16 %v64
  %v494 = vunpack.c.h.b16 %v64
  %v495 = vunpack.c.l.b16 %v65
  %v496 = vunpack.c.l.b16 %v66
  %v497 = vunpack.c.h.b16 %v66
  %v498 = vunpack.c.l.b16 %v67
  %v499 = vunpack.c.h.b16 %v67
  %v500 = vunpack.c.l.b16 %v68
  %v501 = vunpack.c.h.b16 %v68
  %v502 = vunpack.c.l.b16 %v69
  %v503 = vunpack.c.h.b16 %v69
  %v504 = vunpack.c.l.b16 %v70
  %v505 = vunpack.c.l.b16 %v71
  %v506 = vunpack.c.h.b16 %v71
  %v507 = vunpack.c.l.b16 %v72
  %v508 = vunpack.c.h.b16 %v72
  %v509 = vunpack.c.l.b16 %v73
  %v510 = vunpack.c.h.b16 %v73
  %v511 = vunpack.c.l.b16 %v74
  %v512 = vunpack.c.h.b16 %v74
  %v513 = vunpack.c.l.b16 %v75
  %v514 = vunpack.c.l.b16 %v76
  %v515 = vunpack.c.h.b16 %v76
  %v516 = vunpack.c.l.b16 %v77
  %v517 = vunpack.c.h.b16 %v77
  %v518 = vunpack.c.l.b16 %v78
  %v519 = vunpack.c.h.b16 %v78
  %v520 = vunpack.c.l.b16 %v79
  %v521 = vunpack.c.h.b16 %v79
  %v522 = vunpack.c.l.b16 %v80
  %v523 = vunpack.c.l.b16 %v81
  %v524 = vunpack.c.h.b16 %v81
  %v525 = vunpack.c.l.b16 %v82
  %v526 = vunpack.c.h.b16 %v82
  %v527 = vunpack.c.l.b16 %v83
  %v528 = vunpack.c.h.b16 %v83
  %v529 = vunpack.c.l.b16 %v84
  %v530 = vunpack.c.h.b16 %v84
  %v531 = vunpack.c.l.b16 %v85
  %v532 = vunpack.c.l.b16 %v86
  %v533 = vunpack.c.h.b16 %v86
  %v534 = vunpack.c.l.b16 %v87
  %v535 = vunpack.c.h.b16 %v87
  %v536 = vunpack.c.l.b16 %v88
  %v537 = vunpack.c.h.b16 %v88
  %v538 = vunpack.c.l.b16 %v89
  %v539 = vunpack.c.h.b16 %v89
  %v540 = vunpack.c.l.b16 %v90
  %v541 = vunpack.c.l.b16 %v91
  %v542 = vunpack.c.h.b16 %v91
  %v543 = vunpack.c.l.b16 %v92
  %v544 = vunpack.c.h.b16 %v92
  %v545 = vunpack.c.l.b16 %v93
  %v546 = vunpack.c.h.b16 %v93
  %v547 = vunpack.c.l.b16 %v94
  %v548 = vunpack.c.h.b16 %v94
  %v549 = vunpack.c.l.b16 %v95
  %v550 = vunpack.c.l.b16 %v96
  %v551 = vunpack.c.h.b16 %v96
  %v552 = vunpack.c.l.b16 %v97
  %v553 = vunpack.c.h.b16 %v97
  %v554 = vunpack.c.l.b16 %v98
  %v555 = vunpack.c.h.b16 %v98
  %v556 = vunpack.c.l.b16 %v99
  %v557 = vunpack.c.h.b16 %v99
  %v558 = vunpack.c.l.b16 %v100
  %v559 = vunpack.c.l.b16 %v101
  %v560 = vunpack.c.h.b16 %v101
  %v561 = vunpack.c.l.b16 %v102
  %v562 = vunpack.c.h.b16 %v102
  %v563 = vunpack.c.l.b16 %v103
  %v564 = vunpack.c.h.b16 %v103
  %v565 = vunpack.c.l.b16 %v104
  %v566 = vunpack.c.h.b16 %v104
  %v567 = vunpack.c.l.b16 %v105
  %v568 = vunpack.c.l.b16 %v106
  %v569 = vunpack.c.h.b16 %v106
  %v570 = vunpack.c.l.b16 %v107
  %v571 = vunpack.c.h.b16 %v107
  %v572 = vunpack.c.l.b16 %v108
  %v573 = vunpack.c.h.b16 %v108
  %v574 = vunpack.c.l.b16 %v109
  %v575 = vunpack.c.h.b16 %v109
  %v576 = vunpack.c.l.b16 %v110
  %v577 = vunpack.c.l.b16 %v111
  %v578 = vunpack.c.h.b16 %v111
  %v579 = vunpack.c.l.b16 %v112
  %v580 = vunpack.c.h.b16 %v112
  %v581 = vunpack.c.l.b16 %v113
  %v582 = vunpack.c.h.b16 %v113
  %v583 = vunpack.c.l.b16 %v114
  %v584 = vunpack.c.h.b16 %v114
  %v585 = vunpack.c.l.b16 %v115
  %v586 = vunpack.c.l.b16 %v116
  %v587 = vunpack.c.h.b16 %v116
  %v588 = vunpack.c.l.b16 %v117
  %v589 = vunpack.c.h.b16 %v117
  %v590 = vunpack.c.l.b16 %v118
  %v591 = vunpack.c.h.b16 %v118
  %v592 = vunpack.c.l.b16 %v119
  %v593 = vunpack.c.h.b16 %v119
  %v594 = vunpack.c.l.b16 %v120
  %v595 = vunpack.c.l.b16 %v121
  %v596 = vunpack.c.h.b16 %v121
  %v597 = vunpack.c.l.b16 %v122
  %v598 = vunpack.c.h.b16 %v122
  %v599 = vunpack.c.l.b16 %v123
  %v600 = vunpack.c.h.b16 %v123
  %v601 = vunpack.c.l.b16 %v124
  %v602 = vunpack.c.h.b16 %v124
  %v603 = vunpack.c.l.b16 %v125
  %v604 = vunpack.c.l.b16 %v126
  %v605 = vunpack.c.h.b16 %v126
  %v606 = vunpack.c.l.b16 %v127
  %v607 = vunpack.c.h.b16 %v127
  %v608 = vunpack.c.l.b16 %v128
  %v609 = vunpack.c.h.b16 %v128
  %v610 = vunpack.c.l.b16 %v129
  %v611 = vunpack.c.h.b16 %v129
  %v612 = vunpack.c.l.b16 %v130
  %v613 = vunpack.c.l.b16 %v131
  %v614 = vunpack.c.h.b16 %v131
  %v615 = vunpack.c.l.b16 %v132
  %v616 = vunpack.c.h.b16 %v132
  %v617 = vunpack.c.l.b16 %v133
  %v618 = vunpack.c.h.b16 %v133
  %v619 = vunpack.c.l.b16 %v134
  %v620 = vunpack.c.h.b16 %v134
  %v621 = vunpack.c.l.b16 %v135
  %v622 = vunpack.c.l.b16 %v136
  %v623 = vunpack.c.h.b16 %v136
  %v624 = vunpack.c.l.b16 %v137
  %v625 = vunpack.c.h.b16 %v137
  %v626 = vunpack.c.l.b16 %v138
  %v627 = vunpack.c.h.b16 %v138
  %v628 = vunpack.c.l.b16 %v139
  %v629 = vunpack.c.h.b16 %v139
  %v630 = vunpack.c.l.b16 %v140
  %v631 = vunpack.c.l.b16 %v141
  %v632 = vunpack.c.h.b16 %v141
  %v633 = vunpack.c.l.b16 %v142
  %v634 = vunpack.c.h.b16 %v142
  %v635 = vunpack.c.l.b16 %v143
  %v636 = vunpack.c.h.b16 %v143
  %v637 = vunpack.c.l.b16 %v144
  %v638 = vunpack.c.h.b16 %v144
  %v639 = vunpack.c.l.b16 %v145
  %v640 = vpack.c.b16 %v424, %v415
  %v641 = vpack.c.b16 %v425, %v416
  %v642 = vpack.c.b16 %v426, %v417
  %v643 = vpack.c.b16 %v427, %v418
  %v644 = vpack.c.b16 %v428, %v419
  %v645 = vpack.c.b16 %v429, %v420
  %v646 = vpack.c.b16 %v430, %v421
  %v647 = vpack.c.b16 %v431, %v422
  %v648 = vpack.c.b16 %v432, %v423
  %v649 = vpack.c.b16 %v442, %v433
  %v650 = vpack.c.b16 %v443, %v434
  %v651 = vpack.c.b16 %v444, %v435
  %v652 = vpack.c.b16 %v445, %v436
  %v653 = vpack.c.b16 %v446, %v437
  %v654 = vpack.c.b16 %v447, %v438
  %v655 = vpack.c.b16 %v448, %v439
  %v656 = vpack.c.b16 %v449, %v440
  %v657 = vpack.c.b16 %v450, %v441
  %v658 = vpack.c.b16 %v460, %v451
  %v659 = vpack.c.b16 %v461, %v452
  %v660 = vpack.c.b16 %v462, %v453
  %v661 = vpack.c.b16 %v463, %v454
  %v662 = vpack.c.b16 %v464, %v455
  %v663 = vpack.c.b16 %v465, %v456
  %v664 = vpack.c.b16 %v466, %v457
  %v665 = vpack.c.b16 %v467, %v458
  %v666 = vpack.c.b16 %v468, %v459
  %v667 = vpack.c.b16 %v478, %v469
  %v668 = vpack.c.b16 %v479, %v470
  %v669 = vpack.c.b16 %v480, %v471
  %v670 = vpack.c.b16 %v481, %v472
  %v671 = vpack.c.b16 %v482, %v473
  %v672 = vpack.c.b16 %v483, %v474
  %v673 = vpack.c.b16 %v484, %v475
  %v674 = vpack.c.b16 %v485, %v476
  %v675 = vpack.c.b16 %v486, %v477
  %v676 = vpack.c.b16 %v496, %v487
  %v677 = vpack.c.b16 %v497, %v488
  %v678 = vpack.c.b16 %v498, %v489
  %v679 = vpack.c.b16 %v499, %v490
  %v680 = vpack.c.b16 %v500, %v491
  %v681 = vpack.c.b16 %v501, %v492
  %v682 = vpack.c.b16 %v502, %v493
  %v683 = vpack.c.b16 %v503, %v494
  %v684 = vpack.c.b16 %v504, %v495
  %v685 = vpack.c.b16 %v514, %v505
  %v686 = vpack.c.b16 %v515, %v506
  %v687 = vpack.c.b16 %v516, %v507
  %v688 = vpack.c.b16 %v517, %v508
  %v689 = vpack.c.b16 %v518, %v509
  %v690 = vpack.c.b16 %v519, %v510
  %v691 = vpack.c.b16 %v520, %v511
  %v692 = vpack.c.b16 %v521, %v512
  %v693 = vpack.c.b16 %v522, %v513
  %v694 = vpack.c.b16 %v532, %v523
  %v695 = vpack.c.b16 %v533, %v524
  %v696 = vpack.c.b16 %v534, %v525
  %v697 = vpack.c.b16 %v535, %v526
  %v698 = vpack.c.b16 %v536, %v527
  %v699 = vpack.c.b16 %v537, %v528
  %v700 = vpack.c.b16 %v538, %v529
  %v701 = vpack.c.b16 %v539, %v530
  %v702 = vpack.c.b16 %v540, %v531
  %v703 = vpack.c.b16 %v550, %v541
  %v704 = vpack.c.b16 %v551, %v542
  %v705 = vpack.c.b16 %v552, %v543
  %v706 = vpack.c.b16 %v553, %v544
  %v707 = vpack.c.b16 %v554, %v545
  %v708 = vpack.c.b16 %v555, %v546
  %v709 = vpack.c.b16 %v556, %v547
  %v710 = vpack.c.b16 %v557, %v548
  %v711 = vpack.c.b16 %v558, %v549
  %v712 = vpack.c.b16 %v568, %v559
  %v713 = vpack.c.b16 %v569, %v560
  %v714 = vpack.c.b16 %v570, %v561
  %v715 = vpack.c.b16 %v571, %v562
  %v716 = vpack.c.b16 %v572, %v563
  %v717 = vpack.c.b16 %v573, %v564
  %v718 = vpack.c.b16 %v574, %v565
  %v719 = vpack.c.b16 %v575, %v566
  %v720 = vpack.c.b16 %v576, %v567
  %v721 = vpack.c.b16 %v586, %v577
  %v722 = vpack.c.b16 %v587, %v578
  %v723 = vpack.c.b16 %v588, %v579
  %v724 = vpack.c.b16 %v589, %v580
  %v725 = vpack.c.b16 %v590, %v581
  %v726 = vpack.c.b16 %v591, %v582
  %v727 = vpack.c.b16 %v592, %v583
  %v728 = vpack.c.b16 %v593, %v584
  %v729 = vpack.c.b16 %v594, %v585
  %v730 = vpack.c.b16 %v604, %v595
  %v731 = vpack.c.b16 %v605, %v596
  %v732 = vpack.c.b16 %v606, %v597
  %v733 = vpack.c.b16 %v607, %v598
  %v734 = vpack.c.b16 %v608, %v599
  %v735 = vpack.c.b16 %v609, %v600
  %v736 = vpack.c.b16 %v610, %v601
  %v737 = vpack.c.b16 %v611, %v602
  %v738 = vpack.c.b16 %v612, %v603
  %v739 = vpack.c.b16 %v622, %v613
  %v740 = vpack.c.b16 %v623, %v614
  %v741 = vpack.c.b16 %v624, %v615
  %v742 = vpack.c.b16 %v625, %v616
  %v743 = vpack.c.b16 %v626, %v617
  %v744 = vpack.c.b16 %v627, %v618
  %v745 = vpack.c.b16 %v628, %v619
  %v746 = vpack.c.b16 %v629, %v620
  %v747 = vpack.c.b16 %v630, %v621
  %v748 = vpack.c.b16 %v631, %v631
  %v749 = vpack.c.b16 %v632, %v632
  %v750 = vpack.c.b16 %v633, %v633
  %v751 = vpack.c.b16 %v634, %v634
  %v752 = vpack.c.b16 %v635, %v635
  %v753 = vpack.c.b16 %v636, %v636
  %v754 = vpack.c.b16 %v637, %v637
  %v755 = vpack.c.b16 %v638, %v638
  %v756 = vpack.c.b16 %v639, %v639
  %v1018 = vunpack.c.l.b16 %v146
  %v1019 = vunpack.c.l.b16 %v147
  %v1020 = vunpack.c.l.b16 %v148
  %v1021 = vunpack.c.l.b16 %v149
  %v1022 = vunpack.c.l.b16 %v150
  %v1023 = vunpack.c.l.b16 %v151
  %v1024 = vunpack.c.l.b16 %v152
  %v1025 = vunpack.c.l.b16 %v153
  %v1026 = vunpack.c.l.b16 %v154
  %v1027 = vunpack.c.l.b16 %v155
  %v1028 = vunpack.c.l.b16 %v156
  %v1029 = vunpack.c.l.b16 %v157
  %v1030 = vunpack.c.l.b16 %v158
  %v1031 = vunpack.c.l.b16 %v159
  %v1032 = vunpack.c.l.b16 %v160
  %v1033 = vunpack.c.l.b16 %v161
  %v1034 = vunpack.c.l.b16 %v162
  %v1035 = vunpack.c.l.b16 %v163
  %v1036 = vunpack.c.l.b16 %v164
  %v1037 = vunpack.c.l.b16 %v165
  %v1038 = vunpack.c.l.b16 %v166
  %v1039 = vunpack.c.l.b16 %v167
  %v1040 = vunpack.c.l.b16 %v168
  %v1041 = vunpack.c.l.b16 %v169
  %v1042 = vunpack.c.l.b16 %v170
  %v1043 = vunpack.c.l.b16 %v171
  %v1044 = vunpack.c.l.b16 %v172
  %v1045 = vunpack.c.l.b16 %v173
  %v1046 = vunpack.c.l.b16 %v174
  %v1047 = vunpack.c.l.b16 %v175
  %v1048 = vunpack.c.l.b16 %v176
  %v1049 = vunpack.c.l.b16 %v177
  %v1050 = vunpack.c.l.b16 %v178
  %v1051 = vunpack.c.l.b16 %v179
  %v1052 = vunpack.c.l.b16 %v180
  %v1053 = vunpack.c.l.b16 %v181
  %v1054 = vunpack.c.l.b16 %v182
  %v1055 = vunpack.c.l.b16 %v183
  %v1056 = vunpack.c.l.b16 %v184
  %v1057 = vunpack.c.l.b16 %v185
  %v1058 = vunpack.c.l.b16 %v186
  %v1059 = vunpack.c.l.b16 %v187
  %v1060 = vunpack.c.l.b16 %v188
  %v1061 = vunpack.c.l.b16 %v189
  %v1062 = vunpack.c.l.b16 %v190
  %v1063 = vunpack.c.l.b16 %v191
  %v1064 = vunpack.c.l.b16 %v192
  %v1065 = vunpack.c.l.b16 %v193
  %v1066 = vunpack.c.l.b16 %v194
  %v1067 = vunpack.c.l.b16 %v195
  %v1068 = vunpack.c.l.b16 %v196
  %v1069 = vunpack.c.l.b16 %v197
  %v1070 = vunpack.c.l.b16 %v198
  %v1071 = vunpack.c.l.b16 %v199
  %v1072 = vunpack.c.l.b16 %v200
  %v1073 = vunpack.c.l.b16 %v201
  %v1074 = vunpack.c.l.b16 %v202
  %v1075 = vunpack.c.l.b16 %v203
  %v1076 = vunpack.c.l.b16 %v204
  %v1077 = vunpack.c.l.b16 %v205
  %v1078 = vunpack.c.l.b16 %v206
  %v1079 = vunpack.c.l.b16 %v207
  %v1080 = vunpack.c.l.b16 %v208
  %v1081 = vunpack.c.l.b16 %v209
  %v1082 = vunpack.c.l.b16 %v210
  %v1083 = vunpack.c.l.b16 %v211
  %v1084 = vunpack.c.l.b16 %v212
  %v1085 = vunpack.c.l.b16 %v213
  %v1086 = vunpack.c.l.b16 %v214
  %v1087 = vunpack.c.l.b16 %v215
  %v1088 = vunpack.c.l.b16 %v216
  %v1089 = vunpack.c.l.b16 %v217
  %v1090 = vunpack.c.l.b16 %v218
  %v1091 = vunpack.c.l.b16 %v219
  %v1092 = vunpack.c.l.b16 %v220
  %v1093 = vunpack.c.l.b16 %v221
  %v1094 = vunpack.c.l.b16 %v222
  %v1095 = vunpack.c.l.b16 %v223
  %v1096 = vunpack.c.l.b16 %v224
  %v1097 = vunpack.c.l.b16 %v225
  %v1098 = vunpack.c.l.b16 %v226
  %v1099 = vunpack.c.l.b16 %v227
  %v1100 = vunpack.c.l.b16 %v228
  %v1101 = vunpack.c.l.b16 %v229
  %v1102 = vunpack.c.l.b16 %v230
  %v1103 = vunpack.c.l.b16 %v231
  %v1104 = vunpack.c.l.b16 %v232
  %v1105 = vunpack.c.l.b16 %v233
  %v1106 = vunpack.c.l.b16 %v234
  %v1107 = vunpack.c.l.b16 %v235
  %v1108 = vunpack.c.l.b16 %v236
  %v1109 = vunpack.c.l.b16 %v237
  %v1110 = vunpack.c.l.b16 %v238
  %v1111 = vunpack.c.l.b16 %v239
  %v1112 = vunpack.c.l.b16 %v240
  %v1113 = vunpack.c.l.b16 %v241
  %v1114 = vunpack.c.l.b16 %v242
  %v1115 = vunpack.c.l.b16 %v243
  %v1116 = vunpack.c.l.b16 %v244
  %v1117 = vunpack.c.l.b16 %v245
  %v1118 = vunpack.c.l.b16 %v246
  %v1119 = vunpack.c.l.b16 %v247
  %v1120 = vunpack.c.l.b16 %v248
  %v1121 = vunpack.c.l.b16 %v249
  %v1122 = vunpack.c.l.b16 %v250
  %v1123 = vunpack.c.l.b16 %v251
  %v1124 = vunpack.c.l.b16 %v252
  %v1125 = vunpack.c.l.b16 %v253
  %v1126 = vunpack.c.l.b16 %v254
  %v1127 = vunpack.c.l.b16 %v255
  %v1128 = vunpack.c.l.b16 %v256
  %v1129 = vunpack.c.l.b16 %v257
  %v1130 = vunpack.c.l.b16 %v258
  %v1131 = vunpack.c.l.b16 %v259
  %v1132 = vunpack.c.l.b16 %v260
  %v1133 = vunpack.c.l.b16 %v261
  %v1134 = vunpack.c.l.b16 %v262
  %v1135 = vunpack.c.l.b16 %v263
  %v1136 = vunpack.c.l.b16 %v264
  %v1137 = vunpack.c.l.b16 %v265
  %v1138 = vunpack.c.l.b16 %v266
  %v1139 = vunpack.c.l.b16 %v267
  %v1140 = vunpack.c.l.b16 %v268
  %v1141 = vunpack.c.l.b16 %v269
  %v1142 = vunpack.c.l.b16 %v270
  %v1143 = vunpack.c.l.b16 %v271
  %v1144 = vunpack.c.l.b16 %v272
  %v1145 = vunpack.c.l.b16 %v273
  %v1146 = vunpack.c.l.b16 %v274
  %v1147 = vunpack.c.l.b16 %v275
  %v1148 = vunpack.c.l.b16 %v276
  %v1149 = vunpack.c.l.b16 %v277
  %v1150 = vunpack.c.l.b16 %v278
  %v1151 = vunpack.c.l.b16 %v279
  %v1152 = vunpack.c.l.b16 %v280
  %v1153 = vunpack.c.l.b16 %v281
  %v1154 = vunpack.c.l.b16 %v282
  %v1155 = vunpack.c.l.b16 %v283
  %v1156 = vunpack.c.l.b16 %v284
  %v1157 = vunpack.c.l.b16 %v285
  %v1158 = vunpack.c.l.b16 %v286
  %v1159 = vunpack.c.l.b16 %v287
  %v1160 = vunpack.c.l.b16 %v288
  %v1161 = vunpack.c.l.b16 %v289
  %v1162 = vpack.c.b16 %v1019, %v1018
  %v1163 = vpack.c.b16 %v1021, %v1020
  %v1164 = vpack.c.b16 %v1023, %v1022
  %v1165 = vpack.c.b16 %v1025, %v1024
  %v1166 = vpack.c.b16 %v1027, %v1026
  %v1167 = vpack.c.b16 %v1029, %v1028
  %v1168 = vpack.c.b16 %v1031, %v1030
  %v1169 = vpack.c.b16 %v1033, %v1032
  %v1170 = vpack.c.b16 %v1035, %v1034
  %v1171 = vpack.c.b16 %v1037, %v1036
  %v1172 = vpack.c.b16 %v1039, %v1038
  %v1173 = vpack.c.b16 %v1041, %v1040
  %v1174 = vpack.c.b16 %v1043, %v1042
  %v1175 = vpack.c.b16 %v1045, %v1044
  %v1176 = vpack.c.b16 %v1047, %v1046
  %v1177 = vpack.c.b16 %v1049, %v1048
  %v1178 = vpack.c.b16 %v1051, %v1050
  %v1179 = vpack.c.b16 %v1053, %v1052
  %v1180 = vpack.c.b16 %v1055, %v1054
  %v1181 = vpack.c.b16 %v1057, %v1056
  %v1182 = vpack.c.b16 %v1059, %v1058
  %v1183 = vpack.c.b16 %v1061, %v1060
  %v1184 = vpack.c.b16 %v1063, %v1062
  %v1185 = vpack.c.b16 %v1065, %v1064
  %v1186 = vpack.c.b16 %v1067, %v1066
  %v1187 = vpack.c.b16 %v1069, %v1068
  %v1188 = vpack.c.b16 %v1071, %v1070
  %v1189 = vpack.c.b16 %v1073, %v1072
  %v1190 = vpack.c.b16 %v1075, %v1074
  %v1191 = vpack.c.b16 %v1077, %v1076
  %v1192 = vpack.c.b16 %v1079, %v1078
  %v1193 = vpack.c.b16 %v1081, %v1080
  %v1194 = vpack.c.b16 %v1083, %v1082
  %v1195 = vpack.c.b16 %v1085, %v1084
  %v1196 = vpack.c.b16 %v1087, %v1086
  %v1197 = vpack.c.b16 %v1089, %v1088
  %v1198 = vpack.c.b16 %v1091, %v1090
  %v1199 = vpack.c.b16 %v1093, %v1092
  %v1200 = vpack.c.b16 %v1095, %v1094
  %v1201 = vpack.c.b16 %v1097, %v1096
  %v1202 = vpack.c.b16 %v1099, %v1098
  %v1203 = vpack.c.b16 %v1101, %v1100
  %v1204 = vpack.c.b16 %v1103, %v1102
  %v1205 = vpack.c.b16 %v1105, %v1104
  %v1206 = vpack.c.b16 %v1107, %v1106
  %v1207 = vpack.c.b16 %v1109, %v1108
  %v1208 = vpack.c.b16 %v1111, %v1110
  %v1209 = vpack.c.b16 %v1113, %v1112
  %v1210 = vpack.c.b16 %v1115, %v1114
  %v1211 = vpack.c.b16 %v1117, %v1116
  %v1212 = vpack.c.b16 %v1119, %v1118
  %v1213 = vpack.c.b16 %v1121, %v1120
  %v1214 = vpack.c.b16 %v1123, %v1122
  %v1215 = vpack.c.b16 %v1125, %v1124
  %v1216 = vpack.c.b16 %v1127, %v1126
  %v1217 = vpack.c.b16 %v1129, %v1128
  %v1218 = vpack.c.b16 %v1131, %v1130
  %v1219 = vpack.c.b16 %v1133, %v1132
  %v1220 = vpack.c.b16 %v1135, %v1134
  %v1221 = vpack.c.b16 %v1137, %v1136
  %v1222 = vpack.c.b16 %v1139, %v1138
  %v1223 = vpack.c.b16 %v1141, %v1140
  %v1224 = vpack.c.b16 %v1143, %v1142
  %v1225 = vpack.c.b16 %v1145, %v1144
  %v1226 = vpack.c.b16 %v1147, %v1146
  %v1227 = vpack.c.b16 %v1149, %v1148
  %v1228 = vpack.c.b16 %v1151, %v1150
  %v1229 = vpack.c.b16 %v1153, %v1152
  %v1230 = vpack.c.b16 %v1155, %v1154
  %v1231 = vpack.c.b16 %v1157, %v1156
  %v1232 = vpack.c.b16 %v1159, %v1158
  %v1233 = vpack.c.b16 %v1161, %v1160
  %1306 = vmatprep.subr.bf16.mxu0 0
  %1307 = vmatpush1.bf16.msra.mxu0 %v1162
  %1308 = vmatprep.subr.bf16.mxu0 0
  %1309 = vmatpush1.bf16.msra.mxu0 %v1163
  %1310 = vmatprep.subr.bf16.mxu0 0
  %1311 = vmatpush1.bf16.msra.mxu0 %v1164
  %1312 = vmatprep.subr.bf16.mxu0 0
  %1313 = vmatpush1.bf16.msra.mxu0 %v1165
  %1314 = vmatprep.subr.bf16.mxu0 0
  %1315 = vmatpush1.bf16.msra.mxu0 %v1166
  %1316 = vmatprep.subr.bf16.mxu0 0
  %1317 = vmatpush1.bf16.msra.mxu0 %v1167
  %1318 = vmatprep.subr.bf16.mxu0 0
  %1319 = vmatpush1.bf16.msra.mxu0 %v1168
  %1320 = vmatprep.subr.bf16.mxu0 0
  %1321 = vmatpush1.bf16.msra.mxu0 %v1169
  %1322 = vmatprep.subr.bf16.mxu0 0
  %1323 = vmatpush1.bf16.msra.mxu0 %v1170
  %1324 = vmatprep.subr.bf16.mxu0 0
  %1325 = vmatpush1.bf16.msra.mxu0 %v1171
  %1326 = vmatprep.subr.bf16.mxu0 0
  %1327 = vmatpush1.bf16.msra.mxu0 %v1172
  %1328 = vmatprep.subr.bf16.mxu0 0
  %1329 = vmatpush1.bf16.msra.mxu0 %v1173
  %1330 = vmatprep.subr.bf16.mxu0 0
  %1331 = vmatpush1.bf16.msra.mxu0 %v1174
  %1332 = vmatprep.subr.bf16.mxu0 0
  %1333 = vmatpush1.bf16.msra.mxu0 %v1175
  %1334 = vmatprep.subr.bf16.mxu0 0
  %1335 = vmatpush1.bf16.msra.mxu0 %v1176
  %1336 = vmatprep.subr.bf16.mxu0 0
  %1337 = vmatpush1.bf16.msra.mxu0 %v1177
  %1338 = vmatprep.mubr.bf16.mxu0 %v641
  %1339 = vmatmul.mubr.bf16.gmra.mrb[0].mxu0 %v640
  %v1340 = vpop.f32.mrb[0].mxu0
  %v1341 = vadd.f32 0.0, %v1340
  %v1342 = vpop.f32.mrb[0].mxu0
  %v1343 = vpop.f32.mrb[0].mxu0
  %v1344 = vadd.f32 0.0, %v1343
  %v1345 = vpop.f32.mrb[0].mxu0
  %1346 = vmatprep.mubr.bf16.mxu0 %v650
  %1347 = vmatmul.mubr.bf16.gmra.mrb[0].mxu0 %v649
  %v1348 = vpop.f32.mrb[0].mxu0
  %v1349 = vadd.f32 0.0, %v1348
  %v1350 = vpop.f32.mrb[0].mxu0
  %v1351 = vpop.f32.mrb[0].mxu0
  %v1352 = vadd.f32 0.0, %v1351
  %v1353 = vpop.f32.mrb[0].mxu0
  %1354 = vmatprep.mubr.bf16.mxu0 %v659
  %1355 = vmatmul.mubr.bf16.gmra.mrb[0].mxu0 %v658
  %v1356 = vpop.f32.mrb[0].mxu0
  %v1357 = vadd.f32 0.0, %v1356
  %v1358 = vpop.f32.mrb[0].mxu0
  %v1359 = vpop.f32.mrb[0].mxu0
  %v1360 = vadd.f32 0.0, %v1359
  %v1361 = vpop.f32.mrb[0].mxu0
  %1362 = vmatprep.mubr.bf16.mxu0 %v668
  %1363 = vmatmul.mubr.bf16.gmra.mrb[0].mxu0 %v667
  %v1364 = vpop.f32.mrb[0].mxu0
  %v1365 = vadd.f32 0.0, %v1364
  %v1366 = vpop.f32.mrb[0].mxu0
  %v1367 = vpop.f32.mrb[0].mxu0
  %v1368 = vadd.f32 0.0, %v1367
  %v1369 = vpop.f32.mrb[0].mxu0
  %1370 = vmatprep.mubr.bf16.mxu0 %v677
  %1371 = vmatmul.mubr.bf16.gmra.mrb[0].mxu0 %v676
  %v1372 = vpop.f32.mrb[0].mxu0
  %v1373 = vadd.f32 0.0, %v1372
  %v1374 = vpop.f32.mrb[0].mxu0
  %v1375 = vpop.f32.mrb[0].mxu0
  %v1376 = vadd.f32 0.0, %v1375
  %v1377 = vpop.f32.mrb[0].mxu0
  %1378 = vmatprep.mubr.bf16.mxu0 %v686
  %1379 = vmatmul.mubr.bf16.gmra.mrb[0].mxu0 %v685
  %v1380 = vpop.f32.mrb[0].mxu0
  %v1381 = vadd.f32 0.0, %v1380
  %v1382 = vpop.f32.mrb[0].mxu0
  %v1383 = vpop.f32.mrb[0].mxu0
  %v1384 = vadd.f32 0.0, %v1383
  %v1385 = vpop.f32.mrb[0].mxu0
  %1386 = vmatprep.mubr.bf16.mxu0 %v695
  %1387 = vmatmul.mubr.bf16.gmra.mrb[0].mxu0 %v694
  %v1388 = vpop.f32.mrb[0].mxu0
  %v1389 = vadd.f32 0.0, %v1388
  %v1390 = vpop.f32.mrb[0].mxu0
  %v1391 = vpop.f32.mrb[0].mxu0
  %v1392 = vadd.f32 0.0, %v1391
  %v1393 = vpop.f32.mrb[0].mxu0
  %1394 = vmatprep.mubr.bf16.mxu0 %v704
  %1395 = vmatmul.mubr.bf16.gmra.mrb[0].mxu0 %v703
  %v1396 = vpop.f32.mrb[0].mxu0
  %v1397 = vadd.f32 0.0, %v1396
  %v1398 = vpop.f32.mrb[0].mxu0
  %v1399 = vpop.f32.mrb[0].mxu0
  %v1400 = vadd.f32 0.0, %v1399
  %v1401 = vpop.f32.mrb[0].mxu0
  %1402 = vmatprep.mubr.bf16.mxu0 %v713
  %1403 = vmatmul.mubr.bf16.gmra.mrb[0].mxu0 %v712
  %v1404 = vpop.f32.mrb[0].mxu0
  %v1405 = vadd.f32 0.0, %v1404
  %v1406 = vpop.f32.mrb[0].mxu0
  %v1407 = vpop.f32.mrb[0].mxu0
  %v1408 = vadd.f32 0.0, %v1407
  %v1409 = vpop.f32.mrb[0].mxu0
  %1410 = vmatprep.mubr.bf16.mxu0 %v722
  %1411 = vmatmul.mubr.bf16.gmra.mrb[0].mxu0 %v721
  %v1412 = vpop.f32.mrb[0].mxu0
  %v1413 = vadd.f32 0.0, %v1412
  %v1414 = vpop.f32.mrb[0].mxu0
  %v1415 = vpop.f32.mrb[0].mxu0
  %v1416 = vadd.f32 0.0, %v1415
  %v1417 = vpop.f32.mrb[0].mxu0
  %1418 = vmatprep.mubr.bf16.mxu0 %v731
  %1419 = vmatmul.mubr.bf16.gmra.mrb[0].mxu0 %v730
  %v1420 = vpop.f32.mrb[0].mxu0
  %v1421 = vadd.f32 0.0, %v1420
  %v1422 = vpop.f32.mrb[0].mxu0
  %v1423 = vpop.f32.mrb[0].mxu0
  %v1424 = vadd.f32 0.0, %v1423
  %v1425 = vpop.f32.mrb[0].mxu0
  %1426 = vmatprep.mubr.bf16.mxu0 %v740
  %1427 = vmatmul.mubr.bf16.gmra.mrb[0].mxu0 %v739
  %v1428 = vpop.f32.mrb[0].mxu0
  %v1429 = vadd.f32 0.0, %v1428
  %v1430 = vpop.f32.mrb[0].mxu0
  %v1431 = vpop.f32.mrb[0].mxu0
  %v1432 = vadd.f32 0.0, %v1431
  %v1433 = vpop.f32.mrb[0].mxu0
  %1434 = vmatprep.mubr.bf16.mxu0 %v749
  %1435 = vmatmul.mubr.bf16.gmra.mrb[0].mxu0 %v748
  %v1436 = vpop.f32.mrb[0].mxu0
  %v1437 = vadd.f32 0.0, %v1436
  %v1438 = vpop.f32.mrb[0].mxu0
  %v1439 = vpop.f32.mrb[0].mxu0
  %v1440 = vpop.f32.mrb[0].mxu0
  %1441 = vdwg.mxu0
  %1442 = vmatprep.subr.bf16.mxu0 0
  %1443 = vmatpush1.bf16.msra.mxu0 %v1178
  %1444 = vmatprep.subr.bf16.mxu0 0
  %1445 = vmatpush1.bf16.msra.mxu0 %v1179
  %1446 = vmatprep.subr.bf16.mxu0 0
  %1447 = vmatpush1.bf16.msra.mxu0 %v1180
  %1448 = vmatprep.subr.bf16.mxu0 0
  %1449 = vmatpush1.bf16.msra.mxu0 %v1181
  %1450 = vmatprep.subr.bf16.mxu0 0
  %1451 = vmatpush1.bf16.msra.mxu0 %v1182
  %1452 = vmatprep.subr.bf16.mxu0 0
  %1453 = vmatpush1.bf16.msra.mxu0 %v1183
  %1454 = vmatprep.subr.bf16.mxu0 0
  %1455 = vmatpush1.bf16.msra.mxu0 %v1184
  %1456 = vmatprep.subr.bf16.mxu0 0
  %1457 = vmatpush1.bf16.msra.mxu0 %v1185
  %1458 = vmatprep.subr.bf16.mxu0 0
  %1459 = vmatpush1.bf16.msra.mxu0 %v1186
  %1460 = vmatprep.subr.bf16.mxu0 0
  %1461 = vmatpush1.bf16.msra.mxu0 %v1187
  %1462 = vmatprep.subr.bf16.mxu0 0
  %1463 = vmatpush1.bf16.msra.mxu0 %v1188
  %1464 = vmatprep.subr.bf16.mxu0 0
  %1465 = vmatpush1.bf16.msra.mxu0 %v1189
  %1466 = vmatprep.subr.bf16.mxu0 0
  %1467 = vmatpush1.bf16.msra.mxu0 %v1190
  %1468 = vmatprep.subr.bf16.mxu0 0
  %1469 = vmatpush1.bf16.msra.mxu0 %v1191
  %1470 = vmatprep.subr.bf16.mxu0 0
  %1471 = vmatpush1.bf16.msra.mxu0 %v1192
  %1472 = vmatprep.subr.bf16.mxu0 0
  %1473 = vmatpush1.bf16.msra.mxu0 %v1193
  %1474 = vmatprep.mubr.bf16.mxu0 %v643
  %1475 = vmatmul.mubr.bf16.gmra.mrb[0].mxu0 %v642
  %v1476 = vpop.f32.mrb[0].mxu0
  %v1477 = vadd.f32 %v1341, %v1476
  %v1478 = vpop.f32.mrb[0].mxu0
  %v1479 = vpop.f32.mrb[0].mxu0
  %v1480 = vadd.f32 %v1344, %v1479
  %v1481 = vpop.f32.mrb[0].mxu0
  %1482 = vmatprep.mubr.bf16.mxu0 %v652
  %1483 = vmatmul.mubr.bf16.gmra.mrb[0].mxu0 %v651
  %v1484 = vpop.f32.mrb[0].mxu0
  %v1485 = vadd.f32 %v1349, %v1484
  %v1486 = vpop.f32.mrb[0].mxu0
  %v1487 = vpop.f32.mrb[0].mxu0
  %v1488 = vadd.f32 %v1352, %v1487
  %v1489 = vpop.f32.mrb[0].mxu0
  %1490 = vmatprep.mubr.bf16.mxu0 %v661
  %1491 = vmatmul.mubr.bf16.gmra.mrb[0].mxu0 %v660
  %v1492 = vpop.f32.mrb[0].mxu0
  %v1493 = vadd.f32 %v1357, %v1492
  %v1494 = vpop.f32.mrb[0].mxu0
  %v1495 = vpop.f32.mrb[0].mxu0
  %v1496 = vadd.f32 %v1360, %v1495
  %v1497 = vpop.f32.mrb[0].mxu0
  %1498 = vmatprep.mubr.bf16.mxu0 %v670
  %1499 = vmatmul.mubr.bf16.gmra.mrb[0].mxu0 %v669
  %v1500 = vpop.f32.mrb[0].mxu0
  %v1501 = vadd.f32 %v1365, %v1500
  %v1502 = vpop.f32.mrb[0].mxu0
  %v1503 = vpop.f32.mrb[0].mxu0
  %v1504 = vadd.f32 %v1368, %v1503
  %v1505 = vpop.f32.mrb[0].mxu0
  %1506 = vmatprep.mubr.bf16.mxu0 %v679
  %1507 = vmatmul.mubr.bf16.gmra.mrb[0].mxu0 %v678
  %v1508 = vpop.f32.mrb[0].mxu0
  %v1509 = vadd.f32 %v1373, %v1508
  %v1510 = vpop.f32.mrb[0].mxu0
  %v1511 = vpop.f32.mrb[0].mxu0
  %v1512 = vadd.f32 %v1376, %v1511
  %v1513 = vpop.f32.mrb[0].mxu0
  %1514 = vmatprep.mubr.bf16.mxu0 %v688
  %1515 = vmatmul.mubr.bf16.gmra.mrb[0].mxu0 %v687
  %v1516 = vpop.f32.mrb[0].mxu0
  %v1517 = vadd.f32 %v1381, %v1516
  %v1518 = vpop.f32.mrb[0].mxu0
  %v1519 = vpop.f32.mrb[0].mxu0
  %v1520 = vadd.f32 %v1384, %v1519
  %v1521 = vpop.f32.mrb[0].mxu0
  %1522 = vmatprep.mubr.bf16.mxu0 %v697
  %1523 = vmatmul.mubr.bf16.gmra.mrb[0].mxu0 %v696
  %v1524 = vpop.f32.mrb[0].mxu0
  %v1525 = vadd.f32 %v1389, %v1524
  %v1526 = vpop.f32.mrb[0].mxu0
  %v1527 = vpop.f32.mrb[0].mxu0
  %v1528 = vadd.f32 %v1392, %v1527
  %v1529 = vpop.f32.mrb[0].mxu0
  %1530 = vmatprep.mubr.bf16.mxu0 %v706
  %1531 = vmatmul.mubr.bf16.gmra.mrb[0].mxu0 %v705
  %v1532 = vpop.f32.mrb[0].mxu0
  %v1533 = vadd.f32 %v1397, %v1532
  %v1534 = vpop.f32.mrb[0].mxu0
  %v1535 = vpop.f32.mrb[0].mxu0
  %v1536 = vadd.f32 %v1400, %v1535
  %v1537 = vpop.f32.mrb[0].mxu0
  %1538 = vmatprep.mubr.bf16.mxu0 %v715
  %1539 = vmatmul.mubr.bf16.gmra.mrb[0].mxu0 %v714
  %v1540 = vpop.f32.mrb[0].mxu0
  %v1541 = vadd.f32 %v1405, %v1540
  %v1542 = vpop.f32.mrb[0].mxu0
  %v1543 = vpop.f32.mrb[0].mxu0
  %v1544 = vadd.f32 %v1408, %v1543
  %v1545 = vpop.f32.mrb[0].mxu0
  %1546 = vmatprep.mubr.bf16.mxu0 %v724
  %1547 = vmatmul.mubr.bf16.gmra.mrb[0].mxu0 %v723
  %v1548 = vpop.f32.mrb[0].mxu0
  %v1549 = vadd.f32 %v1413, %v1548
  %v1550 = vpop.f32.mrb[0].mxu0
  %v1551 = vpop.f32.mrb[0].mxu0
  %v1552 = vadd.f32 %v1416, %v1551
  %v1553 = vpop.f32.mrb[0].mxu0
  %1554 = vmatprep.mubr.bf16.mxu0 %v733
  %1555 = vmatmul.mubr.bf16.gmra.mrb[0].mxu0 %v732
  %v1556 = vpop.f32.mrb[0].mxu0
  %v1557 = vadd.f32 %v1421, %v1556
  %v1558 = vpop.f32.mrb[0].mxu0
  %v1559 = vpop.f32.mrb[0].mxu0
  %v1560 = vadd.f32 %v1424, %v1559
  %v1561 = vpop.f32.mrb[0].mxu0
  %1562 = vmatprep.mubr.bf16.mxu0 %v742
  %1563 = vmatmul.mubr.bf16.gmra.mrb[0].mxu0 %v741
  %v1564 = vpop.f32.mrb[0].mxu0
  %v1565 = vadd.f32 %v1429, %v1564
  %v1566 = vpop.f32.mrb[0].mxu0
  %v1567 = vpop.f32.mrb[0].mxu0
  %v1568 = vadd.f32 %v1432, %v1567
  %v1569 = vpop.f32.mrb[0].mxu0
  %1570 = vmatprep.mubr.bf16.mxu0 %v751
  %1571 = vmatmul.mubr.bf16.gmra.mrb[0].mxu0 %v750
  %v1572 = vpop.f32.mrb[0].mxu0
  %v1573 = vadd.f32 %v1437, %v1572
  %v1574 = vpop.f32.mrb[0].mxu0
  %v1575 = vpop.f32.mrb[0].mxu0
  %v1576 = vpop.f32.mrb[0].mxu0
  %1577 = vdwg.mxu0
  %1578 = vmatprep.subr.bf16.mxu0 0
  %1579 = vmatpush1.bf16.msra.mxu0 %v1194
  %1580 = vmatprep.subr.bf16.mxu0 0
  %1581 = vmatpush1.bf16.msra.mxu0 %v1195
  %1582 = vmatprep.subr.bf16.mxu0 0
  %1583 = vmatpush1.bf16.msra.mxu0 %v1196
  %1584 = vmatprep.subr.bf16.mxu0 0
  %1585 = vmatpush1.bf16.msra.mxu0 %v1197
  %1586 = vmatprep.subr.bf16.mxu0 0
  %1587 = vmatpush1.bf16.msra.mxu0 %v1198
  %1588 = vmatprep.subr.bf16.mxu0 0
  %1589 = vmatpush1.bf16.msra.mxu0 %v1199
  %1590 = vmatprep.subr.bf16.mxu0 0
  %1591 = vmatpush1.bf16.msra.mxu0 %v1200
  %1592 = vmatprep.subr.bf16.mxu0 0
  %1593 = vmatpush1.bf16.msra.mxu0 %v1201
  %1594 = vmatprep.subr.bf16.mxu0 0
  %1595 = vmatpush1.bf16.msra.mxu0 %v1202
  %1596 = vmatprep.subr.bf16.mxu0 0
  %1597 = vmatpush1.bf16.msra.mxu0 %v1203
  %1598 = vmatprep.subr.bf16.mxu0 0
  %1599 = vmatpush1.bf16.msra.mxu0 %v1204
  %1600 = vmatprep.subr.bf16.mxu0 0
  %1601 = vmatpush1.bf16.msra.mxu0 %v1205
  %1602 = vmatprep.subr.bf16.mxu0 0
  %1603 = vmatpush1.bf16.msra.mxu0 %v1206
  %1604 = vmatprep.subr.bf16.mxu0 0
  %1605 = vmatpush1.bf16.msra.mxu0 %v1207
  %1606 = vmatprep.subr.bf16.mxu0 0
  %1607 = vmatpush1.bf16.msra.mxu0 %v1208
  %1608 = vmatprep.subr.bf16.mxu0 0
  %1609 = vmatpush1.bf16.msra.mxu0 %v1209
  %1610 = vmatprep.mubr.bf16.mxu0 %v645
  %1611 = vmatmul.mubr.bf16.gmra.mrb[0].mxu0 %v644
  %v1612 = vpop.f32.mrb[0].mxu0
  %v1613 = vadd.f32 %v1477, %v1612
  %v1614 = vpop.f32.mrb[0].mxu0
  %v1615 = vpop.f32.mrb[0].mxu0
  %v1616 = vadd.f32 %v1480, %v1615
  %v1617 = vpop.f32.mrb[0].mxu0
  %1618 = vmatprep.mubr.bf16.mxu0 %v654
  %1619 = vmatmul.mubr.bf16.gmra.mrb[0].mxu0 %v653
  %v1620 = vpop.f32.mrb[0].mxu0
  %v1621 = vadd.f32 %v1485, %v1620
  %v1622 = vpop.f32.mrb[0].mxu0
  %v1623 = vpop.f32.mrb[0].mxu0
  %v1624 = vadd.f32 %v1488, %v1623
  %v1625 = vpop.f32.mrb[0].mxu0
  %1626 = vmatprep.mubr.bf16.mxu0 %v663
  %1627 = vmatmul.mubr.bf16.gmra.mrb[0].mxu0 %v662
  %v1628 = vpop.f32.mrb[0].mxu0
  %v1629 = vadd.f32 %v1493, %v1628
  %v1630 = vpop.f32.mrb[0].mxu0
  %v1631 = vpop.f32.mrb[0].mxu0
  %v1632 = vadd.f32 %v1496, %v1631
  %v1633 = vpop.f32.mrb[0].mxu0
  %1634 = vmatprep.mubr.bf16.mxu0 %v672
  %1635 = vmatmul.mubr.bf16.gmra.mrb[0].mxu0 %v671
  %v1636 = vpop.f32.mrb[0].mxu0
  %v1637 = vadd.f32 %v1501, %v1636
  %v1638 = vpop.f32.mrb[0].mxu0
  %v1639 = vpop.f32.mrb[0].mxu0
  %v1640 = vadd.f32 %v1504, %v1639
  %v1641 = vpop.f32.mrb[0].mxu0
  %1642 = vmatprep.mubr.bf16.mxu0 %v681
  %1643 = vmatmul.mubr.bf16.gmra.mrb[0].mxu0 %v680
  %v1644 = vpop.f32.mrb[0].mxu0
  %v1645 = vadd.f32 %v1509, %v1644
  %v1646 = vpop.f32.mrb[0].mxu0
  %v1647 = vpop.f32.mrb[0].mxu0
  %v1648 = vadd.f32 %v1512, %v1647
  %v1649 = vpop.f32.mrb[0].mxu0
  %1650 = vmatprep.mubr.bf16.mxu0 %v690
  %1651 = vmatmul.mubr.bf16.gmra.mrb[0].mxu0 %v689
  %v1652 = vpop.f32.mrb[0].mxu0
  %v1653 = vadd.f32 %v1517, %v1652
  %v1654 = vpop.f32.mrb[0].mxu0
  %v1655 = vpop.f32.mrb[0].mxu0
  %v1656 = vadd.f32 %v1520, %v1655
  %v1657 = vpop.f32.mrb[0].mxu0
  %1658 = vmatprep.mubr.bf16.mxu0 %v699
  %1659 = vmatmul.mubr.bf16.gmra.mrb[0].mxu0 %v698
  %v1660 = vpop.f32.mrb[0].mxu0
  %v1661 = vadd.f32 %v1525, %v1660
  %v1662 = vpop.f32.mrb[0].mxu0
  %v1663 = vpop.f32.mrb[0].mxu0
  %v1664 = vadd.f32 %v1528, %v1663
  %v1665 = vpop.f32.mrb[0].mxu0
  %1666 = vmatprep.mubr.bf16.mxu0 %v708
  %1667 = vmatmul.mubr.bf16.gmra.mrb[0].mxu0 %v707
  %v1668 = vpop.f32.mrb[0].mxu0
  %v1669 = vadd.f32 %v1533, %v1668
  %v1670 = vpop.f32.mrb[0].mxu0
  %v1671 = vpop.f32.mrb[0].mxu0
  %v1672 = vadd.f32 %v1536, %v1671
  %v1673 = vpop.f32.mrb[0].mxu0
  %1674 = vmatprep.mubr.bf16.mxu0 %v717
  %1675 = vmatmul.mubr.bf16.gmra.mrb[0].mxu0 %v716
  %v1676 = vpop.f32.mrb[0].mxu0
  %v1677 = vadd.f32 %v1541, %v1676
  %v1678 = vpop.f32.mrb[0].mxu0
  %v1679 = vpop.f32.mrb[0].mxu0
  %v1680 = vadd.f32 %v1544, %v1679
  %v1681 = vpop.f32.mrb[0].mxu0
  %1682 = vmatprep.mubr.bf16.mxu0 %v726
  %1683 = vmatmul.mubr.bf16.gmra.mrb[0].mxu0 %v725
  %v1684 = vpop.f32.mrb[0].mxu0
  %v1685 = vadd.f32 %v1549, %v1684
  %v1686 = vpop.f32.mrb[0].mxu0
  %v1687 = vpop.f32.mrb[0].mxu0
  %v1688 = vadd.f32 %v1552, %v1687
  %v1689 = vpop.f32.mrb[0].mxu0
  %1690 = vmatprep.mubr.bf16.mxu0 %v735
  %1691 = vmatmul.mubr.bf16.gmra.mrb[0].mxu0 %v734
  %v1692 = vpop.f32.mrb[0].mxu0
  %v1693 = vadd.f32 %v1557, %v1692
  %v1694 = vpop.f32.mrb[0].mxu0
  %v1695 = vpop.f32.mrb[0].mxu0
  %v1696 = vadd.f32 %v1560, %v1695
  %v1697 = vpop.f32.mrb[0].mxu0
  %1698 = vmatprep.mubr.bf16.mxu0 %v744
  %1699 = vmatmul.mubr.bf16.gmra.mrb[0].mxu0 %v743
  %v1700 = vpop.f32.mrb[0].mxu0
  %v1701 = vadd.f32 %v1565, %v1700
  %v1702 = vpop.f32.mrb[0].mxu0
  %v1703 = vpop.f32.mrb[0].mxu0
  %v1704 = vadd.f32 %v1568, %v1703
  %v1705 = vpop.f32.mrb[0].mxu0
  %1706 = vmatprep.mubr.bf16.mxu0 %v753
  %1707 = vmatmul.mubr.bf16.gmra.mrb[0].mxu0 %v752
  %v1708 = vpop.f32.mrb[0].mxu0
  %v1709 = vadd.f32 %v1573, %v1708
  %v1710 = vpop.f32.mrb[0].mxu0
  %v1711 = vpop.f32.mrb[0].mxu0
  %v1712 = vpop.f32.mrb[0].mxu0
  %1713 = vdwg.mxu0
  %1714 = vmatprep.subr.bf16.mxu0 0
  %1715 = vmatpush1.bf16.msra.mxu0 %v1210
  %1716 = vmatprep.subr.bf16.mxu0 0
  %1717 = vmatpush1.bf16.msra.mxu0 %v1211
  %1718 = vmatprep.subr.bf16.mxu0 0
  %1719 = vmatpush1.bf16.msra.mxu0 %v1212
  %1720 = vmatprep.subr.bf16.mxu0 0
  %1721 = vmatpush1.bf16.msra.mxu0 %v1213
  %1722 = vmatprep.subr.bf16.mxu0 0
  %1723 = vmatpush1.bf16.msra.mxu0 %v1214
  %1724 = vmatprep.subr.bf16.mxu0 0
  %1725 = vmatpush1.bf16.msra.mxu0 %v1215
  %1726 = vmatprep.subr.bf16.mxu0 0
  %1727 = vmatpush1.bf16.msra.mxu0 %v1216
  %1728 = vmatprep.subr.bf16.mxu0 0
  %1729 = vmatpush1.bf16.msra.mxu0 %v1217
  %1730 = vmatprep.subr.bf16.mxu0 0
  %1731 = vmatpush1.bf16.msra.mxu0 %v1218
  %1732 = vmatprep.subr.bf16.mxu0 0
  %1733 = vmatpush1.bf16.msra.mxu0 %v1219
  %1734 = vmatprep.subr.bf16.mxu0 0
  %1735 = vmatpush1.bf16.msra.mxu0 %v1220
  %1736 = vmatprep.subr.bf16.mxu0 0
  %1737 = vmatpush1.bf16.msra.mxu0 %v1221
  %1738 = vmatprep.subr.bf16.mxu0 0
  %1739 = vmatpush1.bf16.msra.mxu0 %v1222
  %1740 = vmatprep.subr.bf16.mxu0 0
  %1741 = vmatpush1.bf16.msra.mxu0 %v1223
  %1742 = vmatprep.subr.bf16.mxu0 0
  %1743 = vmatpush1.bf16.msra.mxu0 %v1224
  %1744 = vmatprep.subr.bf16.mxu0 0
  %1745 = vmatpush1.bf16.msra.mxu0 %v1225
  %1746 = vmatprep.mubr.bf16.mxu0 %v647
  %1747 = vmatmul.mubr.bf16.gmra.mrb[0].mxu0 %v646
  %v1748 = vpop.f32.mrb[0].mxu0
  %v1749 = vadd.f32 %v1613, %v1748
  %v1750 = vpop.f32.mrb[0].mxu0
  %v1751 = vpop.f32.mrb[0].mxu0
  %v1752 = vadd.f32 %v1616, %v1751
  %v1753 = vpop.f32.mrb[0].mxu0
  %1754 = vmatprep.mubr.bf16.mxu0 %v656
  %1755 = vmatmul.mubr.bf16.gmra.mrb[0].mxu0 %v655
  %v1756 = vpop.f32.mrb[0].mxu0
  %v1757 = vadd.f32 %v1621, %v1756
  %v1758 = vpop.f32.mrb[0].mxu0
  %v1759 = vpop.f32.mrb[0].mxu0
  %v1760 = vadd.f32 %v1624, %v1759
  %v1761 = vpop.f32.mrb[0].mxu0
  %1762 = vmatprep.mubr.bf16.mxu0 %v665
  %1763 = vmatmul.mubr.bf16.gmra.mrb[0].mxu0 %v664
  %v1764 = vpop.f32.mrb[0].mxu0
  %v1765 = vadd.f32 %v1629, %v1764
  %v1766 = vpop.f32.mrb[0].mxu0
  %v1767 = vpop.f32.mrb[0].mxu0
  %v1768 = vadd.f32 %v1632, %v1767
  %v1769 = vpop.f32.mrb[0].mxu0
  %1770 = vmatprep.mubr.bf16.mxu0 %v674
  %1771 = vmatmul.mubr.bf16.gmra.mrb[0].mxu0 %v673
  %v1772 = vpop.f32.mrb[0].mxu0
  %v1773 = vadd.f32 %v1637, %v1772
  %v1774 = vpop.f32.mrb[0].mxu0
  %v1775 = vpop.f32.mrb[0].mxu0
  %v1776 = vadd.f32 %v1640, %v1775
  %v1777 = vpop.f32.mrb[0].mxu0
  %1778 = vmatprep.mubr.bf16.mxu0 %v683
  %1779 = vmatmul.mubr.bf16.gmra.mrb[0].mxu0 %v682
  %v1780 = vpop.f32.mrb[0].mxu0
  %v1781 = vadd.f32 %v1645, %v1780
  %v1782 = vpop.f32.mrb[0].mxu0
  %v1783 = vpop.f32.mrb[0].mxu0
  %v1784 = vadd.f32 %v1648, %v1783
  %v1785 = vpop.f32.mrb[0].mxu0
  %1786 = vmatprep.mubr.bf16.mxu0 %v692
  %1787 = vmatmul.mubr.bf16.gmra.mrb[0].mxu0 %v691
  %v1788 = vpop.f32.mrb[0].mxu0
  %v1789 = vadd.f32 %v1653, %v1788
  %v1790 = vpop.f32.mrb[0].mxu0
  %v1791 = vpop.f32.mrb[0].mxu0
  %v1792 = vadd.f32 %v1656, %v1791
  %v1793 = vpop.f32.mrb[0].mxu0
  %1794 = vmatprep.mubr.bf16.mxu0 %v701
  %1795 = vmatmul.mubr.bf16.gmra.mrb[0].mxu0 %v700
  %v1796 = vpop.f32.mrb[0].mxu0
  %v1797 = vadd.f32 %v1661, %v1796
  %v1798 = vpop.f32.mrb[0].mxu0
  %v1799 = vpop.f32.mrb[0].mxu0
  %v1800 = vadd.f32 %v1664, %v1799
  %v1801 = vpop.f32.mrb[0].mxu0
  %1802 = vmatprep.mubr.bf16.mxu0 %v710
  %1803 = vmatmul.mubr.bf16.gmra.mrb[0].mxu0 %v709
  %v1804 = vpop.f32.mrb[0].mxu0
  %v1805 = vadd.f32 %v1669, %v1804
  %v1806 = vpop.f32.mrb[0].mxu0
  %v1807 = vpop.f32.mrb[0].mxu0
  %v1808 = vadd.f32 %v1672, %v1807
  %v1809 = vpop.f32.mrb[0].mxu0
  %1810 = vmatprep.mubr.bf16.mxu0 %v719
  %1811 = vmatmul.mubr.bf16.gmra.mrb[0].mxu0 %v718
  %v1812 = vpop.f32.mrb[0].mxu0
  %v1813 = vadd.f32 %v1677, %v1812
  %v1814 = vpop.f32.mrb[0].mxu0
  %v1815 = vpop.f32.mrb[0].mxu0
  %v1816 = vadd.f32 %v1680, %v1815
  %v1817 = vpop.f32.mrb[0].mxu0
  %1818 = vmatprep.mubr.bf16.mxu0 %v728
  %1819 = vmatmul.mubr.bf16.gmra.mrb[0].mxu0 %v727
  %v1820 = vpop.f32.mrb[0].mxu0
  %v1821 = vadd.f32 %v1685, %v1820
  %v1822 = vpop.f32.mrb[0].mxu0
  %v1823 = vpop.f32.mrb[0].mxu0
  %v1824 = vadd.f32 %v1688, %v1823
  %v1825 = vpop.f32.mrb[0].mxu0
  %1826 = vmatprep.mubr.bf16.mxu0 %v737
  %1827 = vmatmul.mubr.bf16.gmra.mrb[0].mxu0 %v736
  %v1828 = vpop.f32.mrb[0].mxu0
  %v1829 = vadd.f32 %v1693, %v1828
  %v1830 = vpop.f32.mrb[0].mxu0
  %v1831 = vpop.f32.mrb[0].mxu0
  %v1832 = vadd.f32 %v1696, %v1831
  %v1833 = vpop.f32.mrb[0].mxu0
  %1834 = vmatprep.mubr.bf16.mxu0 %v746
  %1835 = vmatmul.mubr.bf16.gmra.mrb[0].mxu0 %v745
  %v1836 = vpop.f32.mrb[0].mxu0
  %v1837 = vadd.f32 %v1701, %v1836
  %v1838 = vpop.f32.mrb[0].mxu0
  %v1839 = vpop.f32.mrb[0].mxu0
  %v1840 = vadd.f32 %v1704, %v1839
  %v1841 = vpop.f32.mrb[0].mxu0
  %1842 = vmatprep.mubr.bf16.mxu0 %v755
  %1843 = vmatmul.mubr.bf16.gmra.mrb[0].mxu0 %v754
  %v1844 = vpop.f32.mrb[0].mxu0
  %v1845 = vadd.f32 %v1709, %v1844
  %v1846 = vpop.f32.mrb[0].mxu0
  %v1847 = vpop.f32.mrb[0].mxu0
  %v1848 = vpop.f32.mrb[0].mxu0
  %1849 = vdwg.mxu0
  %1850 = vmatprep.subr.bf16.mxu0 0
  %1851 = vmatpush1.bf16.msra.mxu0 %v1226
  %1852 = vmatprep.subr.bf16.mxu0 0
  %1853 = vmatpush1.bf16.msra.mxu0 %v1227
  %1854 = vmatprep.subr.bf16.mxu0 0
  %1855 = vmatpush1.bf16.msra.mxu0 %v1228
  %1856 = vmatprep.subr.bf16.mxu0 0
  %1857 = vmatpush1.bf16.msra.mxu0 %v1229
  %1858 = vmatprep.subr.bf16.mxu0 0
  %1859 = vmatpush1.bf16.msra.mxu0 %v1230
  %1860 = vmatprep.subr.bf16.mxu0 0
  %1861 = vmatpush1.bf16.msra.mxu0 %v1231
  %1862 = vmatprep.subr.bf16.mxu0 0
  %1863 = vmatpush1.bf16.msra.mxu0 %v1232
  %1864 = vmatprep.subr.bf16.mxu0 0
  %1865 = vmatpush1.bf16.msra.mxu0 %v1233
  %1866 = vmatprep.subr.bf16.mxu0 0
  %1867 = vmatpush1.bf16.msra.mxu0 0
  %1868 = vmatprep.subr.bf16.mxu0 0
  %1869 = vmatpush1.bf16.msra.mxu0 0
  %1870 = vmatprep.subr.bf16.mxu0 0
  %1871 = vmatpush1.bf16.msra.mxu0 0
  %1872 = vmatprep.subr.bf16.mxu0 0
  %1873 = vmatpush1.bf16.msra.mxu0 0
  %1874 = vmatprep.subr.bf16.mxu0 0
  %1875 = vmatpush1.bf16.msra.mxu0 0
  %1876 = vmatprep.subr.bf16.mxu0 0
  %1877 = vmatpush1.bf16.msra.mxu0 0
  %1878 = vmatprep.subr.bf16.mxu0 0
  %1879 = vmatpush1.bf16.msra.mxu0 0
  %1880 = vmatprep.subr.bf16.mxu0 0
  %1881 = vmatpush1.bf16.msra.mxu0 0
  %1882 = vmatprep.mubr.bf16.mxu0 0
  %1883 = vmatmul.mubr.bf16.gmra.mrb[0].mxu0 %v648
  %v1884 = vpop.f32.mrb[0].mxu0
  %v1885 = vadd.f32 %v1749, %v1884
  %v1886 = vpop.f32.mrb[0].mxu0
  %v1887 = vpop.f32.mrb[0].mxu0
  %v1888 = vadd.f32 %v1752, %v1887
  %v1889 = vpop.f32.mrb[0].mxu0
  %1890 = vmatprep.mubr.bf16.mxu0 0
  %1891 = vmatmul.mubr.bf16.gmra.mrb[0].mxu0 %v657
  %v1892 = vpop.f32.mrb[0].mxu0
  %v1893 = vadd.f32 %v1757, %v1892
  %v1894 = vpop.f32.mrb[0].mxu0
  %v1895 = vpop.f32.mrb[0].mxu0
  %v1896 = vadd.f32 %v1760, %v1895
  %v1897 = vpop.f32.mrb[0].mxu0
  %1898 = vmatprep.mubr.bf16.mxu0 0
  %1899 = vmatmul.mubr.bf16.gmra.mrb[0].mxu0 %v666
  %v1900 = vpop.f32.mrb[0].mxu0
  %v1901 = vadd.f32 %v1765, %v1900
  %v1902 = vpop.f32.mrb[0].mxu0
  %v1903 = vpop.f32.mrb[0].mxu0
  %v1904 = vadd.f32 %v1768, %v1903
  %v1905 = vpop.f32.mrb[0].mxu0
  %1906 = vmatprep.mubr.bf16.mxu0 0
  %1907 = vmatmul.mubr.bf16.gmra.mrb[0].mxu0 %v675
  %v1908 = vpop.f32.mrb[0].mxu0
  %v1909 = vadd.f32 %v1773, %v1908
  %v1910 = vpop.f32.mrb[0].mxu0
  %v1911 = vpop.f32.mrb[0].mxu0
  %v1912 = vadd.f32 %v1776, %v1911
  %v1913 = vpop.f32.mrb[0].mxu0
  %1914 = vmatprep.mubr.bf16.mxu0 0
  %1915 = vmatmul.mubr.bf16.gmra.mrb[0].mxu0 %v684
  %v1916 = vpop.f32.mrb[0].mxu0
  %v1917 = vadd.f32 %v1781, %v1916
  %v1918 = vpop.f32.mrb[0].mxu0
  %v1919 = vpop.f32.mrb[0].mxu0
  %v1920 = vadd.f32 %v1784, %v1919
  %v1921 = vpop.f32.mrb[0].mxu0
  %1922 = vmatprep.mubr.bf16.mxu0 0
  %1923 = vmatmul.mubr.bf16.gmra.mrb[0].mxu0 %v693
  %v1924 = vpop.f32.mrb[0].mxu0
  %v1925 = vadd.f32 %v1789, %v1924
  %v1926 = vpop.f32.mrb[0].mxu0
  %v1927 = vpop.f32.mrb[0].mxu0
  %v1928 = vadd.f32 %v1792, %v1927
  %v1929 = vpop.f32.mrb[0].mxu0
  %1930 = vmatprep.mubr.bf16.mxu0 0
  %1931 = vmatmul.mubr.bf16.gmra.mrb[0].mxu0 %v702
  %v1932 = vpop.f32.mrb[0].mxu0
  %v1933 = vadd.f32 %v1797, %v1932
  %v1934 = vpop.f32.mrb[0].mxu0
  %v1935 = vpop.f32.mrb[0].mxu0
  %v1936 = vadd.f32 %v1800, %v1935
  %v1937 = vpop.f32.mrb[0].mxu0
  %1938 = vmatprep.mubr.bf16.mxu0 0
  %1939 = vmatmul.mubr.bf16.gmra.mrb[0].mxu0 %v711
  %v1940 = vpop.f32.mrb[0].mxu0
  %v1941 = vadd.f32 %v1805, %v1940
  %v1942 = vpop.f32.mrb[0].mxu0
  %v1943 = vpop.f32.mrb[0].mxu0
  %v1944 = vadd.f32 %v1808, %v1943
  %v1945 = vpop.f32.mrb[0].mxu0
  %1946 = vmatprep.mubr.bf16.mxu0 0
  %1947 = vmatmul.mubr.bf16.gmra.mrb[0].mxu0 %v720
  %v1948 = vpop.f32.mrb[0].mxu0
  %v1949 = vadd.f32 %v1813, %v1948
  %v1950 = vpop.f32.mrb[0].mxu0
  %v1951 = vpop.f32.mrb[0].mxu0
  %v1952 = vadd.f32 %v1816, %v1951
  %v1953 = vpop.f32.mrb[0].mxu0
  %1954 = vmatprep.mubr.bf16.mxu0 0
  %1955 = vmatmul.mubr.bf16.gmra.mrb[0].mxu0 %v729
  %v1956 = vpop.f32.mrb[0].mxu0
  %v1957 = vadd.f32 %v1821, %v1956
  %v1958 = vpop.f32.mrb[0].mxu0
  %v1959 = vpop.f32.mrb[0].mxu0
  %v1960 = vadd.f32 %v1824, %v1959
  %v1961 = vpop.f32.mrb[0].mxu0
  %1962 = vmatprep.mubr.bf16.mxu0 0
  %1963 = vmatmul.mubr.bf16.gmra.mrb[0].mxu0 %v738
  %v1964 = vpop.f32.mrb[0].mxu0
  %v1965 = vadd.f32 %v1829, %v1964
  %v1966 = vpop.f32.mrb[0].mxu0
  %v1967 = vpop.f32.mrb[0].mxu0
  %v1968 = vadd.f32 %v1832, %v1967
  %v1969 = vpop.f32.mrb[0].mxu0
  %1970 = vmatprep.mubr.bf16.mxu0 0
  %1971 = vmatmul.mubr.bf16.gmra.mrb[0].mxu0 %v747
  %v1972 = vpop.f32.mrb[0].mxu0
  %v1973 = vadd.f32 %v1837, %v1972
  %v1974 = vpop.f32.mrb[0].mxu0
  %v1975 = vpop.f32.mrb[0].mxu0
  %v1976 = vadd.f32 %v1840, %v1975
  %v1977 = vpop.f32.mrb[0].mxu0
  %1978 = vmatprep.mubr.bf16.mxu0 0
  %1979 = vmatmul.mubr.bf16.gmra.mrb[0].mxu0 %v756
  %v1980 = vpop.f32.mrb[0].mxu0
  %v1981 = vadd.f32 %v1845, %v1980
  %v1982 = vpop.f32.mrb[0].mxu0
  %v1983 = vpop.f32.mrb[0].mxu0
  %v1984 = vpop.f32.mrb[0].mxu0
  %1985 = vdwg.mxu0
  %v1986 = vld [vmem:[%s2] sm:$0x1]
  %v1988 = vlaneseq
  %v1989 = vshrl.u32 %v1988, 7
  %v1990 = vsub.s32 0, %v1989
  %v1991 = vrot.slane %v1986, %v1990
  %v1993 = vmul.f32 %v1885, %v1991
  %v1994 = vmul.f32 %v1888, %v1991
  %v1995 = vmul.f32 %v1893, %v1991
  %v1996 = vmul.f32 %v1896, %v1991
  %v1997 = vmul.f32 %v1901, %v1991
  %v1998 = vmul.f32 %v1904, %v1991
  %v1999 = vmul.f32 %v1909, %v1991
  %v2000 = vmul.f32 %v1912, %v1991
  %v2001 = vmul.f32 %v1917, %v1991
  %v2002 = vmul.f32 %v1920, %v1991
  %v2003 = vmul.f32 %v1925, %v1991
  %v2004 = vmul.f32 %v1928, %v1991
  %v2005 = vmul.f32 %v1933, %v1991
  %v2006 = vmul.f32 %v1936, %v1991
  %v2007 = vmul.f32 %v1941, %v1991
  %v2008 = vmul.f32 %v1944, %v1991
  %v2009 = vmul.f32 %v1949, %v1991
  %v2010 = vmul.f32 %v1952, %v1991
  %v2011 = vmul.f32 %v1957, %v1991
  %v2012 = vmul.f32 %v1960, %v1991
  %v2013 = vmul.f32 %v1965, %v1991
  %v2014 = vmul.f32 %v1968, %v1991
  %v2015 = vmul.f32 %v1973, %v1991
  %v2016 = vmul.f32 %v1976, %v1991
  %v2017 = vmul.f32 %v1981, %v1991
  %v2018 = vld [vmem:[%s3] sm:$0x1]
  %v2020 = vlaneseq
  %v2021 = vshrl.u32 %v2020, 7
  %v2022 = vsub.s32 0, %v2021
  %v2023 = vrot.slane %v2018, %v2022
  %v2025 = vadd.f32 %v1993, %v2023
  %v2026 = vadd.f32 %v1994, %v2023
  %v2027 = vadd.f32 %v1995, %v2023
  %v2028 = vadd.f32 %v1996, %v2023
  %v2029 = vadd.f32 %v1997, %v2023
  %v2030 = vadd.f32 %v1998, %v2023
  %v2031 = vadd.f32 %v1999, %v2023
  %v2032 = vadd.f32 %v2000, %v2023
  %v2033 = vadd.f32 %v2001, %v2023
  %v2034 = vadd.f32 %v2002, %v2023
  %v2035 = vadd.f32 %v2003, %v2023
  %v2036 = vadd.f32 %v2004, %v2023
  %v2037 = vadd.f32 %v2005, %v2023
  %v2038 = vadd.f32 %v2006, %v2023
  %v2039 = vadd.f32 %v2007, %v2023
  %v2040 = vadd.f32 %v2008, %v2023
  %v2041 = vadd.f32 %v2009, %v2023
  %v2042 = vadd.f32 %v2010, %v2023
  %v2043 = vadd.f32 %v2011, %v2023
  %v2044 = vadd.f32 %v2012, %v2023
  %v2045 = vadd.f32 %v2013, %v2023
  %v2046 = vadd.f32 %v2014, %v2023
  %v2047 = vadd.f32 %v2015, %v2023
  %v2048 = vadd.f32 %v2016, %v2023
  %v2049 = vadd.f32 %v2017, %v2023
  %v2050 = vld [vmem:[%s4] sm:$0xff]
  %v2051 = vld [vmem:[%s4 + $0x8] sm:$0xff]
  %v2052 = vld [vmem:[%s4 + $0x10] sm:$0xff]
  %v2053 = vld [vmem:[%s4 + $0x18] sm:$0xff]
  %v2054 = vld [vmem:[%s4 + $0x20] sm:$0xff]
  %v2055 = vld [vmem:[%s4 + $0x28] sm:$0xff]
  %v2056 = vld [vmem:[%s4 + $0x30] sm:$0xff]
  %v2057 = vld [vmem:[%s4 + $0x38] sm:$0xff]
  %v2058 = vld [vmem:[%s4 + $0x40] sm:$0xff]
  %v2059 = vld [vmem:[%s4 + $0x48] sm:$0xff]
  %v2060 = vld [vmem:[%s4 + $0x50] sm:$0xff]
  %v2061 = vld [vmem:[%s4 + $0x58] sm:$0xff]
  %v2062 = vld [vmem:[%s4 + $0x60] sm:$0xff]
  %v2063 = vld [vmem:[%s4 + $0x68] sm:$0xff]
  %v2064 = vld [vmem:[%s4 + $0x70] sm:$0xff]
  %v2065 = vld [vmem:[%s4 + $0x78] sm:$0xff]
  %v2066 = vld [vmem:[%s4 + $0x80] sm:$0xff]
  %v2067 = vld [vmem:[%s4 + $0x88] sm:$0xff]
  %v2068 = vld [vmem:[%s4 + $0x90] sm:$0xff]
  %v2069 = vld [vmem:[%s4 + $0x98] sm:$0xff]
  %v2070 = vld [vmem:[%s4 + $0xa0] sm:$0xff]
  %v2071 = vld [vmem:[%s4 + $0xa8] sm:$0xff]
  %v2072 = vld [vmem:[%s4 + $0xb0] sm:$0xff]
  %v2073 = vld [vmem:[%s4 + $0xb8] sm:$0xff]
  %v2074 = vld [vmem:[%s4 + $0xc0] sm:$0xff]
  %v2075 = vadd.f32 %v2025, %v2050
  %v2076 = vadd.f32 %v2026, %v2051
  %v2077 = vadd.f32 %v2027, %v2052
  %v2078 = vadd.f32 %v2028, %v2053
  %v2079 = vadd.f32 %v2029, %v2054
  %v2080 = vadd.f32 %v2030, %v2055
  %v2081 = vadd.f32 %v2031, %v2056
  %v2082 = vadd.f32 %v2032, %v2057
  %v2083 = vadd.f32 %v2033, %v2058
  %v2084 = vadd.f32 %v2034, %v2059
  %v2085 = vadd.f32 %v2035, %v2060
  %v2086 = vadd.f32 %v2036, %v2061
  %v2087 = vadd.f32 %v2037, %v2062
  %v2088 = vadd.f32 %v2038, %v2063
  %v2089 = vadd.f32 %v2039, %v2064
  %v2090 = vadd.f32 %v2040, %v2065
  %v2091 = vadd.f32 %v2041, %v2066
  %v2092 = vadd.f32 %v2042, %v2067
  %v2093 = vadd.f32 %v2043, %v2068
  %v2094 = vadd.f32 %v2044, %v2069
  %v2095 = vadd.f32 %v2045, %v2070
  %v2096 = vadd.f32 %v2046, %v2071
  %v2097 = vadd.f32 %v2047, %v2072
  %v2098 = vadd.f32 %v2048, %v2073
  %v2099 = vadd.f32 %v2049, %v2074
  %v2100 = vmax.f32 %v2075, 0.0
  %v2101 = vmax.f32 %v2076, 0.0
  %v2102 = vmax.f32 %v2077, 0.0
  %v2103 = vmax.f32 %v2078, 0.0
  %v2104 = vmax.f32 %v2079, 0.0
  %v2105 = vmax.f32 %v2080, 0.0
  %v2106 = vmax.f32 %v2081, 0.0
  %v2107 = vmax.f32 %v2082, 0.0
  %v2108 = vmax.f32 %v2083, 0.0
  %v2109 = vmax.f32 %v2084, 0.0
  %v2110 = vmax.f32 %v2085, 0.0
  %v2111 = vmax.f32 %v2086, 0.0
  %v2112 = vmax.f32 %v2087, 0.0
  %v2113 = vmax.f32 %v2088, 0.0
  %v2114 = vmax.f32 %v2089, 0.0
  %v2115 = vmax.f32 %v2090, 0.0
  %v2116 = vmax.f32 %v2091, 0.0
  %v2117 = vmax.f32 %v2092, 0.0
  %v2118 = vmax.f32 %v2093, 0.0
  %v2119 = vmax.f32 %v2094, 0.0
  %v2120 = vmax.f32 %v2095, 0.0
  %v2121 = vmax.f32 %v2096, 0.0
  %v2122 = vmax.f32 %v2097, 0.0
  %v2123 = vmax.f32 %v2098, 0.0
  %v2124 = vmax.f32 %v2099, 0.0
  %2125 = vst [vmem:[%s5] sm:$0xff] %v2100
  %2126 = vst [vmem:[%s5 + $0x8] sm:$0xff] %v2101
  %2127 = vst [vmem:[%s5 + $0x10] sm:$0xff] %v2102
  %2128 = vst [vmem:[%s5 + $0x18] sm:$0xff] %v2103
  %2129 = vst [vmem:[%s5 + $0x20] sm:$0xff] %v2104
  %2130 = vst [vmem:[%s5 + $0x28] sm:$0xff] %v2105
  %2131 = vst [vmem:[%s5 + $0x30] sm:$0xff] %v2106
  %2132 = vst [vmem:[%s5 + $0x38] sm:$0xff] %v2107
  %2133 = vst [vmem:[%s5 + $0x40] sm:$0xff] %v2108
  %2134 = vst [vmem:[%s5 + $0x48] sm:$0xff] %v2109
  %2135 = vst [vmem:[%s5 + $0x50] sm:$0xff] %v2110
  %2136 = vst [vmem:[%s5 + $0x58] sm:$0xff] %v2111
  %2137 = vst [vmem:[%s5 + $0x60] sm:$0xff] %v2112
  %2138 = vst [vmem:[%s5 + $0x68] sm:$0xff] %v2113
  %2139 = vst [vmem:[%s5 + $0x70] sm:$0xff] %v2114
  %2140 = vst [vmem:[%s5 + $0x78] sm:$0xff] %v2115
  %2141 = vst [vmem:[%s5 + $0x80] sm:$0xff] %v2116
  %2142 = vst [vmem:[%s5 + $0x88] sm:$0xff] %v2117
  %2143 = vst [vmem:[%s5 + $0x90] sm:$0xff] %v2118
  %2144 = vst [vmem:[%s5 + $0x98] sm:$0xff] %v2119
  %2145 = vst [vmem:[%s5 + $0xa0] sm:$0xff] %v2120
  %2146 = vst [vmem:[%s5 + $0xa8] sm:$0xff] %v2121
  %2147 = vst [vmem:[%s5 + $0xb0] sm:$0xff] %v2122
  %2148 = vst [vmem:[%s5 + $0xb8] sm:$0xff] %v2123
  %2149 = vst [vmem:[%s5 + $0xc0] sm:$0xff] %v2124
  // Predicated region
  $region22: #{forward.15} parent=0 // pred_check
    _
  $region23: #{forward.15} parent=0 // pred_check_branch
    %2151 = sbr.rel (0) target = $region25
  $region24: #{forward.15} parent=0 // pred_region
    _
  $region25: #{forward.15} parent=0 // pred_fallthru
    _
  // Predicated region
  $region26: #{forward.15} parent=0 // pred_check
    _
  $region27: #{forward.15} parent=0 // pred_check_branch
    %2153 = sbr.rel (0) target = $region29
  $region28: #{forward.15} parent=0 // pred_region
    _
  $region29: #{forward.15} parent=0 // pred_fallthru
    _

// kernel: forward.18
$region0: #{forward.18}
  #allocation0 [shape = 'u32[]', space=smem, size = 0x4, offset = 0x4, fixed_abs, tag = 'smem constant byte address 0x4 - core index']
  #allocation1 [shape = 'u32[144,128]{1,0:T(1,128)}', space=vmem, size = 0x12000, scoped, tag = 'internal scratch']
  %s0 = inlined_call_operand.vmem [shape: bf16[50,1152], index: 0, kind: input, shape index: {}]
  %s1 = inlined_call_operand.vmem [shape: bf16[1152,128], index: 1, kind: input, shape index: {}]
  %s2 = inlined_call_operand.vmem [shape: f32[1,128], index: 2, kind: input, shape index: {}]
  %s3 = inlined_call_operand.vmem [shape: f32[1,128], index: 3, kind: input, shape index: {}]
  %s4 = inlined_call_operand.vmem [shape: f32[50,128], index: 4, kind: output, shape index: {}]
  %s5 = sld [smem:[#allocation0]]
  $region26: #{forward.18} parent=0
    _
  %s7 = ssub.s32 1, %s5
  %s8 = scalar_select 0, %s7, %s5
  // Predicated region
  $region2: #{forward.18} parent=0 // pred_check
    _
  $region3: #{forward.18} parent=0 // pred_check_branch
    %10 = sbr.rel (0) target = $region5
  $region4: #{forward.18} parent=0 // pred_region
    _
  $region5: #{forward.18} parent=0 // pred_fallthru
    _
  // Predicated region
  $region6: #{forward.18} parent=0 // pred_check
    _
  $region7: #{forward.18} parent=0 // pred_check_branch
    %12 = sbr.rel (0) target = $region9
  $region8: #{forward.18} parent=0 // pred_region
    _
  $region9: #{forward.18} parent=0 // pred_fallthru
    _
  // Predicated region
  $region10: #{forward.18} parent=0 // pred_check
    _
  $region11: #{forward.18} parent=0 // pred_check_branch
    %14 = sbr.rel (0) target = $region13
  $region12: #{forward.18} parent=0 // pred_region
    _
  $region13: #{forward.18} parent=0 // pred_fallthru
    _
  // Predicated region
  $region14: #{forward.18} parent=0 // pred_check
    _
  $region15: #{forward.18} parent=0 // pred_check_branch
    %16 = sbr.rel (0) target = $region17
  $region16: #{forward.18} parent=0 // pred_region
    _
  $region17: #{forward.18} parent=0 // pred_fallthru
    _
  %v18 = vld [vmem:[%s0] sm:$0xff]
  %v19 = vld [vmem:[%s0 + $0x8] sm:$0xff]
  %v20 = vld [vmem:[%s0 + $0x10] sm:$0xff]
  %v21 = vld [vmem:[%s0 + $0x18] sm:$0xff]
  %v22 = vld [vmem:[%s0 + $0x20] sm:$0xf]
  %v23 = vld [vmem:[%s0 + $0x24] sm:$0xff]
  %v24 = vld [vmem:[%s0 + $0x2c] sm:$0xff]
  %v25 = vld [vmem:[%s0 + $0x34] sm:$0xff]
  %v26 = vld [vmem:[%s0 + $0x3c] sm:$0xff]
  %v27 = vld [vmem:[%s0 + $0x44] sm:$0xf]
  %v28 = vld [vmem:[%s0 + $0x48] sm:$0xff]
  %v29 = vld [vmem:[%s0 + $0x50] sm:$0xff]
  %v30 = vld [vmem:[%s0 + $0x58] sm:$0xff]
  %v31 = vld [vmem:[%s0 + $0x60] sm:$0xff]
  %v32 = vld [vmem:[%s0 + $0x68] sm:$0xf]
  %v33 = vld [vmem:[%s0 + $0x6c] sm:$0xff]
  %v34 = vld [vmem:[%s0 + $0x74] sm:$0xff]
  %v35 = vld [vmem:[%s0 + $0x7c] sm:$0xff]
  %v36 = vld [vmem:[%s0 + $0x84] sm:$0xff]
  %v37 = vld [vmem:[%s0 + $0x8c] sm:$0xf]
  %v38 = vld [vmem:[%s0 + $0x90] sm:$0xff]
  %v39 = vld [vmem:[%s0 + $0x98] sm:$0xff]
  %v40 = vld [vmem:[%s0 + $0xa0] sm:$0xff]
  %v41 = vld [vmem:[%s0 + $0xa8] sm:$0xff]
  %v42 = vld [vmem:[%s0 + $0xb0] sm:$0xf]
  %v43 = vld [vmem:[%s0 + $0xb4] sm:$0xff]
  %v44 = vld [vmem:[%s0 + $0xbc] sm:$0xff]
  %v45 = vld [vmem:[%s0 + $0xc4] sm:$0xff]
  %v46 = vld [vmem:[%s0 + $0xcc] sm:$0xff]
  %v47 = vld [vmem:[%s0 + $0xd4] sm:$0xf]
  %v48 = vld [vmem:[%s0 + $0xd8] sm:$0x11]
  %v49 = vld [vmem:[%s0 + $0xe0] sm:$0x11]
  %v50 = vld [vmem:[%s0 + $0xe8] sm:$0x11]
  %v51 = vld [vmem:[%s0 + $0xf0] sm:$0x11]
  %v52 = vld [vmem:[%s0 + $0xf8] sm:$0x1]
  %v53 = vld [vmem:[%s1] sm:$0xf]
  %v54 = vld [vmem:[%s1 + $0x4] sm:$0xf]
  %v55 = vld [vmem:[%s1 + $0x8] sm:$0xf]
  %v56 = vld [vmem:[%s1 + $0xc] sm:$0xf]
  %v57 = vld [vmem:[%s1 + $0x10] sm:$0xf]
  %v58 = vld [vmem:[%s1 + $0x14] sm:$0xf]
  %v59 = vld [vmem:[%s1 + $0x18] sm:$0xf]
  %v60 = vld [vmem:[%s1 + $0x1c] sm:$0xf]
  %v61 = vld [vmem:[%s1 + $0x20] sm:$0xf]
  %v62 = vld [vmem:[%s1 + $0x24] sm:$0xf]
  %v63 = vld [vmem:[%s1 + $0x28] sm:$0xf]
  %v64 = vld [vmem:[%s1 + $0x2c] sm:$0xf]
  %v65 = vld [vmem:[%s1 + $0x30] sm:$0xf]
  %v66 = vld [vmem:[%s1 + $0x34] sm:$0xf]
  %v67 = vld [vmem:[%s1 + $0x38] sm:$0xf]
  %v68 = vld [vmem:[%s1 + $0x3c] sm:$0xf]
  %v69 = vld [vmem:[%s1 + $0x40] sm:$0xf]
  %v70 = vld [vmem:[%s1 + $0x44] sm:$0xf]
  %v71 = vld [vmem:[%s1 + $0x48] sm:$0xf]
  %v72 = vld [vmem:[%s1 + $0x4c] sm:$0xf]
  %v73 = vld [vmem:[%s1 + $0x50] sm:$0xf]
  %v74 = vld [vmem:[%s1 + $0x54] sm:$0xf]
  %v75 = vld [vmem:[%s1 + $0x58] sm:$0xf]
  %v76 = vld [vmem:[%s1 + $0x5c] sm:$0xf]
  %v77 = vld [vmem:[%s1 + $0x60] sm:$0xf]
  %v78 = vld [vmem:[%s1 + $0x64] sm:$0xf]
  %v79 = vld [vmem:[%s1 + $0x68] sm:$0xf]
  %v80 = vld [vmem:[%s1 + $0x6c] sm:$0xf]
  %v81 = vld [vmem:[%s1 + $0x70] sm:$0xf]
  %v82 = vld [vmem:[%s1 + $0x74] sm:$0xf]
  %v83 = vld [vmem:[%s1 + $0x78] sm:$0xf]
  %v84 = vld [vmem:[%s1 + $0x7c] sm:$0xf]
  %v85 = vld [vmem:[%s1 + $0x80] sm:$0xf]
  %v86 = vld [vmem:[%s1 + $0x84] sm:$0xf]
  %v87 = vld [vmem:[%s1 + $0x88] sm:$0xf]
  %v88 = vld [vmem:[%s1 + $0x8c] sm:$0xf]
  %v89 = vld [vmem:[%s1 + $0x90] sm:$0xf]
  %v90 = vld [vmem:[%s1 + $0x94] sm:$0xf]
  %v91 = vld [vmem:[%s1 + $0x98] sm:$0xf]
  %v92 = vld [vmem:[%s1 + $0x9c] sm:$0xf]
  %v93 = vld [vmem:[%s1 + $0xa0] sm:$0xf]
  %v94 = vld [vmem:[%s1 + $0xa4] sm:$0xf]
  %v95 = vld [vmem:[%s1 + $0xa8] sm:$0xf]
  %v96 = vld [vmem:[%s1 + $0xac] sm:$0xf]
  %v97 = vld [vmem:[%s1 + $0xb0] sm:$0xf]
  %v98 = vld [vmem:[%s1 + $0xb4] sm:$0xf]
  %v99 = vld [vmem:[%s1 + $0xb8] sm:$0xf]
  %v100 = vld [vmem:[%s1 + $0xbc] sm:$0xf]
  %v101 = vld [vmem:[%s1 + $0xc0] sm:$0xf]
  %v102 = vld [vmem:[%s1 + $0xc4] sm:$0xf]
  %v103 = vld [vmem:[%s1 + $0xc8] sm:$0xf]
  %v104 = vld [vmem:[%s1 + $0xcc] sm:$0xf]
  %v105 = vld [vmem:[%s1 + $0xd0] sm:$0xf]
  %v106 = vld [vmem:[%s1 + $0xd4] sm:$0xf]
  %v107 = vld [vmem:[%s1 + $0xd8] sm:$0xf]
  %v108 = vld [vmem:[%s1 + $0xdc] sm:$0xf]
  %v109 = vld [vmem:[%s1 + $0xe0] sm:$0xf]
  %v110 = vld [vmem:[%s1 + $0xe4] sm:$0xf]
  %v111 = vld [vmem:[%s1 + $0xe8] sm:$0xf]
  %v112 = vld [vmem:[%s1 + $0xec] sm:$0xf]
  %v113 = vld [vmem:[%s1 + $0xf0] sm:$0xf]
  %v114 = vld [vmem:[%s1 + $0xf4] sm:$0xf]
  %v115 = vld [vmem:[%s1 + $0xf8] sm:$0xf]
  %v116 = vld [vmem:[%s1 + $0xfc] sm:$0xf]
  %v117 = vld [vmem:[%s1 + $0x100] sm:$0xf]
  %v118 = vld [vmem:[%s1 + $0x104] sm:$0xf]
  %v119 = vld [vmem:[%s1 + $0x108] sm:$0xf]
  %v120 = vld [vmem:[%s1 + $0x10c] sm:$0xf]
  %v121 = vld [vmem:[%s1 + $0x110] sm:$0xf]
  %v122 = vld [vmem:[%s1 + $0x114] sm:$0xf]
  %v123 = vld [vmem:[%s1 + $0x118] sm:$0xf]
  %v124 = vld [vmem:[%s1 + $0x11c] sm:$0xf]
  %v125 = vld [vmem:[%s1 + $0x120] sm:$0xf]
  %v126 = vld [vmem:[%s1 + $0x124] sm:$0xf]
  %v127 = vld [vmem:[%s1 + $0x128] sm:$0xf]
  %v128 = vld [vmem:[%s1 + $0x12c] sm:$0xf]
  %v129 = vld [vmem:[%s1 + $0x130] sm:$0xf]
  %v130 = vld [vmem:[%s1 + $0x134] sm:$0xf]
  %v131 = vld [vmem:[%s1 + $0x138] sm:$0xf]
  %v132 = vld [vmem:[%s1 + $0x13c] sm:$0xf]
  %v133 = vld [vmem:[%s1 + $0x140] sm:$0xf]
  %v134 = vld [vmem:[%s1 + $0x144] sm:$0xf]
  %v135 = vld [vmem:[%s1 + $0x148] sm:$0xf]
  %v136 = vld [vmem:[%s1 + $0x14c] sm:$0xf]
  %v137 = vld [vmem:[%s1 + $0x150] sm:$0xf]
  %v138 = vld [vmem:[%s1 + $0x154] sm:$0xf]
  %v139 = vld [vmem:[%s1 + $0x158] sm:$0xf]
  %v140 = vld [vmem:[%s1 + $0x15c] sm:$0xf]
  %v141 = vld [vmem:[%s1 + $0x160] sm:$0xf]
  %v142 = vld [vmem:[%s1 + $0x164] sm:$0xf]
  %v143 = vld [vmem:[%s1 + $0x168] sm:$0xf]
  %v144 = vld [vmem:[%s1 + $0x16c] sm:$0xf]
  %v145 = vld [vmem:[%s1 + $0x170] sm:$0xf]
  %v146 = vld [vmem:[%s1 + $0x174] sm:$0xf]
  %v147 = vld [vmem:[%s1 + $0x178] sm:$0xf]
  %v148 = vld [vmem:[%s1 + $0x17c] sm:$0xf]
  %v149 = vld [vmem:[%s1 + $0x180] sm:$0xf]
  %v150 = vld [vmem:[%s1 + $0x184] sm:$0xf]
  %v151 = vld [vmem:[%s1 + $0x188] sm:$0xf]
  %v152 = vld [vmem:[%s1 + $0x18c] sm:$0xf]
  %v153 = vld [vmem:[%s1 + $0x190] sm:$0xf]
  %v154 = vld [vmem:[%s1 + $0x194] sm:$0xf]
  %v155 = vld [vmem:[%s1 + $0x198] sm:$0xf]
  %v156 = vld [vmem:[%s1 + $0x19c] sm:$0xf]
  %v157 = vld [vmem:[%s1 + $0x1a0] sm:$0xf]
  %v158 = vld [vmem:[%s1 + $0x1a4] sm:$0xf]
  %v159 = vld [vmem:[%s1 + $0x1a8] sm:$0xf]
  %v160 = vld [vmem:[%s1 + $0x1ac] sm:$0xf]
  %v161 = vld [vmem:[%s1 + $0x1b0] sm:$0xf]
  %v162 = vld [vmem:[%s1 + $0x1b4] sm:$0xf]
  %v163 = vld [vmem:[%s1 + $0x1b8] sm:$0xf]
  %v164 = vld [vmem:[%s1 + $0x1bc] sm:$0xf]
  %v165 = vld [vmem:[%s1 + $0x1c0] sm:$0xf]
  %v166 = vld [vmem:[%s1 + $0x1c4] sm:$0xf]
  %v167 = vld [vmem:[%s1 + $0x1c8] sm:$0xf]
  %v168 = vld [vmem:[%s1 + $0x1cc] sm:$0xf]
  %v169 = vld [vmem:[%s1 + $0x1d0] sm:$0xf]
  %v170 = vld [vmem:[%s1 + $0x1d4] sm:$0xf]
  %v171 = vld [vmem:[%s1 + $0x1d8] sm:$0xf]
  %v172 = vld [vmem:[%s1 + $0x1dc] sm:$0xf]
  %v173 = vld [vmem:[%s1 + $0x1e0] sm:$0xf]
  %v174 = vld [vmem:[%s1 + $0x1e4] sm:$0xf]
  %v175 = vld [vmem:[%s1 + $0x1e8] sm:$0xf]
  %v176 = vld [vmem:[%s1 + $0x1ec] sm:$0xf]
  %v177 = vld [vmem:[%s1 + $0x1f0] sm:$0xf]
  %v178 = vld [vmem:[%s1 + $0x1f4] sm:$0xf]
  %v179 = vld [vmem:[%s1 + $0x1f8] sm:$0xf]
  %v180 = vld [vmem:[%s1 + $0x1fc] sm:$0xf]
  %v181 = vld [vmem:[%s1 + $0x200] sm:$0xf]
  %v182 = vld [vmem:[%s1 + $0x204] sm:$0xf]
  %v183 = vld [vmem:[%s1 + $0x208] sm:$0xf]
  %v184 = vld [vmem:[%s1 + $0x20c] sm:$0xf]
  %v185 = vld [vmem:[%s1 + $0x210] sm:$0xf]
  %v186 = vld [vmem:[%s1 + $0x214] sm:$0xf]
  %v187 = vld [vmem:[%s1 + $0x218] sm:$0xf]
  %v188 = vld [vmem:[%s1 + $0x21c] sm:$0xf]
  %v189 = vld [vmem:[%s1 + $0x220] sm:$0xf]
  %v190 = vld [vmem:[%s1 + $0x224] sm:$0xf]
  %v191 = vld [vmem:[%s1 + $0x228] sm:$0xf]
  %v192 = vld [vmem:[%s1 + $0x22c] sm:$0xf]
  %v193 = vld [vmem:[%s1 + $0x230] sm:$0xf]
  %v194 = vld [vmem:[%s1 + $0x234] sm:$0xf]
  %v195 = vld [vmem:[%s1 + $0x238] sm:$0xf]
  %v196 = vld [vmem:[%s1 + $0x23c] sm:$0xf]
  %v232 = vunpack.c.l.b16 %v18
  %v233 = vunpack.c.h.b16 %v18
  %v234 = vunpack.c.l.b16 %v19
  %v235 = vunpack.c.h.b16 %v19
  %v236 = vunpack.c.l.b16 %v20
  %v237 = vunpack.c.h.b16 %v20
  %v238 = vunpack.c.l.b16 %v21
  %v239 = vunpack.c.h.b16 %v21
  %v240 = vunpack.c.l.b16 %v22
  %v241 = vunpack.c.l.b16 %v23
  %v242 = vunpack.c.h.b16 %v23
  %v243 = vunpack.c.l.b16 %v24
  %v244 = vunpack.c.h.b16 %v24
  %v245 = vunpack.c.l.b16 %v25
  %v246 = vunpack.c.h.b16 %v25
  %v247 = vunpack.c.l.b16 %v26
  %v248 = vunpack.c.h.b16 %v26
  %v249 = vunpack.c.l.b16 %v27
  %v250 = vunpack.c.l.b16 %v28
  %v251 = vunpack.c.h.b16 %v28
  %v252 = vunpack.c.l.b16 %v29
  %v253 = vunpack.c.h.b16 %v29
  %v254 = vunpack.c.l.b16 %v30
  %v255 = vunpack.c.h.b16 %v30
  %v256 = vunpack.c.l.b16 %v31
  %v257 = vunpack.c.h.b16 %v31
  %v258 = vunpack.c.l.b16 %v32
  %v259 = vunpack.c.l.b16 %v33
  %v260 = vunpack.c.h.b16 %v33
  %v261 = vunpack.c.l.b16 %v34
  %v262 = vunpack.c.h.b16 %v34
  %v263 = vunpack.c.l.b16 %v35
  %v264 = vunpack.c.h.b16 %v35
  %v265 = vunpack.c.l.b16 %v36
  %v266 = vunpack.c.h.b16 %v36
  %v267 = vunpack.c.l.b16 %v37
  %v268 = vunpack.c.l.b16 %v38
  %v269 = vunpack.c.h.b16 %v38
  %v270 = vunpack.c.l.b16 %v39
  %v271 = vunpack.c.h.b16 %v39
  %v272 = vunpack.c.l.b16 %v40
  %v273 = vunpack.c.h.b16 %v40
  %v274 = vunpack.c.l.b16 %v41
  %v275 = vunpack.c.h.b16 %v41
  %v276 = vunpack.c.l.b16 %v42
  %v277 = vunpack.c.l.b16 %v43
  %v278 = vunpack.c.h.b16 %v43
  %v279 = vunpack.c.l.b16 %v44
  %v280 = vunpack.c.h.b16 %v44
  %v281 = vunpack.c.l.b16 %v45
  %v282 = vunpack.c.h.b16 %v45
  %v283 = vunpack.c.l.b16 %v46
  %v284 = vunpack.c.h.b16 %v46
  %v285 = vunpack.c.l.b16 %v47
  %v286 = vunpack.c.l.b16 %v48
  %v287 = vunpack.c.h.b16 %v48
  %v288 = vunpack.c.l.b16 %v49
  %v289 = vunpack.c.h.b16 %v49
  %v290 = vunpack.c.l.b16 %v50
  %v291 = vunpack.c.h.b16 %v50
  %v292 = vunpack.c.l.b16 %v51
  %v293 = vunpack.c.h.b16 %v51
  %v294 = vunpack.c.l.b16 %v52
  %v295 = vpack.c.b16 %v241, %v232
  %v296 = vpack.c.b16 %v242, %v233
  %v297 = vpack.c.b16 %v243, %v234
  %v298 = vpack.c.b16 %v244, %v235
  %v299 = vpack.c.b16 %v245, %v236
  %v300 = vpack.c.b16 %v246, %v237
  %v301 = vpack.c.b16 %v247, %v238
  %v302 = vpack.c.b16 %v248, %v239
  %v303 = vpack.c.b16 %v249, %v240
  %v304 = vpack.c.b16 %v259, %v250
  %v305 = vpack.c.b16 %v260, %v251
  %v306 = vpack.c.b16 %v261, %v252
  %v307 = vpack.c.b16 %v262, %v253
  %v308 = vpack.c.b16 %v263, %v254
  %v309 = vpack.c.b16 %v264, %v255
  %v310 = vpack.c.b16 %v265, %v256
  %v311 = vpack.c.b16 %v266, %v257
  %v312 = vpack.c.b16 %v267, %v258
  %v313 = vpack.c.b16 %v277, %v268
  %v314 = vpack.c.b16 %v278, %v269
  %v315 = vpack.c.b16 %v279, %v270
  %v316 = vpack.c.b16 %v280, %v271
  %v317 = vpack.c.b16 %v281, %v272
  %v318 = vpack.c.b16 %v282, %v273
  %v319 = vpack.c.b16 %v283, %v274
  %v320 = vpack.c.b16 %v284, %v275
  %v321 = vpack.c.b16 %v285, %v276
  %v322 = vpack.c.b16 %v286, %v286
  %v323 = vpack.c.b16 %v287, %v287
  %v324 = vpack.c.b16 %v288, %v288
  %v325 = vpack.c.b16 %v289, %v289
  %v326 = vpack.c.b16 %v290, %v290
  %v327 = vpack.c.b16 %v291, %v291
  %v328 = vpack.c.b16 %v292, %v292
  %v329 = vpack.c.b16 %v293, %v293
  %v330 = vpack.c.b16 %v294, %v294
  %v511 = vunpack.c.l.b16 %v53
  %v512 = vunpack.c.l.b16 %v54
  %v513 = vunpack.c.l.b16 %v55
  %v514 = vunpack.c.l.b16 %v56
  %v515 = vunpack.c.l.b16 %v57
  %v516 = vunpack.c.l.b16 %v58
  %v517 = vunpack.c.l.b16 %v59
  %v518 = vunpack.c.l.b16 %v60
  %v519 = vunpack.c.l.b16 %v61
  %v520 = vunpack.c.l.b16 %v62
  %v521 = vunpack.c.l.b16 %v63
  %v522 = vunpack.c.l.b16 %v64
  %v523 = vunpack.c.l.b16 %v65
  %v524 = vunpack.c.l.b16 %v66
  %v525 = vunpack.c.l.b16 %v67
  %v526 = vunpack.c.l.b16 %v68
  %v527 = vunpack.c.l.b16 %v69
  %v528 = vunpack.c.l.b16 %v70
  %v529 = vunpack.c.l.b16 %v71
  %v530 = vunpack.c.l.b16 %v72
  %v531 = vunpack.c.l.b16 %v73
  %v532 = vunpack.c.l.b16 %v74
  %v533 = vunpack.c.l.b16 %v75
  %v534 = vunpack.c.l.b16 %v76
  %v535 = vunpack.c.l.b16 %v77
  %v536 = vunpack.c.l.b16 %v78
  %v537 = vunpack.c.l.b16 %v79
  %v538 = vunpack.c.l.b16 %v80
  %v539 = vunpack.c.l.b16 %v81
  %v540 = vunpack.c.l.b16 %v82
  %v541 = vunpack.c.l.b16 %v83
  %v542 = vunpack.c.l.b16 %v84
  %v543 = vunpack.c.l.b16 %v85
  %v544 = vunpack.c.l.b16 %v86
  %v545 = vunpack.c.l.b16 %v87
  %v546 = vunpack.c.l.b16 %v88
  %v547 = vunpack.c.l.b16 %v89
  %v548 = vunpack.c.l.b16 %v90
  %v549 = vunpack.c.l.b16 %v91
  %v550 = vunpack.c.l.b16 %v92
  %v551 = vunpack.c.l.b16 %v93
  %v552 = vunpack.c.l.b16 %v94
  %v553 = vunpack.c.l.b16 %v95
  %v554 = vunpack.c.l.b16 %v96
  %v555 = vunpack.c.l.b16 %v97
  %v556 = vunpack.c.l.b16 %v98
  %v557 = vunpack.c.l.b16 %v99
  %v558 = vunpack.c.l.b16 %v100
  %v559 = vunpack.c.l.b16 %v101
  %v560 = vunpack.c.l.b16 %v102
  %v561 = vunpack.c.l.b16 %v103
  %v562 = vunpack.c.l.b16 %v104
  %v563 = vunpack.c.l.b16 %v105
  %v564 = vunpack.c.l.b16 %v106
  %v565 = vunpack.c.l.b16 %v107
  %v566 = vunpack.c.l.b16 %v108
  %v567 = vunpack.c.l.b16 %v109
  %v568 = vunpack.c.l.b16 %v110
  %v569 = vunpack.c.l.b16 %v111
  %v570 = vunpack.c.l.b16 %v112
  %v571 = vunpack.c.l.b16 %v113
  %v572 = vunpack.c.l.b16 %v114
  %v573 = vunpack.c.l.b16 %v115
  %v574 = vunpack.c.l.b16 %v116
  %v575 = vunpack.c.l.b16 %v117
  %v576 = vunpack.c.l.b16 %v118
  %v577 = vunpack.c.l.b16 %v119
  %v578 = vunpack.c.l.b16 %v120
  %v579 = vunpack.c.l.b16 %v121
  %v580 = vunpack.c.l.b16 %v122
  %v581 = vunpack.c.l.b16 %v123
  %v582 = vunpack.c.l.b16 %v124
  %v583 = vunpack.c.l.b16 %v125
  %v584 = vunpack.c.l.b16 %v126
  %v585 = vunpack.c.l.b16 %v127
  %v586 = vunpack.c.l.b16 %v128
  %v587 = vunpack.c.l.b16 %v129
  %v588 = vunpack.c.l.b16 %v130
  %v589 = vunpack.c.l.b16 %v131
  %v590 = vunpack.c.l.b16 %v132
  %v591 = vunpack.c.l.b16 %v133
  %v592 = vunpack.c.l.b16 %v134
  %v593 = vunpack.c.l.b16 %v135
  %v594 = vunpack.c.l.b16 %v136
  %v595 = vunpack.c.l.b16 %v137
  %v596 = vunpack.c.l.b16 %v138
  %v597 = vunpack.c.l.b16 %v139
  %v598 = vunpack.c.l.b16 %v140
  %v599 = vunpack.c.l.b16 %v141
  %v600 = vunpack.c.l.b16 %v142
  %v601 = vunpack.c.l.b16 %v143
  %v602 = vunpack.c.l.b16 %v144
  %v603 = vunpack.c.l.b16 %v145
  %v604 = vunpack.c.l.b16 %v146
  %v605 = vunpack.c.l.b16 %v147
  %v606 = vunpack.c.l.b16 %v148
  %v607 = vunpack.c.l.b16 %v149
  %v608 = vunpack.c.l.b16 %v150
  %v609 = vunpack.c.l.b16 %v151
  %v610 = vunpack.c.l.b16 %v152
  %v611 = vunpack.c.l.b16 %v153
  %v612 = vunpack.c.l.b16 %v154
  %v613 = vunpack.c.l.b16 %v155
  %v614 = vunpack.c.l.b16 %v156
  %v615 = vunpack.c.l.b16 %v157
  %v616 = vunpack.c.l.b16 %v158
  %v617 = vunpack.c.l.b16 %v159
  %v618 = vunpack.c.l.b16 %v160
  %v619 = vunpack.c.l.b16 %v161
  %v620 = vunpack.c.l.b16 %v162
  %v621 = vunpack.c.l.b16 %v163
  %v622 = vunpack.c.l.b16 %v164
  %v623 = vunpack.c.l.b16 %v165
  %v624 = vunpack.c.l.b16 %v166
  %v625 = vunpack.c.l.b16 %v167
  %v626 = vunpack.c.l.b16 %v168
  %v627 = vunpack.c.l.b16 %v169
  %v628 = vunpack.c.l.b16 %v170
  %v629 = vunpack.c.l.b16 %v171
  %v630 = vunpack.c.l.b16 %v172
  %v631 = vunpack.c.l.b16 %v173
  %v632 = vunpack.c.l.b16 %v174
  %v633 = vunpack.c.l.b16 %v175
  %v634 = vunpack.c.l.b16 %v176
  %v635 = vunpack.c.l.b16 %v177
  %v636 = vunpack.c.l.b16 %v178
  %v637 = vunpack.c.l.b16 %v179
  %v638 = vunpack.c.l.b16 %v180
  %v639 = vunpack.c.l.b16 %v181
  %v640 = vunpack.c.l.b16 %v182
  %v641 = vunpack.c.l.b16 %v183
  %v642 = vunpack.c.l.b16 %v184
  %v643 = vunpack.c.l.b16 %v185
  %v644 = vunpack.c.l.b16 %v186
  %v645 = vunpack.c.l.b16 %v187
  %v646 = vunpack.c.l.b16 %v188
  %v647 = vunpack.c.l.b16 %v189
  %v648 = vunpack.c.l.b16 %v190
  %v649 = vunpack.c.l.b16 %v191
  %v650 = vunpack.c.l.b16 %v192
  %v651 = vunpack.c.l.b16 %v193
  %v652 = vunpack.c.l.b16 %v194
  %v653 = vunpack.c.l.b16 %v195
  %v654 = vunpack.c.l.b16 %v196
  %v655 = vpack.c.b16 %v512, %v511
  %v656 = vpack.c.b16 %v514, %v513
  %v657 = vpack.c.b16 %v516, %v515
  %v658 = vpack.c.b16 %v518, %v517
  %v659 = vpack.c.b16 %v520, %v519
  %v660 = vpack.c.b16 %v522, %v521
  %v661 = vpack.c.b16 %v524, %v523
  %v662 = vpack.c.b16 %v526, %v525
  %v663 = vpack.c.b16 %v528, %v527
  %v664 = vpack.c.b16 %v530, %v529
  %v665 = vpack.c.b16 %v532, %v531
  %v666 = vpack.c.b16 %v534, %v533
  %v667 = vpack.c.b16 %v536, %v535
  %v668 = vpack.c.b16 %v538, %v537
  %v669 = vpack.c.b16 %v540, %v539
  %v670 = vpack.c.b16 %v542, %v541
  %v671 = vpack.c.b16 %v544, %v543
  %v672 = vpack.c.b16 %v546, %v545
  %v673 = vpack.c.b16 %v548, %v547
  %v674 = vpack.c.b16 %v550, %v549
  %v675 = vpack.c.b16 %v552, %v551
  %v676 = vpack.c.b16 %v554, %v553
  %v677 = vpack.c.b16 %v556, %v555
  %v678 = vpack.c.b16 %v558, %v557
  %v679 = vpack.c.b16 %v560, %v559
  %v680 = vpack.c.b16 %v562, %v561
  %v681 = vpack.c.b16 %v564, %v563
  %v682 = vpack.c.b16 %v566, %v565
  %v683 = vpack.c.b16 %v568, %v567
  %v684 = vpack.c.b16 %v570, %v569
  %v685 = vpack.c.b16 %v572, %v571
  %v686 = vpack.c.b16 %v574, %v573
  %v687 = vpack.c.b16 %v576, %v575
  %v688 = vpack.c.b16 %v578, %v577
  %v689 = vpack.c.b16 %v580, %v579
  %v690 = vpack.c.b16 %v582, %v581
  %v691 = vpack.c.b16 %v584, %v583
  %v692 = vpack.c.b16 %v586, %v585
  %v693 = vpack.c.b16 %v588, %v587
  %v694 = vpack.c.b16 %v590, %v589
  %v695 = vpack.c.b16 %v592, %v591
  %v696 = vpack.c.b16 %v594, %v593
  %v697 = vpack.c.b16 %v596, %v595
  %v698 = vpack.c.b16 %v598, %v597
  %v699 = vpack.c.b16 %v600, %v599
  %v700 = vpack.c.b16 %v602, %v601
  %v701 = vpack.c.b16 %v604, %v603
  %v702 = vpack.c.b16 %v606, %v605
  %v703 = vpack.c.b16 %v608, %v607
  %v704 = vpack.c.b16 %v610, %v609
  %v705 = vpack.c.b16 %v612, %v611
  %v706 = vpack.c.b16 %v614, %v613
  %v707 = vpack.c.b16 %v616, %v615
  %v708 = vpack.c.b16 %v618, %v617
  %v709 = vpack.c.b16 %v620, %v619
  %v710 = vpack.c.b16 %v622, %v621
  %v711 = vpack.c.b16 %v624, %v623
  %v712 = vpack.c.b16 %v626, %v625
  %v713 = vpack.c.b16 %v628, %v627
  %v714 = vpack.c.b16 %v630, %v629
  %v715 = vpack.c.b16 %v632, %v631
  %v716 = vpack.c.b16 %v634, %v633
  %v717 = vpack.c.b16 %v636, %v635
  %v718 = vpack.c.b16 %v638, %v637
  %v719 = vpack.c.b16 %v640, %v639
  %v720 = vpack.c.b16 %v642, %v641
  %v721 = vpack.c.b16 %v644, %v643
  %v722 = vpack.c.b16 %v646, %v645
  %v723 = vpack.c.b16 %v648, %v647
  %v724 = vpack.c.b16 %v650, %v649
  %v725 = vpack.c.b16 %v652, %v651
  %v726 = vpack.c.b16 %v654, %v653
  %799 = vmatprep.subr.bf16.mxu0 0
  %800 = vmatpush1.bf16.msra.mxu0 %v655
  %801 = vmatprep.subr.bf16.mxu0 0
  %802 = vmatpush1.bf16.msra.mxu0 %v656
  %803 = vmatprep.subr.bf16.mxu0 0
  %804 = vmatpush1.bf16.msra.mxu0 %v657
  %805 = vmatprep.subr.bf16.mxu0 0
  %806 = vmatpush1.bf16.msra.mxu0 %v658
  %807 = vmatprep.subr.bf16.mxu0 0
  %808 = vmatpush1.bf16.msra.mxu0 %v659
  %809 = vmatprep.subr.bf16.mxu0 0
  %810 = vmatpush1.bf16.msra.mxu0 %v660
  %811 = vmatprep.subr.bf16.mxu0 0
  %812 = vmatpush1.bf16.msra.mxu0 %v661
  %813 = vmatprep.subr.bf16.mxu0 0
  %814 = vmatpush1.bf16.msra.mxu0 %v662
  %815 = vmatprep.subr.bf16.mxu0 0
  %816 = vmatpush1.bf16.msra.mxu0 %v663
  %817 = vmatprep.subr.bf16.mxu0 0
  %818 = vmatpush1.bf16.msra.mxu0 %v664
  %819 = vmatprep.subr.bf16.mxu0 0
  %820 = vmatpush1.bf16.msra.mxu0 %v665
  %821 = vmatprep.subr.bf16.mxu0 0
  %822 = vmatpush1.bf16.msra.mxu0 %v666
  %823 = vmatprep.subr.bf16.mxu0 0
  %824 = vmatpush1.bf16.msra.mxu0 %v667
  %825 = vmatprep.subr.bf16.mxu0 0
  %826 = vmatpush1.bf16.msra.mxu0 %v668
  %827 = vmatprep.subr.bf16.mxu0 0
  %828 = vmatpush1.bf16.msra.mxu0 %v669
  %829 = vmatprep.subr.bf16.mxu0 0
  %830 = vmatpush1.bf16.msra.mxu0 %v670
  %831 = vmatprep.mubr.bf16.mxu0 %v296
  %832 = vmatmul.mubr.bf16.gmra.mrb[0].mxu0 %v295
  %v833 = vpop.f32.mrb[0].mxu0
  %v834 = vadd.f32 0.0, %v833
  %v835 = vpop.f32.mrb[0].mxu0
  %v836 = vpop.f32.mrb[0].mxu0
  %v837 = vadd.f32 0.0, %v836
  %v838 = vpop.f32.mrb[0].mxu0
  %839 = vmatprep.mubr.bf16.mxu0 %v305
  %840 = vmatmul.mubr.bf16.gmra.mrb[0].mxu0 %v304
  %v841 = vpop.f32.mrb[0].mxu0
  %v842 = vadd.f32 0.0, %v841
  %v843 = vpop.f32.mrb[0].mxu0
  %v844 = vpop.f32.mrb[0].mxu0
  %v845 = vadd.f32 0.0, %v844
  %v846 = vpop.f32.mrb[0].mxu0
  %847 = vmatprep.mubr.bf16.mxu0 %v314
  %848 = vmatmul.mubr.bf16.gmra.mrb[0].mxu0 %v313
  %v849 = vpop.f32.mrb[0].mxu0
  %v850 = vadd.f32 0.0, %v849
  %v851 = vpop.f32.mrb[0].mxu0
  %v852 = vpop.f32.mrb[0].mxu0
  %v853 = vadd.f32 0.0, %v852
  %v854 = vpop.f32.mrb[0].mxu0
  %855 = vmatprep.mubr.bf16.mxu0 %v323
  %856 = vmatmul.mubr.bf16.gmra.mrb[0].mxu0 %v322
  %v857 = vpop.f32.mrb[0].mxu0
  %v858 = vadd.f32 0.0, %v857
  %v859 = vpop.f32.mrb[0].mxu0
  %v860 = vpop.f32.mrb[0].mxu0
  %v861 = vpop.f32.mrb[0].mxu0
  %862 = vdwg.mxu0
  %863 = vmatprep.subr.bf16.mxu0 0
  %864 = vmatpush1.bf16.msra.mxu0 %v671
  %865 = vmatprep.subr.bf16.mxu0 0
  %866 = vmatpush1.bf16.msra.mxu0 %v672
  %867 = vmatprep.subr.bf16.mxu0 0
  %868 = vmatpush1.bf16.msra.mxu0 %v673
  %869 = vmatprep.subr.bf16.mxu0 0
  %870 = vmatpush1.bf16.msra.mxu0 %v674
  %871 = vmatprep.subr.bf16.mxu0 0
  %872 = vmatpush1.bf16.msra.mxu0 %v675
  %873 = vmatprep.subr.bf16.mxu0 0
  %874 = vmatpush1.bf16.msra.mxu0 %v676
  %875 = vmatprep.subr.bf16.mxu0 0
  %876 = vmatpush1.bf16.msra.mxu0 %v677
  %877 = vmatprep.subr.bf16.mxu0 0
  %878 = vmatpush1.bf16.msra.mxu0 %v678
  %879 = vmatprep.subr.bf16.mxu0 0
  %880 = vmatpush1.bf16.msra.mxu0 %v679
  %881 = vmatprep.subr.bf16.mxu0 0
  %882 = vmatpush1.bf16.msra.mxu0 %v680
  %883 = vmatprep.subr.bf16.mxu0 0
  %884 = vmatpush1.bf16.msra.mxu0 %v681
  %885 = vmatprep.subr.bf16.mxu0 0
  %886 = vmatpush1.bf16.msra.mxu0 %v682
  %887 = vmatprep.subr.bf16.mxu0 0
  %888 = vmatpush1.bf16.msra.mxu0 %v683
  %889 = vmatprep.subr.bf16.mxu0 0
  %890 = vmatpush1.bf16.msra.mxu0 %v684
  %891 = vmatprep.subr.bf16.mxu0 0
  %892 = vmatpush1.bf16.msra.mxu0 %v685
  %893 = vmatprep.subr.bf16.mxu0 0
  %894 = vmatpush1.bf16.msra.mxu0 %v686
  %895 = vmatprep.mubr.bf16.mxu0 %v298
  %896 = vmatmul.mubr.bf16.gmra.mrb[0].mxu0 %v297
  %v897 = vpop.f32.mrb[0].mxu0
  %v898 = vadd.f32 %v834, %v897
  %v899 = vpop.f32.mrb[0].mxu0
  %v900 = vpop.f32.mrb[0].mxu0
  %v901 = vadd.f32 %v837, %v900
  %v902 = vpop.f32.mrb[0].mxu0
  %903 = vmatprep.mubr.bf16.mxu0 %v307
  %904 = vmatmul.mubr.bf16.gmra.mrb[0].mxu0 %v306
  %v905 = vpop.f32.mrb[0].mxu0
  %v906 = vadd.f32 %v842, %v905
  %v907 = vpop.f32.mrb[0].mxu0
  %v908 = vpop.f32.mrb[0].mxu0
  %v909 = vadd.f32 %v845, %v908
  %v910 = vpop.f32.mrb[0].mxu0
  %911 = vmatprep.mubr.bf16.mxu0 %v316
  %912 = vmatmul.mubr.bf16.gmra.mrb[0].mxu0 %v315
  %v913 = vpop.f32.mrb[0].mxu0
  %v914 = vadd.f32 %v850, %v913
  %v915 = vpop.f32.mrb[0].mxu0
  %v916 = vpop.f32.mrb[0].mxu0
  %v917 = vadd.f32 %v853, %v916
  %v918 = vpop.f32.mrb[0].mxu0
  %919 = vmatprep.mubr.bf16.mxu0 %v325
  %920 = vmatmul.mubr.bf16.gmra.mrb[0].mxu0 %v324
  %v921 = vpop.f32.mrb[0].mxu0
  %v922 = vadd.f32 %v858, %v921
  %v923 = vpop.f32.mrb[0].mxu0
  %v924 = vpop.f32.mrb[0].mxu0
  %v925 = vpop.f32.mrb[0].mxu0
  %926 = vdwg.mxu0
  %927 = vmatprep.subr.bf16.mxu0 0
  %928 = vmatpush1.bf16.msra.mxu0 %v687
  %929 = vmatprep.subr.bf16.mxu0 0
  %930 = vmatpush1.bf16.msra.mxu0 %v688
  %931 = vmatprep.subr.bf16.mxu0 0
  %932 = vmatpush1.bf16.msra.mxu0 %v689
  %933 = vmatprep.subr.bf16.mxu0 0
  %934 = vmatpush1.bf16.msra.mxu0 %v690
  %935 = vmatprep.subr.bf16.mxu0 0
  %936 = vmatpush1.bf16.msra.mxu0 %v691
  %937 = vmatprep.subr.bf16.mxu0 0
  %938 = vmatpush1.bf16.msra.mxu0 %v692
  %939 = vmatprep.subr.bf16.mxu0 0
  %940 = vmatpush1.bf16.msra.mxu0 %v693
  %941 = vmatprep.subr.bf16.mxu0 0
  %942 = vmatpush1.bf16.msra.mxu0 %v694
  %943 = vmatprep.subr.bf16.mxu0 0
  %944 = vmatpush1.bf16.msra.mxu0 %v695
  %945 = vmatprep.subr.bf16.mxu0 0
  %946 = vmatpush1.bf16.msra.mxu0 %v696
  %947 = vmatprep.subr.bf16.mxu0 0
  %948 = vmatpush1.bf16.msra.mxu0 %v697
  %949 = vmatprep.subr.bf16.mxu0 0
  %950 = vmatpush1.bf16.msra.mxu0 %v698
  %951 = vmatprep.subr.bf16.mxu0 0
  %952 = vmatpush1.bf16.msra.mxu0 %v699
  %953 = vmatprep.subr.bf16.mxu0 0
  %954 = vmatpush1.bf16.msra.mxu0 %v700
  %955 = vmatprep.subr.bf16.mxu0 0
  %956 = vmatpush1.bf16.msra.mxu0 %v701
  %957 = vmatprep.subr.bf16.mxu0 0
  %958 = vmatpush1.bf16.msra.mxu0 %v702
  %959 = vmatprep.mubr.bf16.mxu0 %v300
  %960 = vmatmul.mubr.bf16.gmra.mrb[0].mxu0 %v299
  %v961 = vpop.f32.mrb[0].mxu0
  %v962 = vadd.f32 %v898, %v961
  %v963 = vpop.f32.mrb[0].mxu0
  %v964 = vpop.f32.mrb[0].mxu0
  %v965 = vadd.f32 %v901, %v964
  %v966 = vpop.f32.mrb[0].mxu0
  %967 = vmatprep.mubr.bf16.mxu0 %v309
  %968 = vmatmul.mubr.bf16.gmra.mrb[0].mxu0 %v308
  %v969 = vpop.f32.mrb[0].mxu0
  %v970 = vadd.f32 %v906, %v969
  %v971 = vpop.f32.mrb[0].mxu0
  %v972 = vpop.f32.mrb[0].mxu0
  %v973 = vadd.f32 %v909, %v972
  %v974 = vpop.f32.mrb[0].mxu0
  %975 = vmatprep.mubr.bf16.mxu0 %v318
  %976 = vmatmul.mubr.bf16.gmra.mrb[0].mxu0 %v317
  %v977 = vpop.f32.mrb[0].mxu0
  %v978 = vadd.f32 %v914, %v977
  %v979 = vpop.f32.mrb[0].mxu0
  %v980 = vpop.f32.mrb[0].mxu0
  %v981 = vadd.f32 %v917, %v980
  %v982 = vpop.f32.mrb[0].mxu0
  %983 = vmatprep.mubr.bf16.mxu0 %v327
  %984 = vmatmul.mubr.bf16.gmra.mrb[0].mxu0 %v326
  %v985 = vpop.f32.mrb[0].mxu0
  %v986 = vadd.f32 %v922, %v985
  %v987 = vpop.f32.mrb[0].mxu0
  %v988 = vpop.f32.mrb[0].mxu0
  %v989 = vpop.f32.mrb[0].mxu0
  %990 = vdwg.mxu0
  %991 = vmatprep.subr.bf16.mxu0 0
  %992 = vmatpush1.bf16.msra.mxu0 %v703
  %993 = vmatprep.subr.bf16.mxu0 0
  %994 = vmatpush1.bf16.msra.mxu0 %v704
  %995 = vmatprep.subr.bf16.mxu0 0
  %996 = vmatpush1.bf16.msra.mxu0 %v705
  %997 = vmatprep.subr.bf16.mxu0 0
  %998 = vmatpush1.bf16.msra.mxu0 %v706
  %999 = vmatprep.subr.bf16.mxu0 0
  %1000 = vmatpush1.bf16.msra.mxu0 %v707
  %1001 = vmatprep.subr.bf16.mxu0 0
  %1002 = vmatpush1.bf16.msra.mxu0 %v708
  %1003 = vmatprep.subr.bf16.mxu0 0
  %1004 = vmatpush1.bf16.msra.mxu0 %v709
  %1005 = vmatprep.subr.bf16.mxu0 0
  %1006 = vmatpush1.bf16.msra.mxu0 %v710
  %1007 = vmatprep.subr.bf16.mxu0 0
  %1008 = vmatpush1.bf16.msra.mxu0 %v711
  %1009 = vmatprep.subr.bf16.mxu0 0
  %1010 = vmatpush1.bf16.msra.mxu0 %v712
  %1011 = vmatprep.subr.bf16.mxu0 0
  %1012 = vmatpush1.bf16.msra.mxu0 %v713
  %1013 = vmatprep.subr.bf16.mxu0 0
  %1014 = vmatpush1.bf16.msra.mxu0 %v714
  %1015 = vmatprep.subr.bf16.mxu0 0
  %1016 = vmatpush1.bf16.msra.mxu0 %v715
  %1017 = vmatprep.subr.bf16.mxu0 0
  %1018 = vmatpush1.bf16.msra.mxu0 %v716
  %1019 = vmatprep.subr.bf16.mxu0 0
  %1020 = vmatpush1.bf16.msra.mxu0 %v717
  %1021 = vmatprep.subr.bf16.mxu0 0
  %1022 = vmatpush1.bf16.msra.mxu0 %v718
  %1023 = vmatprep.mubr.bf16.mxu0 %v302
  %1024 = vmatmul.mubr.bf16.gmra.mrb[0].mxu0 %v301
  %v1025 = vpop.f32.mrb[0].mxu0
  %v1026 = vadd.f32 %v962, %v1025
  %v1027 = vpop.f32.mrb[0].mxu0
  %v1028 = vpop.f32.mrb[0].mxu0
  %v1029 = vadd.f32 %v965, %v1028
  %v1030 = vpop.f32.mrb[0].mxu0
  %1031 = vmatprep.mubr.bf16.mxu0 %v311
  %1032 = vmatmul.mubr.bf16.gmra.mrb[0].mxu0 %v310
  %v1033 = vpop.f32.mrb[0].mxu0
  %v1034 = vadd.f32 %v970, %v1033
  %v1035 = vpop.f32.mrb[0].mxu0
  %v1036 = vpop.f32.mrb[0].mxu0
  %v1037 = vadd.f32 %v973, %v1036
  %v1038 = vpop.f32.mrb[0].mxu0
  %1039 = vmatprep.mubr.bf16.mxu0 %v320
  %1040 = vmatmul.mubr.bf16.gmra.mrb[0].mxu0 %v319
  %v1041 = vpop.f32.mrb[0].mxu0
  %v1042 = vadd.f32 %v978, %v1041
  %v1043 = vpop.f32.mrb[0].mxu0
  %v1044 = vpop.f32.mrb[0].mxu0
  %v1045 = vadd.f32 %v981, %v1044
  %v1046 = vpop.f32.mrb[0].mxu0
  %1047 = vmatprep.mubr.bf16.mxu0 %v329
  %1048 = vmatmul.mubr.bf16.gmra.mrb[0].mxu0 %v328
  %v1049 = vpop.f32.mrb[0].mxu0
  %v1050 = vadd.f32 %v986, %v1049
  %v1051 = vpop.f32.mrb[0].mxu0
  %v1052 = vpop.f32.mrb[0].mxu0
  %v1053 = vpop.f32.mrb[0].mxu0
  %1054 = vdwg.mxu0
  %1055 = vmatprep.subr.bf16.mxu0 0
  %1056 = vmatpush1.bf16.msra.mxu0 %v719
  %1057 = vmatprep.subr.bf16.mxu0 0
  %1058 = vmatpush1.bf16.msra.mxu0 %v720
  %1059 = vmatprep.subr.bf16.mxu0 0
  %1060 = vmatpush1.bf16.msra.mxu0 %v721
  %1061 = vmatprep.subr.bf16.mxu0 0
  %1062 = vmatpush1.bf16.msra.mxu0 %v722
  %1063 = vmatprep.subr.bf16.mxu0 0
  %1064 = vmatpush1.bf16.msra.mxu0 %v723
  %1065 = vmatprep.subr.bf16.mxu0 0
  %1066 = vmatpush1.bf16.msra.mxu0 %v724
  %1067 = vmatprep.subr.bf16.mxu0 0
  %1068 = vmatpush1.bf16.msra.mxu0 %v725
  %1069 = vmatprep.subr.bf16.mxu0 0
  %1070 = vmatpush1.bf16.msra.mxu0 %v726
  %1071 = vmatprep.subr.bf16.mxu0 0
  %1072 = vmatpush1.bf16.msra.mxu0 0
  %1073 = vmatprep.subr.bf16.mxu0 0
  %1074 = vmatpush1.bf16.msra.mxu0 0
  %1075 = vmatprep.subr.bf16.mxu0 0
  %1076 = vmatpush1.bf16.msra.mxu0 0
  %1077 = vmatprep.subr.bf16.mxu0 0
  %1078 = vmatpush1.bf16.msra.mxu0 0
  %1079 = vmatprep.subr.bf16.mxu0 0
  %1080 = vmatpush1.bf16.msra.mxu0 0
  %1081 = vmatprep.subr.bf16.mxu0 0
  %1082 = vmatpush1.bf16.msra.mxu0 0
  %1083 = vmatprep.subr.bf16.mxu0 0
  %1084 = vmatpush1.bf16.msra.mxu0 0
  %1085 = vmatprep.subr.bf16.mxu0 0
  %1086 = vmatpush1.bf16.msra.mxu0 0
  %1087 = vmatprep.mubr.bf16.mxu0 0
  %1088 = vmatmul.mubr.bf16.gmra.mrb[0].mxu0 %v303
  %v1089 = vpop.f32.mrb[0].mxu0
  %v1090 = vadd.f32 %v1026, %v1089
  %v1091 = vpop.f32.mrb[0].mxu0
  %v1092 = vpop.f32.mrb[0].mxu0
  %v1093 = vadd.f32 %v1029, %v1092
  %v1094 = vpop.f32.mrb[0].mxu0
  %1095 = vmatprep.mubr.bf16.mxu0 0
  %1096 = vmatmul.mubr.bf16.gmra.mrb[0].mxu0 %v312
  %v1097 = vpop.f32.mrb[0].mxu0
  %v1098 = vadd.f32 %v1034, %v1097
  %v1099 = vpop.f32.mrb[0].mxu0
  %v1100 = vpop.f32.mrb[0].mxu0
  %v1101 = vadd.f32 %v1037, %v1100
  %v1102 = vpop.f32.mrb[0].mxu0
  %1103 = vmatprep.mubr.bf16.mxu0 0
  %1104 = vmatmul.mubr.bf16.gmra.mrb[0].mxu0 %v321
  %v1105 = vpop.f32.mrb[0].mxu0
  %v1106 = vadd.f32 %v1042, %v1105
  %v1107 = vpop.f32.mrb[0].mxu0
  %v1108 = vpop.f32.mrb[0].mxu0
  %v1109 = vadd.f32 %v1045, %v1108
  %v1110 = vpop.f32.mrb[0].mxu0
  %1111 = vmatprep.mubr.bf16.mxu0 0
  %1112 = vmatmul.mubr.bf16.gmra.mrb[0].mxu0 %v330
  %v1113 = vpop.f32.mrb[0].mxu0
  %v1114 = vadd.f32 %v1050, %v1113
  %v1115 = vpop.f32.mrb[0].mxu0
  %v1116 = vpop.f32.mrb[0].mxu0
  %v1117 = vpop.f32.mrb[0].mxu0
  %1118 = vdwg.mxu0
  %v1119 = vld [vmem:[%s2] sm:$0x1]
  %v1121 = vlaneseq
  %v1122 = vshrl.u32 %v1121, 7
  %v1123 = vsub.s32 0, %v1122
  %v1124 = vrot.slane %v1119, %v1123
  %v1126 = vmul.f32 %v1090, %v1124
  %v1127 = vmul.f32 %v1093, %v1124
  %v1128 = vmul.f32 %v1098, %v1124
  %v1129 = vmul.f32 %v1101, %v1124
  %v1130 = vmul.f32 %v1106, %v1124
  %v1131 = vmul.f32 %v1109, %v1124
  %v1132 = vmul.f32 %v1114, %v1124
  %v1133 = vld [vmem:[%s3] sm:$0x1]
  %v1135 = vlaneseq
  %v1136 = vshrl.u32 %v1135, 7
  %v1137 = vsub.s32 0, %v1136
  %v1138 = vrot.slane %v1133, %v1137
  %v1140 = vadd.f32 %v1126, %v1138
  %v1141 = vadd.f32 %v1127, %v1138
  %v1142 = vadd.f32 %v1128, %v1138
  %v1143 = vadd.f32 %v1129, %v1138
  %v1144 = vadd.f32 %v1130, %v1138
  %v1145 = vadd.f32 %v1131, %v1138
  %v1146 = vadd.f32 %v1132, %v1138
  %v1147 = vmax.f32 %v1140, 0.0
  %v1148 = vmax.f32 %v1141, 0.0
  %v1149 = vmax.f32 %v1142, 0.0
  %v1150 = vmax.f32 %v1143, 0.0
  %v1151 = vmax.f32 %v1144, 0.0
  %v1152 = vmax.f32 %v1145, 0.0
  %v1153 = vmax.f32 %v1146, 0.0
  %1154 = vst [vmem:[%s4] sm:$0xff] %v1147
  %1155 = vst [vmem:[%s4 + $0x8] sm:$0xff] %v1148
  %1156 = vst [vmem:[%s4 + $0x10] sm:$0xff] %v1149
  %1157 = vst [vmem:[%s4 + $0x18] sm:$0xff] %v1150
  %1158 = vst [vmem:[%s4 + $0x20] sm:$0xff] %v1151
  %1159 = vst [vmem:[%s4 + $0x28] sm:$0xff] %v1152
  %1160 = vst [vmem:[%s4 + $0x30] sm:$0x3] %v1153
  // Predicated region
  $region18: #{forward.18} parent=0 // pred_check
    _
  $region19: #{forward.18} parent=0 // pred_check_branch
    %1162 = sbr.rel (0) target = $region21
  $region20: #{forward.18} parent=0 // pred_region
    _
  $region21: #{forward.18} parent=0 // pred_fallthru
    _
  // Predicated region
  $region22: #{forward.18} parent=0 // pred_check
    _
  $region23: #{forward.18} parent=0 // pred_check_branch
    %1164 = sbr.rel (0) target = $region25
  $region24: #{forward.18} parent=0 // pred_region
    _
  $region25: #{forward.18} parent=0 // pred_fallthru
    _

// kernel: forward.23
$region0: #{forward.23}
  #allocation0 [shape = 'u32[]', space=smem, size = 0x4, offset = 0x4, fixed_abs, tag = 'smem constant byte address 0x4 - core index']
  #allocation1 [shape = 'u32[144,128]{1,0:T(1,128)}', space=vmem, size = 0x12000, scoped, tag = 'internal scratch']
  %s0 = inlined_call_operand.vmem [shape: f32[8,25,128], index: 0, kind: input, shape index: {}]
  %s1 = inlined_call_operand.vmem [shape: bf16[128,128], index: 1, kind: input, shape index: {}]
  %s2 = inlined_call_operand.vmem [shape: f32[1,128], index: 2, kind: input, shape index: {}]
  %s3 = inlined_call_operand.vmem [shape: f32[8,128], index: 3, kind: output, shape index: {}]
  %s4 = sld [smem:[#allocation0]]
  $region22: #{forward.23} parent=0
    _
  %s6 = ssub.s32 1, %s4
  %s7 = scalar_select 0, %s6, %s4
  // Predicated region
  $region2: #{forward.23} parent=0 // pred_check
    _
  $region3: #{forward.23} parent=0 // pred_check_branch
    %9 = sbr.rel (0) target = $region5
  $region4: #{forward.23} parent=0 // pred_region
    _
  $region5: #{forward.23} parent=0 // pred_fallthru
    _
  // Predicated region
  $region6: #{forward.23} parent=0 // pred_check
    _
  $region7: #{forward.23} parent=0 // pred_check_branch
    %11 = sbr.rel (0) target = $region9
  $region8: #{forward.23} parent=0 // pred_region
    _
  $region9: #{forward.23} parent=0 // pred_fallthru
    _
  // Predicated region
  $region10: #{forward.23} parent=0 // pred_check
    _
  $region11: #{forward.23} parent=0 // pred_check_branch
    %13 = sbr.rel (0) target = $region13
  $region12: #{forward.23} parent=0 // pred_region
    _
  $region13: #{forward.23} parent=0 // pred_fallthru
    _
  %v15 = vld [vmem:[%s0] sm:$0xff]
  %v16 = vld [vmem:[%s0 + $0x8] sm:$0xff]
  %v17 = vld [vmem:[%s0 + $0x10] sm:$0xff]
  %v18 = vld [vmem:[%s0 + $0x18] sm:$0x1]
  %v19 = vld [vmem:[%s0 + $0x20] sm:$0xff]
  %v20 = vld [vmem:[%s0 + $0x28] sm:$0xff]
  %v21 = vld [vmem:[%s0 + $0x30] sm:$0xff]
  %v22 = vld [vmem:[%s0 + $0x38] sm:$0x1]
  %v23 = vld [vmem:[%s0 + $0x40] sm:$0xff]
  %v24 = vld [vmem:[%s0 + $0x48] sm:$0xff]
  %v25 = vld [vmem:[%s0 + $0x50] sm:$0xff]
  %v26 = vld [vmem:[%s0 + $0x58] sm:$0x1]
  %v27 = vld [vmem:[%s0 + $0x60] sm:$0xff]
  %v28 = vld [vmem:[%s0 + $0x68] sm:$0xff]
  %v29 = vld [vmem:[%s0 + $0x70] sm:$0xff]
  %v30 = vld [vmem:[%s0 + $0x78] sm:$0x1]
  %v31 = vld [vmem:[%s0 + $0x80] sm:$0xff]
  %v32 = vld [vmem:[%s0 + $0x88] sm:$0xff]
  %v33 = vld [vmem:[%s0 + $0x90] sm:$0xff]
  %v34 = vld [vmem:[%s0 + $0x98] sm:$0x1]
  %v35 = vld [vmem:[%s0 + $0xa0] sm:$0xff]
  %v36 = vld [vmem:[%s0 + $0xa8] sm:$0xff]
  %v37 = vld [vmem:[%s0 + $0xb0] sm:$0xff]
  %v38 = vld [vmem:[%s0 + $0xb8] sm:$0x1]
  %v39 = vld [vmem:[%s0 + $0xc0] sm:$0xff]
  %v40 = vld [vmem:[%s0 + $0xc8] sm:$0xff]
  %v41 = vld [vmem:[%s0 + $0xd0] sm:$0xff]
  %v42 = vld [vmem:[%s0 + $0xd8] sm:$0x1]
  %v43 = vld [vmem:[%s0 + $0xe0] sm:$0xff]
  %v44 = vld [vmem:[%s0 + $0xe8] sm:$0xff]
  %v45 = vld [vmem:[%s0 + $0xf0] sm:$0xff]
  %v46 = vld [vmem:[%s0 + $0xf8] sm:$0x1]
  %v47 = vadd.f32 %v15, %v16
  %v48 = vadd.f32 %v47, %v17
  %vm49 = vcmask 1040384
  %v50 = vsel %vm49, %v18, 0.0
  %v51 = vadd.f32 %v48, %v50
  %v52 = vrot.slane %v51, 4
  %v53 = vadd.f32 %v51, %v52
  %v54 = vrot.slane %v53, 2
  %v55 = vadd.f32 %v53, %v54
  %v56 = vrot.slane %v55, 1
  %v57 = vadd.f32 %v55, %v56
  %v58 = vadd.f32 %v19, %v20
  %v59 = vadd.f32 %v58, %v21
  %v60 = vsel %vm49, %v22, 0.0
  %v61 = vadd.f32 %v59, %v60
  %v62 = vrot.slane %v61, 4
  %v63 = vadd.f32 %v61, %v62
  %v64 = vrot.slane %v63, 2
  %v65 = vadd.f32 %v63, %v64
  %v66 = vrot.slane %v65, 1
  %v67 = vadd.f32 %v65, %v66
  %v68 = vadd.f32 %v23, %v24
  %v69 = vadd.f32 %v68, %v25
  %v70 = vsel %vm49, %v26, 0.0
  %v71 = vadd.f32 %v69, %v70
  %v72 = vrot.slane %v71, 4
  %v73 = vadd.f32 %v71, %v72
  %v74 = vrot.slane %v73, 2
  %v75 = vadd.f32 %v73, %v74
  %v76 = vrot.slane %v75, 1
  %v77 = vadd.f32 %v75, %v76
  %v78 = vadd.f32 %v27, %v28
  %v79 = vadd.f32 %v78, %v29
  %v80 = vsel %vm49, %v30, 0.0
  %v81 = vadd.f32 %v79, %v80
  %v82 = vrot.slane %v81, 4
  %v83 = vadd.f32 %v81, %v82
  %v84 = vrot.slane %v83, 2
  %v85 = vadd.f32 %v83, %v84
  %v86 = vrot.slane %v85, 1
  %v87 = vadd.f32 %v85, %v86
  %v88 = vadd.f32 %v31, %v32
  %v89 = vadd.f32 %v88, %v33
  %v90 = vsel %vm49, %v34, 0.0
  %v91 = vadd.f32 %v89, %v90
  %v92 = vrot.slane %v91, 4
  %v93 = vadd.f32 %v91, %v92
  %v94 = vrot.slane %v93, 2
  %v95 = vadd.f32 %v93, %v94
  %v96 = vrot.slane %v95, 1
  %v97 = vadd.f32 %v95, %v96
  %v98 = vadd.f32 %v35, %v36
  %v99 = vadd.f32 %v98, %v37
  %v100 = vsel %vm49, %v38, 0.0
  %v101 = vadd.f32 %v99, %v100
  %v102 = vrot.slane %v101, 4
  %v103 = vadd.f32 %v101, %v102
  %v104 = vrot.slane %v103, 2
  %v105 = vadd.f32 %v103, %v104
  %v106 = vrot.slane %v105, 1
  %v107 = vadd.f32 %v105, %v106
  %v108 = vadd.f32 %v39, %v40
  %v109 = vadd.f32 %v108, %v41
  %v110 = vsel %vm49, %v42, 0.0
  %v111 = vadd.f32 %v109, %v110
  %v112 = vrot.slane %v111, 4
  %v113 = vadd.f32 %v111, %v112
  %v114 = vrot.slane %v113, 2
  %v115 = vadd.f32 %v113, %v114
  %v116 = vrot.slane %v115, 1
  %v117 = vadd.f32 %v115, %v116
  %v118 = vadd.f32 %v43, %v44
  %v119 = vadd.f32 %v118, %v45
  %v120 = vsel %vm49, %v46, 0.0
  %v121 = vadd.f32 %v119, %v120
  %v122 = vrot.slane %v121, 4
  %v123 = vadd.f32 %v121, %v122
  %v124 = vrot.slane %v123, 2
  %v125 = vadd.f32 %v123, %v124
  %v126 = vrot.slane %v125, 1
  %v127 = vadd.f32 %v125, %v126
  %v128 = vrcp.pop 25.0
  %v129 = vmul.f32 %v57, %v128
  %v130 = vmul.f32 %v67, %v128
  %v131 = vmul.f32 %v77, %v128
  %v132 = vmul.f32 %v87, %v128
  %v133 = vmul.f32 %v97, %v128
  %v134 = vmul.f32 %v107, %v128
  %v135 = vmul.f32 %v117, %v128
  %v136 = vmul.f32 %v127, %v128
  %v137 = vpack.c.bf16 %v129, %v129
  %v138 = vpack.c.bf16 %v130, %v130
  %v139 = vpack.c.bf16 %v131, %v131
  %v140 = vpack.c.bf16 %v132, %v132
  %v141 = vpack.c.bf16 %v133, %v133
  %v142 = vpack.c.bf16 %v134, %v134
  %v143 = vpack.c.bf16 %v135, %v135
  %v144 = vpack.c.bf16 %v136, %v136
  %v145 = vld [vmem:[%s1] sm:$0xf]
  %v146 = vld [vmem:[%s1 + $0x4] sm:$0xf]
  %v147 = vld [vmem:[%s1 + $0x8] sm:$0xf]
  %v148 = vld [vmem:[%s1 + $0xc] sm:$0xf]
  %v149 = vld [vmem:[%s1 + $0x10] sm:$0xf]
  %v150 = vld [vmem:[%s1 + $0x14] sm:$0xf]
  %v151 = vld [vmem:[%s1 + $0x18] sm:$0xf]
  %v152 = vld [vmem:[%s1 + $0x1c] sm:$0xf]
  %v153 = vld [vmem:[%s1 + $0x20] sm:$0xf]
  %v154 = vld [vmem:[%s1 + $0x24] sm:$0xf]
  %v155 = vld [vmem:[%s1 + $0x28] sm:$0xf]
  %v156 = vld [vmem:[%s1 + $0x2c] sm:$0xf]
  %v157 = vld [vmem:[%s1 + $0x30] sm:$0xf]
  %v158 = vld [vmem:[%s1 + $0x34] sm:$0xf]
  %v159 = vld [vmem:[%s1 + $0x38] sm:$0xf]
  %v160 = vld [vmem:[%s1 + $0x3c] sm:$0xf]
  %v161 = vld [vmem:[%s2] sm:$0x1]
  %v163 = vlaneseq
  %v164 = vshrl.u32 %v163, 7
  %v165 = vsub.s32 0, %v164
  %v166 = vrot.slane %v161, %v165
  %v176 = vunpack.c.l.b16 %v137
  %v177 = vunpack.c.l.b16 %v138
  %v178 = vunpack.c.l.b16 %v139
  %v179 = vunpack.c.l.b16 %v140
  %v180 = vunpack.c.l.b16 %v141
  %v181 = vunpack.c.l.b16 %v142
  %v182 = vunpack.c.l.b16 %v143
  %v183 = vunpack.c.l.b16 %v144
  %vm184 = vcmask 1041409
  %v185 = vsel %vm184, %v177, %v176
  %vm186 = vcmask 1042434
  %v187 = vsel %vm186, %v178, %v185
  %vm188 = vcmask 1043459
  %v189 = vsel %vm188, %v179, %v187
  %vm190 = vcmask 1044484
  %v191 = vsel %vm190, %v180, %v189
  %vm192 = vcmask 1045509
  %v193 = vsel %vm192, %v181, %v191
  %vm194 = vcmask 1046534
  %v195 = vsel %vm194, %v182, %v193
  %vm196 = vcmask 1047559
  %v197 = vsel %vm196, %v183, %v195
  %v198 = vpack.c.b16 %v197, %v197
  %v216 = vunpack.c.l.b16 %v145
  %v217 = vunpack.c.l.b16 %v146
  %v218 = vunpack.c.l.b16 %v147
  %v219 = vunpack.c.l.b16 %v148
  %v220 = vunpack.c.l.b16 %v149
  %v221 = vunpack.c.l.b16 %v150
  %v222 = vunpack.c.l.b16 %v151
  %v223 = vunpack.c.l.b16 %v152
  %v224 = vunpack.c.l.b16 %v153
  %v225 = vunpack.c.l.b16 %v154
  %v226 = vunpack.c.l.b16 %v155
  %v227 = vunpack.c.l.b16 %v156
  %v228 = vunpack.c.l.b16 %v157
  %v229 = vunpack.c.l.b16 %v158
  %v230 = vunpack.c.l.b16 %v159
  %v231 = vunpack.c.l.b16 %v160
  %v232 = vpack.c.b16 %v217, %v216
  %v233 = vpack.c.b16 %v219, %v218
  %v234 = vpack.c.b16 %v221, %v220
  %v235 = vpack.c.b16 %v223, %v222
  %v236 = vpack.c.b16 %v225, %v224
  %v237 = vpack.c.b16 %v227, %v226
  %v238 = vpack.c.b16 %v229, %v228
  %v239 = vpack.c.b16 %v231, %v230
  %248 = vmatprep.subr.bf16.mxu0 0
  %249 = vmatpush1.bf16.msra.mxu0 %v232
  %250 = vmatprep.subr.bf16.mxu0 0
  %251 = vmatpush1.bf16.msra.mxu0 %v233
  %252 = vmatprep.subr.bf16.mxu0 0
  %253 = vmatpush1.bf16.msra.mxu0 %v234
  %254 = vmatprep.subr.bf16.mxu0 0
  %255 = vmatpush1.bf16.msra.mxu0 %v235
  %256 = vmatprep.subr.bf16.mxu0 0
  %257 = vmatpush1.bf16.msra.mxu0 %v236
  %258 = vmatprep.subr.bf16.mxu0 0
  %259 = vmatpush1.bf16.msra.mxu0 %v237
  %260 = vmatprep.subr.bf16.mxu0 0
  %261 = vmatpush1.bf16.msra.mxu0 %v238
  %262 = vmatprep.subr.bf16.mxu0 0
  %263 = vmatpush1.bf16.msra.mxu0 %v239
  %264 = vmatprep.subr.bf16.mxu0 0
  %265 = vmatpush1.bf16.msra.mxu0 0
  %266 = vmatprep.subr.bf16.mxu0 0
  %267 = vmatpush1.bf16.msra.mxu0 0
  %268 = vmatprep.subr.bf16.mxu0 0
  %269 = vmatpush1.bf16.msra.mxu0 0
  %270 = vmatprep.subr.bf16.mxu0 0
  %271 = vmatpush1.bf16.msra.mxu0 0
  %272 = vmatprep.subr.bf16.mxu0 0
  %273 = vmatpush1.bf16.msra.mxu0 0
  %274 = vmatprep.subr.bf16.mxu0 0
  %275 = vmatpush1.bf16.msra.mxu0 0
  %276 = vmatprep.subr.bf16.mxu0 0
  %277 = vmatpush1.bf16.msra.mxu0 0
  %278 = vmatprep.subr.bf16.mxu0 0
  %279 = vmatpush1.bf16.msra.mxu0 0
  %280 = vmatprep.mubr.bf16.mxu0 0
  %281 = vmatmul.mubr.bf16.gmra.mrb[0].mxu0 %v198
  %v282 = vpop.f32.mrb[0].mxu0
  %v283 = vadd.f32 %v166, %v282
  %v284 = vpop.f32.mrb[0].mxu0
  %v285 = vpop.f32.mrb[0].mxu0
  %v286 = vpop.f32.mrb[0].mxu0
  %287 = vdwg.mxu0
  %288 = vst [vmem:[%s3] sm:$0xff] %v283
  // Predicated region
  $region14: #{forward.23} parent=0 // pred_check
    _
  $region15: #{forward.23} parent=0 // pred_check_branch
    %290 = sbr.rel (0) target = $region17
  $region16: #{forward.23} parent=0 // pred_region
    _
  $region17: #{forward.23} parent=0 // pred_fallthru
    _
  // Predicated region
  $region18: #{forward.23} parent=0 // pred_check
    _
  $region19: #{forward.23} parent=0 // pred_check_branch
    %292 = sbr.rel (0) target = $region21
  $region20: #{forward.23} parent=0 // pred_region
    _
  $region21: #{forward.23} parent=0 // pred_fallthru
    _

// kernel: forward.20
$region0: #{forward.20}
  #allocation0 [shape = 'u32[]', space=smem, size = 0x4, offset = 0x4, fixed_abs, tag = 'smem constant byte address 0x4 - core index']
  #allocation1 [shape = 'u32[144,128]{1,0:T(1,128)}', space=vmem, size = 0x12000, scoped, tag = 'internal scratch']
  %s0 = inlined_call_operand.vmem [shape: bf16[50,1152], index: 0, kind: input, shape index: {}]
  %s1 = inlined_call_operand.vmem [shape: bf16[1152,128], index: 1, kind: input, shape index: {}]
  %s2 = inlined_call_operand.vmem [shape: f32[1,128], index: 2, kind: input, shape index: {}]
  %s3 = inlined_call_operand.vmem [shape: f32[1,128], index: 3, kind: input, shape index: {}]
  %s4 = inlined_call_operand.vmem [shape: f32[50,128], index: 4, kind: input, shape index: {}]
  %s5 = inlined_call_operand.vmem [shape: f32[50,128], index: 5, kind: output, shape index: {}]
  %s6 = sld [smem:[#allocation0]]
  $region30: #{forward.20} parent=0
    _
  %s8 = ssub.s32 1, %s6
  %s9 = scalar_select 0, %s8, %s6
  // Predicated region
  $region2: #{forward.20} parent=0 // pred_check
    _
  $region3: #{forward.20} parent=0 // pred_check_branch
    %11 = sbr.rel (0) target = $region5
  $region4: #{forward.20} parent=0 // pred_region
    _
  $region5: #{forward.20} parent=0 // pred_fallthru
    _
  // Predicated region
  $region6: #{forward.20} parent=0 // pred_check
    _
  $region7: #{forward.20} parent=0 // pred_check_branch
    %13 = sbr.rel (0) target = $region9
  $region8: #{forward.20} parent=0 // pred_region
    _
  $region9: #{forward.20} parent=0 // pred_fallthru
    _
  // Predicated region
  $region10: #{forward.20} parent=0 // pred_check
    _
  $region11: #{forward.20} parent=0 // pred_check_branch
    %15 = sbr.rel (0) target = $region13
  $region12: #{forward.20} parent=0 // pred_region
    _
  $region13: #{forward.20} parent=0 // pred_fallthru
    _
  // Predicated region
  $region14: #{forward.20} parent=0 // pred_check
    _
  $region15: #{forward.20} parent=0 // pred_check_branch
    %17 = sbr.rel (0) target = $region17
  $region16: #{forward.20} parent=0 // pred_region
    _
  $region17: #{forward.20} parent=0 // pred_fallthru
    _
  // Predicated region
  $region18: #{forward.20} parent=0 // pred_check
    _
  $region19: #{forward.20} parent=0 // pred_check_branch
    %19 = sbr.rel (0) target = $region21
  $region20: #{forward.20} parent=0 // pred_region
    _
  $region21: #{forward.20} parent=0 // pred_fallthru
    _
  %v21 = vld [vmem:[%s0] sm:$0xff]
  %v22 = vld [vmem:[%s0 + $0x8] sm:$0xff]
  %v23 = vld [vmem:[%s0 + $0x10] sm:$0xff]
  %v24 = vld [vmem:[%s0 + $0x18] sm:$0xff]
  %v25 = vld [vmem:[%s0 + $0x20] sm:$0xf]
  %v26 = vld [vmem:[%s0 + $0x24] sm:$0xff]
  %v27 = vld [vmem:[%s0 + $0x2c] sm:$0xff]
  %v28 = vld [vmem:[%s0 + $0x34] sm:$0xff]
  %v29 = vld [vmem:[%s0 + $0x3c] sm:$0xff]
  %v30 = vld [vmem:[%s0 + $0x44] sm:$0xf]
  %v31 = vld [vmem:[%s0 + $0x48] sm:$0xff]
  %v32 = vld [vmem:[%s0 + $0x50] sm:$0xff]
  %v33 = vld [vmem:[%s0 + $0x58] sm:$0xff]
  %v34 = vld [vmem:[%s0 + $0x60] sm:$0xff]
  %v35 = vld [vmem:[%s0 + $0x68] sm:$0xf]
  %v36 = vld [vmem:[%s0 + $0x6c] sm:$0xff]
  %v37 = vld [vmem:[%s0 + $0x74] sm:$0xff]
  %v38 = vld [vmem:[%s0 + $0x7c] sm:$0xff]
  %v39 = vld [vmem:[%s0 + $0x84] sm:$0xff]
  %v40 = vld [vmem:[%s0 + $0x8c] sm:$0xf]
  %v41 = vld [vmem:[%s0 + $0x90] sm:$0xff]
  %v42 = vld [vmem:[%s0 + $0x98] sm:$0xff]
  %v43 = vld [vmem:[%s0 + $0xa0] sm:$0xff]
  %v44 = vld [vmem:[%s0 + $0xa8] sm:$0xff]
  %v45 = vld [vmem:[%s0 + $0xb0] sm:$0xf]
  %v46 = vld [vmem:[%s0 + $0xb4] sm:$0xff]
  %v47 = vld [vmem:[%s0 + $0xbc] sm:$0xff]
  %v48 = vld [vmem:[%s0 + $0xc4] sm:$0xff]
  %v49 = vld [vmem:[%s0 + $0xcc] sm:$0xff]
  %v50 = vld [vmem:[%s0 + $0xd4] sm:$0xf]
  %v51 = vld [vmem:[%s0 + $0xd8] sm:$0x11]
  %v52 = vld [vmem:[%s0 + $0xe0] sm:$0x11]
  %v53 = vld [vmem:[%s0 + $0xe8] sm:$0x11]
  %v54 = vld [vmem:[%s0 + $0xf0] sm:$0x11]
  %v55 = vld [vmem:[%s0 + $0xf8] sm:$0x1]
  %v56 = vld [vmem:[%s1] sm:$0xf]
  %v57 = vld [vmem:[%s1 + $0x4] sm:$0xf]
  %v58 = vld [vmem:[%s1 + $0x8] sm:$0xf]
  %v59 = vld [vmem:[%s1 + $0xc] sm:$0xf]
  %v60 = vld [vmem:[%s1 + $0x10] sm:$0xf]
  %v61 = vld [vmem:[%s1 + $0x14] sm:$0xf]
  %v62 = vld [vmem:[%s1 + $0x18] sm:$0xf]
  %v63 = vld [vmem:[%s1 + $0x1c] sm:$0xf]
  %v64 = vld [vmem:[%s1 + $0x20] sm:$0xf]
  %v65 = vld [vmem:[%s1 + $0x24] sm:$0xf]
  %v66 = vld [vmem:[%s1 + $0x28] sm:$0xf]
  %v67 = vld [vmem:[%s1 + $0x2c] sm:$0xf]
  %v68 = vld [vmem:[%s1 + $0x30] sm:$0xf]
  %v69 = vld [vmem:[%s1 + $0x34] sm:$0xf]
  %v70 = vld [vmem:[%s1 + $0x38] sm:$0xf]
  %v71 = vld [vmem:[%s1 + $0x3c] sm:$0xf]
  %v72 = vld [vmem:[%s1 + $0x40] sm:$0xf]
  %v73 = vld [vmem:[%s1 + $0x44] sm:$0xf]
  %v74 = vld [vmem:[%s1 + $0x48] sm:$0xf]
  %v75 = vld [vmem:[%s1 + $0x4c] sm:$0xf]
  %v76 = vld [vmem:[%s1 + $0x50] sm:$0xf]
  %v77 = vld [vmem:[%s1 + $0x54] sm:$0xf]
  %v78 = vld [vmem:[%s1 + $0x58] sm:$0xf]
  %v79 = vld [vmem:[%s1 + $0x5c] sm:$0xf]
  %v80 = vld [vmem:[%s1 + $0x60] sm:$0xf]
  %v81 = vld [vmem:[%s1 + $0x64] sm:$0xf]
  %v82 = vld [vmem:[%s1 + $0x68] sm:$0xf]
  %v83 = vld [vmem:[%s1 + $0x6c] sm:$0xf]
  %v84 = vld [vmem:[%s1 + $0x70] sm:$0xf]
  %v85 = vld [vmem:[%s1 + $0x74] sm:$0xf]
  %v86 = vld [vmem:[%s1 + $0x78] sm:$0xf]
  %v87 = vld [vmem:[%s1 + $0x7c] sm:$0xf]
  %v88 = vld [vmem:[%s1 + $0x80] sm:$0xf]
  %v89 = vld [vmem:[%s1 + $0x84] sm:$0xf]
  %v90 = vld [vmem:[%s1 + $0x88] sm:$0xf]
  %v91 = vld [vmem:[%s1 + $0x8c] sm:$0xf]
  %v92 = vld [vmem:[%s1 + $0x90] sm:$0xf]
  %v93 = vld [vmem:[%s1 + $0x94] sm:$0xf]
  %v94 = vld [vmem:[%s1 + $0x98] sm:$0xf]
  %v95 = vld [vmem:[%s1 + $0x9c] sm:$0xf]
  %v96 = vld [vmem:[%s1 + $0xa0] sm:$0xf]
  %v97 = vld [vmem:[%s1 + $0xa4] sm:$0xf]
  %v98 = vld [vmem:[%s1 + $0xa8] sm:$0xf]
  %v99 = vld [vmem:[%s1 + $0xac] sm:$0xf]
  %v100 = vld [vmem:[%s1 + $0xb0] sm:$0xf]
  %v101 = vld [vmem:[%s1 + $0xb4] sm:$0xf]
  %v102 = vld [vmem:[%s1 + $0xb8] sm:$0xf]
  %v103 = vld [vmem:[%s1 + $0xbc] sm:$0xf]
  %v104 = vld [vmem:[%s1 + $0xc0] sm:$0xf]
  %v105 = vld [vmem:[%s1 + $0xc4] sm:$0xf]
  %v106 = vld [vmem:[%s1 + $0xc8] sm:$0xf]
  %v107 = vld [vmem:[%s1 + $0xcc] sm:$0xf]
  %v108 = vld [vmem:[%s1 + $0xd0] sm:$0xf]
  %v109 = vld [vmem:[%s1 + $0xd4] sm:$0xf]
  %v110 = vld [vmem:[%s1 + $0xd8] sm:$0xf]
  %v111 = vld [vmem:[%s1 + $0xdc] sm:$0xf]
  %v112 = vld [vmem:[%s1 + $0xe0] sm:$0xf]
  %v113 = vld [vmem:[%s1 + $0xe4] sm:$0xf]
  %v114 = vld [vmem:[%s1 + $0xe8] sm:$0xf]
  %v115 = vld [vmem:[%s1 + $0xec] sm:$0xf]
  %v116 = vld [vmem:[%s1 + $0xf0] sm:$0xf]
  %v117 = vld [vmem:[%s1 + $0xf4] sm:$0xf]
  %v118 = vld [vmem:[%s1 + $0xf8] sm:$0xf]
  %v119 = vld [vmem:[%s1 + $0xfc] sm:$0xf]
  %v120 = vld [vmem:[%s1 + $0x100] sm:$0xf]
  %v121 = vld [vmem:[%s1 + $0x104] sm:$0xf]
  %v122 = vld [vmem:[%s1 + $0x108] sm:$0xf]
  %v123 = vld [vmem:[%s1 + $0x10c] sm:$0xf]
  %v124 = vld [vmem:[%s1 + $0x110] sm:$0xf]
  %v125 = vld [vmem:[%s1 + $0x114] sm:$0xf]
  %v126 = vld [vmem:[%s1 + $0x118] sm:$0xf]
  %v127 = vld [vmem:[%s1 + $0x11c] sm:$0xf]
  %v128 = vld [vmem:[%s1 + $0x120] sm:$0xf]
  %v129 = vld [vmem:[%s1 + $0x124] sm:$0xf]
  %v130 = vld [vmem:[%s1 + $0x128] sm:$0xf]
  %v131 = vld [vmem:[%s1 + $0x12c] sm:$0xf]
  %v132 = vld [vmem:[%s1 + $0x130] sm:$0xf]
  %v133 = vld [vmem:[%s1 + $0x134] sm:$0xf]
  %v134 = vld [vmem:[%s1 + $0x138] sm:$0xf]
  %v135 = vld [vmem:[%s1 + $0x13c] sm:$0xf]
  %v136 = vld [vmem:[%s1 + $0x140] sm:$0xf]
  %v137 = vld [vmem:[%s1 + $0x144] sm:$0xf]
  %v138 = vld [vmem:[%s1 + $0x148] sm:$0xf]
  %v139 = vld [vmem:[%s1 + $0x14c] sm:$0xf]
  %v140 = vld [vmem:[%s1 + $0x150] sm:$0xf]
  %v141 = vld [vmem:[%s1 + $0x154] sm:$0xf]
  %v142 = vld [vmem:[%s1 + $0x158] sm:$0xf]
  %v143 = vld [vmem:[%s1 + $0x15c] sm:$0xf]
  %v144 = vld [vmem:[%s1 + $0x160] sm:$0xf]
  %v145 = vld [vmem:[%s1 + $0x164] sm:$0xf]
  %v146 = vld [vmem:[%s1 + $0x168] sm:$0xf]
  %v147 = vld [vmem:[%s1 + $0x16c] sm:$0xf]
  %v148 = vld [vmem:[%s1 + $0x170] sm:$0xf]
  %v149 = vld [vmem:[%s1 + $0x174] sm:$0xf]
  %v150 = vld [vmem:[%s1 + $0x178] sm:$0xf]
  %v151 = vld [vmem:[%s1 + $0x17c] sm:$0xf]
  %v152 = vld [vmem:[%s1 + $0x180] sm:$0xf]
  %v153 = vld [vmem:[%s1 + $0x184] sm:$0xf]
  %v154 = vld [vmem:[%s1 + $0x188] sm:$0xf]
  %v155 = vld [vmem:[%s1 + $0x18c] sm:$0xf]
  %v156 = vld [vmem:[%s1 + $0x190] sm:$0xf]
  %v157 = vld [vmem:[%s1 + $0x194] sm:$0xf]
  %v158 = vld [vmem:[%s1 + $0x198] sm:$0xf]
  %v159 = vld [vmem:[%s1 + $0x19c] sm:$0xf]
  %v160 = vld [vmem:[%s1 + $0x1a0] sm:$0xf]
  %v161 = vld [vmem:[%s1 + $0x1a4] sm:$0xf]
  %v162 = vld [vmem:[%s1 + $0x1a8] sm:$0xf]
  %v163 = vld [vmem:[%s1 + $0x1ac] sm:$0xf]
  %v164 = vld [vmem:[%s1 + $0x1b0] sm:$0xf]
  %v165 = vld [vmem:[%s1 + $0x1b4] sm:$0xf]
  %v166 = vld [vmem:[%s1 + $0x1b8] sm:$0xf]
  %v167 = vld [vmem:[%s1 + $0x1bc] sm:$0xf]
  %v168 = vld [vmem:[%s1 + $0x1c0] sm:$0xf]
  %v169 = vld [vmem:[%s1 + $0x1c4] sm:$0xf]
  %v170 = vld [vmem:[%s1 + $0x1c8] sm:$0xf]
  %v171 = vld [vmem:[%s1 + $0x1cc] sm:$0xf]
  %v172 = vld [vmem:[%s1 + $0x1d0] sm:$0xf]
  %v173 = vld [vmem:[%s1 + $0x1d4] sm:$0xf]
  %v174 = vld [vmem:[%s1 + $0x1d8] sm:$0xf]
  %v175 = vld [vmem:[%s1 + $0x1dc] sm:$0xf]
  %v176 = vld [vmem:[%s1 + $0x1e0] sm:$0xf]
  %v177 = vld [vmem:[%s1 + $0x1e4] sm:$0xf]
  %v178 = vld [vmem:[%s1 + $0x1e8] sm:$0xf]
  %v179 = vld [vmem:[%s1 + $0x1ec] sm:$0xf]
  %v180 = vld [vmem:[%s1 + $0x1f0] sm:$0xf]
  %v181 = vld [vmem:[%s1 + $0x1f4] sm:$0xf]
  %v182 = vld [vmem:[%s1 + $0x1f8] sm:$0xf]
  %v183 = vld [vmem:[%s1 + $0x1fc] sm:$0xf]
  %v184 = vld [vmem:[%s1 + $0x200] sm:$0xf]
  %v185 = vld [vmem:[%s1 + $0x204] sm:$0xf]
  %v186 = vld [vmem:[%s1 + $0x208] sm:$0xf]
  %v187 = vld [vmem:[%s1 + $0x20c] sm:$0xf]
  %v188 = vld [vmem:[%s1 + $0x210] sm:$0xf]
  %v189 = vld [vmem:[%s1 + $0x214] sm:$0xf]
  %v190 = vld [vmem:[%s1 + $0x218] sm:$0xf]
  %v191 = vld [vmem:[%s1 + $0x21c] sm:$0xf]
  %v192 = vld [vmem:[%s1 + $0x220] sm:$0xf]
  %v193 = vld [vmem:[%s1 + $0x224] sm:$0xf]
  %v194 = vld [vmem:[%s1 + $0x228] sm:$0xf]
  %v195 = vld [vmem:[%s1 + $0x22c] sm:$0xf]
  %v196 = vld [vmem:[%s1 + $0x230] sm:$0xf]
  %v197 = vld [vmem:[%s1 + $0x234] sm:$0xf]
  %v198 = vld [vmem:[%s1 + $0x238] sm:$0xf]
  %v199 = vld [vmem:[%s1 + $0x23c] sm:$0xf]
  %v235 = vunpack.c.l.b16 %v21
  %v236 = vunpack.c.h.b16 %v21
  %v237 = vunpack.c.l.b16 %v22
  %v238 = vunpack.c.h.b16 %v22
  %v239 = vunpack.c.l.b16 %v23
  %v240 = vunpack.c.h.b16 %v23
  %v241 = vunpack.c.l.b16 %v24
  %v242 = vunpack.c.h.b16 %v24
  %v243 = vunpack.c.l.b16 %v25
  %v244 = vunpack.c.l.b16 %v26
  %v245 = vunpack.c.h.b16 %v26
  %v246 = vunpack.c.l.b16 %v27
  %v247 = vunpack.c.h.b16 %v27
  %v248 = vunpack.c.l.b16 %v28
  %v249 = vunpack.c.h.b16 %v28
  %v250 = vunpack.c.l.b16 %v29
  %v251 = vunpack.c.h.b16 %v29
  %v252 = vunpack.c.l.b16 %v30
  %v253 = vunpack.c.l.b16 %v31
  %v254 = vunpack.c.h.b16 %v31
  %v255 = vunpack.c.l.b16 %v32
  %v256 = vunpack.c.h.b16 %v32
  %v257 = vunpack.c.l.b16 %v33
  %v258 = vunpack.c.h.b16 %v33
  %v259 = vunpack.c.l.b16 %v34
  %v260 = vunpack.c.h.b16 %v34
  %v261 = vunpack.c.l.b16 %v35
  %v262 = vunpack.c.l.b16 %v36
  %v263 = vunpack.c.h.b16 %v36
  %v264 = vunpack.c.l.b16 %v37
  %v265 = vunpack.c.h.b16 %v37
  %v266 = vunpack.c.l.b16 %v38
  %v267 = vunpack.c.h.b16 %v38
  %v268 = vunpack.c.l.b16 %v39
  %v269 = vunpack.c.h.b16 %v39
  %v270 = vunpack.c.l.b16 %v40
  %v271 = vunpack.c.l.b16 %v41
  %v272 = vunpack.c.h.b16 %v41
  %v273 = vunpack.c.l.b16 %v42
  %v274 = vunpack.c.h.b16 %v42
  %v275 = vunpack.c.l.b16 %v43
  %v276 = vunpack.c.h.b16 %v43
  %v277 = vunpack.c.l.b16 %v44
  %v278 = vunpack.c.h.b16 %v44
  %v279 = vunpack.c.l.b16 %v45
  %v280 = vunpack.c.l.b16 %v46
  %v281 = vunpack.c.h.b16 %v46
  %v282 = vunpack.c.l.b16 %v47
  %v283 = vunpack.c.h.b16 %v47
  %v284 = vunpack.c.l.b16 %v48
  %v285 = vunpack.c.h.b16 %v48
  %v286 = vunpack.c.l.b16 %v49
  %v287 = vunpack.c.h.b16 %v49
  %v288 = vunpack.c.l.b16 %v50
  %v289 = vunpack.c.l.b16 %v51
  %v290 = vunpack.c.h.b16 %v51
  %v291 = vunpack.c.l.b16 %v52
  %v292 = vunpack.c.h.b16 %v52
  %v293 = vunpack.c.l.b16 %v53
  %v294 = vunpack.c.h.b16 %v53
  %v295 = vunpack.c.l.b16 %v54
  %v296 = vunpack.c.h.b16 %v54
  %v297 = vunpack.c.l.b16 %v55
  %v298 = vpack.c.b16 %v244, %v235
  %v299 = vpack.c.b16 %v245, %v236
  %v300 = vpack.c.b16 %v246, %v237
  %v301 = vpack.c.b16 %v247, %v238
  %v302 = vpack.c.b16 %v248, %v239
  %v303 = vpack.c.b16 %v249, %v240
  %v304 = vpack.c.b16 %v250, %v241
  %v305 = vpack.c.b16 %v251, %v242
  %v306 = vpack.c.b16 %v252, %v243
  %v307 = vpack.c.b16 %v262, %v253
  %v308 = vpack.c.b16 %v263, %v254
  %v309 = vpack.c.b16 %v264, %v255
  %v310 = vpack.c.b16 %v265, %v256
  %v311 = vpack.c.b16 %v266, %v257
  %v312 = vpack.c.b16 %v267, %v258
  %v313 = vpack.c.b16 %v268, %v259
  %v314 = vpack.c.b16 %v269, %v260
  %v315 = vpack.c.b16 %v270, %v261
  %v316 = vpack.c.b16 %v280, %v271
  %v317 = vpack.c.b16 %v281, %v272
  %v318 = vpack.c.b16 %v282, %v273
  %v319 = vpack.c.b16 %v283, %v274
  %v320 = vpack.c.b16 %v284, %v275
  %v321 = vpack.c.b16 %v285, %v276
  %v322 = vpack.c.b16 %v286, %v277
  %v323 = vpack.c.b16 %v287, %v278
  %v324 = vpack.c.b16 %v288, %v279
  %v325 = vpack.c.b16 %v289, %v289
  %v326 = vpack.c.b16 %v290, %v290
  %v327 = vpack.c.b16 %v291, %v291
  %v328 = vpack.c.b16 %v292, %v292
  %v329 = vpack.c.b16 %v293, %v293
  %v330 = vpack.c.b16 %v294, %v294
  %v331 = vpack.c.b16 %v295, %v295
  %v332 = vpack.c.b16 %v296, %v296
  %v333 = vpack.c.b16 %v297, %v297
  %v514 = vunpack.c.l.b16 %v56
  %v515 = vunpack.c.l.b16 %v57
  %v516 = vunpack.c.l.b16 %v58
  %v517 = vunpack.c.l.b16 %v59
  %v518 = vunpack.c.l.b16 %v60
  %v519 = vunpack.c.l.b16 %v61
  %v520 = vunpack.c.l.b16 %v62
  %v521 = vunpack.c.l.b16 %v63
  %v522 = vunpack.c.l.b16 %v64
  %v523 = vunpack.c.l.b16 %v65
  %v524 = vunpack.c.l.b16 %v66
  %v525 = vunpack.c.l.b16 %v67
  %v526 = vunpack.c.l.b16 %v68
  %v527 = vunpack.c.l.b16 %v69
  %v528 = vunpack.c.l.b16 %v70
  %v529 = vunpack.c.l.b16 %v71
  %v530 = vunpack.c.l.b16 %v72
  %v531 = vunpack.c.l.b16 %v73
  %v532 = vunpack.c.l.b16 %v74
  %v533 = vunpack.c.l.b16 %v75
  %v534 = vunpack.c.l.b16 %v76
  %v535 = vunpack.c.l.b16 %v77
  %v536 = vunpack.c.l.b16 %v78
  %v537 = vunpack.c.l.b16 %v79
  %v538 = vunpack.c.l.b16 %v80
  %v539 = vunpack.c.l.b16 %v81
  %v540 = vunpack.c.l.b16 %v82
  %v541 = vunpack.c.l.b16 %v83
  %v542 = vunpack.c.l.b16 %v84
  %v543 = vunpack.c.l.b16 %v85
  %v544 = vunpack.c.l.b16 %v86
  %v545 = vunpack.c.l.b16 %v87
  %v546 = vunpack.c.l.b16 %v88
  %v547 = vunpack.c.l.b16 %v89
  %v548 = vunpack.c.l.b16 %v90
  %v549 = vunpack.c.l.b16 %v91
  %v550 = vunpack.c.l.b16 %v92
  %v551 = vunpack.c.l.b16 %v93
  %v552 = vunpack.c.l.b16 %v94
  %v553 = vunpack.c.l.b16 %v95
  %v554 = vunpack.c.l.b16 %v96
  %v555 = vunpack.c.l.b16 %v97
  %v556 = vunpack.c.l.b16 %v98
  %v557 = vunpack.c.l.b16 %v99
  %v558 = vunpack.c.l.b16 %v100
  %v559 = vunpack.c.l.b16 %v101
  %v560 = vunpack.c.l.b16 %v102
  %v561 = vunpack.c.l.b16 %v103
  %v562 = vunpack.c.l.b16 %v104
  %v563 = vunpack.c.l.b16 %v105
  %v564 = vunpack.c.l.b16 %v106
  %v565 = vunpack.c.l.b16 %v107
  %v566 = vunpack.c.l.b16 %v108
  %v567 = vunpack.c.l.b16 %v109
  %v568 = vunpack.c.l.b16 %v110
  %v569 = vunpack.c.l.b16 %v111
  %v570 = vunpack.c.l.b16 %v112
  %v571 = vunpack.c.l.b16 %v113
  %v572 = vunpack.c.l.b16 %v114
  %v573 = vunpack.c.l.b16 %v115
  %v574 = vunpack.c.l.b16 %v116
  %v575 = vunpack.c.l.b16 %v117
  %v576 = vunpack.c.l.b16 %v118
  %v577 = vunpack.c.l.b16 %v119
  %v578 = vunpack.c.l.b16 %v120
  %v579 = vunpack.c.l.b16 %v121
  %v580 = vunpack.c.l.b16 %v122
  %v581 = vunpack.c.l.b16 %v123
  %v582 = vunpack.c.l.b16 %v124
  %v583 = vunpack.c.l.b16 %v125
  %v584 = vunpack.c.l.b16 %v126
  %v585 = vunpack.c.l.b16 %v127
  %v586 = vunpack.c.l.b16 %v128
  %v587 = vunpack.c.l.b16 %v129
  %v588 = vunpack.c.l.b16 %v130
  %v589 = vunpack.c.l.b16 %v131
  %v590 = vunpack.c.l.b16 %v132
  %v591 = vunpack.c.l.b16 %v133
  %v592 = vunpack.c.l.b16 %v134
  %v593 = vunpack.c.l.b16 %v135
  %v594 = vunpack.c.l.b16 %v136
  %v595 = vunpack.c.l.b16 %v137
  %v596 = vunpack.c.l.b16 %v138
  %v597 = vunpack.c.l.b16 %v139
  %v598 = vunpack.c.l.b16 %v140
  %v599 = vunpack.c.l.b16 %v141
  %v600 = vunpack.c.l.b16 %v142
  %v601 = vunpack.c.l.b16 %v143
  %v602 = vunpack.c.l.b16 %v144
  %v603 = vunpack.c.l.b16 %v145
  %v604 = vunpack.c.l.b16 %v146
  %v605 = vunpack.c.l.b16 %v147
  %v606 = vunpack.c.l.b16 %v148
  %v607 = vunpack.c.l.b16 %v149
  %v608 = vunpack.c.l.b16 %v150
  %v609 = vunpack.c.l.b16 %v151
  %v610 = vunpack.c.l.b16 %v152
  %v611 = vunpack.c.l.b16 %v153
  %v612 = vunpack.c.l.b16 %v154
  %v613 = vunpack.c.l.b16 %v155
  %v614 = vunpack.c.l.b16 %v156
  %v615 = vunpack.c.l.b16 %v157
  %v616 = vunpack.c.l.b16 %v158
  %v617 = vunpack.c.l.b16 %v159
  %v618 = vunpack.c.l.b16 %v160
  %v619 = vunpack.c.l.b16 %v161
  %v620 = vunpack.c.l.b16 %v162
  %v621 = vunpack.c.l.b16 %v163
  %v622 = vunpack.c.l.b16 %v164
  %v623 = vunpack.c.l.b16 %v165
  %v624 = vunpack.c.l.b16 %v166
  %v625 = vunpack.c.l.b16 %v167
  %v626 = vunpack.c.l.b16 %v168
  %v627 = vunpack.c.l.b16 %v169
  %v628 = vunpack.c.l.b16 %v170
  %v629 = vunpack.c.l.b16 %v171
  %v630 = vunpack.c.l.b16 %v172
  %v631 = vunpack.c.l.b16 %v173
  %v632 = vunpack.c.l.b16 %v174
  %v633 = vunpack.c.l.b16 %v175
  %v634 = vunpack.c.l.b16 %v176
  %v635 = vunpack.c.l.b16 %v177
  %v636 = vunpack.c.l.b16 %v178
  %v637 = vunpack.c.l.b16 %v179
  %v638 = vunpack.c.l.b16 %v180
  %v639 = vunpack.c.l.b16 %v181
  %v640 = vunpack.c.l.b16 %v182
  %v641 = vunpack.c.l.b16 %v183
  %v642 = vunpack.c.l.b16 %v184
  %v643 = vunpack.c.l.b16 %v185
  %v644 = vunpack.c.l.b16 %v186
  %v645 = vunpack.c.l.b16 %v187
  %v646 = vunpack.c.l.b16 %v188
  %v647 = vunpack.c.l.b16 %v189
  %v648 = vunpack.c.l.b16 %v190
  %v649 = vunpack.c.l.b16 %v191
  %v650 = vunpack.c.l.b16 %v192
  %v651 = vunpack.c.l.b16 %v193
  %v652 = vunpack.c.l.b16 %v194
  %v653 = vunpack.c.l.b16 %v195
  %v654 = vunpack.c.l.b16 %v196
  %v655 = vunpack.c.l.b16 %v197
  %v656 = vunpack.c.l.b16 %v198
  %v657 = vunpack.c.l.b16 %v199
  %v658 = vpack.c.b16 %v515, %v514
  %v659 = vpack.c.b16 %v517, %v516
  %v660 = vpack.c.b16 %v519, %v518
  %v661 = vpack.c.b16 %v521, %v520
  %v662 = vpack.c.b16 %v523, %v522
  %v663 = vpack.c.b16 %v525, %v524
  %v664 = vpack.c.b16 %v527, %v526
  %v665 = vpack.c.b16 %v529, %v528
  %v666 = vpack.c.b16 %v531, %v530
  %v667 = vpack.c.b16 %v533, %v532
  %v668 = vpack.c.b16 %v535, %v534
  %v669 = vpack.c.b16 %v537, %v536
  %v670 = vpack.c.b16 %v539, %v538
  %v671 = vpack.c.b16 %v541, %v540
  %v672 = vpack.c.b16 %v543, %v542
  %v673 = vpack.c.b16 %v545, %v544
  %v674 = vpack.c.b16 %v547, %v546
  %v675 = vpack.c.b16 %v549, %v548
  %v676 = vpack.c.b16 %v551, %v550
  %v677 = vpack.c.b16 %v553, %v552
  %v678 = vpack.c.b16 %v555, %v554
  %v679 = vpack.c.b16 %v557, %v556
  %v680 = vpack.c.b16 %v559, %v558
  %v681 = vpack.c.b16 %v561, %v560
  %v682 = vpack.c.b16 %v563, %v562
  %v683 = vpack.c.b16 %v565, %v564
  %v684 = vpack.c.b16 %v567, %v566
  %v685 = vpack.c.b16 %v569, %v568
  %v686 = vpack.c.b16 %v571, %v570
  %v687 = vpack.c.b16 %v573, %v572
  %v688 = vpack.c.b16 %v575, %v574
  %v689 = vpack.c.b16 %v577, %v576
  %v690 = vpack.c.b16 %v579, %v578
  %v691 = vpack.c.b16 %v581, %v580
  %v692 = vpack.c.b16 %v583, %v582
  %v693 = vpack.c.b16 %v585, %v584
  %v694 = vpack.c.b16 %v587, %v586
  %v695 = vpack.c.b16 %v589, %v588
  %v696 = vpack.c.b16 %v591, %v590
  %v697 = vpack.c.b16 %v593, %v592
  %v698 = vpack.c.b16 %v595, %v594
  %v699 = vpack.c.b16 %v597, %v596
  %v700 = vpack.c.b16 %v599, %v598
  %v701 = vpack.c.b16 %v601, %v600
  %v702 = vpack.c.b16 %v603, %v602
  %v703 = vpack.c.b16 %v605, %v604
  %v704 = vpack.c.b16 %v607, %v606
  %v705 = vpack.c.b16 %v609, %v608
  %v706 = vpack.c.b16 %v611, %v610
  %v707 = vpack.c.b16 %v613, %v612
  %v708 = vpack.c.b16 %v615, %v614
  %v709 = vpack.c.b16 %v617, %v616
  %v710 = vpack.c.b16 %v619, %v618
  %v711 = vpack.c.b16 %v621, %v620
  %v712 = vpack.c.b16 %v623, %v622
  %v713 = vpack.c.b16 %v625, %v624
  %v714 = vpack.c.b16 %v627, %v626
  %v715 = vpack.c.b16 %v629, %v628
  %v716 = vpack.c.b16 %v631, %v630
  %v717 = vpack.c.b16 %v633, %v632
  %v718 = vpack.c.b16 %v635, %v634
  %v719 = vpack.c.b16 %v637, %v636
  %v720 = vpack.c.b16 %v639, %v638
  %v721 = vpack.c.b16 %v641, %v640
  %v722 = vpack.c.b16 %v643, %v642
  %v723 = vpack.c.b16 %v645, %v644
  %v724 = vpack.c.b16 %v647, %v646
  %v725 = vpack.c.b16 %v649, %v648
  %v726 = vpack.c.b16 %v651, %v650
  %v727 = vpack.c.b16 %v653, %v652
  %v728 = vpack.c.b16 %v655, %v654
  %v729 = vpack.c.b16 %v657, %v656
  %802 = vmatprep.subr.bf16.mxu0 0
  %803 = vmatpush1.bf16.msra.mxu0 %v658
  %804 = vmatprep.subr.bf16.mxu0 0
  %805 = vmatpush1.bf16.msra.mxu0 %v659
  %806 = vmatprep.subr.bf16.mxu0 0
  %807 = vmatpush1.bf16.msra.mxu0 %v660
  %808 = vmatprep.subr.bf16.mxu0 0
  %809 = vmatpush1.bf16.msra.mxu0 %v661
  %810 = vmatprep.subr.bf16.mxu0 0
  %811 = vmatpush1.bf16.msra.mxu0 %v662
  %812 = vmatprep.subr.bf16.mxu0 0
  %813 = vmatpush1.bf16.msra.mxu0 %v663
  %814 = vmatprep.subr.bf16.mxu0 0
  %815 = vmatpush1.bf16.msra.mxu0 %v664
  %816 = vmatprep.subr.bf16.mxu0 0
  %817 = vmatpush1.bf16.msra.mxu0 %v665
  %818 = vmatprep.subr.bf16.mxu0 0
  %819 = vmatpush1.bf16.msra.mxu0 %v666
  %820 = vmatprep.subr.bf16.mxu0 0
  %821 = vmatpush1.bf16.msra.mxu0 %v667
  %822 = vmatprep.subr.bf16.mxu0 0
  %823 = vmatpush1.bf16.msra.mxu0 %v668
  %824 = vmatprep.subr.bf16.mxu0 0
  %825 = vmatpush1.bf16.msra.mxu0 %v669
  %826 = vmatprep.subr.bf16.mxu0 0
  %827 = vmatpush1.bf16.msra.mxu0 %v670
  %828 = vmatprep.subr.bf16.mxu0 0
  %829 = vmatpush1.bf16.msra.mxu0 %v671
  %830 = vmatprep.subr.bf16.mxu0 0
  %831 = vmatpush1.bf16.msra.mxu0 %v672
  %832 = vmatprep.subr.bf16.mxu0 0
  %833 = vmatpush1.bf16.msra.mxu0 %v673
  %834 = vmatprep.mubr.bf16.mxu0 %v299
  %835 = vmatmul.mubr.bf16.gmra.mrb[0].mxu0 %v298
  %v836 = vpop.f32.mrb[0].mxu0
  %v837 = vadd.f32 0.0, %v836
  %v838 = vpop.f32.mrb[0].mxu0
  %v839 = vpop.f32.mrb[0].mxu0
  %v840 = vadd.f32 0.0, %v839
  %v841 = vpop.f32.mrb[0].mxu0
  %842 = vmatprep.mubr.bf16.mxu0 %v308
  %843 = vmatmul.mubr.bf16.gmra.mrb[0].mxu0 %v307
  %v844 = vpop.f32.mrb[0].mxu0
  %v845 = vadd.f32 0.0, %v844
  %v846 = vpop.f32.mrb[0].mxu0
  %v847 = vpop.f32.mrb[0].mxu0
  %v848 = vadd.f32 0.0, %v847
  %v849 = vpop.f32.mrb[0].mxu0
  %850 = vmatprep.mubr.bf16.mxu0 %v317
  %851 = vmatmul.mubr.bf16.gmra.mrb[0].mxu0 %v316
  %v852 = vpop.f32.mrb[0].mxu0
  %v853 = vadd.f32 0.0, %v852
  %v854 = vpop.f32.mrb[0].mxu0
  %v855 = vpop.f32.mrb[0].mxu0
  %v856 = vadd.f32 0.0, %v855
  %v857 = vpop.f32.mrb[0].mxu0
  %858 = vmatprep.mubr.bf16.mxu0 %v326
  %859 = vmatmul.mubr.bf16.gmra.mrb[0].mxu0 %v325
  %v860 = vpop.f32.mrb[0].mxu0
  %v861 = vadd.f32 0.0, %v860
  %v862 = vpop.f32.mrb[0].mxu0
  %v863 = vpop.f32.mrb[0].mxu0
  %v864 = vpop.f32.mrb[0].mxu0
  %865 = vdwg.mxu0
  %866 = vmatprep.subr.bf16.mxu0 0
  %867 = vmatpush1.bf16.msra.mxu0 %v674
  %868 = vmatprep.subr.bf16.mxu0 0
  %869 = vmatpush1.bf16.msra.mxu0 %v675
  %870 = vmatprep.subr.bf16.mxu0 0
  %871 = vmatpush1.bf16.msra.mxu0 %v676
  %872 = vmatprep.subr.bf16.mxu0 0
  %873 = vmatpush1.bf16.msra.mxu0 %v677
  %874 = vmatprep.subr.bf16.mxu0 0
  %875 = vmatpush1.bf16.msra.mxu0 %v678
  %876 = vmatprep.subr.bf16.mxu0 0
  %877 = vmatpush1.bf16.msra.mxu0 %v679
  %878 = vmatprep.subr.bf16.mxu0 0
  %879 = vmatpush1.bf16.msra.mxu0 %v680
  %880 = vmatprep.subr.bf16.mxu0 0
  %881 = vmatpush1.bf16.msra.mxu0 %v681
  %882 = vmatprep.subr.bf16.mxu0 0
  %883 = vmatpush1.bf16.msra.mxu0 %v682
  %884 = vmatprep.subr.bf16.mxu0 0
  %885 = vmatpush1.bf16.msra.mxu0 %v683
  %886 = vmatprep.subr.bf16.mxu0 0
  %887 = vmatpush1.bf16.msra.mxu0 %v684
  %888 = vmatprep.subr.bf16.mxu0 0
  %889 = vmatpush1.bf16.msra.mxu0 %v685
  %890 = vmatprep.subr.bf16.mxu0 0
  %891 = vmatpush1.bf16.msra.mxu0 %v686
  %892 = vmatprep.subr.bf16.mxu0 0
  %893 = vmatpush1.bf16.msra.mxu0 %v687
  %894 = vmatprep.subr.bf16.mxu0 0
  %895 = vmatpush1.bf16.msra.mxu0 %v688
  %896 = vmatprep.subr.bf16.mxu0 0
  %897 = vmatpush1.bf16.msra.mxu0 %v689
  %898 = vmatprep.mubr.bf16.mxu0 %v301
  %899 = vmatmul.mubr.bf16.gmra.mrb[0].mxu0 %v300
  %v900 = vpop.f32.mrb[0].mxu0
  %v901 = vadd.f32 %v837, %v900
  %v902 = vpop.f32.mrb[0].mxu0
  %v903 = vpop.f32.mrb[0].mxu0
  %v904 = vadd.f32 %v840, %v903
  %v905 = vpop.f32.mrb[0].mxu0
  %906 = vmatprep.mubr.bf16.mxu0 %v310
  %907 = vmatmul.mubr.bf16.gmra.mrb[0].mxu0 %v309
  %v908 = vpop.f32.mrb[0].mxu0
  %v909 = vadd.f32 %v845, %v908
  %v910 = vpop.f32.mrb[0].mxu0
  %v911 = vpop.f32.mrb[0].mxu0
  %v912 = vadd.f32 %v848, %v911
  %v913 = vpop.f32.mrb[0].mxu0
  %914 = vmatprep.mubr.bf16.mxu0 %v319
  %915 = vmatmul.mubr.bf16.gmra.mrb[0].mxu0 %v318
  %v916 = vpop.f32.mrb[0].mxu0
  %v917 = vadd.f32 %v853, %v916
  %v918 = vpop.f32.mrb[0].mxu0
  %v919 = vpop.f32.mrb[0].mxu0
  %v920 = vadd.f32 %v856, %v919
  %v921 = vpop.f32.mrb[0].mxu0
  %922 = vmatprep.mubr.bf16.mxu0 %v328
  %923 = vmatmul.mubr.bf16.gmra.mrb[0].mxu0 %v327
  %v924 = vpop.f32.mrb[0].mxu0
  %v925 = vadd.f32 %v861, %v924
  %v926 = vpop.f32.mrb[0].mxu0
  %v927 = vpop.f32.mrb[0].mxu0
  %v928 = vpop.f32.mrb[0].mxu0
  %929 = vdwg.mxu0
  %930 = vmatprep.subr.bf16.mxu0 0
  %931 = vmatpush1.bf16.msra.mxu0 %v690
  %932 = vmatprep.subr.bf16.mxu0 0
  %933 = vmatpush1.bf16.msra.mxu0 %v691
  %934 = vmatprep.subr.bf16.mxu0 0
  %935 = vmatpush1.bf16.msra.mxu0 %v692
  %936 = vmatprep.subr.bf16.mxu0 0
  %937 = vmatpush1.bf16.msra.mxu0 %v693
  %938 = vmatprep.subr.bf16.mxu0 0
  %939 = vmatpush1.bf16.msra.mxu0 %v694
  %940 = vmatprep.subr.bf16.mxu0 0
  %941 = vmatpush1.bf16.msra.mxu0 %v695
  %942 = vmatprep.subr.bf16.mxu0 0
  %943 = vmatpush1.bf16.msra.mxu0 %v696
  %944 = vmatprep.subr.bf16.mxu0 0
  %945 = vmatpush1.bf16.msra.mxu0 %v697
  %946 = vmatprep.subr.bf16.mxu0 0
  %947 = vmatpush1.bf16.msra.mxu0 %v698
  %948 = vmatprep.subr.bf16.mxu0 0
  %949 = vmatpush1.bf16.msra.mxu0 %v699
  %950 = vmatprep.subr.bf16.mxu0 0
  %951 = vmatpush1.bf16.msra.mxu0 %v700
  %952 = vmatprep.subr.bf16.mxu0 0
  %953 = vmatpush1.bf16.msra.mxu0 %v701
  %954 = vmatprep.subr.bf16.mxu0 0
  %955 = vmatpush1.bf16.msra.mxu0 %v702
  %956 = vmatprep.subr.bf16.mxu0 0
  %957 = vmatpush1.bf16.msra.mxu0 %v703
  %958 = vmatprep.subr.bf16.mxu0 0
  %959 = vmatpush1.bf16.msra.mxu0 %v704
  %960 = vmatprep.subr.bf16.mxu0 0
  %961 = vmatpush1.bf16.msra.mxu0 %v705
  %962 = vmatprep.mubr.bf16.mxu0 %v303
  %963 = vmatmul.mubr.bf16.gmra.mrb[0].mxu0 %v302
  %v964 = vpop.f32.mrb[0].mxu0
  %v965 = vadd.f32 %v901, %v964
  %v966 = vpop.f32.mrb[0].mxu0
  %v967 = vpop.f32.mrb[0].mxu0
  %v968 = vadd.f32 %v904, %v967
  %v969 = vpop.f32.mrb[0].mxu0
  %970 = vmatprep.mubr.bf16.mxu0 %v312
  %971 = vmatmul.mubr.bf16.gmra.mrb[0].mxu0 %v311
  %v972 = vpop.f32.mrb[0].mxu0
  %v973 = vadd.f32 %v909, %v972
  %v974 = vpop.f32.mrb[0].mxu0
  %v975 = vpop.f32.mrb[0].mxu0
  %v976 = vadd.f32 %v912, %v975
  %v977 = vpop.f32.mrb[0].mxu0
  %978 = vmatprep.mubr.bf16.mxu0 %v321
  %979 = vmatmul.mubr.bf16.gmra.mrb[0].mxu0 %v320
  %v980 = vpop.f32.mrb[0].mxu0
  %v981 = vadd.f32 %v917, %v980
  %v982 = vpop.f32.mrb[0].mxu0
  %v983 = vpop.f32.mrb[0].mxu0
  %v984 = vadd.f32 %v920, %v983
  %v985 = vpop.f32.mrb[0].mxu0
  %986 = vmatprep.mubr.bf16.mxu0 %v330
  %987 = vmatmul.mubr.bf16.gmra.mrb[0].mxu0 %v329
  %v988 = vpop.f32.mrb[0].mxu0
  %v989 = vadd.f32 %v925, %v988
  %v990 = vpop.f32.mrb[0].mxu0
  %v991 = vpop.f32.mrb[0].mxu0
  %v992 = vpop.f32.mrb[0].mxu0
  %993 = vdwg.mxu0
  %994 = vmatprep.subr.bf16.mxu0 0
  %995 = vmatpush1.bf16.msra.mxu0 %v706
  %996 = vmatprep.subr.bf16.mxu0 0
  %997 = vmatpush1.bf16.msra.mxu0 %v707
  %998 = vmatprep.subr.bf16.mxu0 0
  %999 = vmatpush1.bf16.msra.mxu0 %v708
  %1000 = vmatprep.subr.bf16.mxu0 0
  %1001 = vmatpush1.bf16.msra.mxu0 %v709
  %1002 = vmatprep.subr.bf16.mxu0 0
  %1003 = vmatpush1.bf16.msra.mxu0 %v710
  %1004 = vmatprep.subr.bf16.mxu0 0
  %1005 = vmatpush1.bf16.msra.mxu0 %v711
  %1006 = vmatprep.subr.bf16.mxu0 0
  %1007 = vmatpush1.bf16.msra.mxu0 %v712
  %1008 = vmatprep.subr.bf16.mxu0 0
  %1009 = vmatpush1.bf16.msra.mxu0 %v713
  %1010 = vmatprep.subr.bf16.mxu0 0
  %1011 = vmatpush1.bf16.msra.mxu0 %v714
  %1012 = vmatprep.subr.bf16.mxu0 0
  %1013 = vmatpush1.bf16.msra.mxu0 %v715
  %1014 = vmatprep.subr.bf16.mxu0 0
  %1015 = vmatpush1.bf16.msra.mxu0 %v716
  %1016 = vmatprep.subr.bf16.mxu0 0
  %1017 = vmatpush1.bf16.msra.mxu0 %v717
  %1018 = vmatprep.subr.bf16.mxu0 0
  %1019 = vmatpush1.bf16.msra.mxu0 %v718
  %1020 = vmatprep.subr.bf16.mxu0 0
  %1021 = vmatpush1.bf16.msra.mxu0 %v719
  %1022 = vmatprep.subr.bf16.mxu0 0
  %1023 = vmatpush1.bf16.msra.mxu0 %v720
  %1024 = vmatprep.subr.bf16.mxu0 0
  %1025 = vmatpush1.bf16.msra.mxu0 %v721
  %1026 = vmatprep.mubr.bf16.mxu0 %v305
  %1027 = vmatmul.mubr.bf16.gmra.mrb[0].mxu0 %v304
  %v1028 = vpop.f32.mrb[0].mxu0
  %v1029 = vadd.f32 %v965, %v1028
  %v1030 = vpop.f32.mrb[0].mxu0
  %v1031 = vpop.f32.mrb[0].mxu0
  %v1032 = vadd.f32 %v968, %v1031
  %v1033 = vpop.f32.mrb[0].mxu0
  %1034 = vmatprep.mubr.bf16.mxu0 %v314
  %1035 = vmatmul.mubr.bf16.gmra.mrb[0].mxu0 %v313
  %v1036 = vpop.f32.mrb[0].mxu0
  %v1037 = vadd.f32 %v973, %v1036
  %v1038 = vpop.f32.mrb[0].mxu0
  %v1039 = vpop.f32.mrb[0].mxu0
  %v1040 = vadd.f32 %v976, %v1039
  %v1041 = vpop.f32.mrb[0].mxu0
  %1042 = vmatprep.mubr.bf16.mxu0 %v323
  %1043 = vmatmul.mubr.bf16.gmra.mrb[0].mxu0 %v322
  %v1044 = vpop.f32.mrb[0].mxu0
  %v1045 = vadd.f32 %v981, %v1044
  %v1046 = vpop.f32.mrb[0].mxu0
  %v1047 = vpop.f32.mrb[0].mxu0
  %v1048 = vadd.f32 %v984, %v1047
  %v1049 = vpop.f32.mrb[0].mxu0
  %1050 = vmatprep.mubr.bf16.mxu0 %v332
  %1051 = vmatmul.mubr.bf16.gmra.mrb[0].mxu0 %v331
  %v1052 = vpop.f32.mrb[0].mxu0
  %v1053 = vadd.f32 %v989, %v1052
  %v1054 = vpop.f32.mrb[0].mxu0
  %v1055 = vpop.f32.mrb[0].mxu0
  %v1056 = vpop.f32.mrb[0].mxu0
  %1057 = vdwg.mxu0
  %1058 = vmatprep.subr.bf16.mxu0 0
  %1059 = vmatpush1.bf16.msra.mxu0 %v722
  %1060 = vmatprep.subr.bf16.mxu0 0
  %1061 = vmatpush1.bf16.msra.mxu0 %v723
  %1062 = vmatprep.subr.bf16.mxu0 0
  %1063 = vmatpush1.bf16.msra.mxu0 %v724
  %1064 = vmatprep.subr.bf16.mxu0 0
  %1065 = vmatpush1.bf16.msra.mxu0 %v725
  %1066 = vmatprep.subr.bf16.mxu0 0
  %1067 = vmatpush1.bf16.msra.mxu0 %v726
  %1068 = vmatprep.subr.bf16.mxu0 0
  %1069 = vmatpush1.bf16.msra.mxu0 %v727
  %1070 = vmatprep.subr.bf16.mxu0 0
  %1071 = vmatpush1.bf16.msra.mxu0 %v728
  %1072 = vmatprep.subr.bf16.mxu0 0
  %1073 = vmatpush1.bf16.msra.mxu0 %v729
  %1074 = vmatprep.subr.bf16.mxu0 0
  %1075 = vmatpush1.bf16.msra.mxu0 0
  %1076 = vmatprep.subr.bf16.mxu0 0
  %1077 = vmatpush1.bf16.msra.mxu0 0
  %1078 = vmatprep.subr.bf16.mxu0 0
  %1079 = vmatpush1.bf16.msra.mxu0 0
  %1080 = vmatprep.subr.bf16.mxu0 0
  %1081 = vmatpush1.bf16.msra.mxu0 0
  %1082 = vmatprep.subr.bf16.mxu0 0
  %1083 = vmatpush1.bf16.msra.mxu0 0
  %1084 = vmatprep.subr.bf16.mxu0 0
  %1085 = vmatpush1.bf16.msra.mxu0 0
  %1086 = vmatprep.subr.bf16.mxu0 0
  %1087 = vmatpush1.bf16.msra.mxu0 0
  %1088 = vmatprep.subr.bf16.mxu0 0
  %1089 = vmatpush1.bf16.msra.mxu0 0
  %1090 = vmatprep.mubr.bf16.mxu0 0
  %1091 = vmatmul.mubr.bf16.gmra.mrb[0].mxu0 %v306
  %v1092 = vpop.f32.mrb[0].mxu0
  %v1093 = vadd.f32 %v1029, %v1092
  %v1094 = vpop.f32.mrb[0].mxu0
  %v1095 = vpop.f32.mrb[0].mxu0
  %v1096 = vadd.f32 %v1032, %v1095
  %v1097 = vpop.f32.mrb[0].mxu0
  %1098 = vmatprep.mubr.bf16.mxu0 0
  %1099 = vmatmul.mubr.bf16.gmra.mrb[0].mxu0 %v315
  %v1100 = vpop.f32.mrb[0].mxu0
  %v1101 = vadd.f32 %v1037, %v1100
  %v1102 = vpop.f32.mrb[0].mxu0
  %v1103 = vpop.f32.mrb[0].mxu0
  %v1104 = vadd.f32 %v1040, %v1103
  %v1105 = vpop.f32.mrb[0].mxu0
  %1106 = vmatprep.mubr.bf16.mxu0 0
  %1107 = vmatmul.mubr.bf16.gmra.mrb[0].mxu0 %v324
  %v1108 = vpop.f32.mrb[0].mxu0
  %v1109 = vadd.f32 %v1045, %v1108
  %v1110 = vpop.f32.mrb[0].mxu0
  %v1111 = vpop.f32.mrb[0].mxu0
  %v1112 = vadd.f32 %v1048, %v1111
  %v1113 = vpop.f32.mrb[0].mxu0
  %1114 = vmatprep.mubr.bf16.mxu0 0
  %1115 = vmatmul.mubr.bf16.gmra.mrb[0].mxu0 %v333
  %v1116 = vpop.f32.mrb[0].mxu0
  %v1117 = vadd.f32 %v1053, %v1116
  %v1118 = vpop.f32.mrb[0].mxu0
  %v1119 = vpop.f32.mrb[0].mxu0
  %v1120 = vpop.f32.mrb[0].mxu0
  %1121 = vdwg.mxu0
  %v1122 = vld [vmem:[%s2] sm:$0x1]
  %v1124 = vlaneseq
  %v1125 = vshrl.u32 %v1124, 7
  %v1126 = vsub.s32 0, %v1125
  %v1127 = vrot.slane %v1122, %v1126
  %v1129 = vmul.f32 %v1093, %v1127
  %v1130 = vmul.f32 %v1096, %v1127
  %v1131 = vmul.f32 %v1101, %v1127
  %v1132 = vmul.f32 %v1104, %v1127
  %v1133 = vmul.f32 %v1109, %v1127
  %v1134 = vmul.f32 %v1112, %v1127
  %v1135 = vmul.f32 %v1117, %v1127
  %v1136 = vld [vmem:[%s3] sm:$0x1]
  %v1138 = vlaneseq
  %v1139 = vshrl.u32 %v1138, 7
  %v1140 = vsub.s32 0, %v1139
  %v1141 = vrot.slane %v1136, %v1140
  %v1143 = vadd.f32 %v1129, %v1141
  %v1144 = vadd.f32 %v1130, %v1141
  %v1145 = vadd.f32 %v1131, %v1141
  %v1146 = vadd.f32 %v1132, %v1141
  %v1147 = vadd.f32 %v1133, %v1141
  %v1148 = vadd.f32 %v1134, %v1141
  %v1149 = vadd.f32 %v1135, %v1141
  %v1150 = vld [vmem:[%s4] sm:$0xff]
  %v1151 = vld [vmem:[%s4 + $0x8] sm:$0xff]
  %v1152 = vld [vmem:[%s4 + $0x10] sm:$0xff]
  %v1153 = vld [vmem:[%s4 + $0x18] sm:$0xff]
  %v1154 = vld [vmem:[%s4 + $0x20] sm:$0xff]
  %v1155 = vld [vmem:[%s4 + $0x28] sm:$0xff]
  %v1156 = vld [vmem:[%s4 + $0x30] sm:$0x3]
  %v1157 = vadd.f32 %v1143, %v1150
  %v1158 = vadd.f32 %v1144, %v1151
  %v1159 = vadd.f32 %v1145, %v1152
  %v1160 = vadd.f32 %v1146, %v1153
  %v1161 = vadd.f32 %v1147, %v1154
  %v1162 = vadd.f32 %v1148, %v1155
  %v1163 = vadd.f32 %v1149, %v1156
  %v1164 = vmax.f32 %v1157, 0.0
  %v1165 = vmax.f32 %v1158, 0.0
  %v1166 = vmax.f32 %v1159, 0.0
  %v1167 = vmax.f32 %v1160, 0.0
  %v1168 = vmax.f32 %v1161, 0.0
  %v1169 = vmax.f32 %v1162, 0.0
  %v1170 = vmax.f32 %v1163, 0.0
  %1171 = vst [vmem:[%s5] sm:$0xff] %v1164
  %1172 = vst [vmem:[%s5 + $0x8] sm:$0xff] %v1165
  %1173 = vst [vmem:[%s5 + $0x10] sm:$0xff] %v1166
  %1174 = vst [vmem:[%s5 + $0x18] sm:$0xff] %v1167
  %1175 = vst [vmem:[%s5 + $0x20] sm:$0xff] %v1168
  %1176 = vst [vmem:[%s5 + $0x28] sm:$0xff] %v1169
  %1177 = vst [vmem:[%s5 + $0x30] sm:$0x3] %v1170
  // Predicated region
  $region22: #{forward.20} parent=0 // pred_check
    _
  $region23: #{forward.20} parent=0 // pred_check_branch
    %1179 = sbr.rel (0) target = $region25
  $region24: #{forward.20} parent=0 // pred_region
    _
  $region25: #{forward.20} parent=0 // pred_fallthru
    _
  // Predicated region
  $region26: #{forward.20} parent=0 // pred_check
    _
  $region27: #{forward.20} parent=0 // pred_check_branch
    %1181 = sbr.rel (0) target = $region29
  $region28: #{forward.20} parent=0 // pred_region
    _
  $region29: #{forward.20} parent=0 // pred_fallthru
    _

</llo_original>
